<compile_context>
chip_gen: v5e
topology: v5e:2x2
jax: 0.10.0
libtpu: 0.0.40
codegen_flags: <defaults>
</compile_context>

<pallas_src>
import functools

import jax
import jax.numpy as jnp
from jax.experimental import pallas as pl
from jax.experimental.pallas import tpu as pltpu


def _erf_approx(x):
    # Abramowitz & Stegun 7.1.26, max abs error ~1.5e-7 (exact-GELU semantics
    # within fp32 noise). Uses only exp/mul/add/where so it always lowers.
    p = 0.3275911
    a1, a2, a3, a4, a5 = (0.254829592, -0.284496736, 1.421413741,
                          -1.453152027, 1.061405429)
    sign = jnp.where(x >= 0.0, 1.0, -1.0)
    ax = jnp.abs(x)
    t = 1.0 / (1.0 + p * ax)
    poly = ((((a5 * t + a4) * t + a3) * t + a2) * t + a1) * t
    return sign * (1.0 - poly * jnp.exp(-ax * ax))


def _gelu_exact(x):
    # Matches F.gelu default (exact / erf-based), not the tanh approximation.
    return 0.5 * x * (1.0 + _erf_approx(x * 0.7071067811865476))


def _residual_cnn_kernel(x_ref, g1_ref, be1_ref, g2_ref, be2_ref,
                         w1_ref, b1_ref, w2_ref, b2_ref,
                         out_ref, pad_ref, *, C, F, T, K):
    eps = 1e-5
    p = K // 2

    # Zero the halo scratch once per grid step; both convs only overwrite the
    # interior, so the halo stays zero for the whole body.
    pad_ref[...] = jnp.zeros_like(pad_ref)

    def layer_norm(plane, g_ref, be_ref):
        # CNNLayerNorm == LayerNorm over the n_feats axis: here that is the
        # sublane axis of a (F, T) plane, normalized per (c, t).
        mean = jnp.mean(plane, axis=0, keepdims=True)
        cent = plane - mean
        var = jnp.mean(cent * cent, axis=0, keepdims=True)
        return cent * jax.lax.rsqrt(var + eps) * g_ref[...] + be_ref[...]

    def conv2d_same(planes, w_ref, b_ref):
        # KxK, stride-1, 'same' cross-correlation (== nn.Conv2d, pad=K//2),
        # done entirely on the VPU: shifted taps (halo scratch) x SMEM scalar
        # weights, accumulated into per-output-channel register planes.
        for ci in range(C):
            pad_ref[ci, p:p + F, p:p + T] = planes[ci]
        acc = [jnp.zeros((F, T), jnp.float32) for _ in range(C)]
        for dh in range(K):
            for dw in range(K):
                tap = pad_ref[:, dh:dh + F, dw:dw + T]          # (C, F, T)
                for ci in range(C):
                    xp = tap[ci]                                # (F, T)
                    for co in range(C):
                        wv = w_ref[((co * C + ci) * K + dh) * K + dw]
                        acc[co] = acc[co] + xp * wv
        return [acc[co] + b_ref[co] for co in range(C)]

    residual = [x_ref[0, c] for c in range(C)]                  # (F, T) each

    h = [_gelu_exact(layer_norm(residual[c], g1_ref, be1_ref)) for c in range(C)]
    # TODO(synk): training-mode dropout omitted (eval-mode dropout == identity).
    h = conv2d_same(h, w1_ref, b1_ref)
    h = [_gelu_exact(layer_norm(h[c], g2_ref, be2_ref)) for c in range(C)]
    h = conv2d_same(h, w2_ref, b2_ref)

    for c in range(C):
        out_ref[0, c] = h[c] + residual[c]


def residual_cnn_forward(x_nchw, params, *, kernel_size):
    """Pallas forward of ResidualCNN. x_nchw: (B, C, n_feats, time) fp32."""
    B, C, F, T = x_nchw.shape
    K = kernel_size
    assert K % 2 == 1, "stride-1 'same' residual conv needs an odd kernel"
    p = K // 2

    # Conv weights/biases as flat fp32 scalar tables -> SMEM.
    w1f = params["w1"].reshape(-1).astype(jnp.float32)      # (Cout*Cin*K*K,)
    w2f = params["w2"].reshape(-1).astype(jnp.float32)
    b1 = params["b1"].astype(jnp.float32)                   # (C,)
    b2 = params["b2"].astype(jnp.float32)
    # LayerNorm params as (F, 1) so they broadcast along the lane (time) axis.
    g1 = params["g1"].reshape(F, 1).astype(jnp.float32)
    be1 = params["be1"].reshape(F, 1).astype(jnp.float32)
    g2 = params["g2"].reshape(F, 1).astype(jnp.float32)
    be2 = params["be2"].reshape(F, 1).astype(jnp.float32)

    kernel = functools.partial(_residual_cnn_kernel, C=C, F=F, T=T, K=K)

    x_spec = pl.BlockSpec((1, C, F, T), lambda b: (b, 0, 0, 0))
    ln_spec = pl.BlockSpec((F, 1), lambda b: (0, 0))
    smem_spec = pl.BlockSpec(memory_space=pltpu.MemorySpace.SMEM)

    # TODO(synk): at production DeepSpeech2 shapes (C=32, time in the
    # thousands) add a time-tile grid axis with a K//2 halo (manual DMA) and,
    # on v6e/v7x, an im2col bf16 MXU path; at these shapes one batch element
    # is a few KB so a batch grid alone bounds VMEM and pipelines the DMA.
    return pl.pallas_call(
        kernel,
        out_shape=jax.ShapeDtypeStruct((B, C, F, T), jnp.float32),
        grid=(B,),
        in_specs=[x_spec, ln_spec, ln_spec, ln_spec, ln_spec,
                  smem_spec, smem_spec, smem_spec, smem_spec],
        out_specs=x_spec,
        scratch_shapes=[pltpu.VMEM((C, F + 2 * p, T + 2 * p), jnp.float32)],
        compiler_params=pltpu.CompilerParams(
            dimension_semantics=("parallel",)),
    )(x_nchw, g1, be1, g2, be2, w1f, b1, w2f, b2)


def residual_cnn_reference(x, params, *, kernel_size):
    """Pure-JAX reference matching the PyTorch forward (eval mode)."""
    K = kernel_size
    pad = K // 2

    def ln(v, g, be):
        mean = v.mean(axis=2, keepdims=True)
        var = ((v - mean) ** 2).mean(axis=2, keepdims=True)
        vn = (v - mean) / jnp.sqrt(var + 1e-5)
        return vn * g.reshape(1, 1, -1, 1) + be.reshape(1, 1, -1, 1)

    def conv(v, w, b):
        y = jax.lax.conv_general_dilated(
            v, w, window_strides=(1, 1), padding=[(pad, pad), (pad, pad)],
            dimension_numbers=("NCHW", "OIHW", "NCHW"))
        return y + b.reshape(1, -1, 1, 1)

    residual = x
    h = ln(x, params["g1"], params["be1"])
    h = jax.nn.gelu(h, approximate=False)
    h = conv(h, params["w1"], params["b1"])
    h = ln(h, params["g2"], params["be2"])
    h = jax.nn.gelu(h, approximate=False)
    h = conv(h, params["w2"], params["b2"])
    return h + residual


if __name__ == "__main__":
    B, C, F, T = 2, 4, 16, 16     # batch, channels(in=out), n_feats, time
    K = 3                         # kernel=3, stride=1, padding=1

    key = jax.random.PRNGKey(0)
    keys = jax.random.split(key, 9)
    x = jax.random.normal(keys[0], (B, C, F, T), jnp.float32)
    params = dict(
        w1=0.1 * jax.random.normal(keys[1], (C, C, K, K), jnp.float32),
        b1=0.05 * jax.random.normal(keys[2], (C,), jnp.float32),
        w2=0.1 * jax.random.normal(keys[3], (C, C, K, K), jnp.float32),
        b2=0.05 * jax.random.normal(keys[4], (C,), jnp.float32),
        g1=1.0 + 0.1 * jax.random.normal(keys[5], (F,), jnp.float32),
        be1=0.1 * jax.random.normal(keys[6], (F,), jnp.float32),
        g2=1.0 + 0.1 * jax.random.normal(keys[7], (F,), jnp.float32),
        be2=0.1 * jax.random.normal(keys[8], (F,), jnp.float32),
    )

    out = residual_cnn_forward(x, params, kernel_size=K)
    out = jax.block_until_ready(out)

    ref = residual_cnn_reference(x, params, kernel_size=K)
    assert out.shape == ref.shape == (B, C, F, T)
    max_err = float(jnp.max(jnp.abs(out - ref)))
    if max_err > 2e-3:
        raise AssertionError(f"kernel/reference mismatch: max_err={max_err}")
    print("KERNEL_OK")
</pallas_src>

<mosaic_0001>
module attributes {stable_mosaic.version = 11 : i64} {
  func.func @_residual_cnn_kernel(%arg0: i32, %arg1: memref<1x4x16x16xf32, #tpu.memory_space<vmem>>, %arg2: memref<16x1xf32, #tpu.memory_space<vmem>>, %arg3: memref<16x1xf32, #tpu.memory_space<vmem>>, %arg4: memref<16x1xf32, #tpu.memory_space<vmem>>, %arg5: memref<16x1xf32, #tpu.memory_space<vmem>>, %arg6: memref<144xf32, #tpu.memory_space<smem>>, %arg7: memref<4xf32, #tpu.memory_space<smem>>, %arg8: memref<144xf32, #tpu.memory_space<smem>>, %arg9: memref<4xf32, #tpu.memory_space<smem>>, %arg10: memref<1x4x16x16xf32, #tpu.memory_space<vmem>>, %arg11: memref<4x18x18xf32, #tpu.memory_space<vmem>>) attributes {dimension_semantics = [#tpu.dimension_semantics<parallel>], iteration_bounds = array<i64: 2>, scalar_prefetch = 0 : i64, scratch_operands = 1 : i64, tpu.core_type = #tpu.core_type<tc>, window_params = [{transform_indices = @transform_0, window_bounds = array<i64: 1, 4, 16, 16>}, {pipeline_mode = #tpu.pipeline_mode<synchronous>, transform_indices = @transform_1, window_bounds = array<i64: 16, 1>}, {pipeline_mode = #tpu.pipeline_mode<synchronous>, transform_indices = @transform_2, window_bounds = array<i64: 16, 1>}, {pipeline_mode = #tpu.pipeline_mode<synchronous>, transform_indices = @transform_3, window_bounds = array<i64: 16, 1>}, {pipeline_mode = #tpu.pipeline_mode<synchronous>, transform_indices = @transform_4, window_bounds = array<i64: 16, 1>}, {transform_indices = @transform_5, window_bounds = array<i64: 144>}, {transform_indices = @transform_6, window_bounds = array<i64: 4>}, {transform_indices = @transform_7, window_bounds = array<i64: 144>}, {transform_indices = @transform_8, window_bounds = array<i64: 4>}, {transform_indices = @transform_9, window_bounds = array<i64: 1, 4, 16, 16>}]} {
    %cst = arith.constant 0.000000e+00 : f32
    %0 = vector.broadcast %cst : f32 to vector<4x18x18xf32>
    %c0 = arith.constant 0 : index
    %c0_0 = arith.constant 0 : index
    %c0_1 = arith.constant 0 : index
    %1 = vector.load %arg11[%c0, %c0_0, %c0_1] : memref<4x18x18xf32, #tpu.memory_space<vmem>>, vector<4x18x18xf32>
    tpu.vector_store %arg11[%c0, %c0_0, %c0_1], %0 {strides = array<i32>} : memref<4x18x18xf32, #tpu.memory_space<vmem>>, vector<4x18x18xf32>,
    %c0_2 = arith.constant 0 : index
    %c0_3 = arith.constant 0 : index
    %c0_4 = arith.constant 0 : index
    %c0_5 = arith.constant 0 : index
    %2 = vector.load %arg1[%c0_2, %c0_3, %c0_4, %c0_5] : memref<1x4x16x16xf32, #tpu.memory_space<vmem>>, vector<1x1x16x16xf32>
    %3 = vector.shape_cast %2 : vector<1x1x16x16xf32> to vector<16x16xf32>
    %c0_6 = arith.constant 0 : index
    %c1 = arith.constant 1 : index
    %c0_7 = arith.constant 0 : index
    %c0_8 = arith.constant 0 : index
    %4 = vector.load %arg1[%c0_6, %c1, %c0_7, %c0_8] : memref<1x4x16x16xf32, #tpu.memory_space<vmem>>, vector<1x1x16x16xf32>
    %5 = vector.shape_cast %4 : vector<1x1x16x16xf32> to vector<16x16xf32>
    %c0_9 = arith.constant 0 : index
    %c2 = arith.constant 2 : index
    %c0_10 = arith.constant 0 : index
    %c0_11 = arith.constant 0 : index
    %6 = vector.load %arg1[%c0_9, %c2, %c0_10, %c0_11] : memref<1x4x16x16xf32, #tpu.memory_space<vmem>>, vector<1x1x16x16xf32>
    %7 = vector.shape_cast %6 : vector<1x1x16x16xf32> to vector<16x16xf32>
    %c0_12 = arith.constant 0 : index
    %c3 = arith.constant 3 : index
    %c0_13 = arith.constant 0 : index
    %c0_14 = arith.constant 0 : index
    %8 = vector.load %arg1[%c0_12, %c3, %c0_13, %c0_14] : memref<1x4x16x16xf32, #tpu.memory_space<vmem>>, vector<1x1x16x16xf32>
    %9 = vector.shape_cast %8 : vector<1x1x16x16xf32> to vector<16x16xf32>
    %cst_15 = arith.constant dense<0.000000e+00> : vector<16xf32>
    %10 = vector.multi_reduction <add>, %3, %cst_15 [0] : vector<16x16xf32> to vector<16xf32>
    %11 = vector.shape_cast %10 : vector<16xf32> to vector<1x16xf32>
    %cst_16 = arith.constant 1.600000e+01 : f32
    %12 = vector.broadcast %cst_16 : f32 to vector<1x16xf32>
    %13 = arith.divf %11, %12 : vector<1x16xf32>
    %14 = vector.broadcast %13 : vector<1x16xf32> to vector<16x16xf32>
    %15 = arith.subf %3, %14 : vector<16x16xf32>
    %16 = arith.mulf %15, %15 : vector<16x16xf32>
    %cst_17 = arith.constant dense<0.000000e+00> : vector<16xf32>
    %17 = vector.multi_reduction <add>, %16, %cst_17 [0] : vector<16x16xf32> to vector<16xf32>
    %18 = vector.shape_cast %17 : vector<16xf32> to vector<1x16xf32>
    %cst_18 = arith.constant 1.600000e+01 : f32
    %19 = vector.broadcast %cst_18 : f32 to vector<1x16xf32>
    %20 = arith.divf %18, %19 : vector<1x16xf32>
    %cst_19 = arith.constant 9.99999974E-6 : f32
    %21 = vector.broadcast %cst_19 : f32 to vector<1x16xf32>
    %22 = arith.addf %20, %21 : vector<1x16xf32>
    %23 = math.rsqrt %22 : vector<1x16xf32>
    %24 = vector.broadcast %23 : vector<1x16xf32> to vector<16x16xf32>
    %25 = arith.mulf %15, %24 : vector<16x16xf32>
    %c0_20 = arith.constant 0 : index
    %c0_21 = arith.constant 0 : index
    %26 = vector.load %arg2[%c0_20, %c0_21] : memref<16x1xf32, #tpu.memory_space<vmem>>, vector<16x1xf32>
    %27 = vector.broadcast %26 : vector<16x1xf32> to vector<16x16xf32>
    %28 = arith.mulf %25, %27 : vector<16x16xf32>
    %c0_22 = arith.constant 0 : index
    %c0_23 = arith.constant 0 : index
    %29 = vector.load %arg3[%c0_22, %c0_23] : memref<16x1xf32, #tpu.memory_space<vmem>>, vector<16x1xf32>
    %30 = vector.broadcast %29 : vector<16x1xf32> to vector<16x16xf32>
    %31 = arith.addf %28, %30 : vector<16x16xf32>
    %cst_24 = arith.constant 5.000000e-01 : f32
    %32 = vector.broadcast %cst_24 : f32 to vector<16x16xf32>
    %33 = arith.mulf %32, %31 : vector<16x16xf32>
    %cst_25 = arith.constant 0.707106769 : f32
    %34 = vector.broadcast %cst_25 : f32 to vector<16x16xf32>
    %35 = arith.mulf %31, %34 : vector<16x16xf32>
    %cst_26 = arith.constant 0.000000e+00 : f32
    %36 = vector.broadcast %cst_26 : f32 to vector<16x16xf32>
    %37 = arith.cmpf oge, %35, %36 : vector<16x16xf32>
    %cst_27 = arith.constant 1.000000e+00 : f32
    %cst_28 = arith.constant -1.000000e+00 : f32
    %38 = vector.broadcast %cst_27 : f32 to vector<16x16xf32>
    %39 = vector.broadcast %cst_28 : f32 to vector<16x16xf32>
    %40 = arith.select %37, %38, %39 : vector<16x16xi1>, vector<16x16xf32>
    %41 = math.absf %35 : vector<16x16xf32>
    %cst_29 = arith.constant 0.327591091 : f32
    %42 = vector.broadcast %cst_29 : f32 to vector<16x16xf32>
    %43 = arith.mulf %42, %41 : vector<16x16xf32>
    %cst_30 = arith.constant 1.000000e+00 : f32
    %44 = vector.broadcast %cst_30 : f32 to vector<16x16xf32>
    %45 = arith.addf %44, %43 : vector<16x16xf32>
    %cst_31 = arith.constant 1.000000e+00 : f32
    %46 = vector.broadcast %cst_31 : f32 to vector<16x16xf32>
    %47 = arith.divf %46, %45 : vector<16x16xf32>
    %cst_32 = arith.constant 1.06140542 : f32
    %48 = vector.broadcast %cst_32 : f32 to vector<16x16xf32>
    %49 = arith.mulf %48, %47 : vector<16x16xf32>
    %cst_33 = arith.constant -1.45315206 : f32
    %50 = vector.broadcast %cst_33 : f32 to vector<16x16xf32>
    %51 = arith.addf %49, %50 : vector<16x16xf32>
    %52 = arith.mulf %51, %47 : vector<16x16xf32>
    %cst_34 = arith.constant 1.42141378 : f32
    %53 = vector.broadcast %cst_34 : f32 to vector<16x16xf32>
    %54 = arith.addf %52, %53 : vector<16x16xf32>
    %55 = arith.mulf %54, %47 : vector<16x16xf32>
    %cst_35 = arith.constant -0.284496725 : f32
    %56 = vector.broadcast %cst_35 : f32 to vector<16x16xf32>
    %57 = arith.addf %55, %56 : vector<16x16xf32>
    %58 = arith.mulf %57, %47 : vector<16x16xf32>
    %cst_36 = arith.constant 0.254829586 : f32
    %59 = vector.broadcast %cst_36 : f32 to vector<16x16xf32>
    %60 = arith.addf %58, %59 : vector<16x16xf32>
    %61 = arith.mulf %60, %47 : vector<16x16xf32>
    %cst_37 = arith.constant 0.000000e+00 : f32
    %62 = vector.broadcast %cst_37 : f32 to vector<16x16xf32>
    %63 = arith.subf %62, %41 : vector<16x16xf32>
    %64 = arith.mulf %63, %41 : vector<16x16xf32>
    %65 = math.exp %64 : vector<16x16xf32>
    %66 = arith.mulf %61, %65 : vector<16x16xf32>
    %cst_38 = arith.constant 1.000000e+00 : f32
    %67 = vector.broadcast %cst_38 : f32 to vector<16x16xf32>
    %68 = arith.subf %67, %66 : vector<16x16xf32>
    %69 = arith.mulf %40, %68 : vector<16x16xf32>
    %cst_39 = arith.constant 1.000000e+00 : f32
    %70 = vector.broadcast %cst_39 : f32 to vector<16x16xf32>
    %71 = arith.addf %70, %69 : vector<16x16xf32>
    %72 = arith.mulf %33, %71 : vector<16x16xf32>
    %cst_40 = arith.constant dense<0.000000e+00> : vector<16xf32>
    %73 = vector.multi_reduction <add>, %5, %cst_40 [0] : vector<16x16xf32> to vector<16xf32>
    %74 = vector.shape_cast %73 : vector<16xf32> to vector<1x16xf32>
    %cst_41 = arith.constant 1.600000e+01 : f32
    %75 = vector.broadcast %cst_41 : f32 to vector<1x16xf32>
    %76 = arith.divf %74, %75 : vector<1x16xf32>
    %77 = vector.broadcast %76 : vector<1x16xf32> to vector<16x16xf32>
    %78 = arith.subf %5, %77 : vector<16x16xf32>
    %79 = arith.mulf %78, %78 : vector<16x16xf32>
    %cst_42 = arith.constant dense<0.000000e+00> : vector<16xf32>
    %80 = vector.multi_reduction <add>, %79, %cst_42 [0] : vector<16x16xf32> to vector<16xf32>
    %81 = vector.shape_cast %80 : vector<16xf32> to vector<1x16xf32>
    %cst_43 = arith.constant 1.600000e+01 : f32
    %82 = vector.broadcast %cst_43 : f32 to vector<1x16xf32>
    %83 = arith.divf %81, %82 : vector<1x16xf32>
    %cst_44 = arith.constant 9.99999974E-6 : f32
    %84 = vector.broadcast %cst_44 : f32 to vector<1x16xf32>
    %85 = arith.addf %83, %84 : vector<1x16xf32>
    %86 = math.rsqrt %85 : vector<1x16xf32>
    %87 = vector.broadcast %86 : vector<1x16xf32> to vector<16x16xf32>
    %88 = arith.mulf %78, %87 : vector<16x16xf32>
    %c0_45 = arith.constant 0 : index
    %c0_46 = arith.constant 0 : index
    %89 = vector.load %arg2[%c0_45, %c0_46] : memref<16x1xf32, #tpu.memory_space<vmem>>, vector<16x1xf32>
    %90 = vector.broadcast %89 : vector<16x1xf32> to vector<16x16xf32>
    %91 = arith.mulf %88, %90 : vector<16x16xf32>
    %c0_47 = arith.constant 0 : index
    %c0_48 = arith.constant 0 : index
    %92 = vector.load %arg3[%c0_47, %c0_48] : memref<16x1xf32, #tpu.memory_space<vmem>>, vector<16x1xf32>
    %93 = vector.broadcast %92 : vector<16x1xf32> to vector<16x16xf32>
    %94 = arith.addf %91, %93 : vector<16x16xf32>
    %cst_49 = arith.constant 5.000000e-01 : f32
    %95 = vector.broadcast %cst_49 : f32 to vector<16x16xf32>
    %96 = arith.mulf %95, %94 : vector<16x16xf32>
    %cst_50 = arith.constant 0.707106769 : f32
    %97 = vector.broadcast %cst_50 : f32 to vector<16x16xf32>
    %98 = arith.mulf %94, %97 : vector<16x16xf32>
    %cst_51 = arith.constant 0.000000e+00 : f32
    %99 = vector.broadcast %cst_51 : f32 to vector<16x16xf32>
    %100 = arith.cmpf oge, %98, %99 : vector<16x16xf32>
    %cst_52 = arith.constant 1.000000e+00 : f32
    %cst_53 = arith.constant -1.000000e+00 : f32
    %101 = vector.broadcast %cst_52 : f32 to vector<16x16xf32>
    %102 = vector.broadcast %cst_53 : f32 to vector<16x16xf32>
    %103 = arith.select %100, %101, %102 : vector<16x16xi1>, vector<16x16xf32>
    %104 = math.absf %98 : vector<16x16xf32>
    %cst_54 = arith.constant 0.327591091 : f32
    %105 = vector.broadcast %cst_54 : f32 to vector<16x16xf32>
    %106 = arith.mulf %105, %104 : vector<16x16xf32>
    %cst_55 = arith.constant 1.000000e+00 : f32
    %107 = vector.broadcast %cst_55 : f32 to vector<16x16xf32>
    %108 = arith.addf %107, %106 : vector<16x16xf32>
    %cst_56 = arith.constant 1.000000e+00 : f32
    %109 = vector.broadcast %cst_56 : f32 to vector<16x16xf32>
    %110 = arith.divf %109, %108 : vector<16x16xf32>
    %cst_57 = arith.constant 1.06140542 : f32
    %111 = vector.broadcast %cst_57 : f32 to vector<16x16xf32>
    %112 = arith.mulf %111, %110 : vector<16x16xf32>
    %cst_58 = arith.constant -1.45315206 : f32
    %113 = vector.broadcast %cst_58 : f32 to vector<16x16xf32>
    %114 = arith.addf %112, %113 : vector<16x16xf32>
    %115 = arith.mulf %114, %110 : vector<16x16xf32>
    %cst_59 = arith.constant 1.42141378 : f32
    %116 = vector.broadcast %cst_59 : f32 to vector<16x16xf32>
    %117 = arith.addf %115, %116 : vector<16x16xf32>
    %118 = arith.mulf %117, %110 : vector<16x16xf32>
    %cst_60 = arith.constant -0.284496725 : f32
    %119 = vector.broadcast %cst_60 : f32 to vector<16x16xf32>
    %120 = arith.addf %118, %119 : vector<16x16xf32>
    %121 = arith.mulf %120, %110 : vector<16x16xf32>
    %cst_61 = arith.constant 0.254829586 : f32
    %122 = vector.broadcast %cst_61 : f32 to vector<16x16xf32>
    %123 = arith.addf %121, %122 : vector<16x16xf32>
    %124 = arith.mulf %123, %110 : vector<16x16xf32>
    %cst_62 = arith.constant 0.000000e+00 : f32
    %125 = vector.broadcast %cst_62 : f32 to vector<16x16xf32>
    %126 = arith.subf %125, %104 : vector<16x16xf32>
    %127 = arith.mulf %126, %104 : vector<16x16xf32>
    %128 = math.exp %127 : vector<16x16xf32>
    %129 = arith.mulf %124, %128 : vector<16x16xf32>
    %cst_63 = arith.constant 1.000000e+00 : f32
    %130 = vector.broadcast %cst_63 : f32 to vector<16x16xf32>
    %131 = arith.subf %130, %129 : vector<16x16xf32>
    %132 = arith.mulf %103, %131 : vector<16x16xf32>
    %cst_64 = arith.constant 1.000000e+00 : f32
    %133 = vector.broadcast %cst_64 : f32 to vector<16x16xf32>
    %134 = arith.addf %133, %132 : vector<16x16xf32>
    %135 = arith.mulf %96, %134 : vector<16x16xf32>
    %cst_65 = arith.constant dense<0.000000e+00> : vector<16xf32>
    %136 = vector.multi_reduction <add>, %7, %cst_65 [0] : vector<16x16xf32> to vector<16xf32>
    %137 = vector.shape_cast %136 : vector<16xf32> to vector<1x16xf32>
    %cst_66 = arith.constant 1.600000e+01 : f32
    %138 = vector.broadcast %cst_66 : f32 to vector<1x16xf32>
    %139 = arith.divf %137, %138 : vector<1x16xf32>
    %140 = vector.broadcast %139 : vector<1x16xf32> to vector<16x16xf32>
    %141 = arith.subf %7, %140 : vector<16x16xf32>
    %142 = arith.mulf %141, %141 : vector<16x16xf32>
    %cst_67 = arith.constant dense<0.000000e+00> : vector<16xf32>
    %143 = vector.multi_reduction <add>, %142, %cst_67 [0] : vector<16x16xf32> to vector<16xf32>
    %144 = vector.shape_cast %143 : vector<16xf32> to vector<1x16xf32>
    %cst_68 = arith.constant 1.600000e+01 : f32
    %145 = vector.broadcast %cst_68 : f32 to vector<1x16xf32>
    %146 = arith.divf %144, %145 : vector<1x16xf32>
    %cst_69 = arith.constant 9.99999974E-6 : f32
    %147 = vector.broadcast %cst_69 : f32 to vector<1x16xf32>
    %148 = arith.addf %146, %147 : vector<1x16xf32>
    %149 = math.rsqrt %148 : vector<1x16xf32>
    %150 = vector.broadcast %149 : vector<1x16xf32> to vector<16x16xf32>
    %151 = arith.mulf %141, %150 : vector<16x16xf32>
    %c0_70 = arith.constant 0 : index
    %c0_71 = arith.constant 0 : index
    %152 = vector.load %arg2[%c0_70, %c0_71] : memref<16x1xf32, #tpu.memory_space<vmem>>, vector<16x1xf32>
    %153 = vector.broadcast %152 : vector<16x1xf32> to vector<16x16xf32>
    %154 = arith.mulf %151, %153 : vector<16x16xf32>
    %c0_72 = arith.constant 0 : index
    %c0_73 = arith.constant 0 : index
    %155 = vector.load %arg3[%c0_72, %c0_73] : memref<16x1xf32, #tpu.memory_space<vmem>>, vector<16x1xf32>
    %156 = vector.broadcast %155 : vector<16x1xf32> to vector<16x16xf32>
    %157 = arith.addf %154, %156 : vector<16x16xf32>
    %cst_74 = arith.constant 5.000000e-01 : f32
    %158 = vector.broadcast %cst_74 : f32 to vector<16x16xf32>
    %159 = arith.mulf %158, %157 : vector<16x16xf32>
    %cst_75 = arith.constant 0.707106769 : f32
    %160 = vector.broadcast %cst_75 : f32 to vector<16x16xf32>
    %161 = arith.mulf %157, %160 : vector<16x16xf32>
    %cst_76 = arith.constant 0.000000e+00 : f32
    %162 = vector.broadcast %cst_76 : f32 to vector<16x16xf32>
    %163 = arith.cmpf oge, %161, %162 : vector<16x16xf32>
    %cst_77 = arith.constant 1.000000e+00 : f32
    %cst_78 = arith.constant -1.000000e+00 : f32
    %164 = vector.broadcast %cst_77 : f32 to vector<16x16xf32>
    %165 = vector.broadcast %cst_78 : f32 to vector<16x16xf32>
    %166 = arith.select %163, %164, %165 : vector<16x16xi1>, vector<16x16xf32>
    %167 = math.absf %161 : vector<16x16xf32>
    %cst_79 = arith.constant 0.327591091 : f32
    %168 = vector.broadcast %cst_79 : f32 to vector<16x16xf32>
    %169 = arith.mulf %168, %167 : vector<16x16xf32>
    %cst_80 = arith.constant 1.000000e+00 : f32
    %170 = vector.broadcast %cst_80 : f32 to vector<16x16xf32>
    %171 = arith.addf %170, %169 : vector<16x16xf32>
    %cst_81 = arith.constant 1.000000e+00 : f32
    %172 = vector.broadcast %cst_81 : f32 to vector<16x16xf32>
    %173 = arith.divf %172, %171 : vector<16x16xf32>
    %cst_82 = arith.constant 1.06140542 : f32
    %174 = vector.broadcast %cst_82 : f32 to vector<16x16xf32>
    %175 = arith.mulf %174, %173 : vector<16x16xf32>
    %cst_83 = arith.constant -1.45315206 : f32
    %176 = vector.broadcast %cst_83 : f32 to vector<16x16xf32>
    %177 = arith.addf %175, %176 : vector<16x16xf32>
    %178 = arith.mulf %177, %173 : vector<16x16xf32>
    %cst_84 = arith.constant 1.42141378 : f32
    %179 = vector.broadcast %cst_84 : f32 to vector<16x16xf32>
    %180 = arith.addf %178, %179 : vector<16x16xf32>
    %181 = arith.mulf %180, %173 : vector<16x16xf32>
    %cst_85 = arith.constant -0.284496725 : f32
    %182 = vector.broadcast %cst_85 : f32 to vector<16x16xf32>
    %183 = arith.addf %181, %182 : vector<16x16xf32>
    %184 = arith.mulf %183, %173 : vector<16x16xf32>
    %cst_86 = arith.constant 0.254829586 : f32
    %185 = vector.broadcast %cst_86 : f32 to vector<16x16xf32>
    %186 = arith.addf %184, %185 : vector<16x16xf32>
    %187 = arith.mulf %186, %173 : vector<16x16xf32>
    %cst_87 = arith.constant 0.000000e+00 : f32
    %188 = vector.broadcast %cst_87 : f32 to vector<16x16xf32>
    %189 = arith.subf %188, %167 : vector<16x16xf32>
    %190 = arith.mulf %189, %167 : vector<16x16xf32>
    %191 = math.exp %190 : vector<16x16xf32>
    %192 = arith.mulf %187, %191 : vector<16x16xf32>
    %cst_88 = arith.constant 1.000000e+00 : f32
    %193 = vector.broadcast %cst_88 : f32 to vector<16x16xf32>
    %194 = arith.subf %193, %192 : vector<16x16xf32>
    %195 = arith.mulf %166, %194 : vector<16x16xf32>
    %cst_89 = arith.constant 1.000000e+00 : f32
    %196 = vector.broadcast %cst_89 : f32 to vector<16x16xf32>
    %197 = arith.addf %196, %195 : vector<16x16xf32>
    %198 = arith.mulf %159, %197 : vector<16x16xf32>
    %cst_90 = arith.constant dense<0.000000e+00> : vector<16xf32>
    %199 = vector.multi_reduction <add>, %9, %cst_90 [0] : vector<16x16xf32> to vector<16xf32>
    %200 = vector.shape_cast %199 : vector<16xf32> to vector<1x16xf32>
    %cst_91 = arith.constant 1.600000e+01 : f32
    %201 = vector.broadcast %cst_91 : f32 to vector<1x16xf32>
    %202 = arith.divf %200, %201 : vector<1x16xf32>
    %203 = vector.broadcast %202 : vector<1x16xf32> to vector<16x16xf32>
    %204 = arith.subf %9, %203 : vector<16x16xf32>
    %205 = arith.mulf %204, %204 : vector<16x16xf32>
    %cst_92 = arith.constant dense<0.000000e+00> : vector<16xf32>
    %206 = vector.multi_reduction <add>, %205, %cst_92 [0] : vector<16x16xf32> to vector<16xf32>
    %207 = vector.shape_cast %206 : vector<16xf32> to vector<1x16xf32>
    %cst_93 = arith.constant 1.600000e+01 : f32
    %208 = vector.broadcast %cst_93 : f32 to vector<1x16xf32>
    %209 = arith.divf %207, %208 : vector<1x16xf32>
    %cst_94 = arith.constant 9.99999974E-6 : f32
    %210 = vector.broadcast %cst_94 : f32 to vector<1x16xf32>
    %211 = arith.addf %209, %210 : vector<1x16xf32>
    %212 = math.rsqrt %211 : vector<1x16xf32>
    %213 = vector.broadcast %212 : vector<1x16xf32> to vector<16x16xf32>
    %214 = arith.mulf %204, %213 : vector<16x16xf32>
    %c0_95 = arith.constant 0 : index
    %c0_96 = arith.constant 0 : index
    %215 = vector.load %arg2[%c0_95, %c0_96] : memref<16x1xf32, #tpu.memory_space<vmem>>, vector<16x1xf32>
    %216 = vector.broadcast %215 : vector<16x1xf32> to vector<16x16xf32>
    %217 = arith.mulf %214, %216 : vector<16x16xf32>
    %c0_97 = arith.constant 0 : index
    %c0_98 = arith.constant 0 : index
    %218 = vector.load %arg3[%c0_97, %c0_98] : memref<16x1xf32, #tpu.memory_space<vmem>>, vector<16x1xf32>
    %219 = vector.broadcast %218 : vector<16x1xf32> to vector<16x16xf32>
    %220 = arith.addf %217, %219 : vector<16x16xf32>
    %cst_99 = arith.constant 5.000000e-01 : f32
    %221 = vector.broadcast %cst_99 : f32 to vector<16x16xf32>
    %222 = arith.mulf %221, %220 : vector<16x16xf32>
    %cst_100 = arith.constant 0.707106769 : f32
    %223 = vector.broadcast %cst_100 : f32 to vector<16x16xf32>
    %224 = arith.mulf %220, %223 : vector<16x16xf32>
    %cst_101 = arith.constant 0.000000e+00 : f32
    %225 = vector.broadcast %cst_101 : f32 to vector<16x16xf32>
    %226 = arith.cmpf oge, %224, %225 : vector<16x16xf32>
    %cst_102 = arith.constant 1.000000e+00 : f32
    %cst_103 = arith.constant -1.000000e+00 : f32
    %227 = vector.broadcast %cst_102 : f32 to vector<16x16xf32>
    %228 = vector.broadcast %cst_103 : f32 to vector<16x16xf32>
    %229 = arith.select %226, %227, %228 : vector<16x16xi1>, vector<16x16xf32>
    %230 = math.absf %224 : vector<16x16xf32>
    %cst_104 = arith.constant 0.327591091 : f32
    %231 = vector.broadcast %cst_104 : f32 to vector<16x16xf32>
    %232 = arith.mulf %231, %230 : vector<16x16xf32>
    %cst_105 = arith.constant 1.000000e+00 : f32
    %233 = vector.broadcast %cst_105 : f32 to vector<16x16xf32>
    %234 = arith.addf %233, %232 : vector<16x16xf32>
    %cst_106 = arith.constant 1.000000e+00 : f32
    %235 = vector.broadcast %cst_106 : f32 to vector<16x16xf32>
    %236 = arith.divf %235, %234 : vector<16x16xf32>
    %cst_107 = arith.constant 1.06140542 : f32
    %237 = vector.broadcast %cst_107 : f32 to vector<16x16xf32>
    %238 = arith.mulf %237, %236 : vector<16x16xf32>
    %cst_108 = arith.constant -1.45315206 : f32
    %239 = vector.broadcast %cst_108 : f32 to vector<16x16xf32>
    %240 = arith.addf %238, %239 : vector<16x16xf32>
    %241 = arith.mulf %240, %236 : vector<16x16xf32>
    %cst_109 = arith.constant 1.42141378 : f32
    %242 = vector.broadcast %cst_109 : f32 to vector<16x16xf32>
    %243 = arith.addf %241, %242 : vector<16x16xf32>
    %244 = arith.mulf %243, %236 : vector<16x16xf32>
    %cst_110 = arith.constant -0.284496725 : f32
    %245 = vector.broadcast %cst_110 : f32 to vector<16x16xf32>
    %246 = arith.addf %244, %245 : vector<16x16xf32>
    %247 = arith.mulf %246, %236 : vector<16x16xf32>
    %cst_111 = arith.constant 0.254829586 : f32
    %248 = vector.broadcast %cst_111 : f32 to vector<16x16xf32>
    %249 = arith.addf %247, %248 : vector<16x16xf32>
    %250 = arith.mulf %249, %236 : vector<16x16xf32>
    %cst_112 = arith.constant 0.000000e+00 : f32
    %251 = vector.broadcast %cst_112 : f32 to vector<16x16xf32>
    %252 = arith.subf %251, %230 : vector<16x16xf32>
    %253 = arith.mulf %252, %230 : vector<16x16xf32>
    %254 = math.exp %253 : vector<16x16xf32>
    %255 = arith.mulf %250, %254 : vector<16x16xf32>
    %cst_113 = arith.constant 1.000000e+00 : f32
    %256 = vector.broadcast %cst_113 : f32 to vector<16x16xf32>
    %257 = arith.subf %256, %255 : vector<16x16xf32>
    %258 = arith.mulf %229, %257 : vector<16x16xf32>
    %cst_114 = arith.constant 1.000000e+00 : f32
    %259 = vector.broadcast %cst_114 : f32 to vector<16x16xf32>
    %260 = arith.addf %259, %258 : vector<16x16xf32>
    %261 = arith.mulf %222, %260 : vector<16x16xf32>
    %c0_115 = arith.constant 0 : index
    %c1_116 = arith.constant 1 : index
    %c1_117 = arith.constant 1 : index
    %262 = vector.load %arg11[%c0_115, %c1_116, %c1_117] : memref<4x18x18xf32, #tpu.memory_space<vmem>>, vector<1x16x16xf32>
    %263 = vector.shape_cast %262 : vector<1x16x16xf32> to vector<16x16xf32>
    %264 = vector.shape_cast %72 : vector<16x16xf32> to vector<1x16x16xf32>
    tpu.vector_store %arg11[%c0_115, %c1_116, %c1_117], %264 {strides = array<i32>} : memref<4x18x18xf32, #tpu.memory_space<vmem>>, vector<1x16x16xf32>,
    %c1_118 = arith.constant 1 : index
    %c1_119 = arith.constant 1 : index
    %c1_120 = arith.constant 1 : index
    %265 = vector.load %arg11[%c1_118, %c1_119, %c1_120] : memref<4x18x18xf32, #tpu.memory_space<vmem>>, vector<1x16x16xf32>
    %266 = vector.shape_cast %265 : vector<1x16x16xf32> to vector<16x16xf32>
    %267 = vector.shape_cast %135 : vector<16x16xf32> to vector<1x16x16xf32>
    tpu.vector_store %arg11[%c1_118, %c1_119, %c1_120], %267 {strides = array<i32>} : memref<4x18x18xf32, #tpu.memory_space<vmem>>, vector<1x16x16xf32>,
    %c2_121 = arith.constant 2 : index
    %c1_122 = arith.constant 1 : index
    %c1_123 = arith.constant 1 : index
    %268 = vector.load %arg11[%c2_121, %c1_122, %c1_123] : memref<4x18x18xf32, #tpu.memory_space<vmem>>, vector<1x16x16xf32>
    %269 = vector.shape_cast %268 : vector<1x16x16xf32> to vector<16x16xf32>
    %270 = vector.shape_cast %198 : vector<16x16xf32> to vector<1x16x16xf32>
    tpu.vector_store %arg11[%c2_121, %c1_122, %c1_123], %270 {strides = array<i32>} : memref<4x18x18xf32, #tpu.memory_space<vmem>>, vector<1x16x16xf32>,
    %c3_124 = arith.constant 3 : index
    %c1_125 = arith.constant 1 : index
    %c1_126 = arith.constant 1 : index
    %271 = vector.load %arg11[%c3_124, %c1_125, %c1_126] : memref<4x18x18xf32, #tpu.memory_space<vmem>>, vector<1x16x16xf32>
    %272 = vector.shape_cast %271 : vector<1x16x16xf32> to vector<16x16xf32>
    %273 = vector.shape_cast %261 : vector<16x16xf32> to vector<1x16x16xf32>
    tpu.vector_store %arg11[%c3_124, %c1_125, %c1_126], %273 {strides = array<i32>} : memref<4x18x18xf32, #tpu.memory_space<vmem>>, vector<1x16x16xf32>,
    %cst_127 = arith.constant 0.000000e+00 : f32
    %274 = vector.broadcast %cst_127 : f32 to vector<16x16xf32>
    %cst_128 = arith.constant 0.000000e+00 : f32
    %275 = vector.broadcast %cst_128 : f32 to vector<16x16xf32>
    %cst_129 = arith.constant 0.000000e+00 : f32
    %276 = vector.broadcast %cst_129 : f32 to vector<16x16xf32>
    %cst_130 = arith.constant 0.000000e+00 : f32
    %277 = vector.broadcast %cst_130 : f32 to vector<16x16xf32>
    %c0_131 = arith.constant 0 : index
    %c0_132 = arith.constant 0 : index
    %c0_133 = arith.constant 0 : index
    %278 = vector.load %arg11[%c0_131, %c0_132, %c0_133] : memref<4x18x18xf32, #tpu.memory_space<vmem>>, vector<4x16x16xf32>
    %279 = vector.extract_strided_slice %278 {offsets = [0, 0, 0], sizes = [1, 16, 16], strides = [1, 1, 1]} : vector<4x16x16xf32> to vector<1x16x16xf32>
    %280 = vector.shape_cast %279 : vector<1x16x16xf32> to vector<16x16xf32>
    %c0_134 = arith.constant 0 : index
    %281 = memref.load %arg6[%c0_134] : memref<144xf32, #tpu.memory_space<smem>>
    %282 = vector.broadcast %281 : f32 to vector<16x16xf32>
    %283 = arith.mulf %280, %282 : vector<16x16xf32>
    %284 = arith.addf %274, %283 : vector<16x16xf32>
    %c36 = arith.constant 36 : index
    %285 = memref.load %arg6[%c36] : memref<144xf32, #tpu.memory_space<smem>>
    %286 = vector.broadcast %285 : f32 to vector<16x16xf32>
    %287 = arith.mulf %280, %286 : vector<16x16xf32>
    %288 = arith.addf %275, %287 : vector<16x16xf32>
    %c72 = arith.constant 72 : index
    %289 = memref.load %arg6[%c72] : memref<144xf32, #tpu.memory_space<smem>>
    %290 = vector.broadcast %289 : f32 to vector<16x16xf32>
    %291 = arith.mulf %280, %290 : vector<16x16xf32>
    %292 = arith.addf %276, %291 : vector<16x16xf32>
    %c108 = arith.constant 108 : index
    %293 = memref.load %arg6[%c108] : memref<144xf32, #tpu.memory_space<smem>>
    %294 = vector.broadcast %293 : f32 to vector<16x16xf32>
    %295 = arith.mulf %280, %294 : vector<16x16xf32>
    %296 = arith.addf %277, %295 : vector<16x16xf32>
    %297 = vector.extract_strided_slice %278 {offsets = [1, 0, 0], sizes = [1, 16, 16], strides = [1, 1, 1]} : vector<4x16x16xf32> to vector<1x16x16xf32>
    %298 = vector.shape_cast %297 : vector<1x16x16xf32> to vector<16x16xf32>
    %c9 = arith.constant 9 : index
    %299 = memref.load %arg6[%c9] : memref<144xf32, #tpu.memory_space<smem>>
    %300 = vector.broadcast %299 : f32 to vector<16x16xf32>
    %301 = arith.mulf %298, %300 : vector<16x16xf32>
    %302 = arith.addf %284, %301 : vector<16x16xf32>
    %c45 = arith.constant 45 : index
    %303 = memref.load %arg6[%c45] : memref<144xf32, #tpu.memory_space<smem>>
    %304 = vector.broadcast %303 : f32 to vector<16x16xf32>
    %305 = arith.mulf %298, %304 : vector<16x16xf32>
    %306 = arith.addf %288, %305 : vector<16x16xf32>
    %c81 = arith.constant 81 : index
    %307 = memref.load %arg6[%c81] : memref<144xf32, #tpu.memory_space<smem>>
    %308 = vector.broadcast %307 : f32 to vector<16x16xf32>
    %309 = arith.mulf %298, %308 : vector<16x16xf32>
    %310 = arith.addf %292, %309 : vector<16x16xf32>
    %c117 = arith.constant 117 : index
    %311 = memref.load %arg6[%c117] : memref<144xf32, #tpu.memory_space<smem>>
    %312 = vector.broadcast %311 : f32 to vector<16x16xf32>
    %313 = arith.mulf %298, %312 : vector<16x16xf32>
    %314 = arith.addf %296, %313 : vector<16x16xf32>
    %315 = vector.extract_strided_slice %278 {offsets = [2, 0, 0], sizes = [1, 16, 16], strides = [1, 1, 1]} : vector<4x16x16xf32> to vector<1x16x16xf32>
    %316 = vector.shape_cast %315 : vector<1x16x16xf32> to vector<16x16xf32>
    %c18 = arith.constant 18 : index
    %317 = memref.load %arg6[%c18] : memref<144xf32, #tpu.memory_space<smem>>
    %318 = vector.broadcast %317 : f32 to vector<16x16xf32>
    %319 = arith.mulf %316, %318 : vector<16x16xf32>
    %320 = arith.addf %302, %319 : vector<16x16xf32>
    %c54 = arith.constant 54 : index
    %321 = memref.load %arg6[%c54] : memref<144xf32, #tpu.memory_space<smem>>
    %322 = vector.broadcast %321 : f32 to vector<16x16xf32>
    %323 = arith.mulf %316, %322 : vector<16x16xf32>
    %324 = arith.addf %306, %323 : vector<16x16xf32>
    %c90 = arith.constant 90 : index
    %325 = memref.load %arg6[%c90] : memref<144xf32, #tpu.memory_space<smem>>
    %326 = vector.broadcast %325 : f32 to vector<16x16xf32>
    %327 = arith.mulf %316, %326 : vector<16x16xf32>
    %328 = arith.addf %310, %327 : vector<16x16xf32>
    %c126 = arith.constant 126 : index
    %329 = memref.load %arg6[%c126] : memref<144xf32, #tpu.memory_space<smem>>
    %330 = vector.broadcast %329 : f32 to vector<16x16xf32>
    %331 = arith.mulf %316, %330 : vector<16x16xf32>
    %332 = arith.addf %314, %331 : vector<16x16xf32>
    %333 = vector.extract_strided_slice %278 {offsets = [3, 0, 0], sizes = [1, 16, 16], strides = [1, 1, 1]} : vector<4x16x16xf32> to vector<1x16x16xf32>
    %334 = vector.shape_cast %333 : vector<1x16x16xf32> to vector<16x16xf32>
    %c27 = arith.constant 27 : index
    %335 = memref.load %arg6[%c27] : memref<144xf32, #tpu.memory_space<smem>>
    %336 = vector.broadcast %335 : f32 to vector<16x16xf32>
    %337 = arith.mulf %334, %336 : vector<16x16xf32>
    %338 = arith.addf %320, %337 : vector<16x16xf32>
    %c63 = arith.constant 63 : index
    %339 = memref.load %arg6[%c63] : memref<144xf32, #tpu.memory_space<smem>>
    %340 = vector.broadcast %339 : f32 to vector<16x16xf32>
    %341 = arith.mulf %334, %340 : vector<16x16xf32>
    %342 = arith.addf %324, %341 : vector<16x16xf32>
    %c99 = arith.constant 99 : index
    %343 = memref.load %arg6[%c99] : memref<144xf32, #tpu.memory_space<smem>>
    %344 = vector.broadcast %343 : f32 to vector<16x16xf32>
    %345 = arith.mulf %334, %344 : vector<16x16xf32>
    %346 = arith.addf %328, %345 : vector<16x16xf32>
    %c135 = arith.constant 135 : index
    %347 = memref.load %arg6[%c135] : memref<144xf32, #tpu.memory_space<smem>>
    %348 = vector.broadcast %347 : f32 to vector<16x16xf32>
    %349 = arith.mulf %334, %348 : vector<16x16xf32>
    %350 = arith.addf %332, %349 : vector<16x16xf32>
    %c0_135 = arith.constant 0 : index
    %c0_136 = arith.constant 0 : index
    %c1_137 = arith.constant 1 : index
    %351 = vector.load %arg11[%c0_135, %c0_136, %c1_137] : memref<4x18x18xf32, #tpu.memory_space<vmem>>, vector<4x16x16xf32>
    %352 = vector.extract_strided_slice %351 {offsets = [0, 0, 0], sizes = [1, 16, 16], strides = [1, 1, 1]} : vector<4x16x16xf32> to vector<1x16x16xf32>
    %353 = vector.shape_cast %352 : vector<1x16x16xf32> to vector<16x16xf32>
    %c1_138 = arith.constant 1 : index
    %354 = memref.load %arg6[%c1_138] : memref<144xf32, #tpu.memory_space<smem>>
    %355 = vector.broadcast %354 : f32 to vector<16x16xf32>
    %356 = arith.mulf %353, %355 : vector<16x16xf32>
    %357 = arith.addf %338, %356 : vector<16x16xf32>
    %c37 = arith.constant 37 : index
    %358 = memref.load %arg6[%c37] : memref<144xf32, #tpu.memory_space<smem>>
    %359 = vector.broadcast %358 : f32 to vector<16x16xf32>
    %360 = arith.mulf %353, %359 : vector<16x16xf32>
    %361 = arith.addf %342, %360 : vector<16x16xf32>
    %c73 = arith.constant 73 : index
    %362 = memref.load %arg6[%c73] : memref<144xf32, #tpu.memory_space<smem>>
    %363 = vector.broadcast %362 : f32 to vector<16x16xf32>
    %364 = arith.mulf %353, %363 : vector<16x16xf32>
    %365 = arith.addf %346, %364 : vector<16x16xf32>
    %c109 = arith.constant 109 : index
    %366 = memref.load %arg6[%c109] : memref<144xf32, #tpu.memory_space<smem>>
    %367 = vector.broadcast %366 : f32 to vector<16x16xf32>
    %368 = arith.mulf %353, %367 : vector<16x16xf32>
    %369 = arith.addf %350, %368 : vector<16x16xf32>
    %370 = vector.extract_strided_slice %351 {offsets = [1, 0, 0], sizes = [1, 16, 16], strides = [1, 1, 1]} : vector<4x16x16xf32> to vector<1x16x16xf32>
    %371 = vector.shape_cast %370 : vector<1x16x16xf32> to vector<16x16xf32>
    %c10 = arith.constant 10 : index
    %372 = memref.load %arg6[%c10] : memref<144xf32, #tpu.memory_space<smem>>
    %373 = vector.broadcast %372 : f32 to vector<16x16xf32>
    %374 = arith.mulf %371, %373 : vector<16x16xf32>
    %375 = arith.addf %357, %374 : vector<16x16xf32>
    %c46 = arith.constant 46 : index
    %376 = memref.load %arg6[%c46] : memref<144xf32, #tpu.memory_space<smem>>
    %377 = vector.broadcast %376 : f32 to vector<16x16xf32>
    %378 = arith.mulf %371, %377 : vector<16x16xf32>
    %379 = arith.addf %361, %378 : vector<16x16xf32>
    %c82 = arith.constant 82 : index
    %380 = memref.load %arg6[%c82] : memref<144xf32, #tpu.memory_space<smem>>
    %381 = vector.broadcast %380 : f32 to vector<16x16xf32>
    %382 = arith.mulf %371, %381 : vector<16x16xf32>
    %383 = arith.addf %365, %382 : vector<16x16xf32>
    %c118 = arith.constant 118 : index
    %384 = memref.load %arg6[%c118] : memref<144xf32, #tpu.memory_space<smem>>
    %385 = vector.broadcast %384 : f32 to vector<16x16xf32>
    %386 = arith.mulf %371, %385 : vector<16x16xf32>
    %387 = arith.addf %369, %386 : vector<16x16xf32>
    %388 = vector.extract_strided_slice %351 {offsets = [2, 0, 0], sizes = [1, 16, 16], strides = [1, 1, 1]} : vector<4x16x16xf32> to vector<1x16x16xf32>
    %389 = vector.shape_cast %388 : vector<1x16x16xf32> to vector<16x16xf32>
    %c19 = arith.constant 19 : index
    %390 = memref.load %arg6[%c19] : memref<144xf32, #tpu.memory_space<smem>>
    %391 = vector.broadcast %390 : f32 to vector<16x16xf32>
    %392 = arith.mulf %389, %391 : vector<16x16xf32>
    %393 = arith.addf %375, %392 : vector<16x16xf32>
    %c55 = arith.constant 55 : index
    %394 = memref.load %arg6[%c55] : memref<144xf32, #tpu.memory_space<smem>>
    %395 = vector.broadcast %394 : f32 to vector<16x16xf32>
    %396 = arith.mulf %389, %395 : vector<16x16xf32>
    %397 = arith.addf %379, %396 : vector<16x16xf32>
    %c91 = arith.constant 91 : index
    %398 = memref.load %arg6[%c91] : memref<144xf32, #tpu.memory_space<smem>>
    %399 = vector.broadcast %398 : f32 to vector<16x16xf32>
    %400 = arith.mulf %389, %399 : vector<16x16xf32>
    %401 = arith.addf %383, %400 : vector<16x16xf32>
    %c127 = arith.constant 127 : index
    %402 = memref.load %arg6[%c127] : memref<144xf32, #tpu.memory_space<smem>>
    %403 = vector.broadcast %402 : f32 to vector<16x16xf32>
    %404 = arith.mulf %389, %403 : vector<16x16xf32>
    %405 = arith.addf %387, %404 : vector<16x16xf32>
    %406 = vector.extract_strided_slice %351 {offsets = [3, 0, 0], sizes = [1, 16, 16], strides = [1, 1, 1]} : vector<4x16x16xf32> to vector<1x16x16xf32>
    %407 = vector.shape_cast %406 : vector<1x16x16xf32> to vector<16x16xf32>
    %c28 = arith.constant 28 : index
    %408 = memref.load %arg6[%c28] : memref<144xf32, #tpu.memory_space<smem>>
    %409 = vector.broadcast %408 : f32 to vector<16x16xf32>
    %410 = arith.mulf %407, %409 : vector<16x16xf32>
    %411 = arith.addf %393, %410 : vector<16x16xf32>
    %c64 = arith.constant 64 : index
    %412 = memref.load %arg6[%c64] : memref<144xf32, #tpu.memory_space<smem>>
    %413 = vector.broadcast %412 : f32 to vector<16x16xf32>
    %414 = arith.mulf %407, %413 : vector<16x16xf32>
    %415 = arith.addf %397, %414 : vector<16x16xf32>
    %c100 = arith.constant 100 : index
    %416 = memref.load %arg6[%c100] : memref<144xf32, #tpu.memory_space<smem>>
    %417 = vector.broadcast %416 : f32 to vector<16x16xf32>
    %418 = arith.mulf %407, %417 : vector<16x16xf32>
    %419 = arith.addf %401, %418 : vector<16x16xf32>
    %c136 = arith.constant 136 : index
    %420 = memref.load %arg6[%c136] : memref<144xf32, #tpu.memory_space<smem>>
    %421 = vector.broadcast %420 : f32 to vector<16x16xf32>
    %422 = arith.mulf %407, %421 : vector<16x16xf32>
    %423 = arith.addf %405, %422 : vector<16x16xf32>
    %c0_139 = arith.constant 0 : index
    %c0_140 = arith.constant 0 : index
    %c2_141 = arith.constant 2 : index
    %424 = vector.load %arg11[%c0_139, %c0_140, %c2_141] : memref<4x18x18xf32, #tpu.memory_space<vmem>>, vector<4x16x16xf32>
    %425 = vector.extract_strided_slice %424 {offsets = [0, 0, 0], sizes = [1, 16, 16], strides = [1, 1, 1]} : vector<4x16x16xf32> to vector<1x16x16xf32>
    %426 = vector.shape_cast %425 : vector<1x16x16xf32> to vector<16x16xf32>
    %c2_142 = arith.constant 2 : index
    %427 = memref.load %arg6[%c2_142] : memref<144xf32, #tpu.memory_space<smem>>
    %428 = vector.broadcast %427 : f32 to vector<16x16xf32>
    %429 = arith.mulf %426, %428 : vector<16x16xf32>
    %430 = arith.addf %411, %429 : vector<16x16xf32>
    %c38 = arith.constant 38 : index
    %431 = memref.load %arg6[%c38] : memref<144xf32, #tpu.memory_space<smem>>
    %432 = vector.broadcast %431 : f32 to vector<16x16xf32>
    %433 = arith.mulf %426, %432 : vector<16x16xf32>
    %434 = arith.addf %415, %433 : vector<16x16xf32>
    %c74 = arith.constant 74 : index
    %435 = memref.load %arg6[%c74] : memref<144xf32, #tpu.memory_space<smem>>
    %436 = vector.broadcast %435 : f32 to vector<16x16xf32>
    %437 = arith.mulf %426, %436 : vector<16x16xf32>
    %438 = arith.addf %419, %437 : vector<16x16xf32>
    %c110 = arith.constant 110 : index
    %439 = memref.load %arg6[%c110] : memref<144xf32, #tpu.memory_space<smem>>
    %440 = vector.broadcast %439 : f32 to vector<16x16xf32>
    %441 = arith.mulf %426, %440 : vector<16x16xf32>
    %442 = arith.addf %423, %441 : vector<16x16xf32>
    %443 = vector.extract_strided_slice %424 {offsets = [1, 0, 0], sizes = [1, 16, 16], strides = [1, 1, 1]} : vector<4x16x16xf32> to vector<1x16x16xf32>
    %444 = vector.shape_cast %443 : vector<1x16x16xf32> to vector<16x16xf32>
    %c11 = arith.constant 11 : index
    %445 = memref.load %arg6[%c11] : memref<144xf32, #tpu.memory_space<smem>>
    %446 = vector.broadcast %445 : f32 to vector<16x16xf32>
    %447 = arith.mulf %444, %446 : vector<16x16xf32>
    %448 = arith.addf %430, %447 : vector<16x16xf32>
    %c47 = arith.constant 47 : index
    %449 = memref.load %arg6[%c47] : memref<144xf32, #tpu.memory_space<smem>>
    %450 = vector.broadcast %449 : f32 to vector<16x16xf32>
    %451 = arith.mulf %444, %450 : vector<16x16xf32>
    %452 = arith.addf %434, %451 : vector<16x16xf32>
    %c83 = arith.constant 83 : index
    %453 = memref.load %arg6[%c83] : memref<144xf32, #tpu.memory_space<smem>>
    %454 = vector.broadcast %453 : f32 to vector<16x16xf32>
    %455 = arith.mulf %444, %454 : vector<16x16xf32>
    %456 = arith.addf %438, %455 : vector<16x16xf32>
    %c119 = arith.constant 119 : index
    %457 = memref.load %arg6[%c119] : memref<144xf32, #tpu.memory_space<smem>>
    %458 = vector.broadcast %457 : f32 to vector<16x16xf32>
    %459 = arith.mulf %444, %458 : vector<16x16xf32>
    %460 = arith.addf %442, %459 : vector<16x16xf32>
    %461 = vector.extract_strided_slice %424 {offsets = [2, 0, 0], sizes = [1, 16, 16], strides = [1, 1, 1]} : vector<4x16x16xf32> to vector<1x16x16xf32>
    %462 = vector.shape_cast %461 : vector<1x16x16xf32> to vector<16x16xf32>
    %c20 = arith.constant 20 : index
    %463 = memref.load %arg6[%c20] : memref<144xf32, #tpu.memory_space<smem>>
    %464 = vector.broadcast %463 : f32 to vector<16x16xf32>
    %465 = arith.mulf %462, %464 : vector<16x16xf32>
    %466 = arith.addf %448, %465 : vector<16x16xf32>
    %c56 = arith.constant 56 : index
    %467 = memref.load %arg6[%c56] : memref<144xf32, #tpu.memory_space<smem>>
    %468 = vector.broadcast %467 : f32 to vector<16x16xf32>
    %469 = arith.mulf %462, %468 : vector<16x16xf32>
    %470 = arith.addf %452, %469 : vector<16x16xf32>
    %c92 = arith.constant 92 : index
    %471 = memref.load %arg6[%c92] : memref<144xf32, #tpu.memory_space<smem>>
    %472 = vector.broadcast %471 : f32 to vector<16x16xf32>
    %473 = arith.mulf %462, %472 : vector<16x16xf32>
    %474 = arith.addf %456, %473 : vector<16x16xf32>
    %c128 = arith.constant 128 : index
    %475 = memref.load %arg6[%c128] : memref<144xf32, #tpu.memory_space<smem>>
    %476 = vector.broadcast %475 : f32 to vector<16x16xf32>
    %477 = arith.mulf %462, %476 : vector<16x16xf32>
    %478 = arith.addf %460, %477 : vector<16x16xf32>
    %479 = vector.extract_strided_slice %424 {offsets = [3, 0, 0], sizes = [1, 16, 16], strides = [1, 1, 1]} : vector<4x16x16xf32> to vector<1x16x16xf32>
    %480 = vector.shape_cast %479 : vector<1x16x16xf32> to vector<16x16xf32>
    %c29 = arith.constant 29 : index
    %481 = memref.load %arg6[%c29] : memref<144xf32, #tpu.memory_space<smem>>
    %482 = vector.broadcast %481 : f32 to vector<16x16xf32>
    %483 = arith.mulf %480, %482 : vector<16x16xf32>
    %484 = arith.addf %466, %483 : vector<16x16xf32>
    %c65 = arith.constant 65 : index
    %485 = memref.load %arg6[%c65] : memref<144xf32, #tpu.memory_space<smem>>
    %486 = vector.broadcast %485 : f32 to vector<16x16xf32>
    %487 = arith.mulf %480, %486 : vector<16x16xf32>
    %488 = arith.addf %470, %487 : vector<16x16xf32>
    %c101 = arith.constant 101 : index
    %489 = memref.load %arg6[%c101] : memref<144xf32, #tpu.memory_space<smem>>
    %490 = vector.broadcast %489 : f32 to vector<16x16xf32>
    %491 = arith.mulf %480, %490 : vector<16x16xf32>
    %492 = arith.addf %474, %491 : vector<16x16xf32>
    %c137 = arith.constant 137 : index
    %493 = memref.load %arg6[%c137] : memref<144xf32, #tpu.memory_space<smem>>
    %494 = vector.broadcast %493 : f32 to vector<16x16xf32>
    %495 = arith.mulf %480, %494 : vector<16x16xf32>
    %496 = arith.addf %478, %495 : vector<16x16xf32>
    %c0_143 = arith.constant 0 : index
    %c1_144 = arith.constant 1 : index
    %c0_145 = arith.constant 0 : index
    %497 = vector.load %arg11[%c0_143, %c1_144, %c0_145] : memref<4x18x18xf32, #tpu.memory_space<vmem>>, vector<4x16x16xf32>
    %498 = vector.extract_strided_slice %497 {offsets = [0, 0, 0], sizes = [1, 16, 16], strides = [1, 1, 1]} : vector<4x16x16xf32> to vector<1x16x16xf32>
    %499 = vector.shape_cast %498 : vector<1x16x16xf32> to vector<16x16xf32>
    %c3_146 = arith.constant 3 : index
    %500 = memref.load %arg6[%c3_146] : memref<144xf32, #tpu.memory_space<smem>>
    %501 = vector.broadcast %500 : f32 to vector<16x16xf32>
    %502 = arith.mulf %499, %501 : vector<16x16xf32>
    %503 = arith.addf %484, %502 : vector<16x16xf32>
    %c39 = arith.constant 39 : index
    %504 = memref.load %arg6[%c39] : memref<144xf32, #tpu.memory_space<smem>>
    %505 = vector.broadcast %504 : f32 to vector<16x16xf32>
    %506 = arith.mulf %499, %505 : vector<16x16xf32>
    %507 = arith.addf %488, %506 : vector<16x16xf32>
    %c75 = arith.constant 75 : index
    %508 = memref.load %arg6[%c75] : memref<144xf32, #tpu.memory_space<smem>>
    %509 = vector.broadcast %508 : f32 to vector<16x16xf32>
    %510 = arith.mulf %499, %509 : vector<16x16xf32>
    %511 = arith.addf %492, %510 : vector<16x16xf32>
    %c111 = arith.constant 111 : index
    %512 = memref.load %arg6[%c111] : memref<144xf32, #tpu.memory_space<smem>>
    %513 = vector.broadcast %512 : f32 to vector<16x16xf32>
    %514 = arith.mulf %499, %513 : vector<16x16xf32>
    %515 = arith.addf %496, %514 : vector<16x16xf32>
    %516 = vector.extract_strided_slice %497 {offsets = [1, 0, 0], sizes = [1, 16, 16], strides = [1, 1, 1]} : vector<4x16x16xf32> to vector<1x16x16xf32>
    %517 = vector.shape_cast %516 : vector<1x16x16xf32> to vector<16x16xf32>
    %c12 = arith.constant 12 : index
    %518 = memref.load %arg6[%c12] : memref<144xf32, #tpu.memory_space<smem>>
    %519 = vector.broadcast %518 : f32 to vector<16x16xf32>
    %520 = arith.mulf %517, %519 : vector<16x16xf32>
    %521 = arith.addf %503, %520 : vector<16x16xf32>
    %c48 = arith.constant 48 : index
    %522 = memref.load %arg6[%c48] : memref<144xf32, #tpu.memory_space<smem>>
    %523 = vector.broadcast %522 : f32 to vector<16x16xf32>
    %524 = arith.mulf %517, %523 : vector<16x16xf32>
    %525 = arith.addf %507, %524 : vector<16x16xf32>
    %c84 = arith.constant 84 : index
    %526 = memref.load %arg6[%c84] : memref<144xf32, #tpu.memory_space<smem>>
    %527 = vector.broadcast %526 : f32 to vector<16x16xf32>
    %528 = arith.mulf %517, %527 : vector<16x16xf32>
    %529 = arith.addf %511, %528 : vector<16x16xf32>
    %c120 = arith.constant 120 : index
    %530 = memref.load %arg6[%c120] : memref<144xf32, #tpu.memory_space<smem>>
    %531 = vector.broadcast %530 : f32 to vector<16x16xf32>
    %532 = arith.mulf %517, %531 : vector<16x16xf32>
    %533 = arith.addf %515, %532 : vector<16x16xf32>
    %534 = vector.extract_strided_slice %497 {offsets = [2, 0, 0], sizes = [1, 16, 16], strides = [1, 1, 1]} : vector<4x16x16xf32> to vector<1x16x16xf32>
    %535 = vector.shape_cast %534 : vector<1x16x16xf32> to vector<16x16xf32>
    %c21 = arith.constant 21 : index
    %536 = memref.load %arg6[%c21] : memref<144xf32, #tpu.memory_space<smem>>
    %537 = vector.broadcast %536 : f32 to vector<16x16xf32>
    %538 = arith.mulf %535, %537 : vector<16x16xf32>
    %539 = arith.addf %521, %538 : vector<16x16xf32>
    %c57 = arith.constant 57 : index
    %540 = memref.load %arg6[%c57] : memref<144xf32, #tpu.memory_space<smem>>
    %541 = vector.broadcast %540 : f32 to vector<16x16xf32>
    %542 = arith.mulf %535, %541 : vector<16x16xf32>
    %543 = arith.addf %525, %542 : vector<16x16xf32>
    %c93 = arith.constant 93 : index
    %544 = memref.load %arg6[%c93] : memref<144xf32, #tpu.memory_space<smem>>
    %545 = vector.broadcast %544 : f32 to vector<16x16xf32>
    %546 = arith.mulf %535, %545 : vector<16x16xf32>
    %547 = arith.addf %529, %546 : vector<16x16xf32>
    %c129 = arith.constant 129 : index
    %548 = memref.load %arg6[%c129] : memref<144xf32, #tpu.memory_space<smem>>
    %549 = vector.broadcast %548 : f32 to vector<16x16xf32>
    %550 = arith.mulf %535, %549 : vector<16x16xf32>
    %551 = arith.addf %533, %550 : vector<16x16xf32>
    %552 = vector.extract_strided_slice %497 {offsets = [3, 0, 0], sizes = [1, 16, 16], strides = [1, 1, 1]} : vector<4x16x16xf32> to vector<1x16x16xf32>
    %553 = vector.shape_cast %552 : vector<1x16x16xf32> to vector<16x16xf32>
    %c30 = arith.constant 30 : index
    %554 = memref.load %arg6[%c30] : memref<144xf32, #tpu.memory_space<smem>>
    %555 = vector.broadcast %554 : f32 to vector<16x16xf32>
    %556 = arith.mulf %553, %555 : vector<16x16xf32>
    %557 = arith.addf %539, %556 : vector<16x16xf32>
    %c66 = arith.constant 66 : index
    %558 = memref.load %arg6[%c66] : memref<144xf32, #tpu.memory_space<smem>>
    %559 = vector.broadcast %558 : f32 to vector<16x16xf32>
    %560 = arith.mulf %553, %559 : vector<16x16xf32>
    %561 = arith.addf %543, %560 : vector<16x16xf32>
    %c102 = arith.constant 102 : index
    %562 = memref.load %arg6[%c102] : memref<144xf32, #tpu.memory_space<smem>>
    %563 = vector.broadcast %562 : f32 to vector<16x16xf32>
    %564 = arith.mulf %553, %563 : vector<16x16xf32>
    %565 = arith.addf %547, %564 : vector<16x16xf32>
    %c138 = arith.constant 138 : index
    %566 = memref.load %arg6[%c138] : memref<144xf32, #tpu.memory_space<smem>>
    %567 = vector.broadcast %566 : f32 to vector<16x16xf32>
    %568 = arith.mulf %553, %567 : vector<16x16xf32>
    %569 = arith.addf %551, %568 : vector<16x16xf32>
    %c0_147 = arith.constant 0 : index
    %c1_148 = arith.constant 1 : index
    %c1_149 = arith.constant 1 : index
    %570 = vector.load %arg11[%c0_147, %c1_148, %c1_149] : memref<4x18x18xf32, #tpu.memory_space<vmem>>, vector<4x16x16xf32>
    %571 = vector.extract_strided_slice %570 {offsets = [0, 0, 0], sizes = [1, 16, 16], strides = [1, 1, 1]} : vector<4x16x16xf32> to vector<1x16x16xf32>
    %572 = vector.shape_cast %571 : vector<1x16x16xf32> to vector<16x16xf32>
    %c4 = arith.constant 4 : index
    %573 = memref.load %arg6[%c4] : memref<144xf32, #tpu.memory_space<smem>>
    %574 = vector.broadcast %573 : f32 to vector<16x16xf32>
    %575 = arith.mulf %572, %574 : vector<16x16xf32>
    %576 = arith.addf %557, %575 : vector<16x16xf32>
    %c40 = arith.constant 40 : index
    %577 = memref.load %arg6[%c40] : memref<144xf32, #tpu.memory_space<smem>>
    %578 = vector.broadcast %577 : f32 to vector<16x16xf32>
    %579 = arith.mulf %572, %578 : vector<16x16xf32>
    %580 = arith.addf %561, %579 : vector<16x16xf32>
    %c76 = arith.constant 76 : index
    %581 = memref.load %arg6[%c76] : memref<144xf32, #tpu.memory_space<smem>>
    %582 = vector.broadcast %581 : f32 to vector<16x16xf32>
    %583 = arith.mulf %572, %582 : vector<16x16xf32>
    %584 = arith.addf %565, %583 : vector<16x16xf32>
    %c112 = arith.constant 112 : index
    %585 = memref.load %arg6[%c112] : memref<144xf32, #tpu.memory_space<smem>>
    %586 = vector.broadcast %585 : f32 to vector<16x16xf32>
    %587 = arith.mulf %572, %586 : vector<16x16xf32>
    %588 = arith.addf %569, %587 : vector<16x16xf32>
    %589 = vector.extract_strided_slice %570 {offsets = [1, 0, 0], sizes = [1, 16, 16], strides = [1, 1, 1]} : vector<4x16x16xf32> to vector<1x16x16xf32>
    %590 = vector.shape_cast %589 : vector<1x16x16xf32> to vector<16x16xf32>
    %c13 = arith.constant 13 : index
    %591 = memref.load %arg6[%c13] : memref<144xf32, #tpu.memory_space<smem>>
    %592 = vector.broadcast %591 : f32 to vector<16x16xf32>
    %593 = arith.mulf %590, %592 : vector<16x16xf32>
    %594 = arith.addf %576, %593 : vector<16x16xf32>
    %c49 = arith.constant 49 : index
    %595 = memref.load %arg6[%c49] : memref<144xf32, #tpu.memory_space<smem>>
    %596 = vector.broadcast %595 : f32 to vector<16x16xf32>
    %597 = arith.mulf %590, %596 : vector<16x16xf32>
    %598 = arith.addf %580, %597 : vector<16x16xf32>
    %c85 = arith.constant 85 : index
    %599 = memref.load %arg6[%c85] : memref<144xf32, #tpu.memory_space<smem>>
    %600 = vector.broadcast %599 : f32 to vector<16x16xf32>
    %601 = arith.mulf %590, %600 : vector<16x16xf32>
    %602 = arith.addf %584, %601 : vector<16x16xf32>
    %c121 = arith.constant 121 : index
    %603 = memref.load %arg6[%c121] : memref<144xf32, #tpu.memory_space<smem>>
    %604 = vector.broadcast %603 : f32 to vector<16x16xf32>
    %605 = arith.mulf %590, %604 : vector<16x16xf32>
    %606 = arith.addf %588, %605 : vector<16x16xf32>
    %607 = vector.extract_strided_slice %570 {offsets = [2, 0, 0], sizes = [1, 16, 16], strides = [1, 1, 1]} : vector<4x16x16xf32> to vector<1x16x16xf32>
    %608 = vector.shape_cast %607 : vector<1x16x16xf32> to vector<16x16xf32>
    %c22 = arith.constant 22 : index
    %609 = memref.load %arg6[%c22] : memref<144xf32, #tpu.memory_space<smem>>
    %610 = vector.broadcast %609 : f32 to vector<16x16xf32>
    %611 = arith.mulf %608, %610 : vector<16x16xf32>
    %612 = arith.addf %594, %611 : vector<16x16xf32>
    %c58 = arith.constant 58 : index
    %613 = memref.load %arg6[%c58] : memref<144xf32, #tpu.memory_space<smem>>
    %614 = vector.broadcast %613 : f32 to vector<16x16xf32>
    %615 = arith.mulf %608, %614 : vector<16x16xf32>
    %616 = arith.addf %598, %615 : vector<16x16xf32>
    %c94 = arith.constant 94 : index
    %617 = memref.load %arg6[%c94] : memref<144xf32, #tpu.memory_space<smem>>
    %618 = vector.broadcast %617 : f32 to vector<16x16xf32>
    %619 = arith.mulf %608, %618 : vector<16x16xf32>
    %620 = arith.addf %602, %619 : vector<16x16xf32>
    %c130 = arith.constant 130 : index
    %621 = memref.load %arg6[%c130] : memref<144xf32, #tpu.memory_space<smem>>
    %622 = vector.broadcast %621 : f32 to vector<16x16xf32>
    %623 = arith.mulf %608, %622 : vector<16x16xf32>
    %624 = arith.addf %606, %623 : vector<16x16xf32>
    %625 = vector.extract_strided_slice %570 {offsets = [3, 0, 0], sizes = [1, 16, 16], strides = [1, 1, 1]} : vector<4x16x16xf32> to vector<1x16x16xf32>
    %626 = vector.shape_cast %625 : vector<1x16x16xf32> to vector<16x16xf32>
    %c31 = arith.constant 31 : index
    %627 = memref.load %arg6[%c31] : memref<144xf32, #tpu.memory_space<smem>>
    %628 = vector.broadcast %627 : f32 to vector<16x16xf32>
    %629 = arith.mulf %626, %628 : vector<16x16xf32>
    %630 = arith.addf %612, %629 : vector<16x16xf32>
    %c67 = arith.constant 67 : index
    %631 = memref.load %arg6[%c67] : memref<144xf32, #tpu.memory_space<smem>>
    %632 = vector.broadcast %631 : f32 to vector<16x16xf32>
    %633 = arith.mulf %626, %632 : vector<16x16xf32>
    %634 = arith.addf %616, %633 : vector<16x16xf32>
    %c103 = arith.constant 103 : index
    %635 = memref.load %arg6[%c103] : memref<144xf32, #tpu.memory_space<smem>>
    %636 = vector.broadcast %635 : f32 to vector<16x16xf32>
    %637 = arith.mulf %626, %636 : vector<16x16xf32>
    %638 = arith.addf %620, %637 : vector<16x16xf32>
    %c139 = arith.constant 139 : index
    %639 = memref.load %arg6[%c139] : memref<144xf32, #tpu.memory_space<smem>>
    %640 = vector.broadcast %639 : f32 to vector<16x16xf32>
    %641 = arith.mulf %626, %640 : vector<16x16xf32>
    %642 = arith.addf %624, %641 : vector<16x16xf32>
    %c0_150 = arith.constant 0 : index
    %c1_151 = arith.constant 1 : index
    %c2_152 = arith.constant 2 : index
    %643 = vector.load %arg11[%c0_150, %c1_151, %c2_152] : memref<4x18x18xf32, #tpu.memory_space<vmem>>, vector<4x16x16xf32>
    %644 = vector.extract_strided_slice %643 {offsets = [0, 0, 0], sizes = [1, 16, 16], strides = [1, 1, 1]} : vector<4x16x16xf32> to vector<1x16x16xf32>
    %645 = vector.shape_cast %644 : vector<1x16x16xf32> to vector<16x16xf32>
    %c5 = arith.constant 5 : index
    %646 = memref.load %arg6[%c5] : memref<144xf32, #tpu.memory_space<smem>>
    %647 = vector.broadcast %646 : f32 to vector<16x16xf32>
    %648 = arith.mulf %645, %647 : vector<16x16xf32>
    %649 = arith.addf %630, %648 : vector<16x16xf32>
    %c41 = arith.constant 41 : index
    %650 = memref.load %arg6[%c41] : memref<144xf32, #tpu.memory_space<smem>>
    %651 = vector.broadcast %650 : f32 to vector<16x16xf32>
    %652 = arith.mulf %645, %651 : vector<16x16xf32>
    %653 = arith.addf %634, %652 : vector<16x16xf32>
    %c77 = arith.constant 77 : index
    %654 = memref.load %arg6[%c77] : memref<144xf32, #tpu.memory_space<smem>>
    %655 = vector.broadcast %654 : f32 to vector<16x16xf32>
    %656 = arith.mulf %645, %655 : vector<16x16xf32>
    %657 = arith.addf %638, %656 : vector<16x16xf32>
    %c113 = arith.constant 113 : index
    %658 = memref.load %arg6[%c113] : memref<144xf32, #tpu.memory_space<smem>>
    %659 = vector.broadcast %658 : f32 to vector<16x16xf32>
    %660 = arith.mulf %645, %659 : vector<16x16xf32>
    %661 = arith.addf %642, %660 : vector<16x16xf32>
    %662 = vector.extract_strided_slice %643 {offsets = [1, 0, 0], sizes = [1, 16, 16], strides = [1, 1, 1]} : vector<4x16x16xf32> to vector<1x16x16xf32>
    %663 = vector.shape_cast %662 : vector<1x16x16xf32> to vector<16x16xf32>
    %c14 = arith.constant 14 : index
    %664 = memref.load %arg6[%c14] : memref<144xf32, #tpu.memory_space<smem>>
    %665 = vector.broadcast %664 : f32 to vector<16x16xf32>
    %666 = arith.mulf %663, %665 : vector<16x16xf32>
    %667 = arith.addf %649, %666 : vector<16x16xf32>
    %c50 = arith.constant 50 : index
    %668 = memref.load %arg6[%c50] : memref<144xf32, #tpu.memory_space<smem>>
    %669 = vector.broadcast %668 : f32 to vector<16x16xf32>
    %670 = arith.mulf %663, %669 : vector<16x16xf32>
    %671 = arith.addf %653, %670 : vector<16x16xf32>
    %c86 = arith.constant 86 : index
    %672 = memref.load %arg6[%c86] : memref<144xf32, #tpu.memory_space<smem>>
    %673 = vector.broadcast %672 : f32 to vector<16x16xf32>
    %674 = arith.mulf %663, %673 : vector<16x16xf32>
    %675 = arith.addf %657, %674 : vector<16x16xf32>
    %c122 = arith.constant 122 : index
    %676 = memref.load %arg6[%c122] : memref<144xf32, #tpu.memory_space<smem>>
    %677 = vector.broadcast %676 : f32 to vector<16x16xf32>
    %678 = arith.mulf %663, %677 : vector<16x16xf32>
    %679 = arith.addf %661, %678 : vector<16x16xf32>
    %680 = vector.extract_strided_slice %643 {offsets = [2, 0, 0], sizes = [1, 16, 16], strides = [1, 1, 1]} : vector<4x16x16xf32> to vector<1x16x16xf32>
    %681 = vector.shape_cast %680 : vector<1x16x16xf32> to vector<16x16xf32>
    %c23 = arith.constant 23 : index
    %682 = memref.load %arg6[%c23] : memref<144xf32, #tpu.memory_space<smem>>
    %683 = vector.broadcast %682 : f32 to vector<16x16xf32>
    %684 = arith.mulf %681, %683 : vector<16x16xf32>
    %685 = arith.addf %667, %684 : vector<16x16xf32>
    %c59 = arith.constant 59 : index
    %686 = memref.load %arg6[%c59] : memref<144xf32, #tpu.memory_space<smem>>
    %687 = vector.broadcast %686 : f32 to vector<16x16xf32>
    %688 = arith.mulf %681, %687 : vector<16x16xf32>
    %689 = arith.addf %671, %688 : vector<16x16xf32>
    %c95 = arith.constant 95 : index
    %690 = memref.load %arg6[%c95] : memref<144xf32, #tpu.memory_space<smem>>
    %691 = vector.broadcast %690 : f32 to vector<16x16xf32>
    %692 = arith.mulf %681, %691 : vector<16x16xf32>
    %693 = arith.addf %675, %692 : vector<16x16xf32>
    %c131 = arith.constant 131 : index
    %694 = memref.load %arg6[%c131] : memref<144xf32, #tpu.memory_space<smem>>
    %695 = vector.broadcast %694 : f32 to vector<16x16xf32>
    %696 = arith.mulf %681, %695 : vector<16x16xf32>
    %697 = arith.addf %679, %696 : vector<16x16xf32>
    %698 = vector.extract_strided_slice %643 {offsets = [3, 0, 0], sizes = [1, 16, 16], strides = [1, 1, 1]} : vector<4x16x16xf32> to vector<1x16x16xf32>
    %699 = vector.shape_cast %698 : vector<1x16x16xf32> to vector<16x16xf32>
    %c32 = arith.constant 32 : index
    %700 = memref.load %arg6[%c32] : memref<144xf32, #tpu.memory_space<smem>>
    %701 = vector.broadcast %700 : f32 to vector<16x16xf32>
    %702 = arith.mulf %699, %701 : vector<16x16xf32>
    %703 = arith.addf %685, %702 : vector<16x16xf32>
    %c68 = arith.constant 68 : index
    %704 = memref.load %arg6[%c68] : memref<144xf32, #tpu.memory_space<smem>>
    %705 = vector.broadcast %704 : f32 to vector<16x16xf32>
    %706 = arith.mulf %699, %705 : vector<16x16xf32>
    %707 = arith.addf %689, %706 : vector<16x16xf32>
    %c104 = arith.constant 104 : index
    %708 = memref.load %arg6[%c104] : memref<144xf32, #tpu.memory_space<smem>>
    %709 = vector.broadcast %708 : f32 to vector<16x16xf32>
    %710 = arith.mulf %699, %709 : vector<16x16xf32>
    %711 = arith.addf %693, %710 : vector<16x16xf32>
    %c140 = arith.constant 140 : index
    %712 = memref.load %arg6[%c140] : memref<144xf32, #tpu.memory_space<smem>>
    %713 = vector.broadcast %712 : f32 to vector<16x16xf32>
    %714 = arith.mulf %699, %713 : vector<16x16xf32>
    %715 = arith.addf %697, %714 : vector<16x16xf32>
    %c0_153 = arith.constant 0 : index
    %c2_154 = arith.constant 2 : index
    %c0_155 = arith.constant 0 : index
    %716 = vector.load %arg11[%c0_153, %c2_154, %c0_155] : memref<4x18x18xf32, #tpu.memory_space<vmem>>, vector<4x16x16xf32>
    %717 = vector.extract_strided_slice %716 {offsets = [0, 0, 0], sizes = [1, 16, 16], strides = [1, 1, 1]} : vector<4x16x16xf32> to vector<1x16x16xf32>
    %718 = vector.shape_cast %717 : vector<1x16x16xf32> to vector<16x16xf32>
    %c6 = arith.constant 6 : index
    %719 = memref.load %arg6[%c6] : memref<144xf32, #tpu.memory_space<smem>>
    %720 = vector.broadcast %719 : f32 to vector<16x16xf32>
    %721 = arith.mulf %718, %720 : vector<16x16xf32>
    %722 = arith.addf %703, %721 : vector<16x16xf32>
    %c42 = arith.constant 42 : index
    %723 = memref.load %arg6[%c42] : memref<144xf32, #tpu.memory_space<smem>>
    %724 = vector.broadcast %723 : f32 to vector<16x16xf32>
    %725 = arith.mulf %718, %724 : vector<16x16xf32>
    %726 = arith.addf %707, %725 : vector<16x16xf32>
    %c78 = arith.constant 78 : index
    %727 = memref.load %arg6[%c78] : memref<144xf32, #tpu.memory_space<smem>>
    %728 = vector.broadcast %727 : f32 to vector<16x16xf32>
    %729 = arith.mulf %718, %728 : vector<16x16xf32>
    %730 = arith.addf %711, %729 : vector<16x16xf32>
    %c114 = arith.constant 114 : index
    %731 = memref.load %arg6[%c114] : memref<144xf32, #tpu.memory_space<smem>>
    %732 = vector.broadcast %731 : f32 to vector<16x16xf32>
    %733 = arith.mulf %718, %732 : vector<16x16xf32>
    %734 = arith.addf %715, %733 : vector<16x16xf32>
    %735 = vector.extract_strided_slice %716 {offsets = [1, 0, 0], sizes = [1, 16, 16], strides = [1, 1, 1]} : vector<4x16x16xf32> to vector<1x16x16xf32>
    %736 = vector.shape_cast %735 : vector<1x16x16xf32> to vector<16x16xf32>
    %c15 = arith.constant 15 : index
    %737 = memref.load %arg6[%c15] : memref<144xf32, #tpu.memory_space<smem>>
    %738 = vector.broadcast %737 : f32 to vector<16x16xf32>
    %739 = arith.mulf %736, %738 : vector<16x16xf32>
    %740 = arith.addf %722, %739 : vector<16x16xf32>
    %c51 = arith.constant 51 : index
    %741 = memref.load %arg6[%c51] : memref<144xf32, #tpu.memory_space<smem>>
    %742 = vector.broadcast %741 : f32 to vector<16x16xf32>
    %743 = arith.mulf %736, %742 : vector<16x16xf32>
    %744 = arith.addf %726, %743 : vector<16x16xf32>
    %c87 = arith.constant 87 : index
    %745 = memref.load %arg6[%c87] : memref<144xf32, #tpu.memory_space<smem>>
    %746 = vector.broadcast %745 : f32 to vector<16x16xf32>
    %747 = arith.mulf %736, %746 : vector<16x16xf32>
    %748 = arith.addf %730, %747 : vector<16x16xf32>
    %c123 = arith.constant 123 : index
    %749 = memref.load %arg6[%c123] : memref<144xf32, #tpu.memory_space<smem>>
    %750 = vector.broadcast %749 : f32 to vector<16x16xf32>
    %751 = arith.mulf %736, %750 : vector<16x16xf32>
    %752 = arith.addf %734, %751 : vector<16x16xf32>
    %753 = vector.extract_strided_slice %716 {offsets = [2, 0, 0], sizes = [1, 16, 16], strides = [1, 1, 1]} : vector<4x16x16xf32> to vector<1x16x16xf32>
    %754 = vector.shape_cast %753 : vector<1x16x16xf32> to vector<16x16xf32>
    %c24 = arith.constant 24 : index
    %755 = memref.load %arg6[%c24] : memref<144xf32, #tpu.memory_space<smem>>
    %756 = vector.broadcast %755 : f32 to vector<16x16xf32>
    %757 = arith.mulf %754, %756 : vector<16x16xf32>
    %758 = arith.addf %740, %757 : vector<16x16xf32>
    %c60 = arith.constant 60 : index
    %759 = memref.load %arg6[%c60] : memref<144xf32, #tpu.memory_space<smem>>
    %760 = vector.broadcast %759 : f32 to vector<16x16xf32>
    %761 = arith.mulf %754, %760 : vector<16x16xf32>
    %762 = arith.addf %744, %761 : vector<16x16xf32>
    %c96 = arith.constant 96 : index
    %763 = memref.load %arg6[%c96] : memref<144xf32, #tpu.memory_space<smem>>
    %764 = vector.broadcast %763 : f32 to vector<16x16xf32>
    %765 = arith.mulf %754, %764 : vector<16x16xf32>
    %766 = arith.addf %748, %765 : vector<16x16xf32>
    %c132 = arith.constant 132 : index
    %767 = memref.load %arg6[%c132] : memref<144xf32, #tpu.memory_space<smem>>
    %768 = vector.broadcast %767 : f32 to vector<16x16xf32>
    %769 = arith.mulf %754, %768 : vector<16x16xf32>
    %770 = arith.addf %752, %769 : vector<16x16xf32>
    %771 = vector.extract_strided_slice %716 {offsets = [3, 0, 0], sizes = [1, 16, 16], strides = [1, 1, 1]} : vector<4x16x16xf32> to vector<1x16x16xf32>
    %772 = vector.shape_cast %771 : vector<1x16x16xf32> to vector<16x16xf32>
    %c33 = arith.constant 33 : index
    %773 = memref.load %arg6[%c33] : memref<144xf32, #tpu.memory_space<smem>>
    %774 = vector.broadcast %773 : f32 to vector<16x16xf32>
    %775 = arith.mulf %772, %774 : vector<16x16xf32>
    %776 = arith.addf %758, %775 : vector<16x16xf32>
    %c69 = arith.constant 69 : index
    %777 = memref.load %arg6[%c69] : memref<144xf32, #tpu.memory_space<smem>>
    %778 = vector.broadcast %777 : f32 to vector<16x16xf32>
    %779 = arith.mulf %772, %778 : vector<16x16xf32>
    %780 = arith.addf %762, %779 : vector<16x16xf32>
    %c105 = arith.constant 105 : index
    %781 = memref.load %arg6[%c105] : memref<144xf32, #tpu.memory_space<smem>>
    %782 = vector.broadcast %781 : f32 to vector<16x16xf32>
    %783 = arith.mulf %772, %782 : vector<16x16xf32>
    %784 = arith.addf %766, %783 : vector<16x16xf32>
    %c141 = arith.constant 141 : index
    %785 = memref.load %arg6[%c141] : memref<144xf32, #tpu.memory_space<smem>>
    %786 = vector.broadcast %785 : f32 to vector<16x16xf32>
    %787 = arith.mulf %772, %786 : vector<16x16xf32>
    %788 = arith.addf %770, %787 : vector<16x16xf32>
    %c0_156 = arith.constant 0 : index
    %c2_157 = arith.constant 2 : index
    %c1_158 = arith.constant 1 : index
    %789 = vector.load %arg11[%c0_156, %c2_157, %c1_158] : memref<4x18x18xf32, #tpu.memory_space<vmem>>, vector<4x16x16xf32>
    %790 = vector.extract_strided_slice %789 {offsets = [0, 0, 0], sizes = [1, 16, 16], strides = [1, 1, 1]} : vector<4x16x16xf32> to vector<1x16x16xf32>
    %791 = vector.shape_cast %790 : vector<1x16x16xf32> to vector<16x16xf32>
    %c7 = arith.constant 7 : index
    %792 = memref.load %arg6[%c7] : memref<144xf32, #tpu.memory_space<smem>>
    %793 = vector.broadcast %792 : f32 to vector<16x16xf32>
    %794 = arith.mulf %791, %793 : vector<16x16xf32>
    %795 = arith.addf %776, %794 : vector<16x16xf32>
    %c43 = arith.constant 43 : index
    %796 = memref.load %arg6[%c43] : memref<144xf32, #tpu.memory_space<smem>>
    %797 = vector.broadcast %796 : f32 to vector<16x16xf32>
    %798 = arith.mulf %791, %797 : vector<16x16xf32>
    %799 = arith.addf %780, %798 : vector<16x16xf32>
    %c79 = arith.constant 79 : index
    %800 = memref.load %arg6[%c79] : memref<144xf32, #tpu.memory_space<smem>>
    %801 = vector.broadcast %800 : f32 to vector<16x16xf32>
    %802 = arith.mulf %791, %801 : vector<16x16xf32>
    %803 = arith.addf %784, %802 : vector<16x16xf32>
    %c115 = arith.constant 115 : index
    %804 = memref.load %arg6[%c115] : memref<144xf32, #tpu.memory_space<smem>>
    %805 = vector.broadcast %804 : f32 to vector<16x16xf32>
    %806 = arith.mulf %791, %805 : vector<16x16xf32>
    %807 = arith.addf %788, %806 : vector<16x16xf32>
    %808 = vector.extract_strided_slice %789 {offsets = [1, 0, 0], sizes = [1, 16, 16], strides = [1, 1, 1]} : vector<4x16x16xf32> to vector<1x16x16xf32>
    %809 = vector.shape_cast %808 : vector<1x16x16xf32> to vector<16x16xf32>
    %c16 = arith.constant 16 : index
    %810 = memref.load %arg6[%c16] : memref<144xf32, #tpu.memory_space<smem>>
    %811 = vector.broadcast %810 : f32 to vector<16x16xf32>
    %812 = arith.mulf %809, %811 : vector<16x16xf32>
    %813 = arith.addf %795, %812 : vector<16x16xf32>
    %c52 = arith.constant 52 : index
    %814 = memref.load %arg6[%c52] : memref<144xf32, #tpu.memory_space<smem>>
    %815 = vector.broadcast %814 : f32 to vector<16x16xf32>
    %816 = arith.mulf %809, %815 : vector<16x16xf32>
    %817 = arith.addf %799, %816 : vector<16x16xf32>
    %c88 = arith.constant 88 : index
    %818 = memref.load %arg6[%c88] : memref<144xf32, #tpu.memory_space<smem>>
    %819 = vector.broadcast %818 : f32 to vector<16x16xf32>
    %820 = arith.mulf %809, %819 : vector<16x16xf32>
    %821 = arith.addf %803, %820 : vector<16x16xf32>
    %c124 = arith.constant 124 : index
    %822 = memref.load %arg6[%c124] : memref<144xf32, #tpu.memory_space<smem>>
    %823 = vector.broadcast %822 : f32 to vector<16x16xf32>
    %824 = arith.mulf %809, %823 : vector<16x16xf32>
    %825 = arith.addf %807, %824 : vector<16x16xf32>
    %826 = vector.extract_strided_slice %789 {offsets = [2, 0, 0], sizes = [1, 16, 16], strides = [1, 1, 1]} : vector<4x16x16xf32> to vector<1x16x16xf32>
    %827 = vector.shape_cast %826 : vector<1x16x16xf32> to vector<16x16xf32>
    %c25 = arith.constant 25 : index
    %828 = memref.load %arg6[%c25] : memref<144xf32, #tpu.memory_space<smem>>
    %829 = vector.broadcast %828 : f32 to vector<16x16xf32>
    %830 = arith.mulf %827, %829 : vector<16x16xf32>
    %831 = arith.addf %813, %830 : vector<16x16xf32>
    %c61 = arith.constant 61 : index
    %832 = memref.load %arg6[%c61] : memref<144xf32, #tpu.memory_space<smem>>
    %833 = vector.broadcast %832 : f32 to vector<16x16xf32>
    %834 = arith.mulf %827, %833 : vector<16x16xf32>
    %835 = arith.addf %817, %834 : vector<16x16xf32>
    %c97 = arith.constant 97 : index
    %836 = memref.load %arg6[%c97] : memref<144xf32, #tpu.memory_space<smem>>
    %837 = vector.broadcast %836 : f32 to vector<16x16xf32>
    %838 = arith.mulf %827, %837 : vector<16x16xf32>
    %839 = arith.addf %821, %838 : vector<16x16xf32>
    %c133 = arith.constant 133 : index
    %840 = memref.load %arg6[%c133] : memref<144xf32, #tpu.memory_space<smem>>
    %841 = vector.broadcast %840 : f32 to vector<16x16xf32>
    %842 = arith.mulf %827, %841 : vector<16x16xf32>
    %843 = arith.addf %825, %842 : vector<16x16xf32>
    %844 = vector.extract_strided_slice %789 {offsets = [3, 0, 0], sizes = [1, 16, 16], strides = [1, 1, 1]} : vector<4x16x16xf32> to vector<1x16x16xf32>
    %845 = vector.shape_cast %844 : vector<1x16x16xf32> to vector<16x16xf32>
    %c34 = arith.constant 34 : index
    %846 = memref.load %arg6[%c34] : memref<144xf32, #tpu.memory_space<smem>>
    %847 = vector.broadcast %846 : f32 to vector<16x16xf32>
    %848 = arith.mulf %845, %847 : vector<16x16xf32>
    %849 = arith.addf %831, %848 : vector<16x16xf32>
    %c70 = arith.constant 70 : index
    %850 = memref.load %arg6[%c70] : memref<144xf32, #tpu.memory_space<smem>>
    %851 = vector.broadcast %850 : f32 to vector<16x16xf32>
    %852 = arith.mulf %845, %851 : vector<16x16xf32>
    %853 = arith.addf %835, %852 : vector<16x16xf32>
    %c106 = arith.constant 106 : index
    %854 = memref.load %arg6[%c106] : memref<144xf32, #tpu.memory_space<smem>>
    %855 = vector.broadcast %854 : f32 to vector<16x16xf32>
    %856 = arith.mulf %845, %855 : vector<16x16xf32>
    %857 = arith.addf %839, %856 : vector<16x16xf32>
    %c142 = arith.constant 142 : index
    %858 = memref.load %arg6[%c142] : memref<144xf32, #tpu.memory_space<smem>>
    %859 = vector.broadcast %858 : f32 to vector<16x16xf32>
    %860 = arith.mulf %845, %859 : vector<16x16xf32>
    %861 = arith.addf %843, %860 : vector<16x16xf32>
    %c0_159 = arith.constant 0 : index
    %c2_160 = arith.constant 2 : index
    %c2_161 = arith.constant 2 : index
    %862 = vector.load %arg11[%c0_159, %c2_160, %c2_161] : memref<4x18x18xf32, #tpu.memory_space<vmem>>, vector<4x16x16xf32>
    %863 = vector.extract_strided_slice %862 {offsets = [0, 0, 0], sizes = [1, 16, 16], strides = [1, 1, 1]} : vector<4x16x16xf32> to vector<1x16x16xf32>
    %864 = vector.shape_cast %863 : vector<1x16x16xf32> to vector<16x16xf32>
    %c8 = arith.constant 8 : index
    %865 = memref.load %arg6[%c8] : memref<144xf32, #tpu.memory_space<smem>>
    %866 = vector.broadcast %865 : f32 to vector<16x16xf32>
    %867 = arith.mulf %864, %866 : vector<16x16xf32>
    %868 = arith.addf %849, %867 : vector<16x16xf32>
    %c44 = arith.constant 44 : index
    %869 = memref.load %arg6[%c44] : memref<144xf32, #tpu.memory_space<smem>>
    %870 = vector.broadcast %869 : f32 to vector<16x16xf32>
    %871 = arith.mulf %864, %870 : vector<16x16xf32>
    %872 = arith.addf %853, %871 : vector<16x16xf32>
    %c80 = arith.constant 80 : index
    %873 = memref.load %arg6[%c80] : memref<144xf32, #tpu.memory_space<smem>>
    %874 = vector.broadcast %873 : f32 to vector<16x16xf32>
    %875 = arith.mulf %864, %874 : vector<16x16xf32>
    %876 = arith.addf %857, %875 : vector<16x16xf32>
    %c116 = arith.constant 116 : index
    %877 = memref.load %arg6[%c116] : memref<144xf32, #tpu.memory_space<smem>>
    %878 = vector.broadcast %877 : f32 to vector<16x16xf32>
    %879 = arith.mulf %864, %878 : vector<16x16xf32>
    %880 = arith.addf %861, %879 : vector<16x16xf32>
    %881 = vector.extract_strided_slice %862 {offsets = [1, 0, 0], sizes = [1, 16, 16], strides = [1, 1, 1]} : vector<4x16x16xf32> to vector<1x16x16xf32>
    %882 = vector.shape_cast %881 : vector<1x16x16xf32> to vector<16x16xf32>
    %c17 = arith.constant 17 : index
    %883 = memref.load %arg6[%c17] : memref<144xf32, #tpu.memory_space<smem>>
    %884 = vector.broadcast %883 : f32 to vector<16x16xf32>
    %885 = arith.mulf %882, %884 : vector<16x16xf32>
    %886 = arith.addf %868, %885 : vector<16x16xf32>
    %c53 = arith.constant 53 : index
    %887 = memref.load %arg6[%c53] : memref<144xf32, #tpu.memory_space<smem>>
    %888 = vector.broadcast %887 : f32 to vector<16x16xf32>
    %889 = arith.mulf %882, %888 : vector<16x16xf32>
    %890 = arith.addf %872, %889 : vector<16x16xf32>
    %c89 = arith.constant 89 : index
    %891 = memref.load %arg6[%c89] : memref<144xf32, #tpu.memory_space<smem>>
    %892 = vector.broadcast %891 : f32 to vector<16x16xf32>
    %893 = arith.mulf %882, %892 : vector<16x16xf32>
    %894 = arith.addf %876, %893 : vector<16x16xf32>
    %c125 = arith.constant 125 : index
    %895 = memref.load %arg6[%c125] : memref<144xf32, #tpu.memory_space<smem>>
    %896 = vector.broadcast %895 : f32 to vector<16x16xf32>
    %897 = arith.mulf %882, %896 : vector<16x16xf32>
    %898 = arith.addf %880, %897 : vector<16x16xf32>
    %899 = vector.extract_strided_slice %862 {offsets = [2, 0, 0], sizes = [1, 16, 16], strides = [1, 1, 1]} : vector<4x16x16xf32> to vector<1x16x16xf32>
    %900 = vector.shape_cast %899 : vector<1x16x16xf32> to vector<16x16xf32>
    %c26 = arith.constant 26 : index
    %901 = memref.load %arg6[%c26] : memref<144xf32, #tpu.memory_space<smem>>
    %902 = vector.broadcast %901 : f32 to vector<16x16xf32>
    %903 = arith.mulf %900, %902 : vector<16x16xf32>
    %904 = arith.addf %886, %903 : vector<16x16xf32>
    %c62 = arith.constant 62 : index
    %905 = memref.load %arg6[%c62] : memref<144xf32, #tpu.memory_space<smem>>
    %906 = vector.broadcast %905 : f32 to vector<16x16xf32>
    %907 = arith.mulf %900, %906 : vector<16x16xf32>
    %908 = arith.addf %890, %907 : vector<16x16xf32>
    %c98 = arith.constant 98 : index
    %909 = memref.load %arg6[%c98] : memref<144xf32, #tpu.memory_space<smem>>
    %910 = vector.broadcast %909 : f32 to vector<16x16xf32>
    %911 = arith.mulf %900, %910 : vector<16x16xf32>
    %912 = arith.addf %894, %911 : vector<16x16xf32>
    %c134 = arith.constant 134 : index
    %913 = memref.load %arg6[%c134] : memref<144xf32, #tpu.memory_space<smem>>
    %914 = vector.broadcast %913 : f32 to vector<16x16xf32>
    %915 = arith.mulf %900, %914 : vector<16x16xf32>
    %916 = arith.addf %898, %915 : vector<16x16xf32>
    %917 = vector.extract_strided_slice %862 {offsets = [3, 0, 0], sizes = [1, 16, 16], strides = [1, 1, 1]} : vector<4x16x16xf32> to vector<1x16x16xf32>
    %918 = vector.shape_cast %917 : vector<1x16x16xf32> to vector<16x16xf32>
    %c35 = arith.constant 35 : index
    %919 = memref.load %arg6[%c35] : memref<144xf32, #tpu.memory_space<smem>>
    %920 = vector.broadcast %919 : f32 to vector<16x16xf32>
    %921 = arith.mulf %918, %920 : vector<16x16xf32>
    %922 = arith.addf %904, %921 : vector<16x16xf32>
    %c71 = arith.constant 71 : index
    %923 = memref.load %arg6[%c71] : memref<144xf32, #tpu.memory_space<smem>>
    %924 = vector.broadcast %923 : f32 to vector<16x16xf32>
    %925 = arith.mulf %918, %924 : vector<16x16xf32>
    %926 = arith.addf %908, %925 : vector<16x16xf32>
    %c107 = arith.constant 107 : index
    %927 = memref.load %arg6[%c107] : memref<144xf32, #tpu.memory_space<smem>>
    %928 = vector.broadcast %927 : f32 to vector<16x16xf32>
    %929 = arith.mulf %918, %928 : vector<16x16xf32>
    %930 = arith.addf %912, %929 : vector<16x16xf32>
    %c143 = arith.constant 143 : index
    %931 = memref.load %arg6[%c143] : memref<144xf32, #tpu.memory_space<smem>>
    %932 = vector.broadcast %931 : f32 to vector<16x16xf32>
    %933 = arith.mulf %918, %932 : vector<16x16xf32>
    %934 = arith.addf %916, %933 : vector<16x16xf32>
    %c0_162 = arith.constant 0 : index
    %935 = memref.load %arg7[%c0_162] : memref<4xf32, #tpu.memory_space<smem>>
    %936 = vector.broadcast %935 : f32 to vector<16x16xf32>
    %937 = arith.addf %922, %936 : vector<16x16xf32>
    %c1_163 = arith.constant 1 : index
    %938 = memref.load %arg7[%c1_163] : memref<4xf32, #tpu.memory_space<smem>>
    %939 = vector.broadcast %938 : f32 to vector<16x16xf32>
    %940 = arith.addf %926, %939 : vector<16x16xf32>
    %c2_164 = arith.constant 2 : index
    %941 = memref.load %arg7[%c2_164] : memref<4xf32, #tpu.memory_space<smem>>
    %942 = vector.broadcast %941 : f32 to vector<16x16xf32>
    %943 = arith.addf %930, %942 : vector<16x16xf32>
    %c3_165 = arith.constant 3 : index
    %944 = memref.load %arg7[%c3_165] : memref<4xf32, #tpu.memory_space<smem>>
    %945 = vector.broadcast %944 : f32 to vector<16x16xf32>
    %946 = arith.addf %934, %945 : vector<16x16xf32>
    %cst_166 = arith.constant dense<0.000000e+00> : vector<16xf32>
    %947 = vector.multi_reduction <add>, %937, %cst_166 [0] : vector<16x16xf32> to vector<16xf32>
    %948 = vector.shape_cast %947 : vector<16xf32> to vector<1x16xf32>
    %cst_167 = arith.constant 1.600000e+01 : f32
    %949 = vector.broadcast %cst_167 : f32 to vector<1x16xf32>
    %950 = arith.divf %948, %949 : vector<1x16xf32>
    %951 = vector.broadcast %950 : vector<1x16xf32> to vector<16x16xf32>
    %952 = arith.subf %937, %951 : vector<16x16xf32>
    %953 = arith.mulf %952, %952 : vector<16x16xf32>
    %cst_168 = arith.constant dense<0.000000e+00> : vector<16xf32>
    %954 = vector.multi_reduction <add>, %953, %cst_168 [0] : vector<16x16xf32> to vector<16xf32>
    %955 = vector.shape_cast %954 : vector<16xf32> to vector<1x16xf32>
    %cst_169 = arith.constant 1.600000e+01 : f32
    %956 = vector.broadcast %cst_169 : f32 to vector<1x16xf32>
    %957 = arith.divf %955, %956 : vector<1x16xf32>
    %cst_170 = arith.constant 9.99999974E-6 : f32
    %958 = vector.broadcast %cst_170 : f32 to vector<1x16xf32>
    %959 = arith.addf %957, %958 : vector<1x16xf32>
    %960 = math.rsqrt %959 : vector<1x16xf32>
    %961 = vector.broadcast %960 : vector<1x16xf32> to vector<16x16xf32>
    %962 = arith.mulf %952, %961 : vector<16x16xf32>
    %c0_171 = arith.constant 0 : index
    %c0_172 = arith.constant 0 : index
    %963 = vector.load %arg4[%c0_171, %c0_172] : memref<16x1xf32, #tpu.memory_space<vmem>>, vector<16x1xf32>
    %964 = vector.broadcast %963 : vector<16x1xf32> to vector<16x16xf32>
    %965 = arith.mulf %962, %964 : vector<16x16xf32>
    %c0_173 = arith.constant 0 : index
    %c0_174 = arith.constant 0 : index
    %966 = vector.load %arg5[%c0_173, %c0_174] : memref<16x1xf32, #tpu.memory_space<vmem>>, vector<16x1xf32>
    %967 = vector.broadcast %966 : vector<16x1xf32> to vector<16x16xf32>
    %968 = arith.addf %965, %967 : vector<16x16xf32>
    %cst_175 = arith.constant 5.000000e-01 : f32
    %969 = vector.broadcast %cst_175 : f32 to vector<16x16xf32>
    %970 = arith.mulf %969, %968 : vector<16x16xf32>
    %cst_176 = arith.constant 0.707106769 : f32
    %971 = vector.broadcast %cst_176 : f32 to vector<16x16xf32>
    %972 = arith.mulf %968, %971 : vector<16x16xf32>
    %cst_177 = arith.constant 0.000000e+00 : f32
    %973 = vector.broadcast %cst_177 : f32 to vector<16x16xf32>
    %974 = arith.cmpf oge, %972, %973 : vector<16x16xf32>
    %cst_178 = arith.constant 1.000000e+00 : f32
    %cst_179 = arith.constant -1.000000e+00 : f32
    %975 = vector.broadcast %cst_178 : f32 to vector<16x16xf32>
    %976 = vector.broadcast %cst_179 : f32 to vector<16x16xf32>
    %977 = arith.select %974, %975, %976 : vector<16x16xi1>, vector<16x16xf32>
    %978 = math.absf %972 : vector<16x16xf32>
    %cst_180 = arith.constant 0.327591091 : f32
    %979 = vector.broadcast %cst_180 : f32 to vector<16x16xf32>
    %980 = arith.mulf %979, %978 : vector<16x16xf32>
    %cst_181 = arith.constant 1.000000e+00 : f32
    %981 = vector.broadcast %cst_181 : f32 to vector<16x16xf32>
    %982 = arith.addf %981, %980 : vector<16x16xf32>
    %cst_182 = arith.constant 1.000000e+00 : f32
    %983 = vector.broadcast %cst_182 : f32 to vector<16x16xf32>
    %984 = arith.divf %983, %982 : vector<16x16xf32>
    %cst_183 = arith.constant 1.06140542 : f32
    %985 = vector.broadcast %cst_183 : f32 to vector<16x16xf32>
    %986 = arith.mulf %985, %984 : vector<16x16xf32>
    %cst_184 = arith.constant -1.45315206 : f32
    %987 = vector.broadcast %cst_184 : f32 to vector<16x16xf32>
    %988 = arith.addf %986, %987 : vector<16x16xf32>
    %989 = arith.mulf %988, %984 : vector<16x16xf32>
    %cst_185 = arith.constant 1.42141378 : f32
    %990 = vector.broadcast %cst_185 : f32 to vector<16x16xf32>
    %991 = arith.addf %989, %990 : vector<16x16xf32>
    %992 = arith.mulf %991, %984 : vector<16x16xf32>
    %cst_186 = arith.constant -0.284496725 : f32
    %993 = vector.broadcast %cst_186 : f32 to vector<16x16xf32>
    %994 = arith.addf %992, %993 : vector<16x16xf32>
    %995 = arith.mulf %994, %984 : vector<16x16xf32>
    %cst_187 = arith.constant 0.254829586 : f32
    %996 = vector.broadcast %cst_187 : f32 to vector<16x16xf32>
    %997 = arith.addf %995, %996 : vector<16x16xf32>
    %998 = arith.mulf %997, %984 : vector<16x16xf32>
    %cst_188 = arith.constant 0.000000e+00 : f32
    %999 = vector.broadcast %cst_188 : f32 to vector<16x16xf32>
    %1000 = arith.subf %999, %978 : vector<16x16xf32>
    %1001 = arith.mulf %1000, %978 : vector<16x16xf32>
    %1002 = math.exp %1001 : vector<16x16xf32>
    %1003 = arith.mulf %998, %1002 : vector<16x16xf32>
    %cst_189 = arith.constant 1.000000e+00 : f32
    %1004 = vector.broadcast %cst_189 : f32 to vector<16x16xf32>
    %1005 = arith.subf %1004, %1003 : vector<16x16xf32>
    %1006 = arith.mulf %977, %1005 : vector<16x16xf32>
    %cst_190 = arith.constant 1.000000e+00 : f32
    %1007 = vector.broadcast %cst_190 : f32 to vector<16x16xf32>
    %1008 = arith.addf %1007, %1006 : vector<16x16xf32>
    %1009 = arith.mulf %970, %1008 : vector<16x16xf32>
    %cst_191 = arith.constant dense<0.000000e+00> : vector<16xf32>
    %1010 = vector.multi_reduction <add>, %940, %cst_191 [0] : vector<16x16xf32> to vector<16xf32>
    %1011 = vector.shape_cast %1010 : vector<16xf32> to vector<1x16xf32>
    %cst_192 = arith.constant 1.600000e+01 : f32
    %1012 = vector.broadcast %cst_192 : f32 to vector<1x16xf32>
    %1013 = arith.divf %1011, %1012 : vector<1x16xf32>
    %1014 = vector.broadcast %1013 : vector<1x16xf32> to vector<16x16xf32>
    %1015 = arith.subf %940, %1014 : vector<16x16xf32>
    %1016 = arith.mulf %1015, %1015 : vector<16x16xf32>
    %cst_193 = arith.constant dense<0.000000e+00> : vector<16xf32>
    %1017 = vector.multi_reduction <add>, %1016, %cst_193 [0] : vector<16x16xf32> to vector<16xf32>
    %1018 = vector.shape_cast %1017 : vector<16xf32> to vector<1x16xf32>
    %cst_194 = arith.constant 1.600000e+01 : f32
    %1019 = vector.broadcast %cst_194 : f32 to vector<1x16xf32>
    %1020 = arith.divf %1018, %1019 : vector<1x16xf32>
    %cst_195 = arith.constant 9.99999974E-6 : f32
    %1021 = vector.broadcast %cst_195 : f32 to vector<1x16xf32>
    %1022 = arith.addf %1020, %1021 : vector<1x16xf32>
    %1023 = math.rsqrt %1022 : vector<1x16xf32>
    %1024 = vector.broadcast %1023 : vector<1x16xf32> to vector<16x16xf32>
    %1025 = arith.mulf %1015, %1024 : vector<16x16xf32>
    %c0_196 = arith.constant 0 : index
    %c0_197 = arith.constant 0 : index
    %1026 = vector.load %arg4[%c0_196, %c0_197] : memref<16x1xf32, #tpu.memory_space<vmem>>, vector<16x1xf32>
    %1027 = vector.broadcast %1026 : vector<16x1xf32> to vector<16x16xf32>
    %1028 = arith.mulf %1025, %1027 : vector<16x16xf32>
    %c0_198 = arith.constant 0 : index
    %c0_199 = arith.constant 0 : index
    %1029 = vector.load %arg5[%c0_198, %c0_199] : memref<16x1xf32, #tpu.memory_space<vmem>>, vector<16x1xf32>
    %1030 = vector.broadcast %1029 : vector<16x1xf32> to vector<16x16xf32>
    %1031 = arith.addf %1028, %1030 : vector<16x16xf32>
    %cst_200 = arith.constant 5.000000e-01 : f32
    %1032 = vector.broadcast %cst_200 : f32 to vector<16x16xf32>
    %1033 = arith.mulf %1032, %1031 : vector<16x16xf32>
    %cst_201 = arith.constant 0.707106769 : f32
    %1034 = vector.broadcast %cst_201 : f32 to vector<16x16xf32>
    %1035 = arith.mulf %1031, %1034 : vector<16x16xf32>
    %cst_202 = arith.constant 0.000000e+00 : f32
    %1036 = vector.broadcast %cst_202 : f32 to vector<16x16xf32>
    %1037 = arith.cmpf oge, %1035, %1036 : vector<16x16xf32>
    %cst_203 = arith.constant 1.000000e+00 : f32
    %cst_204 = arith.constant -1.000000e+00 : f32
    %1038 = vector.broadcast %cst_203 : f32 to vector<16x16xf32>
    %1039 = vector.broadcast %cst_204 : f32 to vector<16x16xf32>
    %1040 = arith.select %1037, %1038, %1039 : vector<16x16xi1>, vector<16x16xf32>
    %1041 = math.absf %1035 : vector<16x16xf32>
    %cst_205 = arith.constant 0.327591091 : f32
    %1042 = vector.broadcast %cst_205 : f32 to vector<16x16xf32>
    %1043 = arith.mulf %1042, %1041 : vector<16x16xf32>
    %cst_206 = arith.constant 1.000000e+00 : f32
    %1044 = vector.broadcast %cst_206 : f32 to vector<16x16xf32>
    %1045 = arith.addf %1044, %1043 : vector<16x16xf32>
    %cst_207 = arith.constant 1.000000e+00 : f32
    %1046 = vector.broadcast %cst_207 : f32 to vector<16x16xf32>
    %1047 = arith.divf %1046, %1045 : vector<16x16xf32>
    %cst_208 = arith.constant 1.06140542 : f32
    %1048 = vector.broadcast %cst_208 : f32 to vector<16x16xf32>
    %1049 = arith.mulf %1048, %1047 : vector<16x16xf32>
    %cst_209 = arith.constant -1.45315206 : f32
    %1050 = vector.broadcast %cst_209 : f32 to vector<16x16xf32>
    %1051 = arith.addf %1049, %1050 : vector<16x16xf32>
    %1052 = arith.mulf %1051, %1047 : vector<16x16xf32>
    %cst_210 = arith.constant 1.42141378 : f32
    %1053 = vector.broadcast %cst_210 : f32 to vector<16x16xf32>
    %1054 = arith.addf %1052, %1053 : vector<16x16xf32>
    %1055 = arith.mulf %1054, %1047 : vector<16x16xf32>
    %cst_211 = arith.constant -0.284496725 : f32
    %1056 = vector.broadcast %cst_211 : f32 to vector<16x16xf32>
    %1057 = arith.addf %1055, %1056 : vector<16x16xf32>
    %1058 = arith.mulf %1057, %1047 : vector<16x16xf32>
    %cst_212 = arith.constant 0.254829586 : f32
    %1059 = vector.broadcast %cst_212 : f32 to vector<16x16xf32>
    %1060 = arith.addf %1058, %1059 : vector<16x16xf32>
    %1061 = arith.mulf %1060, %1047 : vector<16x16xf32>
    %cst_213 = arith.constant 0.000000e+00 : f32
    %1062 = vector.broadcast %cst_213 : f32 to vector<16x16xf32>
    %1063 = arith.subf %1062, %1041 : vector<16x16xf32>
    %1064 = arith.mulf %1063, %1041 : vector<16x16xf32>
    %1065 = math.exp %1064 : vector<16x16xf32>
    %1066 = arith.mulf %1061, %1065 : vector<16x16xf32>
    %cst_214 = arith.constant 1.000000e+00 : f32
    %1067 = vector.broadcast %cst_214 : f32 to vector<16x16xf32>
    %1068 = arith.subf %1067, %1066 : vector<16x16xf32>
    %1069 = arith.mulf %1040, %1068 : vector<16x16xf32>
    %cst_215 = arith.constant 1.000000e+00 : f32
    %1070 = vector.broadcast %cst_215 : f32 to vector<16x16xf32>
    %1071 = arith.addf %1070, %1069 : vector<16x16xf32>
    %1072 = arith.mulf %1033, %1071 : vector<16x16xf32>
    %cst_216 = arith.constant dense<0.000000e+00> : vector<16xf32>
    %1073 = vector.multi_reduction <add>, %943, %cst_216 [0] : vector<16x16xf32> to vector<16xf32>
    %1074 = vector.shape_cast %1073 : vector<16xf32> to vector<1x16xf32>
    %cst_217 = arith.constant 1.600000e+01 : f32
    %1075 = vector.broadcast %cst_217 : f32 to vector<1x16xf32>
    %1076 = arith.divf %1074, %1075 : vector<1x16xf32>
    %1077 = vector.broadcast %1076 : vector<1x16xf32> to vector<16x16xf32>
    %1078 = arith.subf %943, %1077 : vector<16x16xf32>
    %1079 = arith.mulf %1078, %1078 : vector<16x16xf32>
    %cst_218 = arith.constant dense<0.000000e+00> : vector<16xf32>
    %1080 = vector.multi_reduction <add>, %1079, %cst_218 [0] : vector<16x16xf32> to vector<16xf32>
    %1081 = vector.shape_cast %1080 : vector<16xf32> to vector<1x16xf32>
    %cst_219 = arith.constant 1.600000e+01 : f32
    %1082 = vector.broadcast %cst_219 : f32 to vector<1x16xf32>
    %1083 = arith.divf %1081, %1082 : vector<1x16xf32>
    %cst_220 = arith.constant 9.99999974E-6 : f32
    %1084 = vector.broadcast %cst_220 : f32 to vector<1x16xf32>
    %1085 = arith.addf %1083, %1084 : vector<1x16xf32>
    %1086 = math.rsqrt %1085 : vector<1x16xf32>
    %1087 = vector.broadcast %1086 : vector<1x16xf32> to vector<16x16xf32>
    %1088 = arith.mulf %1078, %1087 : vector<16x16xf32>
    %c0_221 = arith.constant 0 : index
    %c0_222 = arith.constant 0 : index
    %1089 = vector.load %arg4[%c0_221, %c0_222] : memref<16x1xf32, #tpu.memory_space<vmem>>, vector<16x1xf32>
    %1090 = vector.broadcast %1089 : vector<16x1xf32> to vector<16x16xf32>
    %1091 = arith.mulf %1088, %1090 : vector<16x16xf32>
    %c0_223 = arith.constant 0 : index
    %c0_224 = arith.constant 0 : index
    %1092 = vector.load %arg5[%c0_223, %c0_224] : memref<16x1xf32, #tpu.memory_space<vmem>>, vector<16x1xf32>
    %1093 = vector.broadcast %1092 : vector<16x1xf32> to vector<16x16xf32>
    %1094 = arith.addf %1091, %1093 : vector<16x16xf32>
    %cst_225 = arith.constant 5.000000e-01 : f32
    %1095 = vector.broadcast %cst_225 : f32 to vector<16x16xf32>
    %1096 = arith.mulf %1095, %1094 : vector<16x16xf32>
    %cst_226 = arith.constant 0.707106769 : f32
    %1097 = vector.broadcast %cst_226 : f32 to vector<16x16xf32>
    %1098 = arith.mulf %1094, %1097 : vector<16x16xf32>
    %cst_227 = arith.constant 0.000000e+00 : f32
    %1099 = vector.broadcast %cst_227 : f32 to vector<16x16xf32>
    %1100 = arith.cmpf oge, %1098, %1099 : vector<16x16xf32>
    %cst_228 = arith.constant 1.000000e+00 : f32
    %cst_229 = arith.constant -1.000000e+00 : f32
    %1101 = vector.broadcast %cst_228 : f32 to vector<16x16xf32>
    %1102 = vector.broadcast %cst_229 : f32 to vector<16x16xf32>
    %1103 = arith.select %1100, %1101, %1102 : vector<16x16xi1>, vector<16x16xf32>
    %1104 = math.absf %1098 : vector<16x16xf32>
    %cst_230 = arith.constant 0.327591091 : f32
    %1105 = vector.broadcast %cst_230 : f32 to vector<16x16xf32>
    %1106 = arith.mulf %1105, %1104 : vector<16x16xf32>
    %cst_231 = arith.constant 1.000000e+00 : f32
    %1107 = vector.broadcast %cst_231 : f32 to vector<16x16xf32>
    %1108 = arith.addf %1107, %1106 : vector<16x16xf32>
    %cst_232 = arith.constant 1.000000e+00 : f32
    %1109 = vector.broadcast %cst_232 : f32 to vector<16x16xf32>
    %1110 = arith.divf %1109, %1108 : vector<16x16xf32>
    %cst_233 = arith.constant 1.06140542 : f32
    %1111 = vector.broadcast %cst_233 : f32 to vector<16x16xf32>
    %1112 = arith.mulf %1111, %1110 : vector<16x16xf32>
    %cst_234 = arith.constant -1.45315206 : f32
    %1113 = vector.broadcast %cst_234 : f32 to vector<16x16xf32>
    %1114 = arith.addf %1112, %1113 : vector<16x16xf32>
    %1115 = arith.mulf %1114, %1110 : vector<16x16xf32>
    %cst_235 = arith.constant 1.42141378 : f32
    %1116 = vector.broadcast %cst_235 : f32 to vector<16x16xf32>
    %1117 = arith.addf %1115, %1116 : vector<16x16xf32>
    %1118 = arith.mulf %1117, %1110 : vector<16x16xf32>
    %cst_236 = arith.constant -0.284496725 : f32
    %1119 = vector.broadcast %cst_236 : f32 to vector<16x16xf32>
    %1120 = arith.addf %1118, %1119 : vector<16x16xf32>
    %1121 = arith.mulf %1120, %1110 : vector<16x16xf32>
    %cst_237 = arith.constant 0.254829586 : f32
    %1122 = vector.broadcast %cst_237 : f32 to vector<16x16xf32>
    %1123 = arith.addf %1121, %1122 : vector<16x16xf32>
    %1124 = arith.mulf %1123, %1110 : vector<16x16xf32>
    %cst_238 = arith.constant 0.000000e+00 : f32
    %1125 = vector.broadcast %cst_238 : f32 to vector<16x16xf32>
    %1126 = arith.subf %1125, %1104 : vector<16x16xf32>
    %1127 = arith.mulf %1126, %1104 : vector<16x16xf32>
    %1128 = math.exp %1127 : vector<16x16xf32>
    %1129 = arith.mulf %1124, %1128 : vector<16x16xf32>
    %cst_239 = arith.constant 1.000000e+00 : f32
    %1130 = vector.broadcast %cst_239 : f32 to vector<16x16xf32>
    %1131 = arith.subf %1130, %1129 : vector<16x16xf32>
    %1132 = arith.mulf %1103, %1131 : vector<16x16xf32>
    %cst_240 = arith.constant 1.000000e+00 : f32
    %1133 = vector.broadcast %cst_240 : f32 to vector<16x16xf32>
    %1134 = arith.addf %1133, %1132 : vector<16x16xf32>
    %1135 = arith.mulf %1096, %1134 : vector<16x16xf32>
    %cst_241 = arith.constant dense<0.000000e+00> : vector<16xf32>
    %1136 = vector.multi_reduction <add>, %946, %cst_241 [0] : vector<16x16xf32> to vector<16xf32>
    %1137 = vector.shape_cast %1136 : vector<16xf32> to vector<1x16xf32>
    %cst_242 = arith.constant 1.600000e+01 : f32
    %1138 = vector.broadcast %cst_242 : f32 to vector<1x16xf32>
    %1139 = arith.divf %1137, %1138 : vector<1x16xf32>
    %1140 = vector.broadcast %1139 : vector<1x16xf32> to vector<16x16xf32>
    %1141 = arith.subf %946, %1140 : vector<16x16xf32>
    %1142 = arith.mulf %1141, %1141 : vector<16x16xf32>
    %cst_243 = arith.constant dense<0.000000e+00> : vector<16xf32>
    %1143 = vector.multi_reduction <add>, %1142, %cst_243 [0] : vector<16x16xf32> to vector<16xf32>
    %1144 = vector.shape_cast %1143 : vector<16xf32> to vector<1x16xf32>
    %cst_244 = arith.constant 1.600000e+01 : f32
    %1145 = vector.broadcast %cst_244 : f32 to vector<1x16xf32>
    %1146 = arith.divf %1144, %1145 : vector<1x16xf32>
    %cst_245 = arith.constant 9.99999974E-6 : f32
    %1147 = vector.broadcast %cst_245 : f32 to vector<1x16xf32>
    %1148 = arith.addf %1146, %1147 : vector<1x16xf32>
    %1149 = math.rsqrt %1148 : vector<1x16xf32>
    %1150 = vector.broadcast %1149 : vector<1x16xf32> to vector<16x16xf32>
    %1151 = arith.mulf %1141, %1150 : vector<16x16xf32>
    %c0_246 = arith.constant 0 : index
    %c0_247 = arith.constant 0 : index
    %1152 = vector.load %arg4[%c0_246, %c0_247] : memref<16x1xf32, #tpu.memory_space<vmem>>, vector<16x1xf32>
    %1153 = vector.broadcast %1152 : vector<16x1xf32> to vector<16x16xf32>
    %1154 = arith.mulf %1151, %1153 : vector<16x16xf32>
    %c0_248 = arith.constant 0 : index
    %c0_249 = arith.constant 0 : index
    %1155 = vector.load %arg5[%c0_248, %c0_249] : memref<16x1xf32, #tpu.memory_space<vmem>>, vector<16x1xf32>
    %1156 = vector.broadcast %1155 : vector<16x1xf32> to vector<16x16xf32>
    %1157 = arith.addf %1154, %1156 : vector<16x16xf32>
    %cst_250 = arith.constant 5.000000e-01 : f32
    %1158 = vector.broadcast %cst_250 : f32 to vector<16x16xf32>
    %1159 = arith.mulf %1158, %1157 : vector<16x16xf32>
    %cst_251 = arith.constant 0.707106769 : f32
    %1160 = vector.broadcast %cst_251 : f32 to vector<16x16xf32>
    %1161 = arith.mulf %1157, %1160 : vector<16x16xf32>
    %cst_252 = arith.constant 0.000000e+00 : f32
    %1162 = vector.broadcast %cst_252 : f32 to vector<16x16xf32>
    %1163 = arith.cmpf oge, %1161, %1162 : vector<16x16xf32>
    %cst_253 = arith.constant 1.000000e+00 : f32
    %cst_254 = arith.constant -1.000000e+00 : f32
    %1164 = vector.broadcast %cst_253 : f32 to vector<16x16xf32>
    %1165 = vector.broadcast %cst_254 : f32 to vector<16x16xf32>
    %1166 = arith.select %1163, %1164, %1165 : vector<16x16xi1>, vector<16x16xf32>
    %1167 = math.absf %1161 : vector<16x16xf32>
    %cst_255 = arith.constant 0.327591091 : f32
    %1168 = vector.broadcast %cst_255 : f32 to vector<16x16xf32>
    %1169 = arith.mulf %1168, %1167 : vector<16x16xf32>
    %cst_256 = arith.constant 1.000000e+00 : f32
    %1170 = vector.broadcast %cst_256 : f32 to vector<16x16xf32>
    %1171 = arith.addf %1170, %1169 : vector<16x16xf32>
    %cst_257 = arith.constant 1.000000e+00 : f32
    %1172 = vector.broadcast %cst_257 : f32 to vector<16x16xf32>
    %1173 = arith.divf %1172, %1171 : vector<16x16xf32>
    %cst_258 = arith.constant 1.06140542 : f32
    %1174 = vector.broadcast %cst_258 : f32 to vector<16x16xf32>
    %1175 = arith.mulf %1174, %1173 : vector<16x16xf32>
    %cst_259 = arith.constant -1.45315206 : f32
    %1176 = vector.broadcast %cst_259 : f32 to vector<16x16xf32>
    %1177 = arith.addf %1175, %1176 : vector<16x16xf32>
    %1178 = arith.mulf %1177, %1173 : vector<16x16xf32>
    %cst_260 = arith.constant 1.42141378 : f32
    %1179 = vector.broadcast %cst_260 : f32 to vector<16x16xf32>
    %1180 = arith.addf %1178, %1179 : vector<16x16xf32>
    %1181 = arith.mulf %1180, %1173 : vector<16x16xf32>
    %cst_261 = arith.constant -0.284496725 : f32
    %1182 = vector.broadcast %cst_261 : f32 to vector<16x16xf32>
    %1183 = arith.addf %1181, %1182 : vector<16x16xf32>
    %1184 = arith.mulf %1183, %1173 : vector<16x16xf32>
    %cst_262 = arith.constant 0.254829586 : f32
    %1185 = vector.broadcast %cst_262 : f32 to vector<16x16xf32>
    %1186 = arith.addf %1184, %1185 : vector<16x16xf32>
    %1187 = arith.mulf %1186, %1173 : vector<16x16xf32>
    %cst_263 = arith.constant 0.000000e+00 : f32
    %1188 = vector.broadcast %cst_263 : f32 to vector<16x16xf32>
    %1189 = arith.subf %1188, %1167 : vector<16x16xf32>
    %1190 = arith.mulf %1189, %1167 : vector<16x16xf32>
    %1191 = math.exp %1190 : vector<16x16xf32>
    %1192 = arith.mulf %1187, %1191 : vector<16x16xf32>
    %cst_264 = arith.constant 1.000000e+00 : f32
    %1193 = vector.broadcast %cst_264 : f32 to vector<16x16xf32>
    %1194 = arith.subf %1193, %1192 : vector<16x16xf32>
    %1195 = arith.mulf %1166, %1194 : vector<16x16xf32>
    %cst_265 = arith.constant 1.000000e+00 : f32
    %1196 = vector.broadcast %cst_265 : f32 to vector<16x16xf32>
    %1197 = arith.addf %1196, %1195 : vector<16x16xf32>
    %1198 = arith.mulf %1159, %1197 : vector<16x16xf32>
    %c0_266 = arith.constant 0 : index
    %c1_267 = arith.constant 1 : index
    %c1_268 = arith.constant 1 : index
    %1199 = vector.load %arg11[%c0_266, %c1_267, %c1_268] : memref<4x18x18xf32, #tpu.memory_space<vmem>>, vector<1x16x16xf32>
    %1200 = vector.shape_cast %1199 : vector<1x16x16xf32> to vector<16x16xf32>
    %1201 = vector.shape_cast %1009 : vector<16x16xf32> to vector<1x16x16xf32>
    tpu.vector_store %arg11[%c0_266, %c1_267, %c1_268], %1201 {strides = array<i32>} : memref<4x18x18xf32, #tpu.memory_space<vmem>>, vector<1x16x16xf32>,
    %c1_269 = arith.constant 1 : index
    %c1_270 = arith.constant 1 : index
    %c1_271 = arith.constant 1 : index
    %1202 = vector.load %arg11[%c1_269, %c1_270, %c1_271] : memref<4x18x18xf32, #tpu.memory_space<vmem>>, vector<1x16x16xf32>
    %1203 = vector.shape_cast %1202 : vector<1x16x16xf32> to vector<16x16xf32>
    %1204 = vector.shape_cast %1072 : vector<16x16xf32> to vector<1x16x16xf32>
    tpu.vector_store %arg11[%c1_269, %c1_270, %c1_271], %1204 {strides = array<i32>} : memref<4x18x18xf32, #tpu.memory_space<vmem>>, vector<1x16x16xf32>,
    %c2_272 = arith.constant 2 : index
    %c1_273 = arith.constant 1 : index
    %c1_274 = arith.constant 1 : index
    %1205 = vector.load %arg11[%c2_272, %c1_273, %c1_274] : memref<4x18x18xf32, #tpu.memory_space<vmem>>, vector<1x16x16xf32>
    %1206 = vector.shape_cast %1205 : vector<1x16x16xf32> to vector<16x16xf32>
    %1207 = vector.shape_cast %1135 : vector<16x16xf32> to vector<1x16x16xf32>
    tpu.vector_store %arg11[%c2_272, %c1_273, %c1_274], %1207 {strides = array<i32>} : memref<4x18x18xf32, #tpu.memory_space<vmem>>, vector<1x16x16xf32>,
    %c3_275 = arith.constant 3 : index
    %c1_276 = arith.constant 1 : index
    %c1_277 = arith.constant 1 : index
    %1208 = vector.load %arg11[%c3_275, %c1_276, %c1_277] : memref<4x18x18xf32, #tpu.memory_space<vmem>>, vector<1x16x16xf32>
    %1209 = vector.shape_cast %1208 : vector<1x16x16xf32> to vector<16x16xf32>
    %1210 = vector.shape_cast %1198 : vector<16x16xf32> to vector<1x16x16xf32>
    tpu.vector_store %arg11[%c3_275, %c1_276, %c1_277], %1210 {strides = array<i32>} : memref<4x18x18xf32, #tpu.memory_space<vmem>>, vector<1x16x16xf32>,
    %cst_278 = arith.constant 0.000000e+00 : f32
    %1211 = vector.broadcast %cst_278 : f32 to vector<16x16xf32>
    %cst_279 = arith.constant 0.000000e+00 : f32
    %1212 = vector.broadcast %cst_279 : f32 to vector<16x16xf32>
    %cst_280 = arith.constant 0.000000e+00 : f32
    %1213 = vector.broadcast %cst_280 : f32 to vector<16x16xf32>
    %cst_281 = arith.constant 0.000000e+00 : f32
    %1214 = vector.broadcast %cst_281 : f32 to vector<16x16xf32>
    %c0_282 = arith.constant 0 : index
    %c0_283 = arith.constant 0 : index
    %c0_284 = arith.constant 0 : index
    %1215 = vector.load %arg11[%c0_282, %c0_283, %c0_284] : memref<4x18x18xf32, #tpu.memory_space<vmem>>, vector<4x16x16xf32>
    %1216 = vector.extract_strided_slice %1215 {offsets = [0, 0, 0], sizes = [1, 16, 16], strides = [1, 1, 1]} : vector<4x16x16xf32> to vector<1x16x16xf32>
    %1217 = vector.shape_cast %1216 : vector<1x16x16xf32> to vector<16x16xf32>
    %c0_285 = arith.constant 0 : index
    %1218 = memref.load %arg8[%c0_285] : memref<144xf32, #tpu.memory_space<smem>>
    %1219 = vector.broadcast %1218 : f32 to vector<16x16xf32>
    %1220 = arith.mulf %1217, %1219 : vector<16x16xf32>
    %1221 = arith.addf %1211, %1220 : vector<16x16xf32>
    %c36_286 = arith.constant 36 : index
    %1222 = memref.load %arg8[%c36_286] : memref<144xf32, #tpu.memory_space<smem>>
    %1223 = vector.broadcast %1222 : f32 to vector<16x16xf32>
    %1224 = arith.mulf %1217, %1223 : vector<16x16xf32>
    %1225 = arith.addf %1212, %1224 : vector<16x16xf32>
    %c72_287 = arith.constant 72 : index
    %1226 = memref.load %arg8[%c72_287] : memref<144xf32, #tpu.memory_space<smem>>
    %1227 = vector.broadcast %1226 : f32 to vector<16x16xf32>
    %1228 = arith.mulf %1217, %1227 : vector<16x16xf32>
    %1229 = arith.addf %1213, %1228 : vector<16x16xf32>
    %c108_288 = arith.constant 108 : index
    %1230 = memref.load %arg8[%c108_288] : memref<144xf32, #tpu.memory_space<smem>>
    %1231 = vector.broadcast %1230 : f32 to vector<16x16xf32>
    %1232 = arith.mulf %1217, %1231 : vector<16x16xf32>
    %1233 = arith.addf %1214, %1232 : vector<16x16xf32>
    %1234 = vector.extract_strided_slice %1215 {offsets = [1, 0, 0], sizes = [1, 16, 16], strides = [1, 1, 1]} : vector<4x16x16xf32> to vector<1x16x16xf32>
    %1235 = vector.shape_cast %1234 : vector<1x16x16xf32> to vector<16x16xf32>
    %c9_289 = arith.constant 9 : index
    %1236 = memref.load %arg8[%c9_289] : memref<144xf32, #tpu.memory_space<smem>>
    %1237 = vector.broadcast %1236 : f32 to vector<16x16xf32>
    %1238 = arith.mulf %1235, %1237 : vector<16x16xf32>
    %1239 = arith.addf %1221, %1238 : vector<16x16xf32>
    %c45_290 = arith.constant 45 : index
    %1240 = memref.load %arg8[%c45_290] : memref<144xf32, #tpu.memory_space<smem>>
    %1241 = vector.broadcast %1240 : f32 to vector<16x16xf32>
    %1242 = arith.mulf %1235, %1241 : vector<16x16xf32>
    %1243 = arith.addf %1225, %1242 : vector<16x16xf32>
    %c81_291 = arith.constant 81 : index
    %1244 = memref.load %arg8[%c81_291] : memref<144xf32, #tpu.memory_space<smem>>
    %1245 = vector.broadcast %1244 : f32 to vector<16x16xf32>
    %1246 = arith.mulf %1235, %1245 : vector<16x16xf32>
    %1247 = arith.addf %1229, %1246 : vector<16x16xf32>
    %c117_292 = arith.constant 117 : index
    %1248 = memref.load %arg8[%c117_292] : memref<144xf32, #tpu.memory_space<smem>>
    %1249 = vector.broadcast %1248 : f32 to vector<16x16xf32>
    %1250 = arith.mulf %1235, %1249 : vector<16x16xf32>
    %1251 = arith.addf %1233, %1250 : vector<16x16xf32>
    %1252 = vector.extract_strided_slice %1215 {offsets = [2, 0, 0], sizes = [1, 16, 16], strides = [1, 1, 1]} : vector<4x16x16xf32> to vector<1x16x16xf32>
    %1253 = vector.shape_cast %1252 : vector<1x16x16xf32> to vector<16x16xf32>
    %c18_293 = arith.constant 18 : index
    %1254 = memref.load %arg8[%c18_293] : memref<144xf32, #tpu.memory_space<smem>>
    %1255 = vector.broadcast %1254 : f32 to vector<16x16xf32>
    %1256 = arith.mulf %1253, %1255 : vector<16x16xf32>
    %1257 = arith.addf %1239, %1256 : vector<16x16xf32>
    %c54_294 = arith.constant 54 : index
    %1258 = memref.load %arg8[%c54_294] : memref<144xf32, #tpu.memory_space<smem>>
    %1259 = vector.broadcast %1258 : f32 to vector<16x16xf32>
    %1260 = arith.mulf %1253, %1259 : vector<16x16xf32>
    %1261 = arith.addf %1243, %1260 : vector<16x16xf32>
    %c90_295 = arith.constant 90 : index
    %1262 = memref.load %arg8[%c90_295] : memref<144xf32, #tpu.memory_space<smem>>
    %1263 = vector.broadcast %1262 : f32 to vector<16x16xf32>
    %1264 = arith.mulf %1253, %1263 : vector<16x16xf32>
    %1265 = arith.addf %1247, %1264 : vector<16x16xf32>
    %c126_296 = arith.constant 126 : index
    %1266 = memref.load %arg8[%c126_296] : memref<144xf32, #tpu.memory_space<smem>>
    %1267 = vector.broadcast %1266 : f32 to vector<16x16xf32>
    %1268 = arith.mulf %1253, %1267 : vector<16x16xf32>
    %1269 = arith.addf %1251, %1268 : vector<16x16xf32>
    %1270 = vector.extract_strided_slice %1215 {offsets = [3, 0, 0], sizes = [1, 16, 16], strides = [1, 1, 1]} : vector<4x16x16xf32> to vector<1x16x16xf32>
    %1271 = vector.shape_cast %1270 : vector<1x16x16xf32> to vector<16x16xf32>
    %c27_297 = arith.constant 27 : index
    %1272 = memref.load %arg8[%c27_297] : memref<144xf32, #tpu.memory_space<smem>>
    %1273 = vector.broadcast %1272 : f32 to vector<16x16xf32>
    %1274 = arith.mulf %1271, %1273 : vector<16x16xf32>
    %1275 = arith.addf %1257, %1274 : vector<16x16xf32>
    %c63_298 = arith.constant 63 : index
    %1276 = memref.load %arg8[%c63_298] : memref<144xf32, #tpu.memory_space<smem>>
    %1277 = vector.broadcast %1276 : f32 to vector<16x16xf32>
    %1278 = arith.mulf %1271, %1277 : vector<16x16xf32>
    %1279 = arith.addf %1261, %1278 : vector<16x16xf32>
    %c99_299 = arith.constant 99 : index
    %1280 = memref.load %arg8[%c99_299] : memref<144xf32, #tpu.memory_space<smem>>
    %1281 = vector.broadcast %1280 : f32 to vector<16x16xf32>
    %1282 = arith.mulf %1271, %1281 : vector<16x16xf32>
    %1283 = arith.addf %1265, %1282 : vector<16x16xf32>
    %c135_300 = arith.constant 135 : index
    %1284 = memref.load %arg8[%c135_300] : memref<144xf32, #tpu.memory_space<smem>>
    %1285 = vector.broadcast %1284 : f32 to vector<16x16xf32>
    %1286 = arith.mulf %1271, %1285 : vector<16x16xf32>
    %1287 = arith.addf %1269, %1286 : vector<16x16xf32>
    %c0_301 = arith.constant 0 : index
    %c0_302 = arith.constant 0 : index
    %c1_303 = arith.constant 1 : index
    %1288 = vector.load %arg11[%c0_301, %c0_302, %c1_303] : memref<4x18x18xf32, #tpu.memory_space<vmem>>, vector<4x16x16xf32>
    %1289 = vector.extract_strided_slice %1288 {offsets = [0, 0, 0], sizes = [1, 16, 16], strides = [1, 1, 1]} : vector<4x16x16xf32> to vector<1x16x16xf32>
    %1290 = vector.shape_cast %1289 : vector<1x16x16xf32> to vector<16x16xf32>
    %c1_304 = arith.constant 1 : index
    %1291 = memref.load %arg8[%c1_304] : memref<144xf32, #tpu.memory_space<smem>>
    %1292 = vector.broadcast %1291 : f32 to vector<16x16xf32>
    %1293 = arith.mulf %1290, %1292 : vector<16x16xf32>
    %1294 = arith.addf %1275, %1293 : vector<16x16xf32>
    %c37_305 = arith.constant 37 : index
    %1295 = memref.load %arg8[%c37_305] : memref<144xf32, #tpu.memory_space<smem>>
    %1296 = vector.broadcast %1295 : f32 to vector<16x16xf32>
    %1297 = arith.mulf %1290, %1296 : vector<16x16xf32>
    %1298 = arith.addf %1279, %1297 : vector<16x16xf32>
    %c73_306 = arith.constant 73 : index
    %1299 = memref.load %arg8[%c73_306] : memref<144xf32, #tpu.memory_space<smem>>
    %1300 = vector.broadcast %1299 : f32 to vector<16x16xf32>
    %1301 = arith.mulf %1290, %1300 : vector<16x16xf32>
    %1302 = arith.addf %1283, %1301 : vector<16x16xf32>
    %c109_307 = arith.constant 109 : index
    %1303 = memref.load %arg8[%c109_307] : memref<144xf32, #tpu.memory_space<smem>>
    %1304 = vector.broadcast %1303 : f32 to vector<16x16xf32>
    %1305 = arith.mulf %1290, %1304 : vector<16x16xf32>
    %1306 = arith.addf %1287, %1305 : vector<16x16xf32>
    %1307 = vector.extract_strided_slice %1288 {offsets = [1, 0, 0], sizes = [1, 16, 16], strides = [1, 1, 1]} : vector<4x16x16xf32> to vector<1x16x16xf32>
    %1308 = vector.shape_cast %1307 : vector<1x16x16xf32> to vector<16x16xf32>
    %c10_308 = arith.constant 10 : index
    %1309 = memref.load %arg8[%c10_308] : memref<144xf32, #tpu.memory_space<smem>>
    %1310 = vector.broadcast %1309 : f32 to vector<16x16xf32>
    %1311 = arith.mulf %1308, %1310 : vector<16x16xf32>
    %1312 = arith.addf %1294, %1311 : vector<16x16xf32>
    %c46_309 = arith.constant 46 : index
    %1313 = memref.load %arg8[%c46_309] : memref<144xf32, #tpu.memory_space<smem>>
    %1314 = vector.broadcast %1313 : f32 to vector<16x16xf32>
    %1315 = arith.mulf %1308, %1314 : vector<16x16xf32>
    %1316 = arith.addf %1298, %1315 : vector<16x16xf32>
    %c82_310 = arith.constant 82 : index
    %1317 = memref.load %arg8[%c82_310] : memref<144xf32, #tpu.memory_space<smem>>
    %1318 = vector.broadcast %1317 : f32 to vector<16x16xf32>
    %1319 = arith.mulf %1308, %1318 : vector<16x16xf32>
    %1320 = arith.addf %1302, %1319 : vector<16x16xf32>
    %c118_311 = arith.constant 118 : index
    %1321 = memref.load %arg8[%c118_311] : memref<144xf32, #tpu.memory_space<smem>>
    %1322 = vector.broadcast %1321 : f32 to vector<16x16xf32>
    %1323 = arith.mulf %1308, %1322 : vector<16x16xf32>
    %1324 = arith.addf %1306, %1323 : vector<16x16xf32>
    %1325 = vector.extract_strided_slice %1288 {offsets = [2, 0, 0], sizes = [1, 16, 16], strides = [1, 1, 1]} : vector<4x16x16xf32> to vector<1x16x16xf32>
    %1326 = vector.shape_cast %1325 : vector<1x16x16xf32> to vector<16x16xf32>
    %c19_312 = arith.constant 19 : index
    %1327 = memref.load %arg8[%c19_312] : memref<144xf32, #tpu.memory_space<smem>>
    %1328 = vector.broadcast %1327 : f32 to vector<16x16xf32>
    %1329 = arith.mulf %1326, %1328 : vector<16x16xf32>
    %1330 = arith.addf %1312, %1329 : vector<16x16xf32>
    %c55_313 = arith.constant 55 : index
    %1331 = memref.load %arg8[%c55_313] : memref<144xf32, #tpu.memory_space<smem>>
    %1332 = vector.broadcast %1331 : f32 to vector<16x16xf32>
    %1333 = arith.mulf %1326, %1332 : vector<16x16xf32>
    %1334 = arith.addf %1316, %1333 : vector<16x16xf32>
    %c91_314 = arith.constant 91 : index
    %1335 = memref.load %arg8[%c91_314] : memref<144xf32, #tpu.memory_space<smem>>
    %1336 = vector.broadcast %1335 : f32 to vector<16x16xf32>
    %1337 = arith.mulf %1326, %1336 : vector<16x16xf32>
    %1338 = arith.addf %1320, %1337 : vector<16x16xf32>
    %c127_315 = arith.constant 127 : index
    %1339 = memref.load %arg8[%c127_315] : memref<144xf32, #tpu.memory_space<smem>>
    %1340 = vector.broadcast %1339 : f32 to vector<16x16xf32>
    %1341 = arith.mulf %1326, %1340 : vector<16x16xf32>
    %1342 = arith.addf %1324, %1341 : vector<16x16xf32>
    %1343 = vector.extract_strided_slice %1288 {offsets = [3, 0, 0], sizes = [1, 16, 16], strides = [1, 1, 1]} : vector<4x16x16xf32> to vector<1x16x16xf32>
    %1344 = vector.shape_cast %1343 : vector<1x16x16xf32> to vector<16x16xf32>
    %c28_316 = arith.constant 28 : index
    %1345 = memref.load %arg8[%c28_316] : memref<144xf32, #tpu.memory_space<smem>>
    %1346 = vector.broadcast %1345 : f32 to vector<16x16xf32>
    %1347 = arith.mulf %1344, %1346 : vector<16x16xf32>
    %1348 = arith.addf %1330, %1347 : vector<16x16xf32>
    %c64_317 = arith.constant 64 : index
    %1349 = memref.load %arg8[%c64_317] : memref<144xf32, #tpu.memory_space<smem>>
    %1350 = vector.broadcast %1349 : f32 to vector<16x16xf32>
    %1351 = arith.mulf %1344, %1350 : vector<16x16xf32>
    %1352 = arith.addf %1334, %1351 : vector<16x16xf32>
    %c100_318 = arith.constant 100 : index
    %1353 = memref.load %arg8[%c100_318] : memref<144xf32, #tpu.memory_space<smem>>
    %1354 = vector.broadcast %1353 : f32 to vector<16x16xf32>
    %1355 = arith.mulf %1344, %1354 : vector<16x16xf32>
    %1356 = arith.addf %1338, %1355 : vector<16x16xf32>
    %c136_319 = arith.constant 136 : index
    %1357 = memref.load %arg8[%c136_319] : memref<144xf32, #tpu.memory_space<smem>>
    %1358 = vector.broadcast %1357 : f32 to vector<16x16xf32>
    %1359 = arith.mulf %1344, %1358 : vector<16x16xf32>
    %1360 = arith.addf %1342, %1359 : vector<16x16xf32>
    %c0_320 = arith.constant 0 : index
    %c0_321 = arith.constant 0 : index
    %c2_322 = arith.constant 2 : index
    %1361 = vector.load %arg11[%c0_320, %c0_321, %c2_322] : memref<4x18x18xf32, #tpu.memory_space<vmem>>, vector<4x16x16xf32>
    %1362 = vector.extract_strided_slice %1361 {offsets = [0, 0, 0], sizes = [1, 16, 16], strides = [1, 1, 1]} : vector<4x16x16xf32> to vector<1x16x16xf32>
    %1363 = vector.shape_cast %1362 : vector<1x16x16xf32> to vector<16x16xf32>
    %c2_323 = arith.constant 2 : index
    %1364 = memref.load %arg8[%c2_323] : memref<144xf32, #tpu.memory_space<smem>>
    %1365 = vector.broadcast %1364 : f32 to vector<16x16xf32>
    %1366 = arith.mulf %1363, %1365 : vector<16x16xf32>
    %1367 = arith.addf %1348, %1366 : vector<16x16xf32>
    %c38_324 = arith.constant 38 : index
    %1368 = memref.load %arg8[%c38_324] : memref<144xf32, #tpu.memory_space<smem>>
    %1369 = vector.broadcast %1368 : f32 to vector<16x16xf32>
    %1370 = arith.mulf %1363, %1369 : vector<16x16xf32>
    %1371 = arith.addf %1352, %1370 : vector<16x16xf32>
    %c74_325 = arith.constant 74 : index
    %1372 = memref.load %arg8[%c74_325] : memref<144xf32, #tpu.memory_space<smem>>
    %1373 = vector.broadcast %1372 : f32 to vector<16x16xf32>
    %1374 = arith.mulf %1363, %1373 : vector<16x16xf32>
    %1375 = arith.addf %1356, %1374 : vector<16x16xf32>
    %c110_326 = arith.constant 110 : index
    %1376 = memref.load %arg8[%c110_326] : memref<144xf32, #tpu.memory_space<smem>>
    %1377 = vector.broadcast %1376 : f32 to vector<16x16xf32>
    %1378 = arith.mulf %1363, %1377 : vector<16x16xf32>
    %1379 = arith.addf %1360, %1378 : vector<16x16xf32>
    %1380 = vector.extract_strided_slice %1361 {offsets = [1, 0, 0], sizes = [1, 16, 16], strides = [1, 1, 1]} : vector<4x16x16xf32> to vector<1x16x16xf32>
    %1381 = vector.shape_cast %1380 : vector<1x16x16xf32> to vector<16x16xf32>
    %c11_327 = arith.constant 11 : index
    %1382 = memref.load %arg8[%c11_327] : memref<144xf32, #tpu.memory_space<smem>>
    %1383 = vector.broadcast %1382 : f32 to vector<16x16xf32>
    %1384 = arith.mulf %1381, %1383 : vector<16x16xf32>
    %1385 = arith.addf %1367, %1384 : vector<16x16xf32>
    %c47_328 = arith.constant 47 : index
    %1386 = memref.load %arg8[%c47_328] : memref<144xf32, #tpu.memory_space<smem>>
    %1387 = vector.broadcast %1386 : f32 to vector<16x16xf32>
    %1388 = arith.mulf %1381, %1387 : vector<16x16xf32>
    %1389 = arith.addf %1371, %1388 : vector<16x16xf32>
    %c83_329 = arith.constant 83 : index
    %1390 = memref.load %arg8[%c83_329] : memref<144xf32, #tpu.memory_space<smem>>
    %1391 = vector.broadcast %1390 : f32 to vector<16x16xf32>
    %1392 = arith.mulf %1381, %1391 : vector<16x16xf32>
    %1393 = arith.addf %1375, %1392 : vector<16x16xf32>
    %c119_330 = arith.constant 119 : index
    %1394 = memref.load %arg8[%c119_330] : memref<144xf32, #tpu.memory_space<smem>>
    %1395 = vector.broadcast %1394 : f32 to vector<16x16xf32>
    %1396 = arith.mulf %1381, %1395 : vector<16x16xf32>
    %1397 = arith.addf %1379, %1396 : vector<16x16xf32>
    %1398 = vector.extract_strided_slice %1361 {offsets = [2, 0, 0], sizes = [1, 16, 16], strides = [1, 1, 1]} : vector<4x16x16xf32> to vector<1x16x16xf32>
    %1399 = vector.shape_cast %1398 : vector<1x16x16xf32> to vector<16x16xf32>
    %c20_331 = arith.constant 20 : index
    %1400 = memref.load %arg8[%c20_331] : memref<144xf32, #tpu.memory_space<smem>>
    %1401 = vector.broadcast %1400 : f32 to vector<16x16xf32>
    %1402 = arith.mulf %1399, %1401 : vector<16x16xf32>
    %1403 = arith.addf %1385, %1402 : vector<16x16xf32>
    %c56_332 = arith.constant 56 : index
    %1404 = memref.load %arg8[%c56_332] : memref<144xf32, #tpu.memory_space<smem>>
    %1405 = vector.broadcast %1404 : f32 to vector<16x16xf32>
    %1406 = arith.mulf %1399, %1405 : vector<16x16xf32>
    %1407 = arith.addf %1389, %1406 : vector<16x16xf32>
    %c92_333 = arith.constant 92 : index
    %1408 = memref.load %arg8[%c92_333] : memref<144xf32, #tpu.memory_space<smem>>
    %1409 = vector.broadcast %1408 : f32 to vector<16x16xf32>
    %1410 = arith.mulf %1399, %1409 : vector<16x16xf32>
    %1411 = arith.addf %1393, %1410 : vector<16x16xf32>
    %c128_334 = arith.constant 128 : index
    %1412 = memref.load %arg8[%c128_334] : memref<144xf32, #tpu.memory_space<smem>>
    %1413 = vector.broadcast %1412 : f32 to vector<16x16xf32>
    %1414 = arith.mulf %1399, %1413 : vector<16x16xf32>
    %1415 = arith.addf %1397, %1414 : vector<16x16xf32>
    %1416 = vector.extract_strided_slice %1361 {offsets = [3, 0, 0], sizes = [1, 16, 16], strides = [1, 1, 1]} : vector<4x16x16xf32> to vector<1x16x16xf32>
    %1417 = vector.shape_cast %1416 : vector<1x16x16xf32> to vector<16x16xf32>
    %c29_335 = arith.constant 29 : index
    %1418 = memref.load %arg8[%c29_335] : memref<144xf32, #tpu.memory_space<smem>>
    %1419 = vector.broadcast %1418 : f32 to vector<16x16xf32>
    %1420 = arith.mulf %1417, %1419 : vector<16x16xf32>
    %1421 = arith.addf %1403, %1420 : vector<16x16xf32>
    %c65_336 = arith.constant 65 : index
    %1422 = memref.load %arg8[%c65_336] : memref<144xf32, #tpu.memory_space<smem>>
    %1423 = vector.broadcast %1422 : f32 to vector<16x16xf32>
    %1424 = arith.mulf %1417, %1423 : vector<16x16xf32>
    %1425 = arith.addf %1407, %1424 : vector<16x16xf32>
    %c101_337 = arith.constant 101 : index
    %1426 = memref.load %arg8[%c101_337] : memref<144xf32, #tpu.memory_space<smem>>
    %1427 = vector.broadcast %1426 : f32 to vector<16x16xf32>
    %1428 = arith.mulf %1417, %1427 : vector<16x16xf32>
    %1429 = arith.addf %1411, %1428 : vector<16x16xf32>
    %c137_338 = arith.constant 137 : index
    %1430 = memref.load %arg8[%c137_338] : memref<144xf32, #tpu.memory_space<smem>>
    %1431 = vector.broadcast %1430 : f32 to vector<16x16xf32>
    %1432 = arith.mulf %1417, %1431 : vector<16x16xf32>
    %1433 = arith.addf %1415, %1432 : vector<16x16xf32>
    %c0_339 = arith.constant 0 : index
    %c1_340 = arith.constant 1 : index
    %c0_341 = arith.constant 0 : index
    %1434 = vector.load %arg11[%c0_339, %c1_340, %c0_341] : memref<4x18x18xf32, #tpu.memory_space<vmem>>, vector<4x16x16xf32>
    %1435 = vector.extract_strided_slice %1434 {offsets = [0, 0, 0], sizes = [1, 16, 16], strides = [1, 1, 1]} : vector<4x16x16xf32> to vector<1x16x16xf32>
    %1436 = vector.shape_cast %1435 : vector<1x16x16xf32> to vector<16x16xf32>
    %c3_342 = arith.constant 3 : index
    %1437 = memref.load %arg8[%c3_342] : memref<144xf32, #tpu.memory_space<smem>>
    %1438 = vector.broadcast %1437 : f32 to vector<16x16xf32>
    %1439 = arith.mulf %1436, %1438 : vector<16x16xf32>
    %1440 = arith.addf %1421, %1439 : vector<16x16xf32>
    %c39_343 = arith.constant 39 : index
    %1441 = memref.load %arg8[%c39_343] : memref<144xf32, #tpu.memory_space<smem>>
    %1442 = vector.broadcast %1441 : f32 to vector<16x16xf32>
    %1443 = arith.mulf %1436, %1442 : vector<16x16xf32>
    %1444 = arith.addf %1425, %1443 : vector<16x16xf32>
    %c75_344 = arith.constant 75 : index
    %1445 = memref.load %arg8[%c75_344] : memref<144xf32, #tpu.memory_space<smem>>
    %1446 = vector.broadcast %1445 : f32 to vector<16x16xf32>
    %1447 = arith.mulf %1436, %1446 : vector<16x16xf32>
    %1448 = arith.addf %1429, %1447 : vector<16x16xf32>
    %c111_345 = arith.constant 111 : index
    %1449 = memref.load %arg8[%c111_345] : memref<144xf32, #tpu.memory_space<smem>>
    %1450 = vector.broadcast %1449 : f32 to vector<16x16xf32>
    %1451 = arith.mulf %1436, %1450 : vector<16x16xf32>
    %1452 = arith.addf %1433, %1451 : vector<16x16xf32>
    %1453 = vector.extract_strided_slice %1434 {offsets = [1, 0, 0], sizes = [1, 16, 16], strides = [1, 1, 1]} : vector<4x16x16xf32> to vector<1x16x16xf32>
    %1454 = vector.shape_cast %1453 : vector<1x16x16xf32> to vector<16x16xf32>
    %c12_346 = arith.constant 12 : index
    %1455 = memref.load %arg8[%c12_346] : memref<144xf32, #tpu.memory_space<smem>>
    %1456 = vector.broadcast %1455 : f32 to vector<16x16xf32>
    %1457 = arith.mulf %1454, %1456 : vector<16x16xf32>
    %1458 = arith.addf %1440, %1457 : vector<16x16xf32>
    %c48_347 = arith.constant 48 : index
    %1459 = memref.load %arg8[%c48_347] : memref<144xf32, #tpu.memory_space<smem>>
    %1460 = vector.broadcast %1459 : f32 to vector<16x16xf32>
    %1461 = arith.mulf %1454, %1460 : vector<16x16xf32>
    %1462 = arith.addf %1444, %1461 : vector<16x16xf32>
    %c84_348 = arith.constant 84 : index
    %1463 = memref.load %arg8[%c84_348] : memref<144xf32, #tpu.memory_space<smem>>
    %1464 = vector.broadcast %1463 : f32 to vector<16x16xf32>
    %1465 = arith.mulf %1454, %1464 : vector<16x16xf32>
    %1466 = arith.addf %1448, %1465 : vector<16x16xf32>
    %c120_349 = arith.constant 120 : index
    %1467 = memref.load %arg8[%c120_349] : memref<144xf32, #tpu.memory_space<smem>>
    %1468 = vector.broadcast %1467 : f32 to vector<16x16xf32>
    %1469 = arith.mulf %1454, %1468 : vector<16x16xf32>
    %1470 = arith.addf %1452, %1469 : vector<16x16xf32>
    %1471 = vector.extract_strided_slice %1434 {offsets = [2, 0, 0], sizes = [1, 16, 16], strides = [1, 1, 1]} : vector<4x16x16xf32> to vector<1x16x16xf32>
    %1472 = vector.shape_cast %1471 : vector<1x16x16xf32> to vector<16x16xf32>
    %c21_350 = arith.constant 21 : index
    %1473 = memref.load %arg8[%c21_350] : memref<144xf32, #tpu.memory_space<smem>>
    %1474 = vector.broadcast %1473 : f32 to vector<16x16xf32>
    %1475 = arith.mulf %1472, %1474 : vector<16x16xf32>
    %1476 = arith.addf %1458, %1475 : vector<16x16xf32>
    %c57_351 = arith.constant 57 : index
    %1477 = memref.load %arg8[%c57_351] : memref<144xf32, #tpu.memory_space<smem>>
    %1478 = vector.broadcast %1477 : f32 to vector<16x16xf32>
    %1479 = arith.mulf %1472, %1478 : vector<16x16xf32>
    %1480 = arith.addf %1462, %1479 : vector<16x16xf32>
    %c93_352 = arith.constant 93 : index
    %1481 = memref.load %arg8[%c93_352] : memref<144xf32, #tpu.memory_space<smem>>
    %1482 = vector.broadcast %1481 : f32 to vector<16x16xf32>
    %1483 = arith.mulf %1472, %1482 : vector<16x16xf32>
    %1484 = arith.addf %1466, %1483 : vector<16x16xf32>
    %c129_353 = arith.constant 129 : index
    %1485 = memref.load %arg8[%c129_353] : memref<144xf32, #tpu.memory_space<smem>>
    %1486 = vector.broadcast %1485 : f32 to vector<16x16xf32>
    %1487 = arith.mulf %1472, %1486 : vector<16x16xf32>
    %1488 = arith.addf %1470, %1487 : vector<16x16xf32>
    %1489 = vector.extract_strided_slice %1434 {offsets = [3, 0, 0], sizes = [1, 16, 16], strides = [1, 1, 1]} : vector<4x16x16xf32> to vector<1x16x16xf32>
    %1490 = vector.shape_cast %1489 : vector<1x16x16xf32> to vector<16x16xf32>
    %c30_354 = arith.constant 30 : index
    %1491 = memref.load %arg8[%c30_354] : memref<144xf32, #tpu.memory_space<smem>>
    %1492 = vector.broadcast %1491 : f32 to vector<16x16xf32>
    %1493 = arith.mulf %1490, %1492 : vector<16x16xf32>
    %1494 = arith.addf %1476, %1493 : vector<16x16xf32>
    %c66_355 = arith.constant 66 : index
    %1495 = memref.load %arg8[%c66_355] : memref<144xf32, #tpu.memory_space<smem>>
    %1496 = vector.broadcast %1495 : f32 to vector<16x16xf32>
    %1497 = arith.mulf %1490, %1496 : vector<16x16xf32>
    %1498 = arith.addf %1480, %1497 : vector<16x16xf32>
    %c102_356 = arith.constant 102 : index
    %1499 = memref.load %arg8[%c102_356] : memref<144xf32, #tpu.memory_space<smem>>
    %1500 = vector.broadcast %1499 : f32 to vector<16x16xf32>
    %1501 = arith.mulf %1490, %1500 : vector<16x16xf32>
    %1502 = arith.addf %1484, %1501 : vector<16x16xf32>
    %c138_357 = arith.constant 138 : index
    %1503 = memref.load %arg8[%c138_357] : memref<144xf32, #tpu.memory_space<smem>>
    %1504 = vector.broadcast %1503 : f32 to vector<16x16xf32>
    %1505 = arith.mulf %1490, %1504 : vector<16x16xf32>
    %1506 = arith.addf %1488, %1505 : vector<16x16xf32>
    %c0_358 = arith.constant 0 : index
    %c1_359 = arith.constant 1 : index
    %c1_360 = arith.constant 1 : index
    %1507 = vector.load %arg11[%c0_358, %c1_359, %c1_360] : memref<4x18x18xf32, #tpu.memory_space<vmem>>, vector<4x16x16xf32>
    %1508 = vector.extract_strided_slice %1507 {offsets = [0, 0, 0], sizes = [1, 16, 16], strides = [1, 1, 1]} : vector<4x16x16xf32> to vector<1x16x16xf32>
    %1509 = vector.shape_cast %1508 : vector<1x16x16xf32> to vector<16x16xf32>
    %c4_361 = arith.constant 4 : index
    %1510 = memref.load %arg8[%c4_361] : memref<144xf32, #tpu.memory_space<smem>>
    %1511 = vector.broadcast %1510 : f32 to vector<16x16xf32>
    %1512 = arith.mulf %1509, %1511 : vector<16x16xf32>
    %1513 = arith.addf %1494, %1512 : vector<16x16xf32>
    %c40_362 = arith.constant 40 : index
    %1514 = memref.load %arg8[%c40_362] : memref<144xf32, #tpu.memory_space<smem>>
    %1515 = vector.broadcast %1514 : f32 to vector<16x16xf32>
    %1516 = arith.mulf %1509, %1515 : vector<16x16xf32>
    %1517 = arith.addf %1498, %1516 : vector<16x16xf32>
    %c76_363 = arith.constant 76 : index
    %1518 = memref.load %arg8[%c76_363] : memref<144xf32, #tpu.memory_space<smem>>
    %1519 = vector.broadcast %1518 : f32 to vector<16x16xf32>
    %1520 = arith.mulf %1509, %1519 : vector<16x16xf32>
    %1521 = arith.addf %1502, %1520 : vector<16x16xf32>
    %c112_364 = arith.constant 112 : index
    %1522 = memref.load %arg8[%c112_364] : memref<144xf32, #tpu.memory_space<smem>>
    %1523 = vector.broadcast %1522 : f32 to vector<16x16xf32>
    %1524 = arith.mulf %1509, %1523 : vector<16x16xf32>
    %1525 = arith.addf %1506, %1524 : vector<16x16xf32>
    %1526 = vector.extract_strided_slice %1507 {offsets = [1, 0, 0], sizes = [1, 16, 16], strides = [1, 1, 1]} : vector<4x16x16xf32> to vector<1x16x16xf32>
    %1527 = vector.shape_cast %1526 : vector<1x16x16xf32> to vector<16x16xf32>
    %c13_365 = arith.constant 13 : index
    %1528 = memref.load %arg8[%c13_365] : memref<144xf32, #tpu.memory_space<smem>>
    %1529 = vector.broadcast %1528 : f32 to vector<16x16xf32>
    %1530 = arith.mulf %1527, %1529 : vector<16x16xf32>
    %1531 = arith.addf %1513, %1530 : vector<16x16xf32>
    %c49_366 = arith.constant 49 : index
    %1532 = memref.load %arg8[%c49_366] : memref<144xf32, #tpu.memory_space<smem>>
    %1533 = vector.broadcast %1532 : f32 to vector<16x16xf32>
    %1534 = arith.mulf %1527, %1533 : vector<16x16xf32>
    %1535 = arith.addf %1517, %1534 : vector<16x16xf32>
    %c85_367 = arith.constant 85 : index
    %1536 = memref.load %arg8[%c85_367] : memref<144xf32, #tpu.memory_space<smem>>
    %1537 = vector.broadcast %1536 : f32 to vector<16x16xf32>
    %1538 = arith.mulf %1527, %1537 : vector<16x16xf32>
    %1539 = arith.addf %1521, %1538 : vector<16x16xf32>
    %c121_368 = arith.constant 121 : index
    %1540 = memref.load %arg8[%c121_368] : memref<144xf32, #tpu.memory_space<smem>>
    %1541 = vector.broadcast %1540 : f32 to vector<16x16xf32>
    %1542 = arith.mulf %1527, %1541 : vector<16x16xf32>
    %1543 = arith.addf %1525, %1542 : vector<16x16xf32>
    %1544 = vector.extract_strided_slice %1507 {offsets = [2, 0, 0], sizes = [1, 16, 16], strides = [1, 1, 1]} : vector<4x16x16xf32> to vector<1x16x16xf32>
    %1545 = vector.shape_cast %1544 : vector<1x16x16xf32> to vector<16x16xf32>
    %c22_369 = arith.constant 22 : index
    %1546 = memref.load %arg8[%c22_369] : memref<144xf32, #tpu.memory_space<smem>>
    %1547 = vector.broadcast %1546 : f32 to vector<16x16xf32>
    %1548 = arith.mulf %1545, %1547 : vector<16x16xf32>
    %1549 = arith.addf %1531, %1548 : vector<16x16xf32>
    %c58_370 = arith.constant 58 : index
    %1550 = memref.load %arg8[%c58_370] : memref<144xf32, #tpu.memory_space<smem>>
    %1551 = vector.broadcast %1550 : f32 to vector<16x16xf32>
    %1552 = arith.mulf %1545, %1551 : vector<16x16xf32>
    %1553 = arith.addf %1535, %1552 : vector<16x16xf32>
    %c94_371 = arith.constant 94 : index
    %1554 = memref.load %arg8[%c94_371] : memref<144xf32, #tpu.memory_space<smem>>
    %1555 = vector.broadcast %1554 : f32 to vector<16x16xf32>
    %1556 = arith.mulf %1545, %1555 : vector<16x16xf32>
    %1557 = arith.addf %1539, %1556 : vector<16x16xf32>
    %c130_372 = arith.constant 130 : index
    %1558 = memref.load %arg8[%c130_372] : memref<144xf32, #tpu.memory_space<smem>>
    %1559 = vector.broadcast %1558 : f32 to vector<16x16xf32>
    %1560 = arith.mulf %1545, %1559 : vector<16x16xf32>
    %1561 = arith.addf %1543, %1560 : vector<16x16xf32>
    %1562 = vector.extract_strided_slice %1507 {offsets = [3, 0, 0], sizes = [1, 16, 16], strides = [1, 1, 1]} : vector<4x16x16xf32> to vector<1x16x16xf32>
    %1563 = vector.shape_cast %1562 : vector<1x16x16xf32> to vector<16x16xf32>
    %c31_373 = arith.constant 31 : index
    %1564 = memref.load %arg8[%c31_373] : memref<144xf32, #tpu.memory_space<smem>>
    %1565 = vector.broadcast %1564 : f32 to vector<16x16xf32>
    %1566 = arith.mulf %1563, %1565 : vector<16x16xf32>
    %1567 = arith.addf %1549, %1566 : vector<16x16xf32>
    %c67_374 = arith.constant 67 : index
    %1568 = memref.load %arg8[%c67_374] : memref<144xf32, #tpu.memory_space<smem>>
    %1569 = vector.broadcast %1568 : f32 to vector<16x16xf32>
    %1570 = arith.mulf %1563, %1569 : vector<16x16xf32>
    %1571 = arith.addf %1553, %1570 : vector<16x16xf32>
    %c103_375 = arith.constant 103 : index
    %1572 = memref.load %arg8[%c103_375] : memref<144xf32, #tpu.memory_space<smem>>
    %1573 = vector.broadcast %1572 : f32 to vector<16x16xf32>
    %1574 = arith.mulf %1563, %1573 : vector<16x16xf32>
    %1575 = arith.addf %1557, %1574 : vector<16x16xf32>
    %c139_376 = arith.constant 139 : index
    %1576 = memref.load %arg8[%c139_376] : memref<144xf32, #tpu.memory_space<smem>>
    %1577 = vector.broadcast %1576 : f32 to vector<16x16xf32>
    %1578 = arith.mulf %1563, %1577 : vector<16x16xf32>
    %1579 = arith.addf %1561, %1578 : vector<16x16xf32>
    %c0_377 = arith.constant 0 : index
    %c1_378 = arith.constant 1 : index
    %c2_379 = arith.constant 2 : index
    %1580 = vector.load %arg11[%c0_377, %c1_378, %c2_379] : memref<4x18x18xf32, #tpu.memory_space<vmem>>, vector<4x16x16xf32>
    %1581 = vector.extract_strided_slice %1580 {offsets = [0, 0, 0], sizes = [1, 16, 16], strides = [1, 1, 1]} : vector<4x16x16xf32> to vector<1x16x16xf32>
    %1582 = vector.shape_cast %1581 : vector<1x16x16xf32> to vector<16x16xf32>
    %c5_380 = arith.constant 5 : index
    %1583 = memref.load %arg8[%c5_380] : memref<144xf32, #tpu.memory_space<smem>>
    %1584 = vector.broadcast %1583 : f32 to vector<16x16xf32>
    %1585 = arith.mulf %1582, %1584 : vector<16x16xf32>
    %1586 = arith.addf %1567, %1585 : vector<16x16xf32>
    %c41_381 = arith.constant 41 : index
    %1587 = memref.load %arg8[%c41_381] : memref<144xf32, #tpu.memory_space<smem>>
    %1588 = vector.broadcast %1587 : f32 to vector<16x16xf32>
    %1589 = arith.mulf %1582, %1588 : vector<16x16xf32>
    %1590 = arith.addf %1571, %1589 : vector<16x16xf32>
    %c77_382 = arith.constant 77 : index
    %1591 = memref.load %arg8[%c77_382] : memref<144xf32, #tpu.memory_space<smem>>
    %1592 = vector.broadcast %1591 : f32 to vector<16x16xf32>
    %1593 = arith.mulf %1582, %1592 : vector<16x16xf32>
    %1594 = arith.addf %1575, %1593 : vector<16x16xf32>
    %c113_383 = arith.constant 113 : index
    %1595 = memref.load %arg8[%c113_383] : memref<144xf32, #tpu.memory_space<smem>>
    %1596 = vector.broadcast %1595 : f32 to vector<16x16xf32>
    %1597 = arith.mulf %1582, %1596 : vector<16x16xf32>
    %1598 = arith.addf %1579, %1597 : vector<16x16xf32>
    %1599 = vector.extract_strided_slice %1580 {offsets = [1, 0, 0], sizes = [1, 16, 16], strides = [1, 1, 1]} : vector<4x16x16xf32> to vector<1x16x16xf32>
    %1600 = vector.shape_cast %1599 : vector<1x16x16xf32> to vector<16x16xf32>
    %c14_384 = arith.constant 14 : index
    %1601 = memref.load %arg8[%c14_384] : memref<144xf32, #tpu.memory_space<smem>>
    %1602 = vector.broadcast %1601 : f32 to vector<16x16xf32>
    %1603 = arith.mulf %1600, %1602 : vector<16x16xf32>
    %1604 = arith.addf %1586, %1603 : vector<16x16xf32>
    %c50_385 = arith.constant 50 : index
    %1605 = memref.load %arg8[%c50_385] : memref<144xf32, #tpu.memory_space<smem>>
    %1606 = vector.broadcast %1605 : f32 to vector<16x16xf32>
    %1607 = arith.mulf %1600, %1606 : vector<16x16xf32>
    %1608 = arith.addf %1590, %1607 : vector<16x16xf32>
    %c86_386 = arith.constant 86 : index
    %1609 = memref.load %arg8[%c86_386] : memref<144xf32, #tpu.memory_space<smem>>
    %1610 = vector.broadcast %1609 : f32 to vector<16x16xf32>
    %1611 = arith.mulf %1600, %1610 : vector<16x16xf32>
    %1612 = arith.addf %1594, %1611 : vector<16x16xf32>
    %c122_387 = arith.constant 122 : index
    %1613 = memref.load %arg8[%c122_387] : memref<144xf32, #tpu.memory_space<smem>>
    %1614 = vector.broadcast %1613 : f32 to vector<16x16xf32>
    %1615 = arith.mulf %1600, %1614 : vector<16x16xf32>
    %1616 = arith.addf %1598, %1615 : vector<16x16xf32>
    %1617 = vector.extract_strided_slice %1580 {offsets = [2, 0, 0], sizes = [1, 16, 16], strides = [1, 1, 1]} : vector<4x16x16xf32> to vector<1x16x16xf32>
    %1618 = vector.shape_cast %1617 : vector<1x16x16xf32> to vector<16x16xf32>
    %c23_388 = arith.constant 23 : index
    %1619 = memref.load %arg8[%c23_388] : memref<144xf32, #tpu.memory_space<smem>>
    %1620 = vector.broadcast %1619 : f32 to vector<16x16xf32>
    %1621 = arith.mulf %1618, %1620 : vector<16x16xf32>
    %1622 = arith.addf %1604, %1621 : vector<16x16xf32>
    %c59_389 = arith.constant 59 : index
    %1623 = memref.load %arg8[%c59_389] : memref<144xf32, #tpu.memory_space<smem>>
    %1624 = vector.broadcast %1623 : f32 to vector<16x16xf32>
    %1625 = arith.mulf %1618, %1624 : vector<16x16xf32>
    %1626 = arith.addf %1608, %1625 : vector<16x16xf32>
    %c95_390 = arith.constant 95 : index
    %1627 = memref.load %arg8[%c95_390] : memref<144xf32, #tpu.memory_space<smem>>
    %1628 = vector.broadcast %1627 : f32 to vector<16x16xf32>
    %1629 = arith.mulf %1618, %1628 : vector<16x16xf32>
    %1630 = arith.addf %1612, %1629 : vector<16x16xf32>
    %c131_391 = arith.constant 131 : index
    %1631 = memref.load %arg8[%c131_391] : memref<144xf32, #tpu.memory_space<smem>>
    %1632 = vector.broadcast %1631 : f32 to vector<16x16xf32>
    %1633 = arith.mulf %1618, %1632 : vector<16x16xf32>
    %1634 = arith.addf %1616, %1633 : vector<16x16xf32>
    %1635 = vector.extract_strided_slice %1580 {offsets = [3, 0, 0], sizes = [1, 16, 16], strides = [1, 1, 1]} : vector<4x16x16xf32> to vector<1x16x16xf32>
    %1636 = vector.shape_cast %1635 : vector<1x16x16xf32> to vector<16x16xf32>
    %c32_392 = arith.constant 32 : index
    %1637 = memref.load %arg8[%c32_392] : memref<144xf32, #tpu.memory_space<smem>>
    %1638 = vector.broadcast %1637 : f32 to vector<16x16xf32>
    %1639 = arith.mulf %1636, %1638 : vector<16x16xf32>
    %1640 = arith.addf %1622, %1639 : vector<16x16xf32>
    %c68_393 = arith.constant 68 : index
    %1641 = memref.load %arg8[%c68_393] : memref<144xf32, #tpu.memory_space<smem>>
    %1642 = vector.broadcast %1641 : f32 to vector<16x16xf32>
    %1643 = arith.mulf %1636, %1642 : vector<16x16xf32>
    %1644 = arith.addf %1626, %1643 : vector<16x16xf32>
    %c104_394 = arith.constant 104 : index
    %1645 = memref.load %arg8[%c104_394] : memref<144xf32, #tpu.memory_space<smem>>
    %1646 = vector.broadcast %1645 : f32 to vector<16x16xf32>
    %1647 = arith.mulf %1636, %1646 : vector<16x16xf32>
    %1648 = arith.addf %1630, %1647 : vector<16x16xf32>
    %c140_395 = arith.constant 140 : index
    %1649 = memref.load %arg8[%c140_395] : memref<144xf32, #tpu.memory_space<smem>>
    %1650 = vector.broadcast %1649 : f32 to vector<16x16xf32>
    %1651 = arith.mulf %1636, %1650 : vector<16x16xf32>
    %1652 = arith.addf %1634, %1651 : vector<16x16xf32>
    %c0_396 = arith.constant 0 : index
    %c2_397 = arith.constant 2 : index
    %c0_398 = arith.constant 0 : index
    %1653 = vector.load %arg11[%c0_396, %c2_397, %c0_398] : memref<4x18x18xf32, #tpu.memory_space<vmem>>, vector<4x16x16xf32>
    %1654 = vector.extract_strided_slice %1653 {offsets = [0, 0, 0], sizes = [1, 16, 16], strides = [1, 1, 1]} : vector<4x16x16xf32> to vector<1x16x16xf32>
    %1655 = vector.shape_cast %1654 : vector<1x16x16xf32> to vector<16x16xf32>
    %c6_399 = arith.constant 6 : index
    %1656 = memref.load %arg8[%c6_399] : memref<144xf32, #tpu.memory_space<smem>>
    %1657 = vector.broadcast %1656 : f32 to vector<16x16xf32>
    %1658 = arith.mulf %1655, %1657 : vector<16x16xf32>
    %1659 = arith.addf %1640, %1658 : vector<16x16xf32>
    %c42_400 = arith.constant 42 : index
    %1660 = memref.load %arg8[%c42_400] : memref<144xf32, #tpu.memory_space<smem>>
    %1661 = vector.broadcast %1660 : f32 to vector<16x16xf32>
    %1662 = arith.mulf %1655, %1661 : vector<16x16xf32>
    %1663 = arith.addf %1644, %1662 : vector<16x16xf32>
    %c78_401 = arith.constant 78 : index
    %1664 = memref.load %arg8[%c78_401] : memref<144xf32, #tpu.memory_space<smem>>
    %1665 = vector.broadcast %1664 : f32 to vector<16x16xf32>
    %1666 = arith.mulf %1655, %1665 : vector<16x16xf32>
    %1667 = arith.addf %1648, %1666 : vector<16x16xf32>
    %c114_402 = arith.constant 114 : index
    %1668 = memref.load %arg8[%c114_402] : memref<144xf32, #tpu.memory_space<smem>>
    %1669 = vector.broadcast %1668 : f32 to vector<16x16xf32>
    %1670 = arith.mulf %1655, %1669 : vector<16x16xf32>
    %1671 = arith.addf %1652, %1670 : vector<16x16xf32>
    %1672 = vector.extract_strided_slice %1653 {offsets = [1, 0, 0], sizes = [1, 16, 16], strides = [1, 1, 1]} : vector<4x16x16xf32> to vector<1x16x16xf32>
    %1673 = vector.shape_cast %1672 : vector<1x16x16xf32> to vector<16x16xf32>
    %c15_403 = arith.constant 15 : index
    %1674 = memref.load %arg8[%c15_403] : memref<144xf32, #tpu.memory_space<smem>>
    %1675 = vector.broadcast %1674 : f32 to vector<16x16xf32>
    %1676 = arith.mulf %1673, %1675 : vector<16x16xf32>
    %1677 = arith.addf %1659, %1676 : vector<16x16xf32>
    %c51_404 = arith.constant 51 : index
    %1678 = memref.load %arg8[%c51_404] : memref<144xf32, #tpu.memory_space<smem>>
    %1679 = vector.broadcast %1678 : f32 to vector<16x16xf32>
    %1680 = arith.mulf %1673, %1679 : vector<16x16xf32>
    %1681 = arith.addf %1663, %1680 : vector<16x16xf32>
    %c87_405 = arith.constant 87 : index
    %1682 = memref.load %arg8[%c87_405] : memref<144xf32, #tpu.memory_space<smem>>
    %1683 = vector.broadcast %1682 : f32 to vector<16x16xf32>
    %1684 = arith.mulf %1673, %1683 : vector<16x16xf32>
    %1685 = arith.addf %1667, %1684 : vector<16x16xf32>
    %c123_406 = arith.constant 123 : index
    %1686 = memref.load %arg8[%c123_406] : memref<144xf32, #tpu.memory_space<smem>>
    %1687 = vector.broadcast %1686 : f32 to vector<16x16xf32>
    %1688 = arith.mulf %1673, %1687 : vector<16x16xf32>
    %1689 = arith.addf %1671, %1688 : vector<16x16xf32>
    %1690 = vector.extract_strided_slice %1653 {offsets = [2, 0, 0], sizes = [1, 16, 16], strides = [1, 1, 1]} : vector<4x16x16xf32> to vector<1x16x16xf32>
    %1691 = vector.shape_cast %1690 : vector<1x16x16xf32> to vector<16x16xf32>
    %c24_407 = arith.constant 24 : index
    %1692 = memref.load %arg8[%c24_407] : memref<144xf32, #tpu.memory_space<smem>>
    %1693 = vector.broadcast %1692 : f32 to vector<16x16xf32>
    %1694 = arith.mulf %1691, %1693 : vector<16x16xf32>
    %1695 = arith.addf %1677, %1694 : vector<16x16xf32>
    %c60_408 = arith.constant 60 : index
    %1696 = memref.load %arg8[%c60_408] : memref<144xf32, #tpu.memory_space<smem>>
    %1697 = vector.broadcast %1696 : f32 to vector<16x16xf32>
    %1698 = arith.mulf %1691, %1697 : vector<16x16xf32>
    %1699 = arith.addf %1681, %1698 : vector<16x16xf32>
    %c96_409 = arith.constant 96 : index
    %1700 = memref.load %arg8[%c96_409] : memref<144xf32, #tpu.memory_space<smem>>
    %1701 = vector.broadcast %1700 : f32 to vector<16x16xf32>
    %1702 = arith.mulf %1691, %1701 : vector<16x16xf32>
    %1703 = arith.addf %1685, %1702 : vector<16x16xf32>
    %c132_410 = arith.constant 132 : index
    %1704 = memref.load %arg8[%c132_410] : memref<144xf32, #tpu.memory_space<smem>>
    %1705 = vector.broadcast %1704 : f32 to vector<16x16xf32>
    %1706 = arith.mulf %1691, %1705 : vector<16x16xf32>
    %1707 = arith.addf %1689, %1706 : vector<16x16xf32>
    %1708 = vector.extract_strided_slice %1653 {offsets = [3, 0, 0], sizes = [1, 16, 16], strides = [1, 1, 1]} : vector<4x16x16xf32> to vector<1x16x16xf32>
    %1709 = vector.shape_cast %1708 : vector<1x16x16xf32> to vector<16x16xf32>
    %c33_411 = arith.constant 33 : index
    %1710 = memref.load %arg8[%c33_411] : memref<144xf32, #tpu.memory_space<smem>>
    %1711 = vector.broadcast %1710 : f32 to vector<16x16xf32>
    %1712 = arith.mulf %1709, %1711 : vector<16x16xf32>
    %1713 = arith.addf %1695, %1712 : vector<16x16xf32>
    %c69_412 = arith.constant 69 : index
    %1714 = memref.load %arg8[%c69_412] : memref<144xf32, #tpu.memory_space<smem>>
    %1715 = vector.broadcast %1714 : f32 to vector<16x16xf32>
    %1716 = arith.mulf %1709, %1715 : vector<16x16xf32>
    %1717 = arith.addf %1699, %1716 : vector<16x16xf32>
    %c105_413 = arith.constant 105 : index
    %1718 = memref.load %arg8[%c105_413] : memref<144xf32, #tpu.memory_space<smem>>
    %1719 = vector.broadcast %1718 : f32 to vector<16x16xf32>
    %1720 = arith.mulf %1709, %1719 : vector<16x16xf32>
    %1721 = arith.addf %1703, %1720 : vector<16x16xf32>
    %c141_414 = arith.constant 141 : index
    %1722 = memref.load %arg8[%c141_414] : memref<144xf32, #tpu.memory_space<smem>>
    %1723 = vector.broadcast %1722 : f32 to vector<16x16xf32>
    %1724 = arith.mulf %1709, %1723 : vector<16x16xf32>
    %1725 = arith.addf %1707, %1724 : vector<16x16xf32>
    %c0_415 = arith.constant 0 : index
    %c2_416 = arith.constant 2 : index
    %c1_417 = arith.constant 1 : index
    %1726 = vector.load %arg11[%c0_415, %c2_416, %c1_417] : memref<4x18x18xf32, #tpu.memory_space<vmem>>, vector<4x16x16xf32>
    %1727 = vector.extract_strided_slice %1726 {offsets = [0, 0, 0], sizes = [1, 16, 16], strides = [1, 1, 1]} : vector<4x16x16xf32> to vector<1x16x16xf32>
    %1728 = vector.shape_cast %1727 : vector<1x16x16xf32> to vector<16x16xf32>
    %c7_418 = arith.constant 7 : index
    %1729 = memref.load %arg8[%c7_418] : memref<144xf32, #tpu.memory_space<smem>>
    %1730 = vector.broadcast %1729 : f32 to vector<16x16xf32>
    %1731 = arith.mulf %1728, %1730 : vector<16x16xf32>
    %1732 = arith.addf %1713, %1731 : vector<16x16xf32>
    %c43_419 = arith.constant 43 : index
    %1733 = memref.load %arg8[%c43_419] : memref<144xf32, #tpu.memory_space<smem>>
    %1734 = vector.broadcast %1733 : f32 to vector<16x16xf32>
    %1735 = arith.mulf %1728, %1734 : vector<16x16xf32>
    %1736 = arith.addf %1717, %1735 : vector<16x16xf32>
    %c79_420 = arith.constant 79 : index
    %1737 = memref.load %arg8[%c79_420] : memref<144xf32, #tpu.memory_space<smem>>
    %1738 = vector.broadcast %1737 : f32 to vector<16x16xf32>
    %1739 = arith.mulf %1728, %1738 : vector<16x16xf32>
    %1740 = arith.addf %1721, %1739 : vector<16x16xf32>
    %c115_421 = arith.constant 115 : index
    %1741 = memref.load %arg8[%c115_421] : memref<144xf32, #tpu.memory_space<smem>>
    %1742 = vector.broadcast %1741 : f32 to vector<16x16xf32>
    %1743 = arith.mulf %1728, %1742 : vector<16x16xf32>
    %1744 = arith.addf %1725, %1743 : vector<16x16xf32>
    %1745 = vector.extract_strided_slice %1726 {offsets = [1, 0, 0], sizes = [1, 16, 16], strides = [1, 1, 1]} : vector<4x16x16xf32> to vector<1x16x16xf32>
    %1746 = vector.shape_cast %1745 : vector<1x16x16xf32> to vector<16x16xf32>
    %c16_422 = arith.constant 16 : index
    %1747 = memref.load %arg8[%c16_422] : memref<144xf32, #tpu.memory_space<smem>>
    %1748 = vector.broadcast %1747 : f32 to vector<16x16xf32>
    %1749 = arith.mulf %1746, %1748 : vector<16x16xf32>
    %1750 = arith.addf %1732, %1749 : vector<16x16xf32>
    %c52_423 = arith.constant 52 : index
    %1751 = memref.load %arg8[%c52_423] : memref<144xf32, #tpu.memory_space<smem>>
    %1752 = vector.broadcast %1751 : f32 to vector<16x16xf32>
    %1753 = arith.mulf %1746, %1752 : vector<16x16xf32>
    %1754 = arith.addf %1736, %1753 : vector<16x16xf32>
    %c88_424 = arith.constant 88 : index
    %1755 = memref.load %arg8[%c88_424] : memref<144xf32, #tpu.memory_space<smem>>
    %1756 = vector.broadcast %1755 : f32 to vector<16x16xf32>
    %1757 = arith.mulf %1746, %1756 : vector<16x16xf32>
    %1758 = arith.addf %1740, %1757 : vector<16x16xf32>
    %c124_425 = arith.constant 124 : index
    %1759 = memref.load %arg8[%c124_425] : memref<144xf32, #tpu.memory_space<smem>>
    %1760 = vector.broadcast %1759 : f32 to vector<16x16xf32>
    %1761 = arith.mulf %1746, %1760 : vector<16x16xf32>
    %1762 = arith.addf %1744, %1761 : vector<16x16xf32>
    %1763 = vector.extract_strided_slice %1726 {offsets = [2, 0, 0], sizes = [1, 16, 16], strides = [1, 1, 1]} : vector<4x16x16xf32> to vector<1x16x16xf32>
    %1764 = vector.shape_cast %1763 : vector<1x16x16xf32> to vector<16x16xf32>
    %c25_426 = arith.constant 25 : index
    %1765 = memref.load %arg8[%c25_426] : memref<144xf32, #tpu.memory_space<smem>>
    %1766 = vector.broadcast %1765 : f32 to vector<16x16xf32>
    %1767 = arith.mulf %1764, %1766 : vector<16x16xf32>
    %1768 = arith.addf %1750, %1767 : vector<16x16xf32>
    %c61_427 = arith.constant 61 : index
    %1769 = memref.load %arg8[%c61_427] : memref<144xf32, #tpu.memory_space<smem>>
    %1770 = vector.broadcast %1769 : f32 to vector<16x16xf32>
    %1771 = arith.mulf %1764, %1770 : vector<16x16xf32>
    %1772 = arith.addf %1754, %1771 : vector<16x16xf32>
    %c97_428 = arith.constant 97 : index
    %1773 = memref.load %arg8[%c97_428] : memref<144xf32, #tpu.memory_space<smem>>
    %1774 = vector.broadcast %1773 : f32 to vector<16x16xf32>
    %1775 = arith.mulf %1764, %1774 : vector<16x16xf32>
    %1776 = arith.addf %1758, %1775 : vector<16x16xf32>
    %c133_429 = arith.constant 133 : index
    %1777 = memref.load %arg8[%c133_429] : memref<144xf32, #tpu.memory_space<smem>>
    %1778 = vector.broadcast %1777 : f32 to vector<16x16xf32>
    %1779 = arith.mulf %1764, %1778 : vector<16x16xf32>
    %1780 = arith.addf %1762, %1779 : vector<16x16xf32>
    %1781 = vector.extract_strided_slice %1726 {offsets = [3, 0, 0], sizes = [1, 16, 16], strides = [1, 1, 1]} : vector<4x16x16xf32> to vector<1x16x16xf32>
    %1782 = vector.shape_cast %1781 : vector<1x16x16xf32> to vector<16x16xf32>
    %c34_430 = arith.constant 34 : index
    %1783 = memref.load %arg8[%c34_430] : memref<144xf32, #tpu.memory_space<smem>>
    %1784 = vector.broadcast %1783 : f32 to vector<16x16xf32>
    %1785 = arith.mulf %1782, %1784 : vector<16x16xf32>
    %1786 = arith.addf %1768, %1785 : vector<16x16xf32>
    %c70_431 = arith.constant 70 : index
    %1787 = memref.load %arg8[%c70_431] : memref<144xf32, #tpu.memory_space<smem>>
    %1788 = vector.broadcast %1787 : f32 to vector<16x16xf32>
    %1789 = arith.mulf %1782, %1788 : vector<16x16xf32>
    %1790 = arith.addf %1772, %1789 : vector<16x16xf32>
    %c106_432 = arith.constant 106 : index
    %1791 = memref.load %arg8[%c106_432] : memref<144xf32, #tpu.memory_space<smem>>
    %1792 = vector.broadcast %1791 : f32 to vector<16x16xf32>
    %1793 = arith.mulf %1782, %1792 : vector<16x16xf32>
    %1794 = arith.addf %1776, %1793 : vector<16x16xf32>
    %c142_433 = arith.constant 142 : index
    %1795 = memref.load %arg8[%c142_433] : memref<144xf32, #tpu.memory_space<smem>>
    %1796 = vector.broadcast %1795 : f32 to vector<16x16xf32>
    %1797 = arith.mulf %1782, %1796 : vector<16x16xf32>
    %1798 = arith.addf %1780, %1797 : vector<16x16xf32>
    %c0_434 = arith.constant 0 : index
    %c2_435 = arith.constant 2 : index
    %c2_436 = arith.constant 2 : index
    %1799 = vector.load %arg11[%c0_434, %c2_435, %c2_436] : memref<4x18x18xf32, #tpu.memory_space<vmem>>, vector<4x16x16xf32>
    %1800 = vector.extract_strided_slice %1799 {offsets = [0, 0, 0], sizes = [1, 16, 16], strides = [1, 1, 1]} : vector<4x16x16xf32> to vector<1x16x16xf32>
    %1801 = vector.shape_cast %1800 : vector<1x16x16xf32> to vector<16x16xf32>
    %c8_437 = arith.constant 8 : index
    %1802 = memref.load %arg8[%c8_437] : memref<144xf32, #tpu.memory_space<smem>>
    %1803 = vector.broadcast %1802 : f32 to vector<16x16xf32>
    %1804 = arith.mulf %1801, %1803 : vector<16x16xf32>
    %1805 = arith.addf %1786, %1804 : vector<16x16xf32>
    %c44_438 = arith.constant 44 : index
    %1806 = memref.load %arg8[%c44_438] : memref<144xf32, #tpu.memory_space<smem>>
    %1807 = vector.broadcast %1806 : f32 to vector<16x16xf32>
    %1808 = arith.mulf %1801, %1807 : vector<16x16xf32>
    %1809 = arith.addf %1790, %1808 : vector<16x16xf32>
    %c80_439 = arith.constant 80 : index
    %1810 = memref.load %arg8[%c80_439] : memref<144xf32, #tpu.memory_space<smem>>
    %1811 = vector.broadcast %1810 : f32 to vector<16x16xf32>
    %1812 = arith.mulf %1801, %1811 : vector<16x16xf32>
    %1813 = arith.addf %1794, %1812 : vector<16x16xf32>
    %c116_440 = arith.constant 116 : index
    %1814 = memref.load %arg8[%c116_440] : memref<144xf32, #tpu.memory_space<smem>>
    %1815 = vector.broadcast %1814 : f32 to vector<16x16xf32>
    %1816 = arith.mulf %1801, %1815 : vector<16x16xf32>
    %1817 = arith.addf %1798, %1816 : vector<16x16xf32>
    %1818 = vector.extract_strided_slice %1799 {offsets = [1, 0, 0], sizes = [1, 16, 16], strides = [1, 1, 1]} : vector<4x16x16xf32> to vector<1x16x16xf32>
    %1819 = vector.shape_cast %1818 : vector<1x16x16xf32> to vector<16x16xf32>
    %c17_441 = arith.constant 17 : index
    %1820 = memref.load %arg8[%c17_441] : memref<144xf32, #tpu.memory_space<smem>>
    %1821 = vector.broadcast %1820 : f32 to vector<16x16xf32>
    %1822 = arith.mulf %1819, %1821 : vector<16x16xf32>
    %1823 = arith.addf %1805, %1822 : vector<16x16xf32>
    %c53_442 = arith.constant 53 : index
    %1824 = memref.load %arg8[%c53_442] : memref<144xf32, #tpu.memory_space<smem>>
    %1825 = vector.broadcast %1824 : f32 to vector<16x16xf32>
    %1826 = arith.mulf %1819, %1825 : vector<16x16xf32>
    %1827 = arith.addf %1809, %1826 : vector<16x16xf32>
    %c89_443 = arith.constant 89 : index
    %1828 = memref.load %arg8[%c89_443] : memref<144xf32, #tpu.memory_space<smem>>
    %1829 = vector.broadcast %1828 : f32 to vector<16x16xf32>
    %1830 = arith.mulf %1819, %1829 : vector<16x16xf32>
    %1831 = arith.addf %1813, %1830 : vector<16x16xf32>
    %c125_444 = arith.constant 125 : index
    %1832 = memref.load %arg8[%c125_444] : memref<144xf32, #tpu.memory_space<smem>>
    %1833 = vector.broadcast %1832 : f32 to vector<16x16xf32>
    %1834 = arith.mulf %1819, %1833 : vector<16x16xf32>
    %1835 = arith.addf %1817, %1834 : vector<16x16xf32>
    %1836 = vector.extract_strided_slice %1799 {offsets = [2, 0, 0], sizes = [1, 16, 16], strides = [1, 1, 1]} : vector<4x16x16xf32> to vector<1x16x16xf32>
    %1837 = vector.shape_cast %1836 : vector<1x16x16xf32> to vector<16x16xf32>
    %c26_445 = arith.constant 26 : index
    %1838 = memref.load %arg8[%c26_445] : memref<144xf32, #tpu.memory_space<smem>>
    %1839 = vector.broadcast %1838 : f32 to vector<16x16xf32>
    %1840 = arith.mulf %1837, %1839 : vector<16x16xf32>
    %1841 = arith.addf %1823, %1840 : vector<16x16xf32>
    %c62_446 = arith.constant 62 : index
    %1842 = memref.load %arg8[%c62_446] : memref<144xf32, #tpu.memory_space<smem>>
    %1843 = vector.broadcast %1842 : f32 to vector<16x16xf32>
    %1844 = arith.mulf %1837, %1843 : vector<16x16xf32>
    %1845 = arith.addf %1827, %1844 : vector<16x16xf32>
    %c98_447 = arith.constant 98 : index
    %1846 = memref.load %arg8[%c98_447] : memref<144xf32, #tpu.memory_space<smem>>
    %1847 = vector.broadcast %1846 : f32 to vector<16x16xf32>
    %1848 = arith.mulf %1837, %1847 : vector<16x16xf32>
    %1849 = arith.addf %1831, %1848 : vector<16x16xf32>
    %c134_448 = arith.constant 134 : index
    %1850 = memref.load %arg8[%c134_448] : memref<144xf32, #tpu.memory_space<smem>>
    %1851 = vector.broadcast %1850 : f32 to vector<16x16xf32>
    %1852 = arith.mulf %1837, %1851 : vector<16x16xf32>
    %1853 = arith.addf %1835, %1852 : vector<16x16xf32>
    %1854 = vector.extract_strided_slice %1799 {offsets = [3, 0, 0], sizes = [1, 16, 16], strides = [1, 1, 1]} : vector<4x16x16xf32> to vector<1x16x16xf32>
    %1855 = vector.shape_cast %1854 : vector<1x16x16xf32> to vector<16x16xf32>
    %c35_449 = arith.constant 35 : index
    %1856 = memref.load %arg8[%c35_449] : memref<144xf32, #tpu.memory_space<smem>>
    %1857 = vector.broadcast %1856 : f32 to vector<16x16xf32>
    %1858 = arith.mulf %1855, %1857 : vector<16x16xf32>
    %1859 = arith.addf %1841, %1858 : vector<16x16xf32>
    %c71_450 = arith.constant 71 : index
    %1860 = memref.load %arg8[%c71_450] : memref<144xf32, #tpu.memory_space<smem>>
    %1861 = vector.broadcast %1860 : f32 to vector<16x16xf32>
    %1862 = arith.mulf %1855, %1861 : vector<16x16xf32>
    %1863 = arith.addf %1845, %1862 : vector<16x16xf32>
    %c107_451 = arith.constant 107 : index
    %1864 = memref.load %arg8[%c107_451] : memref<144xf32, #tpu.memory_space<smem>>
    %1865 = vector.broadcast %1864 : f32 to vector<16x16xf32>
    %1866 = arith.mulf %1855, %1865 : vector<16x16xf32>
    %1867 = arith.addf %1849, %1866 : vector<16x16xf32>
    %c143_452 = arith.constant 143 : index
    %1868 = memref.load %arg8[%c143_452] : memref<144xf32, #tpu.memory_space<smem>>
    %1869 = vector.broadcast %1868 : f32 to vector<16x16xf32>
    %1870 = arith.mulf %1855, %1869 : vector<16x16xf32>
    %1871 = arith.addf %1853, %1870 : vector<16x16xf32>
    %c0_453 = arith.constant 0 : index
    %1872 = memref.load %arg9[%c0_453] : memref<4xf32, #tpu.memory_space<smem>>
    %1873 = vector.broadcast %1872 : f32 to vector<16x16xf32>
    %1874 = arith.addf %1859, %1873 : vector<16x16xf32>
    %c1_454 = arith.constant 1 : index
    %1875 = memref.load %arg9[%c1_454] : memref<4xf32, #tpu.memory_space<smem>>
    %1876 = vector.broadcast %1875 : f32 to vector<16x16xf32>
    %1877 = arith.addf %1863, %1876 : vector<16x16xf32>
    %c2_455 = arith.constant 2 : index
    %1878 = memref.load %arg9[%c2_455] : memref<4xf32, #tpu.memory_space<smem>>
    %1879 = vector.broadcast %1878 : f32 to vector<16x16xf32>
    %1880 = arith.addf %1867, %1879 : vector<16x16xf32>
    %c3_456 = arith.constant 3 : index
    %1881 = memref.load %arg9[%c3_456] : memref<4xf32, #tpu.memory_space<smem>>
    %1882 = vector.broadcast %1881 : f32 to vector<16x16xf32>
    %1883 = arith.addf %1871, %1882 : vector<16x16xf32>
    %1884 = arith.addf %1874, %3 : vector<16x16xf32>
    %c0_457 = arith.constant 0 : index
    %c0_458 = arith.constant 0 : index
    %c0_459 = arith.constant 0 : index
    %c0_460 = arith.constant 0 : index
    %1885 = vector.load %arg10[%c0_457, %c0_458, %c0_459, %c0_460] : memref<1x4x16x16xf32, #tpu.memory_space<vmem>>, vector<1x1x16x16xf32>
    %1886 = vector.shape_cast %1885 : vector<1x1x16x16xf32> to vector<16x16xf32>
    %1887 = vector.shape_cast %1884 : vector<16x16xf32> to vector<1x1x16x16xf32>
    tpu.vector_store %arg10[%c0_457, %c0_458, %c0_459, %c0_460], %1887 {strides = array<i32>} : memref<1x4x16x16xf32, #tpu.memory_space<vmem>>, vector<1x1x16x16xf32>,
    %1888 = arith.addf %1877, %5 : vector<16x16xf32>
    %c0_461 = arith.constant 0 : index
    %c1_462 = arith.constant 1 : index
    %c0_463 = arith.constant 0 : index
    %c0_464 = arith.constant 0 : index
    %1889 = vector.load %arg10[%c0_461, %c1_462, %c0_463, %c0_464] : memref<1x4x16x16xf32, #tpu.memory_space<vmem>>, vector<1x1x16x16xf32>
    %1890 = vector.shape_cast %1889 : vector<1x1x16x16xf32> to vector<16x16xf32>
    %1891 = vector.shape_cast %1888 : vector<16x16xf32> to vector<1x1x16x16xf32>
    tpu.vector_store %arg10[%c0_461, %c1_462, %c0_463, %c0_464], %1891 {strides = array<i32>} : memref<1x4x16x16xf32, #tpu.memory_space<vmem>>, vector<1x1x16x16xf32>,
    %1892 = arith.addf %1880, %7 : vector<16x16xf32>
    %c0_465 = arith.constant 0 : index
    %c2_466 = arith.constant 2 : index
    %c0_467 = arith.constant 0 : index
    %c0_468 = arith.constant 0 : index
    %1893 = vector.load %arg10[%c0_465, %c2_466, %c0_467, %c0_468] : memref<1x4x16x16xf32, #tpu.memory_space<vmem>>, vector<1x1x16x16xf32>
    %1894 = vector.shape_cast %1893 : vector<1x1x16x16xf32> to vector<16x16xf32>
    %1895 = vector.shape_cast %1892 : vector<16x16xf32> to vector<1x1x16x16xf32>
    tpu.vector_store %arg10[%c0_465, %c2_466, %c0_467, %c0_468], %1895 {strides = array<i32>} : memref<1x4x16x16xf32, #tpu.memory_space<vmem>>, vector<1x1x16x16xf32>,
    %1896 = arith.addf %1883, %9 : vector<16x16xf32>
    %c0_469 = arith.constant 0 : index
    %c3_470 = arith.constant 3 : index
    %c0_471 = arith.constant 0 : index
    %c0_472 = arith.constant 0 : index
    %1897 = vector.load %arg10[%c0_469, %c3_470, %c0_471, %c0_472] : memref<1x4x16x16xf32, #tpu.memory_space<vmem>>, vector<1x1x16x16xf32>
    %1898 = vector.shape_cast %1897 : vector<1x1x16x16xf32> to vector<16x16xf32>
    %1899 = vector.shape_cast %1896 : vector<16x16xf32> to vector<1x1x16x16xf32>
    tpu.vector_store %arg10[%c0_469, %c3_470, %c0_471, %c0_472], %1899 {strides = array<i32>} : memref<1x4x16x16xf32, #tpu.memory_space<vmem>>, vector<1x1x16x16xf32>,
    return
  }
  func.func @transform_0(%arg0: i32) -> (i32, i32, i32, i32) {
    %c0_i32 = arith.constant 0 : i32
    %c0_i32_0 = arith.constant 0 : i32
    %c0_i32_1 = arith.constant 0 : i32
    %c0_i32_2 = arith.constant 0 : i32
    return %arg0, %c0_i32, %c0_i32_0, %c0_i32_1 : i32, i32, i32, i32
  }
  func.func @transform_1(%arg0: i32) -> (i32, i32) {
    %c0_i32 = arith.constant 0 : i32
    %c0_i32_0 = arith.constant 0 : i32
    %c0_i32_1 = arith.constant 0 : i32
    return %c0_i32, %c0_i32_0 : i32, i32
  }
  func.func @transform_2(%arg0: i32) -> (i32, i32) {
    %c0_i32 = arith.constant 0 : i32
    %c0_i32_0 = arith.constant 0 : i32
    %c0_i32_1 = arith.constant 0 : i32
    return %c0_i32, %c0_i32_0 : i32, i32
  }
  func.func @transform_3(%arg0: i32) -> (i32, i32) {
    %c0_i32 = arith.constant 0 : i32
    %c0_i32_0 = arith.constant 0 : i32
    %c0_i32_1 = arith.constant 0 : i32
    return %c0_i32, %c0_i32_0 : i32, i32
  }
  func.func @transform_4(%arg0: i32) -> (i32, i32) {
    %c0_i32 = arith.constant 0 : i32
    %c0_i32_0 = arith.constant 0 : i32
    %c0_i32_1 = arith.constant 0 : i32
    return %c0_i32, %c0_i32_0 : i32, i32
  }
  func.func @transform_5(%arg0: i32) -> i32 {
    %c0_i32 = arith.constant 0 : i32
    %c0_i32_0 = arith.constant 0 : i32
    return %c0_i32 : i32
  }
  func.func @transform_6(%arg0: i32) -> i32 {
    %c0_i32 = arith.constant 0 : i32
    %c0_i32_0 = arith.constant 0 : i32
    return %c0_i32 : i32
  }
  func.func @transform_7(%arg0: i32) -> i32 {
    %c0_i32 = arith.constant 0 : i32
    %c0_i32_0 = arith.constant 0 : i32
    return %c0_i32 : i32
  }
  func.func @transform_8(%arg0: i32) -> i32 {
    %c0_i32 = arith.constant 0 : i32
    %c0_i32_0 = arith.constant 0 : i32
    return %c0_i32 : i32
  }
  func.func @transform_9(%arg0: i32) -> (i32, i32, i32, i32) {
    %c0_i32 = arith.constant 0 : i32
    %c0_i32_0 = arith.constant 0 : i32
    %c0_i32_1 = arith.constant 0 : i32
    %c0_i32_2 = arith.constant 0 : i32
    return %arg0, %c0_i32, %c0_i32_0, %c0_i32_1 : i32, i32, i32, i32
  }
}

</mosaic_0001>

<llo_original>
// kernel: tpu_custom_call.1
$region0: #{tpu_custom_call.1}
  #allocation0 [shape = 'u32[]', space=smem, size = 0x4, offset = 0x4, fixed_abs, tag = 'smem constant byte address 0x4 - core index']
  #allocation1 [shape = 'u32[72,128]{1,0:T(1,128)}', space=vmem, size = 0x9000, scoped, tag = 'internal scratch']
  #allocation2 [shape = 'f32[4,18,18]{2,1,0:T(8,128)}', space=vmem, size = 0xc000, scoped, tag = 'scratch operand']
  %s0 = inlined_call_operand.hbm [shape: f32[2,4,16,16], index: 0, kind: input, shape index: {}]
  %s1 = inlined_call_operand.vmem [shape: f32[16,1], index: 1, kind: input, shape index: {}]
  %s2 = inlined_call_operand.vmem [shape: f32[16,1], index: 2, kind: input, shape index: {}]
  %s3 = inlined_call_operand.vmem [shape: f32[16,1], index: 3, kind: input, shape index: {}]
  %s4 = inlined_call_operand.vmem [shape: f32[16,1], index: 4, kind: input, shape index: {}]
  %s5 = inlined_call_operand.vmem [shape: f32[144], index: 5, kind: input, shape index: {}]
  %s6 = inlined_call_operand.vmem [shape: f32[4], index: 6, kind: input, shape index: {}]
  %s7 = inlined_call_operand.vmem [shape: f32[144], index: 7, kind: input, shape index: {}]
  %s8 = inlined_call_operand.vmem [shape: f32[4], index: 8, kind: input, shape index: {}]
  %s9 = inlined_call_operand.hbm [shape: f32[2,4,16,16], index: 9, kind: output, shape index: {}]
  %s10 = sld [smem:[#allocation0]]
  $region89: #{tpu_custom_call.1} parent=0
    _
  %s12 = ssub.s32 1, %s10
  %s13 = scalar_select 0, %s12, %s10
  $region1: #{tpu_custom_call.1} parent=0
    #allocation3 [shape = 'u8[65536]{0}', space=vmem, size = 0x10000, scoped, tag = 'input window, operand 0']
    #allocation4 [shape = 's32[2]{0}', space=sflag, size = 0x8, scoped, tag = 'scoped memory for tpu_custom_call.1']
    #allocation5 [shape = 's32[2]{0}', space=sflag, size = 0x8, scoped, tag = 'scoped memory for tpu_custom_call.1']
    #allocation6 [shape = 's32[2]{0}', space=sflag, size = 0x8, scoped, tag = 'scoped memory for tpu_custom_call.1']
    #allocation7 [shape = 'u8[1024]{0}', space=smem, size = 0x400, scoped, tag = 'input window, operand 5, single buffered']
    #allocation8 [shape = 'u8[512]{0}', space=smem, size = 0x200, scoped, tag = 'input window, operand 6, single buffered']
    #allocation9 [shape = 's32[1]{0}', space=sflag, size = 0x4, scoped, tag = 'scoped memory for tpu_custom_call.1']
    #allocation10 [shape = 'u8[1024]{0}', space=smem, size = 0x400, scoped, tag = 'input window, operand 7, single buffered']
    #allocation11 [shape = 'u8[512]{0}', space=smem, size = 0x200, scoped, tag = 'input window, operand 8, single buffered']
    #allocation12 [shape = 's32[1]{0}', space=sflag, size = 0x4, scoped, tag = 'scoped memory for tpu_custom_call.1']
    #allocation13 [shape = 'u8[65536]{0}', space=vmem, size = 0x10000, scoped, tag = 'output window, operand 0']
    %14 = vsyncpa [#allocation4], 0
    %s15 = scalar_lea.sflag [#allocation4], 1
    %16 = vsyncpa %s15, 0
    %17 = vsyncpa [#allocation6], 0
    %18 = vsyncpa [#allocation9], 0
    %19 = vsyncpa [#allocation12], 0
    %20 = vsyncpa [#allocation5], 0
    %s21 = scalar_lea.sflag [#allocation5], 1
    %22 = vsyncpa %s21, 0
    loop: start=0, step=1, limit=4
    $region2: #{tpu_custom_call.1} parent=1 // loop_pre_header
      _
    $region3: #{tpu_custom_call.1} parent=1 // loop_header
      %s24 = sphi 0, %s28
      %p25 = scmp.ge.s32.totalorder %s24, 4
      %s34 = sphi 0, %s36
      %s37 = sphi 0, %s34
      %s38 = sphi 0, %s37
      %s54 = sphi 0, %s38
      %s58 = sphi 0, %s58
      %s60 = sphi 0, %s58
      %s61 = sphi 0, %s60
      %s75 = sphi 0, %s61
      %s79 = sphi 0, %s79
      %s81 = sphi 0, %s79
      %s82 = sphi 0, %s81
      %s96 = sphi 0, %s82
      %s100 = sphi 0, %s100
      %s102 = sphi 0, %s100
      %s103 = sphi 0, %s102
      %s117 = sphi 0, %s103
      %s121 = sphi 0, %s121
      %s123 = sphi 0, %s121
      %s124 = sphi 0, %s123
      %s138 = sphi 0, %s124
      %s142 = sphi 0, %s142
      %s144 = sphi 0, %s142
      %s145 = sphi 0, %s144
      %s159 = sphi 0, %s145
      %s163 = sphi 0, %s163
      %s165 = sphi 0, %s163
      %s166 = sphi 0, %s165
      %s180 = sphi 0, %s166
      %s184 = sphi 0, %s184
      %s186 = sphi 0, %s184
      %s187 = sphi 0, %s186
      %s201 = sphi 0, %s187
      %s205 = sphi 0, %s205
      %s207 = sphi 0, %s205
      %s208 = sphi 0, %s207
      %s222 = sphi 0, %s208
      %s228 = sphi 0, %s230
      %s231 = sphi 0, %s228
      %s232 = sphi 0, %s231
      %s248 = sphi 0, %s232
    $region4: #{tpu_custom_call.1} parent=1 // loop_header_branch
      %27 = sbr.rel (%p25) target = $region8
    $region5: #{tpu_custom_call.1} parent=1 // loop_body
      %s29 = ssub.s32 %s24, 1
      %s30 = ssub.s32 %s24, 2
      %s31 = sadd.s32 %s24, 1
      %s32 = ssub.s32 %s24, %s31
      %p33 = scmp.eq.s32.totalorder %s32, 0
      %s35 = sadd.s32 %s34, 1
      %s36 = scalar_select %p33, %s34, %s35
      %p39 = pneg %p33
      %p40 = scmp.eq.s32.totalorder %s24, 1
      %p41 = por %p39, %p40
      %p42 = scmp.ne.s32.totalorder %s34, %s37
      %p43 = scmp.eq.s32.totalorder %s24, 0
      %p44 = por %p42, %p43
      %p45 = scmp.ne.s32.totalorder %s34, %s37
      %p46 = scmp.eq.s32.totalorder %s29, 1
      %p47 = por %p45, %p46
      %p48 = scmp.ne.s32.totalorder %s37, %s38
      %p49 = scmp.eq.s32.totalorder %s29, 0
      %p50 = por %p48, %p49
      %p51 = scmp.ne.s32.totalorder %s37, %s38
      %p52 = scmp.eq.s32.totalorder %s30, 1
      %p53 = por %p51, %p52
      %p55 = scmp.ne.s32.totalorder %s38, %s54
      %p56 = scmp.eq.s32.totalorder %s30, 0
      %p57 = por %p55, %p56
      %s59 = sadd.s32 %s58, 1
      %p62 = scmp.eq.s32.totalorder %s24, 1
      %p63 = scmp.ne.s32.totalorder %s58, %s60
      %p64 = scmp.eq.s32.totalorder %s24, 0
      %p65 = por %p63, %p64
      %p66 = scmp.ne.s32.totalorder %s58, %s60
      %p67 = scmp.eq.s32.totalorder %s29, 1
      %p68 = por %p66, %p67
      %p69 = scmp.ne.s32.totalorder %s60, %s61
      %p70 = scmp.eq.s32.totalorder %s29, 0
      %p71 = por %p69, %p70
      %p72 = scmp.ne.s32.totalorder %s60, %s61
      %p73 = scmp.eq.s32.totalorder %s30, 1
      %p74 = por %p72, %p73
      %p76 = scmp.ne.s32.totalorder %s61, %s75
      %p77 = scmp.eq.s32.totalorder %s30, 0
      %p78 = por %p76, %p77
      %s80 = sadd.s32 %s79, 1
      %p83 = scmp.eq.s32.totalorder %s24, 1
      %p84 = scmp.ne.s32.totalorder %s79, %s81
      %p85 = scmp.eq.s32.totalorder %s24, 0
      %p86 = por %p84, %p85
      %p87 = scmp.ne.s32.totalorder %s79, %s81
      %p88 = scmp.eq.s32.totalorder %s29, 1
      %p89 = por %p87, %p88
      %p90 = scmp.ne.s32.totalorder %s81, %s82
      %p91 = scmp.eq.s32.totalorder %s29, 0
      %p92 = por %p90, %p91
      %p93 = scmp.ne.s32.totalorder %s81, %s82
      %p94 = scmp.eq.s32.totalorder %s30, 1
      %p95 = por %p93, %p94
      %p97 = scmp.ne.s32.totalorder %s82, %s96
      %p98 = scmp.eq.s32.totalorder %s30, 0
      %p99 = por %p97, %p98
      %s101 = sadd.s32 %s100, 1
      %p104 = scmp.eq.s32.totalorder %s24, 1
      %p105 = scmp.ne.s32.totalorder %s100, %s102
      %p106 = scmp.eq.s32.totalorder %s24, 0
      %p107 = por %p105, %p106
      %p108 = scmp.ne.s32.totalorder %s100, %s102
      %p109 = scmp.eq.s32.totalorder %s29, 1
      %p110 = por %p108, %p109
      %p111 = scmp.ne.s32.totalorder %s102, %s103
      %p112 = scmp.eq.s32.totalorder %s29, 0
      %p113 = por %p111, %p112
      %p114 = scmp.ne.s32.totalorder %s102, %s103
      %p115 = scmp.eq.s32.totalorder %s30, 1
      %p116 = por %p114, %p115
      %p118 = scmp.ne.s32.totalorder %s103, %s117
      %p119 = scmp.eq.s32.totalorder %s30, 0
      %p120 = por %p118, %p119
      %s122 = sadd.s32 %s121, 1
      %p125 = scmp.eq.s32.totalorder %s24, 1
      %p126 = scmp.ne.s32.totalorder %s121, %s123
      %p127 = scmp.eq.s32.totalorder %s24, 0
      %p128 = por %p126, %p127
      %p129 = scmp.ne.s32.totalorder %s121, %s123
      %p130 = scmp.eq.s32.totalorder %s29, 1
      %p131 = por %p129, %p130
      %p132 = scmp.ne.s32.totalorder %s123, %s124
      %p133 = scmp.eq.s32.totalorder %s29, 0
      %p134 = por %p132, %p133
      %p135 = scmp.ne.s32.totalorder %s123, %s124
      %p136 = scmp.eq.s32.totalorder %s30, 1
      %p137 = por %p135, %p136
      %p139 = scmp.ne.s32.totalorder %s124, %s138
      %p140 = scmp.eq.s32.totalorder %s30, 0
      %p141 = por %p139, %p140
      %s143 = sadd.s32 %s142, 1
      %p146 = scmp.eq.s32.totalorder %s24, 1
      %p147 = scmp.ne.s32.totalorder %s142, %s144
      %p148 = scmp.eq.s32.totalorder %s24, 0
      %p149 = por %p147, %p148
      %p150 = scmp.ne.s32.totalorder %s142, %s144
      %p151 = scmp.eq.s32.totalorder %s29, 1
      %p152 = por %p150, %p151
      %p153 = scmp.ne.s32.totalorder %s144, %s145
      %p154 = scmp.eq.s32.totalorder %s29, 0
      %p155 = por %p153, %p154
      %p156 = scmp.ne.s32.totalorder %s144, %s145
      %p157 = scmp.eq.s32.totalorder %s30, 1
      %p158 = por %p156, %p157
      %p160 = scmp.ne.s32.totalorder %s145, %s159
      %p161 = scmp.eq.s32.totalorder %s30, 0
      %p162 = por %p160, %p161
      %s164 = sadd.s32 %s163, 1
      %p167 = scmp.eq.s32.totalorder %s24, 1
      %p168 = scmp.ne.s32.totalorder %s163, %s165
      %p169 = scmp.eq.s32.totalorder %s24, 0
      %p170 = por %p168, %p169
      %p171 = scmp.ne.s32.totalorder %s163, %s165
      %p172 = scmp.eq.s32.totalorder %s29, 1
      %p173 = por %p171, %p172
      %p174 = scmp.ne.s32.totalorder %s165, %s166
      %p175 = scmp.eq.s32.totalorder %s29, 0
      %p176 = por %p174, %p175
      %p177 = scmp.ne.s32.totalorder %s165, %s166
      %p178 = scmp.eq.s32.totalorder %s30, 1
      %p179 = por %p177, %p178
      %p181 = scmp.ne.s32.totalorder %s166, %s180
      %p182 = scmp.eq.s32.totalorder %s30, 0
      %p183 = por %p181, %p182
      %s185 = sadd.s32 %s184, 1
      %p188 = scmp.eq.s32.totalorder %s24, 1
      %p189 = scmp.ne.s32.totalorder %s184, %s186
      %p190 = scmp.eq.s32.totalorder %s24, 0
      %p191 = por %p189, %p190
      %p192 = scmp.ne.s32.totalorder %s184, %s186
      %p193 = scmp.eq.s32.totalorder %s29, 1
      %p194 = por %p192, %p193
      %p195 = scmp.ne.s32.totalorder %s186, %s187
      %p196 = scmp.eq.s32.totalorder %s29, 0
      %p197 = por %p195, %p196
      %p198 = scmp.ne.s32.totalorder %s186, %s187
      %p199 = scmp.eq.s32.totalorder %s30, 1
      %p200 = por %p198, %p199
      %p202 = scmp.ne.s32.totalorder %s187, %s201
      %p203 = scmp.eq.s32.totalorder %s30, 0
      %p204 = por %p202, %p203
      %s206 = sadd.s32 %s205, 1
      %p209 = scmp.eq.s32.totalorder %s24, 1
      %p210 = scmp.ne.s32.totalorder %s205, %s207
      %p211 = scmp.eq.s32.totalorder %s24, 0
      %p212 = por %p210, %p211
      %p213 = scmp.ne.s32.totalorder %s205, %s207
      %p214 = scmp.eq.s32.totalorder %s29, 1
      %p215 = por %p213, %p214
      %p216 = scmp.ne.s32.totalorder %s207, %s208
      %p217 = scmp.eq.s32.totalorder %s29, 0
      %p218 = por %p216, %p217
      %p219 = scmp.ne.s32.totalorder %s207, %s208
      %p220 = scmp.eq.s32.totalorder %s30, 1
      %p221 = por %p219, %p220
      %p223 = scmp.ne.s32.totalorder %s208, %s222
      %p224 = scmp.eq.s32.totalorder %s30, 0
      %p225 = por %p223, %p224
      %s226 = ssub.s32 %s24, %s31
      %p227 = scmp.eq.s32.totalorder %s226, 0
      %s229 = sadd.s32 %s228, 1
      %s230 = scalar_select %p227, %s228, %s229
      %p233 = pneg %p227
      %p234 = scmp.eq.s32.totalorder %s24, 1
      %p235 = por %p233, %p234
      %p236 = scmp.ne.s32.totalorder %s228, %s231
      %p237 = scmp.eq.s32.totalorder %s24, 0
      %p238 = por %p236, %p237
      %p239 = scmp.ne.s32.totalorder %s228, %s231
      %p240 = scmp.eq.s32.totalorder %s29, 1
      %p241 = por %p239, %p240
      %p242 = scmp.ne.s32.totalorder %s231, %s232
      %p243 = scmp.eq.s32.totalorder %s29, 0
      %p244 = por %p242, %p243
      %p245 = scmp.ne.s32.totalorder %s231, %s232
      %p246 = scmp.eq.s32.totalorder %s30, 1
      %p247 = por %p245, %p246
      %p249 = scmp.ne.s32.totalorder %s232, %s248
      %p250 = scmp.eq.s32.totalorder %s30, 0
      %p251 = por %p249, %p250
      %p252 = scmp.le.s32.totalorder 1, %s24
      %p253 = scmp.lt.s32.totalorder %s24, 3
      %p254 = pnand %p252, %p253
      %p255 = pneg %p254
      // Predicated region
      $region9: #{tpu_custom_call.1} parent=5 // pred_check
        _
      $region10: #{tpu_custom_call.1} parent=5 // pred_check_branch
        %257 = sbr.rel (%p254) target = $region12
      $region11: #{tpu_custom_call.1} parent=5 // pred_region
        %s258 = ssub.s32 %s24, 1
        // Predicated region
        $region13: #{tpu_custom_call.1} parent=11 // pred_check
          %p259 = pneg %p71
        $region14: #{tpu_custom_call.1} parent=11 // pred_check_branch
          %261 = sbr.rel (%p259) target = $region16
        $region15: #{tpu_custom_call.1} parent=11 // pred_region
          _
        $region16: #{tpu_custom_call.1} parent=11 // pred_fallthru
          _
        // Predicated region
        $region17: #{tpu_custom_call.1} parent=11 // pred_check
          %p262 = pneg %p92
        $region18: #{tpu_custom_call.1} parent=11 // pred_check_branch
          %264 = sbr.rel (%p262) target = $region20
        $region19: #{tpu_custom_call.1} parent=11 // pred_region
          _
        $region20: #{tpu_custom_call.1} parent=11 // pred_fallthru
          _
        // Predicated region
        $region21: #{tpu_custom_call.1} parent=11 // pred_check
          %p265 = pneg %p113
        $region22: #{tpu_custom_call.1} parent=11 // pred_check_branch
          %267 = sbr.rel (%p265) target = $region24
        $region23: #{tpu_custom_call.1} parent=11 // pred_region
          _
        $region24: #{tpu_custom_call.1} parent=11 // pred_fallthru
          _
        // Predicated region
        $region25: #{tpu_custom_call.1} parent=11 // pred_check
          %p268 = pneg %p134
        $region26: #{tpu_custom_call.1} parent=11 // pred_check_branch
          %270 = sbr.rel (%p268) target = $region28
        $region27: #{tpu_custom_call.1} parent=11 // pred_region
          _
        $region28: #{tpu_custom_call.1} parent=11 // pred_fallthru
          _
        // Predicated region
        $region29: #{tpu_custom_call.1} parent=11 // pred_check
          %p271 = pneg %p155
        $region30: #{tpu_custom_call.1} parent=11 // pred_check_branch
          %273 = sbr.rel (%p271) target = $region32
        $region31: #{tpu_custom_call.1} parent=11 // pred_region
          %275 = vsyncadd [#allocation6], 0
          %s277 = sshll.u32 %s5, 4
          %s278 = int_to_ptr.vmem [resolvable:$true] %s277
          %280 = dma.vmem_to_smem %s278, 32, [#allocation7], [#allocation6]
        $region32: #{tpu_custom_call.1} parent=11 // pred_fallthru
          _
        // Predicated region
        $region33: #{tpu_custom_call.1} parent=11 // pred_check
          %p281 = pneg %p176
        $region34: #{tpu_custom_call.1} parent=11 // pred_check_branch
          %283 = sbr.rel (%p281) target = $region36
        $region35: #{tpu_custom_call.1} parent=11 // pred_region
          %285 = vsyncadd [#allocation9], 0
          %s287 = sshll.u32 %s6, 4
          %s288 = int_to_ptr.vmem [resolvable:$true] %s287
          %290 = dma.vmem_to_smem %s288, 16, [#allocation8], [#allocation9]
        $region36: #{tpu_custom_call.1} parent=11 // pred_fallthru
          _
        // Predicated region
        $region37: #{tpu_custom_call.1} parent=11 // pred_check
          %p291 = pneg %p197
        $region38: #{tpu_custom_call.1} parent=11 // pred_check_branch
          %293 = sbr.rel (%p291) target = $region40
        $region39: #{tpu_custom_call.1} parent=11 // pred_region
          %295 = vsyncadd [#allocation9], 0
          %s297 = sshll.u32 %s7, 4
          %s298 = int_to_ptr.vmem [resolvable:$true] %s297
          %300 = dma.vmem_to_smem %s298, 32, [#allocation10], [#allocation9]
        $region40: #{tpu_custom_call.1} parent=11 // pred_fallthru
          _
        // Predicated region
        $region41: #{tpu_custom_call.1} parent=11 // pred_check
          %p301 = pneg %p218
        $region42: #{tpu_custom_call.1} parent=11 // pred_check_branch
          %303 = sbr.rel (%p301) target = $region44
        $region43: #{tpu_custom_call.1} parent=11 // pred_region
          %305 = vsyncadd [#allocation12], 0
          %s307 = sshll.u32 %s8, 4
          %s308 = int_to_ptr.vmem [resolvable:$true] %s307
          %310 = dma.vmem_to_smem %s308, 16, [#allocation11], [#allocation12]
        $region44: #{tpu_custom_call.1} parent=11 // pred_fallthru
          _
      $region12: #{tpu_custom_call.1} parent=5 // pred_fallthru
        _
      %p311 = scmp.lt.s32.totalorder %s24, 2
      // Predicated region
      $region45: #{tpu_custom_call.1} parent=5 // pred_check
        %p312 = pneg %p311
      $region46: #{tpu_custom_call.1} parent=5 // pred_check_branch
        %314 = sbr.rel (%p312) target = $region48
      $region47: #{tpu_custom_call.1} parent=5 // pred_region
        // Predicated region
        $region49: #{tpu_custom_call.1} parent=47 // pred_check
          %p315 = pneg %p44
        $region50: #{tpu_custom_call.1} parent=47 // pred_check_branch
          %317 = sbr.rel (%p315) target = $region52
        $region51: #{tpu_custom_call.1} parent=47 // pred_region
          %s318 = sand.u32 %s34, 1
          %s319 = scalar_lea.sflag [#allocation4], %s318
          %s320 = sand.u32 %s34, 1
          %s321 = smul.addr %s320, 64
          %s322 = scalar_lea.vmem [#allocation3], %s321
          %324 = vsyncadd %s319, 0
          %s325 = smul.addr %s24, 8
          %s326 = smul.addr %s325, 8
          %s327 = scalar_lea.hbm %s0, %s326
          %s328 = sshll.u32 %s327, 4
          %s329 = int_to_ptr.hbm [resolvable:$true] %s328
          %s330 = sshll.u32 %s322, 4
          %s331 = int_to_ptr.vmem [resolvable:$true] %s330
          %336 = dma.hbm_to_vmem [thread:$0]  %s329, 1024, %s331, %s319, 128, 128, 8
        $region52: #{tpu_custom_call.1} parent=47 // pred_fallthru
          _
      $region48: #{tpu_custom_call.1} parent=5 // pred_fallthru
        _
      %p337 = scmp.le.s32.totalorder 1, %s24
      %p338 = scmp.lt.s32.totalorder %s24, 3
      %p339 = pnand %p337, %p338
      %p340 = pneg %p339
      // Predicated region
      $region53: #{tpu_custom_call.1} parent=5 // pred_check
        _
      $region54: #{tpu_custom_call.1} parent=5 // pred_check_branch
        %342 = sbr.rel (%p339) target = $region56
      $region55: #{tpu_custom_call.1} parent=5 // pred_region
        %s343 = ssub.s32 %s24, 1
        %s344 = sand.u32 %s37, 1
        %s345 = scalar_lea.sflag [#allocation4], %s344
        %s346 = sand.u32 %s37, 1
        %s347 = smul.addr %s346, 64
        %s348 = scalar_lea.vmem [#allocation3], %s347
        // Predicated region
        $region57: #{tpu_custom_call.1} parent=55 // pred_check
          %p349 = pneg %p50
        $region58: #{tpu_custom_call.1} parent=55 // pred_check_branch
          %351 = sbr.rel (%p349) target = $region60
        $region59: #{tpu_custom_call.1} parent=55 // pred_region
          %353 = dma.done %s345, 1024
        $region60: #{tpu_custom_call.1} parent=55 // pred_fallthru
          _
        // Predicated region
        $region61: #{tpu_custom_call.1} parent=55 // pred_check
          %p354 = pneg %p155
        $region62: #{tpu_custom_call.1} parent=55 // pred_check_branch
          %356 = sbr.rel (%p354) target = $region64
        $region63: #{tpu_custom_call.1} parent=55 // pred_region
          %358 = dma.done [#allocation6], 32
        $region64: #{tpu_custom_call.1} parent=55 // pred_fallthru
          _
        // Predicated region
        $region65: #{tpu_custom_call.1} parent=55 // pred_check
          %p359 = pneg %p176
        $region66: #{tpu_custom_call.1} parent=55 // pred_check_branch
          %361 = sbr.rel (%p359) target = $region68
        $region67: #{tpu_custom_call.1} parent=55 // pred_region
          %363 = dma.done [#allocation9], 16
        $region68: #{tpu_custom_call.1} parent=55 // pred_fallthru
          _
        // Predicated region
        $region69: #{tpu_custom_call.1} parent=55 // pred_check
          %p364 = pneg %p197
        $region70: #{tpu_custom_call.1} parent=55 // pred_check_branch
          %366 = sbr.rel (%p364) target = $region72
        $region71: #{tpu_custom_call.1} parent=55 // pred_region
          %368 = dma.done [#allocation9], 32
        $region72: #{tpu_custom_call.1} parent=55 // pred_fallthru
          _
        // Predicated region
        $region73: #{tpu_custom_call.1} parent=55 // pred_check
          %p369 = pneg %p218
        $region74: #{tpu_custom_call.1} parent=55 // pred_check_branch
          %371 = sbr.rel (%p369) target = $region76
        $region75: #{tpu_custom_call.1} parent=55 // pred_region
          %373 = dma.done [#allocation12], 16
        $region76: #{tpu_custom_call.1} parent=55 // pred_fallthru
          _
        %374 = sfence
        %s375 = sand.u32 %s37, 1
        %s376 = scalar_lea.sflag [#allocation4], %s375
        %s377 = sand.u32 %s37, 1
        %s378 = smul.addr %s377, 64
        %s379 = scalar_lea.vmem [#allocation3], %s378
        %p380 = pneg %p50
        %p381 = pneg %p47
        %p382 = pneg %p71
        %p383 = pneg %p68
        %p384 = pneg %p92
        %p385 = pneg %p89
        %p386 = pneg %p113
        %p387 = pneg %p110
        %p388 = pneg %p134
        %p389 = pneg %p131
        %p390 = pneg %p155
        %p391 = pneg %p152
        %p392 = pneg %p176
        %p393 = pneg %p173
        %p394 = pneg %p197
        %p395 = pneg %p194
        %p396 = pneg %p218
        %p397 = pneg %p215
        %p398 = pneg %p244
        %p399 = pneg %p241
        %s400 = sand.u32 %s231, 1
        %s401 = scalar_lea.sflag [#allocation5], %s400
        %s402 = sand.u32 %s231, 1
        %s403 = smul.addr %s402, 64
        %s404 = scalar_lea.vmem [#allocation13], %s403
        %vm405 = vcmask 146432
        %406 = vst.msk [vmem:[#allocation2] sm:$0xff] %vm405, 0.0
        %407 = vst.msk [vmem:[#allocation2 + $0x8] sm:$0xff] %vm405, 0.0
        %vm408 = vcmask 140288
        %409 = vst.msk [vmem:[#allocation2 + $0x10] sm:$0x3] %vm408, 0.0
        %410 = vst.msk [vmem:[#allocation2 + $0x18] sm:$0xff] %vm405, 0.0
        %411 = vst.msk [vmem:[#allocation2 + $0x20] sm:$0xff] %vm405, 0.0
        %412 = vst.msk [vmem:[#allocation2 + $0x28] sm:$0x3] %vm408, 0.0
        %413 = vst.msk [vmem:[#allocation2 + $0x30] sm:$0xff] %vm405, 0.0
        %414 = vst.msk [vmem:[#allocation2 + $0x38] sm:$0xff] %vm405, 0.0
        %415 = vst.msk [vmem:[#allocation2 + $0x40] sm:$0x3] %vm408, 0.0
        %416 = vst.msk [vmem:[#allocation2 + $0x48] sm:$0xff] %vm405, 0.0
        %417 = vst.msk [vmem:[#allocation2 + $0x50] sm:$0xff] %vm405, 0.0
        %418 = vst.msk [vmem:[#allocation2 + $0x58] sm:$0x3] %vm408, 0.0
        %v419 = vld [vmem:[%s348] sm:$0xff]
        %v420 = vld [vmem:[%s348 + $0x8] sm:$0xff]
        %s421 = scalar_lea.vmem %s348, 16 [#allocation3]
        %v422 = vld [vmem:[%s421] sm:$0xff]
        %v423 = vld [vmem:[%s421 + $0x8] sm:$0xff]
        %s424 = scalar_lea.vmem %s348, 32 [#allocation3]
        %v425 = vld [vmem:[%s424] sm:$0xff]
        %v426 = vld [vmem:[%s424 + $0x8] sm:$0xff]
        %s427 = scalar_lea.vmem %s348, 48 [#allocation3]
        %v428 = vld [vmem:[%s427] sm:$0xff]
        %v429 = vld [vmem:[%s427 + $0x8] sm:$0xff]
        %vm430 = vcmask 130048
        %v431 = vsel %vm430, %v419, 0.0
        %v432 = vsel %vm430, %v420, 0.0
        %v433 = vadd.f32 %v431, %v432
        %v434 = vrot.slane %v433, 4
        %v435 = vadd.f32 %v433, %v434
        %v436 = vrot.slane %v435, 2
        %v437 = vadd.f32 %v435, %v436
        %v438 = vrot.slane %v437, 1
        %v439 = vadd.f32 %v437, %v438
        %v440 = vrcp.pop 16.0
        %v441 = vmul.f32 16.0, %v440
        %v442 = vsub.f32 1.0, %v441
        %v443 = vmul.f32 %v440, %v442
        %v444 = vadd.f32 %v440, %v443
        %vm445 = vweird.f32 %v440
        %v446 = vsel %vm445, %v440, %v444
        %v447 = vmul.f32 %v439, %v446
        %v448 = vsub.f32 %v419, %v447
        %v449 = vsub.f32 %v420, %v447
        %v450 = vmul.f32 %v448, %v448
        %v451 = vmul.f32 %v449, %v449
        %v452 = vsel %vm430, %v450, 0.0
        %v453 = vsel %vm430, %v451, 0.0
        %v454 = vadd.f32 %v452, %v453
        %v455 = vrot.slane %v454, 4
        %v456 = vadd.f32 %v454, %v455
        %v457 = vrot.slane %v456, 2
        %v458 = vadd.f32 %v456, %v457
        %v459 = vrot.slane %v458, 1
        %v460 = vadd.f32 %v458, %v459
        %v461 = vmul.f32 %v460, %v446
        %v462 = vadd.f32 %v461, 1e-05
        %v463 = vrsqrt.pop %v462
        %v464 = vmul.f32 %v463, %v462
        %v465 = vmul.f32 %v464, %v463
        %v466 = vmul.f32 0.5, %v465
        %v467 = vsub.f32 1.5, %v466
        %v468 = vmul.f32 %v463, %v467
        %vm469 = vweird.f32 %v462
        %vm470 = vweird.f32 %v463
        %vm471 = vmor %vm469, %vm470
        %v472 = vsel %vm471, %v463, %v468
        %v473 = vmul.f32 %v448, %v472
        %v474 = vmul.f32 %v449, %v472
        %v475 = vld [vmem:[%s1] sm:$0xff]
        %v476 = vld [vmem:[%s1 + $0x8] sm:$0xff]
        %478 = vset.pattern.permute.xlu0 0
        %479 = vperm.xlu0 %478, %v475
        %v480 = vpop.permute.xlu0 %479
        %483 = vset.pattern.permute.xlu0 0
        %484 = vperm.xlu0 %483, %v476
        %v485 = vpop.permute.xlu0 %484
        %v487 = vmul.f32 %v473, %v480
        %v488 = vmul.f32 %v474, %v485
        %v489 = vld [vmem:[%s2] sm:$0xff]
        %v490 = vld [vmem:[%s2 + $0x8] sm:$0xff]
        %492 = vset.pattern.permute.xlu0 0
        %493 = vperm.xlu0 %492, %v489
        %v494 = vpop.permute.xlu0 %493
        %497 = vset.pattern.permute.xlu0 0
        %498 = vperm.xlu0 %497, %v490
        %v499 = vpop.permute.xlu0 %498
        %v501 = vadd.f32 %v487, %v494
        %v502 = vadd.f32 %v488, %v499
        %v503 = vmul.f32 %v501, 0.5
        %v504 = vmul.f32 %v502, 0.5
        %v505 = vmul.f32 %v501, 0.70710677
        %v506 = vmul.f32 %v502, 0.70710677
        %vm507 = vcmp.ge.f32.partialorder %v505, 0.0
        %vm508 = vcmp.ge.f32.partialorder %v506, 0.0
        %v509 = vsel %vm507, 1.0, -1.0
        %v510 = vsel %vm508, 1.0, -1.0
        %v511 = vand.u32 2147483647, %v505
        %v512 = vand.u32 2147483647, %v506
        %v513 = vmul.f32 %v511, 0.3275911
        %v514 = vmul.f32 %v512, 0.3275911
        %v515 = vadd.f32 %v513, 1.0
        %v516 = vadd.f32 %v514, 1.0
        %v517 = vrcp.pop %v515
        %v518 = vmul.f32 %v515, %v517
        %v519 = vsub.f32 1.0, %v518
        %v520 = vmul.f32 %v517, %v519
        %v521 = vadd.f32 %v517, %v520
        %vm522 = vweird.f32 %v515
        %vm523 = vweird.f32 %v517
        %vm524 = vmor %vm522, %vm523
        %v525 = vsel %vm524, %v517, %v521
        %v526 = vand.u32 2147483647, %v515
        %vm527 = vcmp.eq.f32.partialorder %v526, 8.507059e+37
        %v528 = vand.u32 %v515, 2147483648
        %v529 = vor.u32 1.1754944e-38, %v528
        %v530 = vsel %vm527, %v529, %v525
        %v531 = vmul.f32 1.0, %v530
        %v532 = vrcp.pop %v516
        %v533 = vmul.f32 %v516, %v532
        %v534 = vsub.f32 1.0, %v533
        %v535 = vmul.f32 %v532, %v534
        %v536 = vadd.f32 %v532, %v535
        %vm537 = vweird.f32 %v516
        %vm538 = vweird.f32 %v532
        %vm539 = vmor %vm537, %vm538
        %v540 = vsel %vm539, %v532, %v536
        %v541 = vand.u32 2147483647, %v516
        %vm542 = vcmp.eq.f32.partialorder %v541, 8.507059e+37
        %v543 = vand.u32 %v516, 2147483648
        %v544 = vor.u32 1.1754944e-38, %v543
        %v545 = vsel %vm542, %v544, %v540
        %v546 = vmul.f32 1.0, %v545
        %v547 = vmul.f32 %v531, 1.0614054
        %v548 = vmul.f32 %v546, 1.0614054
        %v549 = vadd.f32 %v547, -1.4531521
        %v550 = vadd.f32 %v548, -1.4531521
        %v551 = vmul.f32 %v549, %v531
        %v552 = vmul.f32 %v550, %v546
        %v553 = vadd.f32 %v551, 1.4214138
        %v554 = vadd.f32 %v552, 1.4214138
        %v555 = vmul.f32 %v553, %v531
        %v556 = vmul.f32 %v554, %v546
        %v557 = vadd.f32 %v555, -0.28449672
        %v558 = vadd.f32 %v556, -0.28449672
        %v559 = vmul.f32 %v557, %v531
        %v560 = vmul.f32 %v558, %v546
        %v561 = vadd.f32 %v559, 0.2548296
        %v562 = vadd.f32 %v560, 0.2548296
        %v563 = vmul.f32 %v561, %v531
        %v564 = vmul.f32 %v562, %v546
        %v565 = vsub.f32 0.0, %v511
        %v566 = vsub.f32 0.0, %v512
        %v567 = vmul.f32 %v565, %v511
        %v568 = vmul.f32 %v566, %v512
        %v569 = vmul.f32 %v567, 1.442695
        %v570 = vpow.pop %v569
        %v571 = vmul.f32 %v568, 1.442695
        %v572 = vpow.pop %v571
        %v573 = vmul.f32 %v563, %v570
        %v574 = vmul.f32 %v564, %v572
        %v575 = vsub.f32 1.0, %v573
        %v576 = vsub.f32 1.0, %v574
        %v577 = vmul.f32 %v509, %v575
        %v578 = vmul.f32 %v510, %v576
        %v579 = vadd.f32 %v577, 1.0
        %v580 = vadd.f32 %v578, 1.0
        %v581 = vmul.f32 %v503, %v579
        %v582 = vmul.f32 %v504, %v580
        %v583 = vsel %vm430, %v422, 0.0
        %v584 = vsel %vm430, %v423, 0.0
        %v585 = vadd.f32 %v583, %v584
        %v586 = vrot.slane %v585, 4
        %v587 = vadd.f32 %v585, %v586
        %v588 = vrot.slane %v587, 2
        %v589 = vadd.f32 %v587, %v588
        %v590 = vrot.slane %v589, 1
        %v591 = vadd.f32 %v589, %v590
        %v592 = vmul.f32 %v591, %v446
        %v593 = vsub.f32 %v422, %v592
        %v594 = vsub.f32 %v423, %v592
        %v595 = vmul.f32 %v593, %v593
        %v596 = vmul.f32 %v594, %v594
        %v597 = vsel %vm430, %v595, 0.0
        %v598 = vsel %vm430, %v596, 0.0
        %v599 = vadd.f32 %v597, %v598
        %v600 = vrot.slane %v599, 4
        %v601 = vadd.f32 %v599, %v600
        %v602 = vrot.slane %v601, 2
        %v603 = vadd.f32 %v601, %v602
        %v604 = vrot.slane %v603, 1
        %v605 = vadd.f32 %v603, %v604
        %v606 = vmul.f32 %v605, %v446
        %v607 = vadd.f32 %v606, 1e-05
        %v608 = vrsqrt.pop %v607
        %v609 = vmul.f32 %v608, %v607
        %v610 = vmul.f32 %v609, %v608
        %v611 = vmul.f32 0.5, %v610
        %v612 = vsub.f32 1.5, %v611
        %v613 = vmul.f32 %v608, %v612
        %vm614 = vweird.f32 %v607
        %vm615 = vweird.f32 %v608
        %vm616 = vmor %vm614, %vm615
        %v617 = vsel %vm616, %v608, %v613
        %v618 = vmul.f32 %v593, %v617
        %v619 = vmul.f32 %v594, %v617
        %v620 = vmul.f32 %v618, %v480
        %v621 = vmul.f32 %v619, %v485
        %v622 = vadd.f32 %v620, %v494
        %v623 = vadd.f32 %v621, %v499
        %v624 = vmul.f32 %v622, 0.5
        %v625 = vmul.f32 %v623, 0.5
        %v626 = vmul.f32 %v622, 0.70710677
        %v627 = vmul.f32 %v623, 0.70710677
        %vm628 = vcmp.ge.f32.partialorder %v626, 0.0
        %vm629 = vcmp.ge.f32.partialorder %v627, 0.0
        %v630 = vsel %vm628, 1.0, -1.0
        %v631 = vsel %vm629, 1.0, -1.0
        %v632 = vand.u32 2147483647, %v626
        %v633 = vand.u32 2147483647, %v627
        %v634 = vmul.f32 %v632, 0.3275911
        %v635 = vmul.f32 %v633, 0.3275911
        %v636 = vadd.f32 %v634, 1.0
        %v637 = vadd.f32 %v635, 1.0
        %v638 = vrcp.pop %v636
        %v639 = vmul.f32 %v636, %v638
        %v640 = vsub.f32 1.0, %v639
        %v641 = vmul.f32 %v638, %v640
        %v642 = vadd.f32 %v638, %v641
        %vm643 = vweird.f32 %v636
        %vm644 = vweird.f32 %v638
        %vm645 = vmor %vm643, %vm644
        %v646 = vsel %vm645, %v638, %v642
        %v647 = vand.u32 2147483647, %v636
        %vm648 = vcmp.eq.f32.partialorder %v647, 8.507059e+37
        %v649 = vand.u32 %v636, 2147483648
        %v650 = vor.u32 1.1754944e-38, %v649
        %v651 = vsel %vm648, %v650, %v646
        %v652 = vmul.f32 1.0, %v651
        %v653 = vrcp.pop %v637
        %v654 = vmul.f32 %v637, %v653
        %v655 = vsub.f32 1.0, %v654
        %v656 = vmul.f32 %v653, %v655
        %v657 = vadd.f32 %v653, %v656
        %vm658 = vweird.f32 %v637
        %vm659 = vweird.f32 %v653
        %vm660 = vmor %vm658, %vm659
        %v661 = vsel %vm660, %v653, %v657
        %v662 = vand.u32 2147483647, %v637
        %vm663 = vcmp.eq.f32.partialorder %v662, 8.507059e+37
        %v664 = vand.u32 %v637, 2147483648
        %v665 = vor.u32 1.1754944e-38, %v664
        %v666 = vsel %vm663, %v665, %v661
        %v667 = vmul.f32 1.0, %v666
        %v668 = vmul.f32 %v652, 1.0614054
        %v669 = vmul.f32 %v667, 1.0614054
        %v670 = vadd.f32 %v668, -1.4531521
        %v671 = vadd.f32 %v669, -1.4531521
        %v672 = vmul.f32 %v670, %v652
        %v673 = vmul.f32 %v671, %v667
        %v674 = vadd.f32 %v672, 1.4214138
        %v675 = vadd.f32 %v673, 1.4214138
        %v676 = vmul.f32 %v674, %v652
        %v677 = vmul.f32 %v675, %v667
        %v678 = vadd.f32 %v676, -0.28449672
        %v679 = vadd.f32 %v677, -0.28449672
        %v680 = vmul.f32 %v678, %v652
        %v681 = vmul.f32 %v679, %v667
        %v682 = vadd.f32 %v680, 0.2548296
        %v683 = vadd.f32 %v681, 0.2548296
        %v684 = vmul.f32 %v682, %v652
        %v685 = vmul.f32 %v683, %v667
        %v686 = vsub.f32 0.0, %v632
        %v687 = vsub.f32 0.0, %v633
        %v688 = vmul.f32 %v686, %v632
        %v689 = vmul.f32 %v687, %v633
        %v690 = vmul.f32 %v688, 1.442695
        %v691 = vpow.pop %v690
        %v692 = vmul.f32 %v689, 1.442695
        %v693 = vpow.pop %v692
        %v694 = vmul.f32 %v684, %v691
        %v695 = vmul.f32 %v685, %v693
        %v696 = vsub.f32 1.0, %v694
        %v697 = vsub.f32 1.0, %v695
        %v698 = vmul.f32 %v630, %v696
        %v699 = vmul.f32 %v631, %v697
        %v700 = vadd.f32 %v698, 1.0
        %v701 = vadd.f32 %v699, 1.0
        %v702 = vmul.f32 %v624, %v700
        %v703 = vmul.f32 %v625, %v701
        %v704 = vsel %vm430, %v425, 0.0
        %v705 = vsel %vm430, %v426, 0.0
        %v706 = vadd.f32 %v704, %v705
        %v707 = vrot.slane %v706, 4
        %v708 = vadd.f32 %v706, %v707
        %v709 = vrot.slane %v708, 2
        %v710 = vadd.f32 %v708, %v709
        %v711 = vrot.slane %v710, 1
        %v712 = vadd.f32 %v710, %v711
        %v713 = vmul.f32 %v712, %v446
        %v714 = vsub.f32 %v425, %v713
        %v715 = vsub.f32 %v426, %v713
        %v716 = vmul.f32 %v714, %v714
        %v717 = vmul.f32 %v715, %v715
        %v718 = vsel %vm430, %v716, 0.0
        %v719 = vsel %vm430, %v717, 0.0
        %v720 = vadd.f32 %v718, %v719
        %v721 = vrot.slane %v720, 4
        %v722 = vadd.f32 %v720, %v721
        %v723 = vrot.slane %v722, 2
        %v724 = vadd.f32 %v722, %v723
        %v725 = vrot.slane %v724, 1
        %v726 = vadd.f32 %v724, %v725
        %v727 = vmul.f32 %v726, %v446
        %v728 = vadd.f32 %v727, 1e-05
        %v729 = vrsqrt.pop %v728
        %v730 = vmul.f32 %v729, %v728
        %v731 = vmul.f32 %v730, %v729
        %v732 = vmul.f32 0.5, %v731
        %v733 = vsub.f32 1.5, %v732
        %v734 = vmul.f32 %v729, %v733
        %vm735 = vweird.f32 %v728
        %vm736 = vweird.f32 %v729
        %vm737 = vmor %vm735, %vm736
        %v738 = vsel %vm737, %v729, %v734
        %v739 = vmul.f32 %v714, %v738
        %v740 = vmul.f32 %v715, %v738
        %v741 = vmul.f32 %v739, %v480
        %v742 = vmul.f32 %v740, %v485
        %v743 = vadd.f32 %v741, %v494
        %v744 = vadd.f32 %v742, %v499
        %v745 = vmul.f32 %v743, 0.5
        %v746 = vmul.f32 %v744, 0.5
        %v747 = vmul.f32 %v743, 0.70710677
        %v748 = vmul.f32 %v744, 0.70710677
        %vm749 = vcmp.ge.f32.partialorder %v747, 0.0
        %vm750 = vcmp.ge.f32.partialorder %v748, 0.0
        %v751 = vsel %vm749, 1.0, -1.0
        %v752 = vsel %vm750, 1.0, -1.0
        %v753 = vand.u32 2147483647, %v747
        %v754 = vand.u32 2147483647, %v748
        %v755 = vmul.f32 %v753, 0.3275911
        %v756 = vmul.f32 %v754, 0.3275911
        %v757 = vadd.f32 %v755, 1.0
        %v758 = vadd.f32 %v756, 1.0
        %v759 = vrcp.pop %v757
        %v760 = vmul.f32 %v757, %v759
        %v761 = vsub.f32 1.0, %v760
        %v762 = vmul.f32 %v759, %v761
        %v763 = vadd.f32 %v759, %v762
        %vm764 = vweird.f32 %v757
        %vm765 = vweird.f32 %v759
        %vm766 = vmor %vm764, %vm765
        %v767 = vsel %vm766, %v759, %v763
        %v768 = vand.u32 2147483647, %v757
        %vm769 = vcmp.eq.f32.partialorder %v768, 8.507059e+37
        %v770 = vand.u32 %v757, 2147483648
        %v771 = vor.u32 1.1754944e-38, %v770
        %v772 = vsel %vm769, %v771, %v767
        %v773 = vmul.f32 1.0, %v772
        %v774 = vrcp.pop %v758
        %v775 = vmul.f32 %v758, %v774
        %v776 = vsub.f32 1.0, %v775
        %v777 = vmul.f32 %v774, %v776
        %v778 = vadd.f32 %v774, %v777
        %vm779 = vweird.f32 %v758
        %vm780 = vweird.f32 %v774
        %vm781 = vmor %vm779, %vm780
        %v782 = vsel %vm781, %v774, %v778
        %v783 = vand.u32 2147483647, %v758
        %vm784 = vcmp.eq.f32.partialorder %v783, 8.507059e+37
        %v785 = vand.u32 %v758, 2147483648
        %v786 = vor.u32 1.1754944e-38, %v785
        %v787 = vsel %vm784, %v786, %v782
        %v788 = vmul.f32 1.0, %v787
        %v789 = vmul.f32 %v773, 1.0614054
        %v790 = vmul.f32 %v788, 1.0614054
        %v791 = vadd.f32 %v789, -1.4531521
        %v792 = vadd.f32 %v790, -1.4531521
        %v793 = vmul.f32 %v791, %v773
        %v794 = vmul.f32 %v792, %v788
        %v795 = vadd.f32 %v793, 1.4214138
        %v796 = vadd.f32 %v794, 1.4214138
        %v797 = vmul.f32 %v795, %v773
        %v798 = vmul.f32 %v796, %v788
        %v799 = vadd.f32 %v797, -0.28449672
        %v800 = vadd.f32 %v798, -0.28449672
        %v801 = vmul.f32 %v799, %v773
        %v802 = vmul.f32 %v800, %v788
        %v803 = vadd.f32 %v801, 0.2548296
        %v804 = vadd.f32 %v802, 0.2548296
        %v805 = vmul.f32 %v803, %v773
        %v806 = vmul.f32 %v804, %v788
        %v807 = vsub.f32 0.0, %v753
        %v808 = vsub.f32 0.0, %v754
        %v809 = vmul.f32 %v807, %v753
        %v810 = vmul.f32 %v808, %v754
        %v811 = vmul.f32 %v809, 1.442695
        %v812 = vpow.pop %v811
        %v813 = vmul.f32 %v810, 1.442695
        %v814 = vpow.pop %v813
        %v815 = vmul.f32 %v805, %v812
        %v816 = vmul.f32 %v806, %v814
        %v817 = vsub.f32 1.0, %v815
        %v818 = vsub.f32 1.0, %v816
        %v819 = vmul.f32 %v751, %v817
        %v820 = vmul.f32 %v752, %v818
        %v821 = vadd.f32 %v819, 1.0
        %v822 = vadd.f32 %v820, 1.0
        %v823 = vmul.f32 %v745, %v821
        %v824 = vmul.f32 %v746, %v822
        %v825 = vsel %vm430, %v428, 0.0
        %v826 = vsel %vm430, %v429, 0.0
        %v827 = vadd.f32 %v825, %v826
        %v828 = vrot.slane %v827, 4
        %v829 = vadd.f32 %v827, %v828
        %v830 = vrot.slane %v829, 2
        %v831 = vadd.f32 %v829, %v830
        %v832 = vrot.slane %v831, 1
        %v833 = vadd.f32 %v831, %v832
        %v834 = vmul.f32 %v833, %v446
        %v835 = vsub.f32 %v428, %v834
        %v836 = vsub.f32 %v429, %v834
        %v837 = vmul.f32 %v835, %v835
        %v838 = vmul.f32 %v836, %v836
        %v839 = vsel %vm430, %v837, 0.0
        %v840 = vsel %vm430, %v838, 0.0
        %v841 = vadd.f32 %v839, %v840
        %v842 = vrot.slane %v841, 4
        %v843 = vadd.f32 %v841, %v842
        %v844 = vrot.slane %v843, 2
        %v845 = vadd.f32 %v843, %v844
        %v846 = vrot.slane %v845, 1
        %v847 = vadd.f32 %v845, %v846
        %v848 = vmul.f32 %v847, %v446
        %v849 = vadd.f32 %v848, 1e-05
        %v850 = vrsqrt.pop %v849
        %v851 = vmul.f32 %v850, %v849
        %v852 = vmul.f32 %v851, %v850
        %v853 = vmul.f32 0.5, %v852
        %v854 = vsub.f32 1.5, %v853
        %v855 = vmul.f32 %v850, %v854
        %vm856 = vweird.f32 %v849
        %vm857 = vweird.f32 %v850
        %vm858 = vmor %vm856, %vm857
        %v859 = vsel %vm858, %v850, %v855
        %v860 = vmul.f32 %v835, %v859
        %v861 = vmul.f32 %v836, %v859
        %v862 = vmul.f32 %v860, %v480
        %v863 = vmul.f32 %v861, %v485
        %v864 = vadd.f32 %v862, %v494
        %v865 = vadd.f32 %v863, %v499
        %v866 = vmul.f32 %v864, 0.5
        %v867 = vmul.f32 %v865, 0.5
        %v868 = vmul.f32 %v864, 0.70710677
        %v869 = vmul.f32 %v865, 0.70710677
        %vm870 = vcmp.ge.f32.partialorder %v868, 0.0
        %vm871 = vcmp.ge.f32.partialorder %v869, 0.0
        %v872 = vsel %vm870, 1.0, -1.0
        %v873 = vsel %vm871, 1.0, -1.0
        %v874 = vand.u32 2147483647, %v868
        %v875 = vand.u32 2147483647, %v869
        %v876 = vmul.f32 %v874, 0.3275911
        %v877 = vmul.f32 %v875, 0.3275911
        %v878 = vadd.f32 %v876, 1.0
        %v879 = vadd.f32 %v877, 1.0
        %v880 = vrcp.pop %v878
        %v881 = vmul.f32 %v878, %v880
        %v882 = vsub.f32 1.0, %v881
        %v883 = vmul.f32 %v880, %v882
        %v884 = vadd.f32 %v880, %v883
        %vm885 = vweird.f32 %v878
        %vm886 = vweird.f32 %v880
        %vm887 = vmor %vm885, %vm886
        %v888 = vsel %vm887, %v880, %v884
        %v889 = vand.u32 2147483647, %v878
        %vm890 = vcmp.eq.f32.partialorder %v889, 8.507059e+37
        %v891 = vand.u32 %v878, 2147483648
        %v892 = vor.u32 1.1754944e-38, %v891
        %v893 = vsel %vm890, %v892, %v888
        %v894 = vmul.f32 1.0, %v893
        %v895 = vrcp.pop %v879
        %v896 = vmul.f32 %v879, %v895
        %v897 = vsub.f32 1.0, %v896
        %v898 = vmul.f32 %v895, %v897
        %v899 = vadd.f32 %v895, %v898
        %vm900 = vweird.f32 %v879
        %vm901 = vweird.f32 %v895
        %vm902 = vmor %vm900, %vm901
        %v903 = vsel %vm902, %v895, %v899
        %v904 = vand.u32 2147483647, %v879
        %vm905 = vcmp.eq.f32.partialorder %v904, 8.507059e+37
        %v906 = vand.u32 %v879, 2147483648
        %v907 = vor.u32 1.1754944e-38, %v906
        %v908 = vsel %vm905, %v907, %v903
        %v909 = vmul.f32 1.0, %v908
        %v910 = vmul.f32 %v894, 1.0614054
        %v911 = vmul.f32 %v909, 1.0614054
        %v912 = vadd.f32 %v910, -1.4531521
        %v913 = vadd.f32 %v911, -1.4531521
        %v914 = vmul.f32 %v912, %v894
        %v915 = vmul.f32 %v913, %v909
        %v916 = vadd.f32 %v914, 1.4214138
        %v917 = vadd.f32 %v915, 1.4214138
        %v918 = vmul.f32 %v916, %v894
        %v919 = vmul.f32 %v917, %v909
        %v920 = vadd.f32 %v918, -0.28449672
        %v921 = vadd.f32 %v919, -0.28449672
        %v922 = vmul.f32 %v920, %v894
        %v923 = vmul.f32 %v921, %v909
        %v924 = vadd.f32 %v922, 0.2548296
        %v925 = vadd.f32 %v923, 0.2548296
        %v926 = vmul.f32 %v924, %v894
        %v927 = vmul.f32 %v925, %v909
        %v928 = vsub.f32 0.0, %v874
        %v929 = vsub.f32 0.0, %v875
        %v930 = vmul.f32 %v928, %v874
        %v931 = vmul.f32 %v929, %v875
        %v932 = vmul.f32 %v930, 1.442695
        %v933 = vpow.pop %v932
        %v934 = vmul.f32 %v931, 1.442695
        %v935 = vpow.pop %v934
        %v936 = vmul.f32 %v926, %v933
        %v937 = vmul.f32 %v927, %v935
        %v938 = vsub.f32 1.0, %v936
        %v939 = vsub.f32 1.0, %v937
        %v940 = vmul.f32 %v872, %v938
        %v941 = vmul.f32 %v873, %v939
        %v942 = vadd.f32 %v940, 1.0
        %v943 = vadd.f32 %v941, 1.0
        %v944 = vmul.f32 %v866, %v942
        %v945 = vmul.f32 %v867, %v943
        %948 = vrot.lane.b32.xlu0 %v581, 1
        %v949 = vpop.permute.xlu0 %948
        %950 = vrot.lane.b32.xlu0 %v582, 1
        %v951 = vpop.permute.xlu0 %950
        %vm954 = vcmask 138248
        %955 = vst.msk [vmem:[#allocation2 + $0x1] sm:$0xff] %vm954, %v949
        %956 = vst.msk [vmem:[#allocation2 + $0x9] sm:$0xff] %vm954, %v951
        %959 = vrot.lane.b32.xlu0 %v702, 1
        %v960 = vpop.permute.xlu0 %959
        %961 = vrot.lane.b32.xlu0 %v703, 1
        %v962 = vpop.permute.xlu0 %961
        %s965 = scalar_lea.vmem [#allocation2], 24
        %966 = vst.msk [vmem:[%s965 + $0x1] sm:$0xff] %vm954, %v960
        %967 = vst.msk [vmem:[%s965 + $0x9] sm:$0xff] %vm954, %v962
        %970 = vrot.lane.b32.xlu0 %v823, 1
        %v971 = vpop.permute.xlu0 %970
        %972 = vrot.lane.b32.xlu0 %v824, 1
        %v973 = vpop.permute.xlu0 %972
        %s976 = scalar_lea.vmem [#allocation2], 48
        %977 = vst.msk [vmem:[%s976 + $0x1] sm:$0xff] %vm954, %v971
        %978 = vst.msk [vmem:[%s976 + $0x9] sm:$0xff] %vm954, %v973
        %981 = vrot.lane.b32.xlu0 %v944, 1
        %v982 = vpop.permute.xlu0 %981
        %983 = vrot.lane.b32.xlu0 %v945, 1
        %v984 = vpop.permute.xlu0 %983
        %s987 = scalar_lea.vmem [#allocation2], 72
        %988 = vst.msk [vmem:[%s987 + $0x1] sm:$0xff] %vm954, %v982
        %989 = vst.msk [vmem:[%s987 + $0x9] sm:$0xff] %vm954, %v984
        %v990 = vld [vmem:[#allocation2] sm:$0xff]
        %v991 = vld [vmem:[#allocation2 + $0x8] sm:$0xff]
        %v992 = vld [vmem:[#allocation2 + $0x18] sm:$0xff]
        %v993 = vld [vmem:[#allocation2 + $0x20] sm:$0xff]
        %v994 = vld [vmem:[#allocation2 + $0x30] sm:$0xff]
        %v995 = vld [vmem:[#allocation2 + $0x38] sm:$0xff]
        %v996 = vld [vmem:[#allocation2 + $0x48] sm:$0xff]
        %v997 = vld [vmem:[#allocation2 + $0x50] sm:$0xff]
        %s998 = sld [smem:[#allocation7]]
        %v999 = vstv %s998
        %v1000 = vmul.f32 %v990, %v999
        %v1001 = vmul.f32 %v991, %v999
        %v1002 = vadd.f32 %v1000, 0.0
        %v1003 = vadd.f32 %v1001, 0.0
        %s1004 = sld [smem:[#allocation7 + $0x24]]
        %v1005 = vstv %s1004
        %v1006 = vmul.f32 %v990, %v1005
        %v1007 = vmul.f32 %v991, %v1005
        %v1008 = vadd.f32 %v1006, 0.0
        %v1009 = vadd.f32 %v1007, 0.0
        %s1010 = sld [smem:[#allocation7 + $0x48]]
        %v1011 = vstv %s1010
        %v1012 = vmul.f32 %v990, %v1011
        %v1013 = vmul.f32 %v991, %v1011
        %v1014 = vadd.f32 %v1012, 0.0
        %v1015 = vadd.f32 %v1013, 0.0
        %s1016 = sld [smem:[#allocation7 + $0x6c]]
        %v1017 = vstv %s1016
        %v1018 = vmul.f32 %v990, %v1017
        %v1019 = vmul.f32 %v991, %v1017
        %v1020 = vadd.f32 %v1018, 0.0
        %v1021 = vadd.f32 %v1019, 0.0
        %s1022 = sld [smem:[#allocation7 + $0x9]]
        %v1023 = vstv %s1022
        %v1024 = vmul.f32 %v992, %v1023
        %v1025 = vmul.f32 %v993, %v1023
        %v1026 = vadd.f32 %v1002, %v1024
        %v1027 = vadd.f32 %v1003, %v1025
        %s1028 = sld [smem:[#allocation7 + $0x2d]]
        %v1029 = vstv %s1028
        %v1030 = vmul.f32 %v992, %v1029
        %v1031 = vmul.f32 %v993, %v1029
        %v1032 = vadd.f32 %v1008, %v1030
        %v1033 = vadd.f32 %v1009, %v1031
        %s1034 = sld [smem:[#allocation7 + $0x51]]
        %v1035 = vstv %s1034
        %v1036 = vmul.f32 %v992, %v1035
        %v1037 = vmul.f32 %v993, %v1035
        %v1038 = vadd.f32 %v1014, %v1036
        %v1039 = vadd.f32 %v1015, %v1037
        %s1040 = sld [smem:[#allocation7 + $0x75]]
        %v1041 = vstv %s1040
        %v1042 = vmul.f32 %v992, %v1041
        %v1043 = vmul.f32 %v993, %v1041
        %v1044 = vadd.f32 %v1020, %v1042
        %v1045 = vadd.f32 %v1021, %v1043
        %s1046 = sld [smem:[#allocation7 + $0x12]]
        %v1047 = vstv %s1046
        %v1048 = vmul.f32 %v994, %v1047
        %v1049 = vmul.f32 %v995, %v1047
        %v1050 = vadd.f32 %v1026, %v1048
        %v1051 = vadd.f32 %v1027, %v1049
        %s1052 = sld [smem:[#allocation7 + $0x36]]
        %v1053 = vstv %s1052
        %v1054 = vmul.f32 %v994, %v1053
        %v1055 = vmul.f32 %v995, %v1053
        %v1056 = vadd.f32 %v1032, %v1054
        %v1057 = vadd.f32 %v1033, %v1055
        %s1058 = sld [smem:[#allocation7 + $0x5a]]
        %v1059 = vstv %s1058
        %v1060 = vmul.f32 %v994, %v1059
        %v1061 = vmul.f32 %v995, %v1059
        %v1062 = vadd.f32 %v1038, %v1060
        %v1063 = vadd.f32 %v1039, %v1061
        %s1064 = sld [smem:[#allocation7 + $0x7e]]
        %v1065 = vstv %s1064
        %v1066 = vmul.f32 %v994, %v1065
        %v1067 = vmul.f32 %v995, %v1065
        %v1068 = vadd.f32 %v1044, %v1066
        %v1069 = vadd.f32 %v1045, %v1067
        %s1070 = sld [smem:[#allocation7 + $0x1b]]
        %v1071 = vstv %s1070
        %v1072 = vmul.f32 %v996, %v1071
        %v1073 = vmul.f32 %v997, %v1071
        %v1074 = vadd.f32 %v1050, %v1072
        %v1075 = vadd.f32 %v1051, %v1073
        %s1076 = sld [smem:[#allocation7 + $0x3f]]
        %v1077 = vstv %s1076
        %v1078 = vmul.f32 %v996, %v1077
        %v1079 = vmul.f32 %v997, %v1077
        %v1080 = vadd.f32 %v1056, %v1078
        %v1081 = vadd.f32 %v1057, %v1079
        %s1082 = sld [smem:[#allocation7 + $0x63]]
        %v1083 = vstv %s1082
        %v1084 = vmul.f32 %v996, %v1083
        %v1085 = vmul.f32 %v997, %v1083
        %v1086 = vadd.f32 %v1062, %v1084
        %v1087 = vadd.f32 %v1063, %v1085
        %s1088 = sld [smem:[#allocation7 + $0x87]]
        %v1089 = vstv %s1088
        %v1090 = vmul.f32 %v996, %v1089
        %v1091 = vmul.f32 %v997, %v1089
        %v1092 = vadd.f32 %v1068, %v1090
        %v1093 = vadd.f32 %v1069, %v1091
        %s1094 = sld [smem:[#allocation7 + $0x1]]
        %v1095 = vstv %s1094
        %v1096 = vmul.f32 %v990, %v1095
        %v1097 = vmul.f32 %v991, %v1095
        %1100 = vrot.lane.b32.xlu0 %v1096, 127
        %v1101 = vpop.permute.xlu0 %1100
        %1102 = vrot.lane.b32.xlu0 %v1097, 127
        %v1103 = vpop.permute.xlu0 %1102
        %v1106 = vadd.f32 %v1074, %v1101
        %v1107 = vadd.f32 %v1075, %v1103
        %s1108 = sld [smem:[#allocation7 + $0x25]]
        %v1109 = vstv %s1108
        %v1110 = vmul.f32 %v990, %v1109
        %v1111 = vmul.f32 %v991, %v1109
        %1114 = vrot.lane.b32.xlu0 %v1110, 127
        %v1115 = vpop.permute.xlu0 %1114
        %1116 = vrot.lane.b32.xlu0 %v1111, 127
        %v1117 = vpop.permute.xlu0 %1116
        %v1120 = vadd.f32 %v1080, %v1115
        %v1121 = vadd.f32 %v1081, %v1117
        %s1122 = sld [smem:[#allocation7 + $0x49]]
        %v1123 = vstv %s1122
        %v1124 = vmul.f32 %v990, %v1123
        %v1125 = vmul.f32 %v991, %v1123
        %1128 = vrot.lane.b32.xlu0 %v1124, 127
        %v1129 = vpop.permute.xlu0 %1128
        %1130 = vrot.lane.b32.xlu0 %v1125, 127
        %v1131 = vpop.permute.xlu0 %1130
        %v1134 = vadd.f32 %v1086, %v1129
        %v1135 = vadd.f32 %v1087, %v1131
        %s1136 = sld [smem:[#allocation7 + $0x6d]]
        %v1137 = vstv %s1136
        %v1138 = vmul.f32 %v990, %v1137
        %v1139 = vmul.f32 %v991, %v1137
        %1142 = vrot.lane.b32.xlu0 %v1138, 127
        %v1143 = vpop.permute.xlu0 %1142
        %1144 = vrot.lane.b32.xlu0 %v1139, 127
        %v1145 = vpop.permute.xlu0 %1144
        %v1148 = vadd.f32 %v1092, %v1143
        %v1149 = vadd.f32 %v1093, %v1145
        %s1150 = sld [smem:[#allocation7 + $0xa]]
        %v1151 = vstv %s1150
        %v1152 = vmul.f32 %v992, %v1151
        %v1153 = vmul.f32 %v993, %v1151
        %1156 = vrot.lane.b32.xlu0 %v1152, 127
        %v1157 = vpop.permute.xlu0 %1156
        %1158 = vrot.lane.b32.xlu0 %v1153, 127
        %v1159 = vpop.permute.xlu0 %1158
        %v1162 = vadd.f32 %v1106, %v1157
        %v1163 = vadd.f32 %v1107, %v1159
        %s1164 = sld [smem:[#allocation7 + $0x2e]]
        %v1165 = vstv %s1164
        %v1166 = vmul.f32 %v992, %v1165
        %v1167 = vmul.f32 %v993, %v1165
        %1170 = vrot.lane.b32.xlu0 %v1166, 127
        %v1171 = vpop.permute.xlu0 %1170
        %1172 = vrot.lane.b32.xlu0 %v1167, 127
        %v1173 = vpop.permute.xlu0 %1172
        %v1176 = vadd.f32 %v1120, %v1171
        %v1177 = vadd.f32 %v1121, %v1173
        %s1178 = sld [smem:[#allocation7 + $0x52]]
        %v1179 = vstv %s1178
        %v1180 = vmul.f32 %v992, %v1179
        %v1181 = vmul.f32 %v993, %v1179
        %1184 = vrot.lane.b32.xlu0 %v1180, 127
        %v1185 = vpop.permute.xlu0 %1184
        %1186 = vrot.lane.b32.xlu0 %v1181, 127
        %v1187 = vpop.permute.xlu0 %1186
        %v1190 = vadd.f32 %v1134, %v1185
        %v1191 = vadd.f32 %v1135, %v1187
        %s1192 = sld [smem:[#allocation7 + $0x76]]
        %v1193 = vstv %s1192
        %v1194 = vmul.f32 %v992, %v1193
        %v1195 = vmul.f32 %v993, %v1193
        %1198 = vrot.lane.b32.xlu0 %v1194, 127
        %v1199 = vpop.permute.xlu0 %1198
        %1200 = vrot.lane.b32.xlu0 %v1195, 127
        %v1201 = vpop.permute.xlu0 %1200
        %v1204 = vadd.f32 %v1148, %v1199
        %v1205 = vadd.f32 %v1149, %v1201
        %s1206 = sld [smem:[#allocation7 + $0x13]]
        %v1207 = vstv %s1206
        %v1208 = vmul.f32 %v994, %v1207
        %v1209 = vmul.f32 %v995, %v1207
        %1212 = vrot.lane.b32.xlu0 %v1208, 127
        %v1213 = vpop.permute.xlu0 %1212
        %1214 = vrot.lane.b32.xlu0 %v1209, 127
        %v1215 = vpop.permute.xlu0 %1214
        %v1218 = vadd.f32 %v1162, %v1213
        %v1219 = vadd.f32 %v1163, %v1215
        %s1220 = sld [smem:[#allocation7 + $0x37]]
        %v1221 = vstv %s1220
        %v1222 = vmul.f32 %v994, %v1221
        %v1223 = vmul.f32 %v995, %v1221
        %1226 = vrot.lane.b32.xlu0 %v1222, 127
        %v1227 = vpop.permute.xlu0 %1226
        %1228 = vrot.lane.b32.xlu0 %v1223, 127
        %v1229 = vpop.permute.xlu0 %1228
        %v1232 = vadd.f32 %v1176, %v1227
        %v1233 = vadd.f32 %v1177, %v1229
        %s1234 = sld [smem:[#allocation7 + $0x5b]]
        %v1235 = vstv %s1234
        %v1236 = vmul.f32 %v994, %v1235
        %v1237 = vmul.f32 %v995, %v1235
        %1240 = vrot.lane.b32.xlu0 %v1236, 127
        %v1241 = vpop.permute.xlu0 %1240
        %1242 = vrot.lane.b32.xlu0 %v1237, 127
        %v1243 = vpop.permute.xlu0 %1242
        %v1246 = vadd.f32 %v1190, %v1241
        %v1247 = vadd.f32 %v1191, %v1243
        %s1248 = sld [smem:[#allocation7 + $0x7f]]
        %v1249 = vstv %s1248
        %v1250 = vmul.f32 %v994, %v1249
        %v1251 = vmul.f32 %v995, %v1249
        %1254 = vrot.lane.b32.xlu0 %v1250, 127
        %v1255 = vpop.permute.xlu0 %1254
        %1256 = vrot.lane.b32.xlu0 %v1251, 127
        %v1257 = vpop.permute.xlu0 %1256
        %v1260 = vadd.f32 %v1204, %v1255
        %v1261 = vadd.f32 %v1205, %v1257
        %s1262 = sld [smem:[#allocation7 + $0x1c]]
        %v1263 = vstv %s1262
        %v1264 = vmul.f32 %v996, %v1263
        %v1265 = vmul.f32 %v997, %v1263
        %1268 = vrot.lane.b32.xlu0 %v1264, 127
        %v1269 = vpop.permute.xlu0 %1268
        %1270 = vrot.lane.b32.xlu0 %v1265, 127
        %v1271 = vpop.permute.xlu0 %1270
        %v1274 = vadd.f32 %v1218, %v1269
        %v1275 = vadd.f32 %v1219, %v1271
        %s1276 = sld [smem:[#allocation7 + $0x40]]
        %v1277 = vstv %s1276
        %v1278 = vmul.f32 %v996, %v1277
        %v1279 = vmul.f32 %v997, %v1277
        %1282 = vrot.lane.b32.xlu0 %v1278, 127
        %v1283 = vpop.permute.xlu0 %1282
        %1284 = vrot.lane.b32.xlu0 %v1279, 127
        %v1285 = vpop.permute.xlu0 %1284
        %v1288 = vadd.f32 %v1232, %v1283
        %v1289 = vadd.f32 %v1233, %v1285
        %s1290 = sld [smem:[#allocation7 + $0x64]]
        %v1291 = vstv %s1290
        %v1292 = vmul.f32 %v996, %v1291
        %v1293 = vmul.f32 %v997, %v1291
        %1296 = vrot.lane.b32.xlu0 %v1292, 127
        %v1297 = vpop.permute.xlu0 %1296
        %1298 = vrot.lane.b32.xlu0 %v1293, 127
        %v1299 = vpop.permute.xlu0 %1298
        %v1302 = vadd.f32 %v1246, %v1297
        %v1303 = vadd.f32 %v1247, %v1299
        %s1304 = sld [smem:[#allocation7 + $0x88]]
        %v1305 = vstv %s1304
        %v1306 = vmul.f32 %v996, %v1305
        %v1307 = vmul.f32 %v997, %v1305
        %1310 = vrot.lane.b32.xlu0 %v1306, 127
        %v1311 = vpop.permute.xlu0 %1310
        %1312 = vrot.lane.b32.xlu0 %v1307, 127
        %v1313 = vpop.permute.xlu0 %1312
        %v1316 = vadd.f32 %v1260, %v1311
        %v1317 = vadd.f32 %v1261, %v1313
        %s1318 = sld [smem:[#allocation7 + $0x2]]
        %v1319 = vstv %s1318
        %v1320 = vmul.f32 %v990, %v1319
        %v1321 = vmul.f32 %v991, %v1319
        %1324 = vrot.lane.b32.xlu0 %v1320, 126
        %v1325 = vpop.permute.xlu0 %1324
        %1326 = vrot.lane.b32.xlu0 %v1321, 126
        %v1327 = vpop.permute.xlu0 %1326
        %v1330 = vadd.f32 %v1274, %v1325
        %v1331 = vadd.f32 %v1275, %v1327
        %s1332 = sld [smem:[#allocation7 + $0x26]]
        %v1333 = vstv %s1332
        %v1334 = vmul.f32 %v990, %v1333
        %v1335 = vmul.f32 %v991, %v1333
        %1338 = vrot.lane.b32.xlu0 %v1334, 126
        %v1339 = vpop.permute.xlu0 %1338
        %1340 = vrot.lane.b32.xlu0 %v1335, 126
        %v1341 = vpop.permute.xlu0 %1340
        %v1344 = vadd.f32 %v1288, %v1339
        %v1345 = vadd.f32 %v1289, %v1341
        %s1346 = sld [smem:[#allocation7 + $0x4a]]
        %v1347 = vstv %s1346
        %v1348 = vmul.f32 %v990, %v1347
        %v1349 = vmul.f32 %v991, %v1347
        %1352 = vrot.lane.b32.xlu0 %v1348, 126
        %v1353 = vpop.permute.xlu0 %1352
        %1354 = vrot.lane.b32.xlu0 %v1349, 126
        %v1355 = vpop.permute.xlu0 %1354
        %v1358 = vadd.f32 %v1302, %v1353
        %v1359 = vadd.f32 %v1303, %v1355
        %s1360 = sld [smem:[#allocation7 + $0x6e]]
        %v1361 = vstv %s1360
        %v1362 = vmul.f32 %v990, %v1361
        %v1363 = vmul.f32 %v991, %v1361
        %1366 = vrot.lane.b32.xlu0 %v1362, 126
        %v1367 = vpop.permute.xlu0 %1366
        %1368 = vrot.lane.b32.xlu0 %v1363, 126
        %v1369 = vpop.permute.xlu0 %1368
        %v1372 = vadd.f32 %v1316, %v1367
        %v1373 = vadd.f32 %v1317, %v1369
        %s1374 = sld [smem:[#allocation7 + $0xb]]
        %v1375 = vstv %s1374
        %v1376 = vmul.f32 %v992, %v1375
        %v1377 = vmul.f32 %v993, %v1375
        %1380 = vrot.lane.b32.xlu0 %v1376, 126
        %v1381 = vpop.permute.xlu0 %1380
        %1382 = vrot.lane.b32.xlu0 %v1377, 126
        %v1383 = vpop.permute.xlu0 %1382
        %v1386 = vadd.f32 %v1330, %v1381
        %v1387 = vadd.f32 %v1331, %v1383
        %s1388 = sld [smem:[#allocation7 + $0x2f]]
        %v1389 = vstv %s1388
        %v1390 = vmul.f32 %v992, %v1389
        %v1391 = vmul.f32 %v993, %v1389
        %1394 = vrot.lane.b32.xlu0 %v1390, 126
        %v1395 = vpop.permute.xlu0 %1394
        %1396 = vrot.lane.b32.xlu0 %v1391, 126
        %v1397 = vpop.permute.xlu0 %1396
        %v1400 = vadd.f32 %v1344, %v1395
        %v1401 = vadd.f32 %v1345, %v1397
        %s1402 = sld [smem:[#allocation7 + $0x53]]
        %v1403 = vstv %s1402
        %v1404 = vmul.f32 %v992, %v1403
        %v1405 = vmul.f32 %v993, %v1403
        %1408 = vrot.lane.b32.xlu0 %v1404, 126
        %v1409 = vpop.permute.xlu0 %1408
        %1410 = vrot.lane.b32.xlu0 %v1405, 126
        %v1411 = vpop.permute.xlu0 %1410
        %v1414 = vadd.f32 %v1358, %v1409
        %v1415 = vadd.f32 %v1359, %v1411
        %s1416 = sld [smem:[#allocation7 + $0x77]]
        %v1417 = vstv %s1416
        %v1418 = vmul.f32 %v992, %v1417
        %v1419 = vmul.f32 %v993, %v1417
        %1422 = vrot.lane.b32.xlu0 %v1418, 126
        %v1423 = vpop.permute.xlu0 %1422
        %1424 = vrot.lane.b32.xlu0 %v1419, 126
        %v1425 = vpop.permute.xlu0 %1424
        %v1428 = vadd.f32 %v1372, %v1423
        %v1429 = vadd.f32 %v1373, %v1425
        %s1430 = sld [smem:[#allocation7 + $0x14]]
        %v1431 = vstv %s1430
        %v1432 = vmul.f32 %v994, %v1431
        %v1433 = vmul.f32 %v995, %v1431
        %1436 = vrot.lane.b32.xlu0 %v1432, 126
        %v1437 = vpop.permute.xlu0 %1436
        %1438 = vrot.lane.b32.xlu0 %v1433, 126
        %v1439 = vpop.permute.xlu0 %1438
        %v1442 = vadd.f32 %v1386, %v1437
        %v1443 = vadd.f32 %v1387, %v1439
        %s1444 = sld [smem:[#allocation7 + $0x38]]
        %v1445 = vstv %s1444
        %v1446 = vmul.f32 %v994, %v1445
        %v1447 = vmul.f32 %v995, %v1445
        %1450 = vrot.lane.b32.xlu0 %v1446, 126
        %v1451 = vpop.permute.xlu0 %1450
        %1452 = vrot.lane.b32.xlu0 %v1447, 126
        %v1453 = vpop.permute.xlu0 %1452
        %v1456 = vadd.f32 %v1400, %v1451
        %v1457 = vadd.f32 %v1401, %v1453
        %s1458 = sld [smem:[#allocation7 + $0x5c]]
        %v1459 = vstv %s1458
        %v1460 = vmul.f32 %v994, %v1459
        %v1461 = vmul.f32 %v995, %v1459
        %1464 = vrot.lane.b32.xlu0 %v1460, 126
        %v1465 = vpop.permute.xlu0 %1464
        %1466 = vrot.lane.b32.xlu0 %v1461, 126
        %v1467 = vpop.permute.xlu0 %1466
        %v1470 = vadd.f32 %v1414, %v1465
        %v1471 = vadd.f32 %v1415, %v1467
        %s1472 = sld [smem:[#allocation7 + $0x80]]
        %v1473 = vstv %s1472
        %v1474 = vmul.f32 %v994, %v1473
        %v1475 = vmul.f32 %v995, %v1473
        %1478 = vrot.lane.b32.xlu0 %v1474, 126
        %v1479 = vpop.permute.xlu0 %1478
        %1480 = vrot.lane.b32.xlu0 %v1475, 126
        %v1481 = vpop.permute.xlu0 %1480
        %v1484 = vadd.f32 %v1428, %v1479
        %v1485 = vadd.f32 %v1429, %v1481
        %s1486 = sld [smem:[#allocation7 + $0x1d]]
        %v1487 = vstv %s1486
        %v1488 = vmul.f32 %v996, %v1487
        %v1489 = vmul.f32 %v997, %v1487
        %1492 = vrot.lane.b32.xlu0 %v1488, 126
        %v1493 = vpop.permute.xlu0 %1492
        %1494 = vrot.lane.b32.xlu0 %v1489, 126
        %v1495 = vpop.permute.xlu0 %1494
        %v1498 = vadd.f32 %v1442, %v1493
        %v1499 = vadd.f32 %v1443, %v1495
        %s1500 = sld [smem:[#allocation7 + $0x41]]
        %v1501 = vstv %s1500
        %v1502 = vmul.f32 %v996, %v1501
        %v1503 = vmul.f32 %v997, %v1501
        %1506 = vrot.lane.b32.xlu0 %v1502, 126
        %v1507 = vpop.permute.xlu0 %1506
        %1508 = vrot.lane.b32.xlu0 %v1503, 126
        %v1509 = vpop.permute.xlu0 %1508
        %v1512 = vadd.f32 %v1456, %v1507
        %v1513 = vadd.f32 %v1457, %v1509
        %s1514 = sld [smem:[#allocation7 + $0x65]]
        %v1515 = vstv %s1514
        %v1516 = vmul.f32 %v996, %v1515
        %v1517 = vmul.f32 %v997, %v1515
        %1520 = vrot.lane.b32.xlu0 %v1516, 126
        %v1521 = vpop.permute.xlu0 %1520
        %1522 = vrot.lane.b32.xlu0 %v1517, 126
        %v1523 = vpop.permute.xlu0 %1522
        %v1526 = vadd.f32 %v1470, %v1521
        %v1527 = vadd.f32 %v1471, %v1523
        %s1528 = sld [smem:[#allocation7 + $0x89]]
        %v1529 = vstv %s1528
        %v1530 = vmul.f32 %v996, %v1529
        %v1531 = vmul.f32 %v997, %v1529
        %1534 = vrot.lane.b32.xlu0 %v1530, 126
        %v1535 = vpop.permute.xlu0 %1534
        %1536 = vrot.lane.b32.xlu0 %v1531, 126
        %v1537 = vpop.permute.xlu0 %1536
        %v1540 = vadd.f32 %v1484, %v1535
        %v1541 = vadd.f32 %v1485, %v1537
        %v1542 = vld [vmem:[#allocation2 + $0x1] sm:$0xff]
        %v1543 = vld [vmem:[#allocation2 + $0x9] sm:$0xff]
        %v1544 = vld [vmem:[#allocation2 + $0x19] sm:$0xff]
        %v1545 = vld [vmem:[#allocation2 + $0x21] sm:$0xff]
        %v1546 = vld [vmem:[#allocation2 + $0x31] sm:$0xff]
        %v1547 = vld [vmem:[#allocation2 + $0x39] sm:$0xff]
        %v1548 = vld [vmem:[#allocation2 + $0x49] sm:$0xff]
        %v1549 = vld [vmem:[#allocation2 + $0x51] sm:$0xff]
        %s1550 = sld [smem:[#allocation7 + $0x3]]
        %v1551 = vstv %s1550
        %v1552 = vmul.f32 %v1542, %v1551
        %v1553 = vmul.f32 %v1543, %v1551
        %v1554 = vadd.f32 %v1498, %v1552
        %v1555 = vadd.f32 %v1499, %v1553
        %s1556 = sld [smem:[#allocation7 + $0x27]]
        %v1557 = vstv %s1556
        %v1558 = vmul.f32 %v1542, %v1557
        %v1559 = vmul.f32 %v1543, %v1557
        %v1560 = vadd.f32 %v1512, %v1558
        %v1561 = vadd.f32 %v1513, %v1559
        %s1562 = sld [smem:[#allocation7 + $0x4b]]
        %v1563 = vstv %s1562
        %v1564 = vmul.f32 %v1542, %v1563
        %v1565 = vmul.f32 %v1543, %v1563
        %v1566 = vadd.f32 %v1526, %v1564
        %v1567 = vadd.f32 %v1527, %v1565
        %s1568 = sld [smem:[#allocation7 + $0x6f]]
        %v1569 = vstv %s1568
        %v1570 = vmul.f32 %v1542, %v1569
        %v1571 = vmul.f32 %v1543, %v1569
        %v1572 = vadd.f32 %v1540, %v1570
        %v1573 = vadd.f32 %v1541, %v1571
        %s1574 = sld [smem:[#allocation7 + $0xc]]
        %v1575 = vstv %s1574
        %v1576 = vmul.f32 %v1544, %v1575
        %v1577 = vmul.f32 %v1545, %v1575
        %v1578 = vadd.f32 %v1554, %v1576
        %v1579 = vadd.f32 %v1555, %v1577
        %s1580 = sld [smem:[#allocation7 + $0x30]]
        %v1581 = vstv %s1580
        %v1582 = vmul.f32 %v1544, %v1581
        %v1583 = vmul.f32 %v1545, %v1581
        %v1584 = vadd.f32 %v1560, %v1582
        %v1585 = vadd.f32 %v1561, %v1583
        %s1586 = sld [smem:[#allocation7 + $0x54]]
        %v1587 = vstv %s1586
        %v1588 = vmul.f32 %v1544, %v1587
        %v1589 = vmul.f32 %v1545, %v1587
        %v1590 = vadd.f32 %v1566, %v1588
        %v1591 = vadd.f32 %v1567, %v1589
        %s1592 = sld [smem:[#allocation7 + $0x78]]
        %v1593 = vstv %s1592
        %v1594 = vmul.f32 %v1544, %v1593
        %v1595 = vmul.f32 %v1545, %v1593
        %v1596 = vadd.f32 %v1572, %v1594
        %v1597 = vadd.f32 %v1573, %v1595
        %s1598 = sld [smem:[#allocation7 + $0x15]]
        %v1599 = vstv %s1598
        %v1600 = vmul.f32 %v1546, %v1599
        %v1601 = vmul.f32 %v1547, %v1599
        %v1602 = vadd.f32 %v1578, %v1600
        %v1603 = vadd.f32 %v1579, %v1601
        %s1604 = sld [smem:[#allocation7 + $0x39]]
        %v1605 = vstv %s1604
        %v1606 = vmul.f32 %v1546, %v1605
        %v1607 = vmul.f32 %v1547, %v1605
        %v1608 = vadd.f32 %v1584, %v1606
        %v1609 = vadd.f32 %v1585, %v1607
        %s1610 = sld [smem:[#allocation7 + $0x5d]]
        %v1611 = vstv %s1610
        %v1612 = vmul.f32 %v1546, %v1611
        %v1613 = vmul.f32 %v1547, %v1611
        %v1614 = vadd.f32 %v1590, %v1612
        %v1615 = vadd.f32 %v1591, %v1613
        %s1616 = sld [smem:[#allocation7 + $0x81]]
        %v1617 = vstv %s1616
        %v1618 = vmul.f32 %v1546, %v1617
        %v1619 = vmul.f32 %v1547, %v1617
        %v1620 = vadd.f32 %v1596, %v1618
        %v1621 = vadd.f32 %v1597, %v1619
        %s1622 = sld [smem:[#allocation7 + $0x1e]]
        %v1623 = vstv %s1622
        %v1624 = vmul.f32 %v1548, %v1623
        %v1625 = vmul.f32 %v1549, %v1623
        %v1626 = vadd.f32 %v1602, %v1624
        %v1627 = vadd.f32 %v1603, %v1625
        %s1628 = sld [smem:[#allocation7 + $0x42]]
        %v1629 = vstv %s1628
        %v1630 = vmul.f32 %v1548, %v1629
        %v1631 = vmul.f32 %v1549, %v1629
        %v1632 = vadd.f32 %v1608, %v1630
        %v1633 = vadd.f32 %v1609, %v1631
        %s1634 = sld [smem:[#allocation7 + $0x66]]
        %v1635 = vstv %s1634
        %v1636 = vmul.f32 %v1548, %v1635
        %v1637 = vmul.f32 %v1549, %v1635
        %v1638 = vadd.f32 %v1614, %v1636
        %v1639 = vadd.f32 %v1615, %v1637
        %s1640 = sld [smem:[#allocation7 + $0x8a]]
        %v1641 = vstv %s1640
        %v1642 = vmul.f32 %v1548, %v1641
        %v1643 = vmul.f32 %v1549, %v1641
        %v1644 = vadd.f32 %v1620, %v1642
        %v1645 = vadd.f32 %v1621, %v1643
        %s1646 = sld [smem:[#allocation7 + $0x4]]
        %v1647 = vstv %s1646
        %v1648 = vmul.f32 %v1542, %v1647
        %v1649 = vmul.f32 %v1543, %v1647
        %1652 = vrot.lane.b32.xlu0 %v1648, 127
        %v1653 = vpop.permute.xlu0 %1652
        %1654 = vrot.lane.b32.xlu0 %v1649, 127
        %v1655 = vpop.permute.xlu0 %1654
        %v1658 = vadd.f32 %v1626, %v1653
        %v1659 = vadd.f32 %v1627, %v1655
        %s1660 = sld [smem:[#allocation7 + $0x28]]
        %v1661 = vstv %s1660
        %v1662 = vmul.f32 %v1542, %v1661
        %v1663 = vmul.f32 %v1543, %v1661
        %1666 = vrot.lane.b32.xlu0 %v1662, 127
        %v1667 = vpop.permute.xlu0 %1666
        %1668 = vrot.lane.b32.xlu0 %v1663, 127
        %v1669 = vpop.permute.xlu0 %1668
        %v1672 = vadd.f32 %v1632, %v1667
        %v1673 = vadd.f32 %v1633, %v1669
        %s1674 = sld [smem:[#allocation7 + $0x4c]]
        %v1675 = vstv %s1674
        %v1676 = vmul.f32 %v1542, %v1675
        %v1677 = vmul.f32 %v1543, %v1675
        %1680 = vrot.lane.b32.xlu0 %v1676, 127
        %v1681 = vpop.permute.xlu0 %1680
        %1682 = vrot.lane.b32.xlu0 %v1677, 127
        %v1683 = vpop.permute.xlu0 %1682
        %v1686 = vadd.f32 %v1638, %v1681
        %v1687 = vadd.f32 %v1639, %v1683
        %s1688 = sld [smem:[#allocation7 + $0x70]]
        %v1689 = vstv %s1688
        %v1690 = vmul.f32 %v1542, %v1689
        %v1691 = vmul.f32 %v1543, %v1689
        %1694 = vrot.lane.b32.xlu0 %v1690, 127
        %v1695 = vpop.permute.xlu0 %1694
        %1696 = vrot.lane.b32.xlu0 %v1691, 127
        %v1697 = vpop.permute.xlu0 %1696
        %v1700 = vadd.f32 %v1644, %v1695
        %v1701 = vadd.f32 %v1645, %v1697
        %s1702 = sld [smem:[#allocation7 + $0xd]]
        %v1703 = vstv %s1702
        %v1704 = vmul.f32 %v1544, %v1703
        %v1705 = vmul.f32 %v1545, %v1703
        %1708 = vrot.lane.b32.xlu0 %v1704, 127
        %v1709 = vpop.permute.xlu0 %1708
        %1710 = vrot.lane.b32.xlu0 %v1705, 127
        %v1711 = vpop.permute.xlu0 %1710
        %v1714 = vadd.f32 %v1658, %v1709
        %v1715 = vadd.f32 %v1659, %v1711
        %s1716 = sld [smem:[#allocation7 + $0x31]]
        %v1717 = vstv %s1716
        %v1718 = vmul.f32 %v1544, %v1717
        %v1719 = vmul.f32 %v1545, %v1717
        %1722 = vrot.lane.b32.xlu0 %v1718, 127
        %v1723 = vpop.permute.xlu0 %1722
        %1724 = vrot.lane.b32.xlu0 %v1719, 127
        %v1725 = vpop.permute.xlu0 %1724
        %v1728 = vadd.f32 %v1672, %v1723
        %v1729 = vadd.f32 %v1673, %v1725
        %s1730 = sld [smem:[#allocation7 + $0x55]]
        %v1731 = vstv %s1730
        %v1732 = vmul.f32 %v1544, %v1731
        %v1733 = vmul.f32 %v1545, %v1731
        %1736 = vrot.lane.b32.xlu0 %v1732, 127
        %v1737 = vpop.permute.xlu0 %1736
        %1738 = vrot.lane.b32.xlu0 %v1733, 127
        %v1739 = vpop.permute.xlu0 %1738
        %v1742 = vadd.f32 %v1686, %v1737
        %v1743 = vadd.f32 %v1687, %v1739
        %s1744 = sld [smem:[#allocation7 + $0x79]]
        %v1745 = vstv %s1744
        %v1746 = vmul.f32 %v1544, %v1745
        %v1747 = vmul.f32 %v1545, %v1745
        %1750 = vrot.lane.b32.xlu0 %v1746, 127
        %v1751 = vpop.permute.xlu0 %1750
        %1752 = vrot.lane.b32.xlu0 %v1747, 127
        %v1753 = vpop.permute.xlu0 %1752
        %v1756 = vadd.f32 %v1700, %v1751
        %v1757 = vadd.f32 %v1701, %v1753
        %s1758 = sld [smem:[#allocation7 + $0x16]]
        %v1759 = vstv %s1758
        %v1760 = vmul.f32 %v1546, %v1759
        %v1761 = vmul.f32 %v1547, %v1759
        %1764 = vrot.lane.b32.xlu0 %v1760, 127
        %v1765 = vpop.permute.xlu0 %1764
        %1766 = vrot.lane.b32.xlu0 %v1761, 127
        %v1767 = vpop.permute.xlu0 %1766
        %v1770 = vadd.f32 %v1714, %v1765
        %v1771 = vadd.f32 %v1715, %v1767
        %s1772 = sld [smem:[#allocation7 + $0x3a]]
        %v1773 = vstv %s1772
        %v1774 = vmul.f32 %v1546, %v1773
        %v1775 = vmul.f32 %v1547, %v1773
        %1778 = vrot.lane.b32.xlu0 %v1774, 127
        %v1779 = vpop.permute.xlu0 %1778
        %1780 = vrot.lane.b32.xlu0 %v1775, 127
        %v1781 = vpop.permute.xlu0 %1780
        %v1784 = vadd.f32 %v1728, %v1779
        %v1785 = vadd.f32 %v1729, %v1781
        %s1786 = sld [smem:[#allocation7 + $0x5e]]
        %v1787 = vstv %s1786
        %v1788 = vmul.f32 %v1546, %v1787
        %v1789 = vmul.f32 %v1547, %v1787
        %1792 = vrot.lane.b32.xlu0 %v1788, 127
        %v1793 = vpop.permute.xlu0 %1792
        %1794 = vrot.lane.b32.xlu0 %v1789, 127
        %v1795 = vpop.permute.xlu0 %1794
        %v1798 = vadd.f32 %v1742, %v1793
        %v1799 = vadd.f32 %v1743, %v1795
        %s1800 = sld [smem:[#allocation7 + $0x82]]
        %v1801 = vstv %s1800
        %v1802 = vmul.f32 %v1546, %v1801
        %v1803 = vmul.f32 %v1547, %v1801
        %1806 = vrot.lane.b32.xlu0 %v1802, 127
        %v1807 = vpop.permute.xlu0 %1806
        %1808 = vrot.lane.b32.xlu0 %v1803, 127
        %v1809 = vpop.permute.xlu0 %1808
        %v1812 = vadd.f32 %v1756, %v1807
        %v1813 = vadd.f32 %v1757, %v1809
        %s1814 = sld [smem:[#allocation7 + $0x1f]]
        %v1815 = vstv %s1814
        %v1816 = vmul.f32 %v1548, %v1815
        %v1817 = vmul.f32 %v1549, %v1815
        %1820 = vrot.lane.b32.xlu0 %v1816, 127
        %v1821 = vpop.permute.xlu0 %1820
        %1822 = vrot.lane.b32.xlu0 %v1817, 127
        %v1823 = vpop.permute.xlu0 %1822
        %v1826 = vadd.f32 %v1770, %v1821
        %v1827 = vadd.f32 %v1771, %v1823
        %s1828 = sld [smem:[#allocation7 + $0x43]]
        %v1829 = vstv %s1828
        %v1830 = vmul.f32 %v1548, %v1829
        %v1831 = vmul.f32 %v1549, %v1829
        %1834 = vrot.lane.b32.xlu0 %v1830, 127
        %v1835 = vpop.permute.xlu0 %1834
        %1836 = vrot.lane.b32.xlu0 %v1831, 127
        %v1837 = vpop.permute.xlu0 %1836
        %v1840 = vadd.f32 %v1784, %v1835
        %v1841 = vadd.f32 %v1785, %v1837
        %s1842 = sld [smem:[#allocation7 + $0x67]]
        %v1843 = vstv %s1842
        %v1844 = vmul.f32 %v1548, %v1843
        %v1845 = vmul.f32 %v1549, %v1843
        %1848 = vrot.lane.b32.xlu0 %v1844, 127
        %v1849 = vpop.permute.xlu0 %1848
        %1850 = vrot.lane.b32.xlu0 %v1845, 127
        %v1851 = vpop.permute.xlu0 %1850
        %v1854 = vadd.f32 %v1798, %v1849
        %v1855 = vadd.f32 %v1799, %v1851
        %s1856 = sld [smem:[#allocation7 + $0x8b]]
        %v1857 = vstv %s1856
        %v1858 = vmul.f32 %v1548, %v1857
        %v1859 = vmul.f32 %v1549, %v1857
        %1862 = vrot.lane.b32.xlu0 %v1858, 127
        %v1863 = vpop.permute.xlu0 %1862
        %1864 = vrot.lane.b32.xlu0 %v1859, 127
        %v1865 = vpop.permute.xlu0 %1864
        %v1868 = vadd.f32 %v1812, %v1863
        %v1869 = vadd.f32 %v1813, %v1865
        %s1870 = sld [smem:[#allocation7 + $0x5]]
        %v1871 = vstv %s1870
        %v1872 = vmul.f32 %v1542, %v1871
        %v1873 = vmul.f32 %v1543, %v1871
        %1876 = vrot.lane.b32.xlu0 %v1872, 126
        %v1877 = vpop.permute.xlu0 %1876
        %1878 = vrot.lane.b32.xlu0 %v1873, 126
        %v1879 = vpop.permute.xlu0 %1878
        %v1882 = vadd.f32 %v1826, %v1877
        %v1883 = vadd.f32 %v1827, %v1879
        %s1884 = sld [smem:[#allocation7 + $0x29]]
        %v1885 = vstv %s1884
        %v1886 = vmul.f32 %v1542, %v1885
        %v1887 = vmul.f32 %v1543, %v1885
        %1890 = vrot.lane.b32.xlu0 %v1886, 126
        %v1891 = vpop.permute.xlu0 %1890
        %1892 = vrot.lane.b32.xlu0 %v1887, 126
        %v1893 = vpop.permute.xlu0 %1892
        %v1896 = vadd.f32 %v1840, %v1891
        %v1897 = vadd.f32 %v1841, %v1893
        %s1898 = sld [smem:[#allocation7 + $0x4d]]
        %v1899 = vstv %s1898
        %v1900 = vmul.f32 %v1542, %v1899
        %v1901 = vmul.f32 %v1543, %v1899
        %1904 = vrot.lane.b32.xlu0 %v1900, 126
        %v1905 = vpop.permute.xlu0 %1904
        %1906 = vrot.lane.b32.xlu0 %v1901, 126
        %v1907 = vpop.permute.xlu0 %1906
        %v1910 = vadd.f32 %v1854, %v1905
        %v1911 = vadd.f32 %v1855, %v1907
        %s1912 = sld [smem:[#allocation7 + $0x71]]
        %v1913 = vstv %s1912
        %v1914 = vmul.f32 %v1542, %v1913
        %v1915 = vmul.f32 %v1543, %v1913
        %1918 = vrot.lane.b32.xlu0 %v1914, 126
        %v1919 = vpop.permute.xlu0 %1918
        %1920 = vrot.lane.b32.xlu0 %v1915, 126
        %v1921 = vpop.permute.xlu0 %1920
        %v1924 = vadd.f32 %v1868, %v1919
        %v1925 = vadd.f32 %v1869, %v1921
        %s1926 = sld [smem:[#allocation7 + $0xe]]
        %v1927 = vstv %s1926
        %v1928 = vmul.f32 %v1544, %v1927
        %v1929 = vmul.f32 %v1545, %v1927
        %1932 = vrot.lane.b32.xlu0 %v1928, 126
        %v1933 = vpop.permute.xlu0 %1932
        %1934 = vrot.lane.b32.xlu0 %v1929, 126
        %v1935 = vpop.permute.xlu0 %1934
        %v1938 = vadd.f32 %v1882, %v1933
        %v1939 = vadd.f32 %v1883, %v1935
        %s1940 = sld [smem:[#allocation7 + $0x32]]
        %v1941 = vstv %s1940
        %v1942 = vmul.f32 %v1544, %v1941
        %v1943 = vmul.f32 %v1545, %v1941
        %1946 = vrot.lane.b32.xlu0 %v1942, 126
        %v1947 = vpop.permute.xlu0 %1946
        %1948 = vrot.lane.b32.xlu0 %v1943, 126
        %v1949 = vpop.permute.xlu0 %1948
        %v1952 = vadd.f32 %v1896, %v1947
        %v1953 = vadd.f32 %v1897, %v1949
        %s1954 = sld [smem:[#allocation7 + $0x56]]
        %v1955 = vstv %s1954
        %v1956 = vmul.f32 %v1544, %v1955
        %v1957 = vmul.f32 %v1545, %v1955
        %1960 = vrot.lane.b32.xlu0 %v1956, 126
        %v1961 = vpop.permute.xlu0 %1960
        %1962 = vrot.lane.b32.xlu0 %v1957, 126
        %v1963 = vpop.permute.xlu0 %1962
        %v1966 = vadd.f32 %v1910, %v1961
        %v1967 = vadd.f32 %v1911, %v1963
        %s1968 = sld [smem:[#allocation7 + $0x7a]]
        %v1969 = vstv %s1968
        %v1970 = vmul.f32 %v1544, %v1969
        %v1971 = vmul.f32 %v1545, %v1969
        %1974 = vrot.lane.b32.xlu0 %v1970, 126
        %v1975 = vpop.permute.xlu0 %1974
        %1976 = vrot.lane.b32.xlu0 %v1971, 126
        %v1977 = vpop.permute.xlu0 %1976
        %v1980 = vadd.f32 %v1924, %v1975
        %v1981 = vadd.f32 %v1925, %v1977
        %s1982 = sld [smem:[#allocation7 + $0x17]]
        %v1983 = vstv %s1982
        %v1984 = vmul.f32 %v1546, %v1983
        %v1985 = vmul.f32 %v1547, %v1983
        %1988 = vrot.lane.b32.xlu0 %v1984, 126
        %v1989 = vpop.permute.xlu0 %1988
        %1990 = vrot.lane.b32.xlu0 %v1985, 126
        %v1991 = vpop.permute.xlu0 %1990
        %v1994 = vadd.f32 %v1938, %v1989
        %v1995 = vadd.f32 %v1939, %v1991
        %s1996 = sld [smem:[#allocation7 + $0x3b]]
        %v1997 = vstv %s1996
        %v1998 = vmul.f32 %v1546, %v1997
        %v1999 = vmul.f32 %v1547, %v1997
        %2002 = vrot.lane.b32.xlu0 %v1998, 126
        %v2003 = vpop.permute.xlu0 %2002
        %2004 = vrot.lane.b32.xlu0 %v1999, 126
        %v2005 = vpop.permute.xlu0 %2004
        %v2008 = vadd.f32 %v1952, %v2003
        %v2009 = vadd.f32 %v1953, %v2005
        %s2010 = sld [smem:[#allocation7 + $0x5f]]
        %v2011 = vstv %s2010
        %v2012 = vmul.f32 %v1546, %v2011
        %v2013 = vmul.f32 %v1547, %v2011
        %2016 = vrot.lane.b32.xlu0 %v2012, 126
        %v2017 = vpop.permute.xlu0 %2016
        %2018 = vrot.lane.b32.xlu0 %v2013, 126
        %v2019 = vpop.permute.xlu0 %2018
        %v2022 = vadd.f32 %v1966, %v2017
        %v2023 = vadd.f32 %v1967, %v2019
        %s2024 = sld [smem:[#allocation7 + $0x83]]
        %v2025 = vstv %s2024
        %v2026 = vmul.f32 %v1546, %v2025
        %v2027 = vmul.f32 %v1547, %v2025
        %2030 = vrot.lane.b32.xlu0 %v2026, 126
        %v2031 = vpop.permute.xlu0 %2030
        %2032 = vrot.lane.b32.xlu0 %v2027, 126
        %v2033 = vpop.permute.xlu0 %2032
        %v2036 = vadd.f32 %v1980, %v2031
        %v2037 = vadd.f32 %v1981, %v2033
        %s2038 = sld [smem:[#allocation7 + $0x20]]
        %v2039 = vstv %s2038
        %v2040 = vmul.f32 %v1548, %v2039
        %v2041 = vmul.f32 %v1549, %v2039
        %2044 = vrot.lane.b32.xlu0 %v2040, 126
        %v2045 = vpop.permute.xlu0 %2044
        %2046 = vrot.lane.b32.xlu0 %v2041, 126
        %v2047 = vpop.permute.xlu0 %2046
        %v2050 = vadd.f32 %v1994, %v2045
        %v2051 = vadd.f32 %v1995, %v2047
        %s2052 = sld [smem:[#allocation7 + $0x44]]
        %v2053 = vstv %s2052
        %v2054 = vmul.f32 %v1548, %v2053
        %v2055 = vmul.f32 %v1549, %v2053
        %2058 = vrot.lane.b32.xlu0 %v2054, 126
        %v2059 = vpop.permute.xlu0 %2058
        %2060 = vrot.lane.b32.xlu0 %v2055, 126
        %v2061 = vpop.permute.xlu0 %2060
        %v2064 = vadd.f32 %v2008, %v2059
        %v2065 = vadd.f32 %v2009, %v2061
        %s2066 = sld [smem:[#allocation7 + $0x68]]
        %v2067 = vstv %s2066
        %v2068 = vmul.f32 %v1548, %v2067
        %v2069 = vmul.f32 %v1549, %v2067
        %2072 = vrot.lane.b32.xlu0 %v2068, 126
        %v2073 = vpop.permute.xlu0 %2072
        %2074 = vrot.lane.b32.xlu0 %v2069, 126
        %v2075 = vpop.permute.xlu0 %2074
        %v2078 = vadd.f32 %v2022, %v2073
        %v2079 = vadd.f32 %v2023, %v2075
        %s2080 = sld [smem:[#allocation7 + $0x8c]]
        %v2081 = vstv %s2080
        %v2082 = vmul.f32 %v1548, %v2081
        %v2083 = vmul.f32 %v1549, %v2081
        %2086 = vrot.lane.b32.xlu0 %v2082, 126
        %v2087 = vpop.permute.xlu0 %2086
        %2088 = vrot.lane.b32.xlu0 %v2083, 126
        %v2089 = vpop.permute.xlu0 %2088
        %v2092 = vadd.f32 %v2036, %v2087
        %v2093 = vadd.f32 %v2037, %v2089
        %v2094 = vld [vmem:[#allocation2 + $0x2] sm:$0xff]
        %v2095 = vld [vmem:[#allocation2 + $0xa] sm:$0xff]
        %v2096 = vld [vmem:[#allocation2 + $0x1a] sm:$0xff]
        %v2097 = vld [vmem:[#allocation2 + $0x22] sm:$0xff]
        %v2098 = vld [vmem:[#allocation2 + $0x32] sm:$0xff]
        %v2099 = vld [vmem:[#allocation2 + $0x3a] sm:$0xff]
        %v2100 = vld [vmem:[#allocation2 + $0x4a] sm:$0xff]
        %v2101 = vld [vmem:[#allocation2 + $0x52] sm:$0xff]
        %s2102 = sld [smem:[#allocation7 + $0x6]]
        %v2103 = vstv %s2102
        %v2104 = vmul.f32 %v2094, %v2103
        %v2105 = vmul.f32 %v2095, %v2103
        %v2106 = vadd.f32 %v2050, %v2104
        %v2107 = vadd.f32 %v2051, %v2105
        %s2108 = sld [smem:[#allocation7 + $0x2a]]
        %v2109 = vstv %s2108
        %v2110 = vmul.f32 %v2094, %v2109
        %v2111 = vmul.f32 %v2095, %v2109
        %v2112 = vadd.f32 %v2064, %v2110
        %v2113 = vadd.f32 %v2065, %v2111
        %s2114 = sld [smem:[#allocation7 + $0x4e]]
        %v2115 = vstv %s2114
        %v2116 = vmul.f32 %v2094, %v2115
        %v2117 = vmul.f32 %v2095, %v2115
        %v2118 = vadd.f32 %v2078, %v2116
        %v2119 = vadd.f32 %v2079, %v2117
        %s2120 = sld [smem:[#allocation7 + $0x72]]
        %v2121 = vstv %s2120
        %v2122 = vmul.f32 %v2094, %v2121
        %v2123 = vmul.f32 %v2095, %v2121
        %v2124 = vadd.f32 %v2092, %v2122
        %v2125 = vadd.f32 %v2093, %v2123
        %s2126 = sld [smem:[#allocation7 + $0xf]]
        %v2127 = vstv %s2126
        %v2128 = vmul.f32 %v2096, %v2127
        %v2129 = vmul.f32 %v2097, %v2127
        %v2130 = vadd.f32 %v2106, %v2128
        %v2131 = vadd.f32 %v2107, %v2129
        %s2132 = sld [smem:[#allocation7 + $0x33]]
        %v2133 = vstv %s2132
        %v2134 = vmul.f32 %v2096, %v2133
        %v2135 = vmul.f32 %v2097, %v2133
        %v2136 = vadd.f32 %v2112, %v2134
        %v2137 = vadd.f32 %v2113, %v2135
        %s2138 = sld [smem:[#allocation7 + $0x57]]
        %v2139 = vstv %s2138
        %v2140 = vmul.f32 %v2096, %v2139
        %v2141 = vmul.f32 %v2097, %v2139
        %v2142 = vadd.f32 %v2118, %v2140
        %v2143 = vadd.f32 %v2119, %v2141
        %s2144 = sld [smem:[#allocation7 + $0x7b]]
        %v2145 = vstv %s2144
        %v2146 = vmul.f32 %v2096, %v2145
        %v2147 = vmul.f32 %v2097, %v2145
        %v2148 = vadd.f32 %v2124, %v2146
        %v2149 = vadd.f32 %v2125, %v2147
        %s2150 = sld [smem:[#allocation7 + $0x18]]
        %v2151 = vstv %s2150
        %v2152 = vmul.f32 %v2098, %v2151
        %v2153 = vmul.f32 %v2099, %v2151
        %v2154 = vadd.f32 %v2130, %v2152
        %v2155 = vadd.f32 %v2131, %v2153
        %s2156 = sld [smem:[#allocation7 + $0x3c]]
        %v2157 = vstv %s2156
        %v2158 = vmul.f32 %v2098, %v2157
        %v2159 = vmul.f32 %v2099, %v2157
        %v2160 = vadd.f32 %v2136, %v2158
        %v2161 = vadd.f32 %v2137, %v2159
        %s2162 = sld [smem:[#allocation7 + $0x60]]
        %v2163 = vstv %s2162
        %v2164 = vmul.f32 %v2098, %v2163
        %v2165 = vmul.f32 %v2099, %v2163
        %v2166 = vadd.f32 %v2142, %v2164
        %v2167 = vadd.f32 %v2143, %v2165
        %s2168 = sld [smem:[#allocation7 + $0x84]]
        %v2169 = vstv %s2168
        %v2170 = vmul.f32 %v2098, %v2169
        %v2171 = vmul.f32 %v2099, %v2169
        %v2172 = vadd.f32 %v2148, %v2170
        %v2173 = vadd.f32 %v2149, %v2171
        %s2174 = sld [smem:[#allocation7 + $0x21]]
        %v2175 = vstv %s2174
        %v2176 = vmul.f32 %v2100, %v2175
        %v2177 = vmul.f32 %v2101, %v2175
        %v2178 = vadd.f32 %v2154, %v2176
        %v2179 = vadd.f32 %v2155, %v2177
        %s2180 = sld [smem:[#allocation7 + $0x45]]
        %v2181 = vstv %s2180
        %v2182 = vmul.f32 %v2100, %v2181
        %v2183 = vmul.f32 %v2101, %v2181
        %v2184 = vadd.f32 %v2160, %v2182
        %v2185 = vadd.f32 %v2161, %v2183
        %s2186 = sld [smem:[#allocation7 + $0x69]]
        %v2187 = vstv %s2186
        %v2188 = vmul.f32 %v2100, %v2187
        %v2189 = vmul.f32 %v2101, %v2187
        %v2190 = vadd.f32 %v2166, %v2188
        %v2191 = vadd.f32 %v2167, %v2189
        %s2192 = sld [smem:[#allocation7 + $0x8d]]
        %v2193 = vstv %s2192
        %v2194 = vmul.f32 %v2100, %v2193
        %v2195 = vmul.f32 %v2101, %v2193
        %v2196 = vadd.f32 %v2172, %v2194
        %v2197 = vadd.f32 %v2173, %v2195
        %s2198 = sld [smem:[#allocation7 + $0x7]]
        %v2199 = vstv %s2198
        %v2200 = vmul.f32 %v2094, %v2199
        %v2201 = vmul.f32 %v2095, %v2199
        %2204 = vrot.lane.b32.xlu0 %v2200, 127
        %v2205 = vpop.permute.xlu0 %2204
        %2206 = vrot.lane.b32.xlu0 %v2201, 127
        %v2207 = vpop.permute.xlu0 %2206
        %v2210 = vadd.f32 %v2178, %v2205
        %v2211 = vadd.f32 %v2179, %v2207
        %s2212 = sld [smem:[#allocation7 + $0x2b]]
        %v2213 = vstv %s2212
        %v2214 = vmul.f32 %v2094, %v2213
        %v2215 = vmul.f32 %v2095, %v2213
        %2218 = vrot.lane.b32.xlu0 %v2214, 127
        %v2219 = vpop.permute.xlu0 %2218
        %2220 = vrot.lane.b32.xlu0 %v2215, 127
        %v2221 = vpop.permute.xlu0 %2220
        %v2224 = vadd.f32 %v2184, %v2219
        %v2225 = vadd.f32 %v2185, %v2221
        %s2226 = sld [smem:[#allocation7 + $0x4f]]
        %v2227 = vstv %s2226
        %v2228 = vmul.f32 %v2094, %v2227
        %v2229 = vmul.f32 %v2095, %v2227
        %2232 = vrot.lane.b32.xlu0 %v2228, 127
        %v2233 = vpop.permute.xlu0 %2232
        %2234 = vrot.lane.b32.xlu0 %v2229, 127
        %v2235 = vpop.permute.xlu0 %2234
        %v2238 = vadd.f32 %v2190, %v2233
        %v2239 = vadd.f32 %v2191, %v2235
        %s2240 = sld [smem:[#allocation7 + $0x73]]
        %v2241 = vstv %s2240
        %v2242 = vmul.f32 %v2094, %v2241
        %v2243 = vmul.f32 %v2095, %v2241
        %2246 = vrot.lane.b32.xlu0 %v2242, 127
        %v2247 = vpop.permute.xlu0 %2246
        %2248 = vrot.lane.b32.xlu0 %v2243, 127
        %v2249 = vpop.permute.xlu0 %2248
        %v2252 = vadd.f32 %v2196, %v2247
        %v2253 = vadd.f32 %v2197, %v2249
        %s2254 = sld [smem:[#allocation7 + $0x10]]
        %v2255 = vstv %s2254
        %v2256 = vmul.f32 %v2096, %v2255
        %v2257 = vmul.f32 %v2097, %v2255
        %2260 = vrot.lane.b32.xlu0 %v2256, 127
        %v2261 = vpop.permute.xlu0 %2260
        %2262 = vrot.lane.b32.xlu0 %v2257, 127
        %v2263 = vpop.permute.xlu0 %2262
        %v2266 = vadd.f32 %v2210, %v2261
        %v2267 = vadd.f32 %v2211, %v2263
        %s2268 = sld [smem:[#allocation7 + $0x34]]
        %v2269 = vstv %s2268
        %v2270 = vmul.f32 %v2096, %v2269
        %v2271 = vmul.f32 %v2097, %v2269
        %2274 = vrot.lane.b32.xlu0 %v2270, 127
        %v2275 = vpop.permute.xlu0 %2274
        %2276 = vrot.lane.b32.xlu0 %v2271, 127
        %v2277 = vpop.permute.xlu0 %2276
        %v2280 = vadd.f32 %v2224, %v2275
        %v2281 = vadd.f32 %v2225, %v2277
        %s2282 = sld [smem:[#allocation7 + $0x58]]
        %v2283 = vstv %s2282
        %v2284 = vmul.f32 %v2096, %v2283
        %v2285 = vmul.f32 %v2097, %v2283
        %2288 = vrot.lane.b32.xlu0 %v2284, 127
        %v2289 = vpop.permute.xlu0 %2288
        %2290 = vrot.lane.b32.xlu0 %v2285, 127
        %v2291 = vpop.permute.xlu0 %2290
        %v2294 = vadd.f32 %v2238, %v2289
        %v2295 = vadd.f32 %v2239, %v2291
        %s2296 = sld [smem:[#allocation7 + $0x7c]]
        %v2297 = vstv %s2296
        %v2298 = vmul.f32 %v2096, %v2297
        %v2299 = vmul.f32 %v2097, %v2297
        %2302 = vrot.lane.b32.xlu0 %v2298, 127
        %v2303 = vpop.permute.xlu0 %2302
        %2304 = vrot.lane.b32.xlu0 %v2299, 127
        %v2305 = vpop.permute.xlu0 %2304
        %v2308 = vadd.f32 %v2252, %v2303
        %v2309 = vadd.f32 %v2253, %v2305
        %s2310 = sld [smem:[#allocation7 + $0x19]]
        %v2311 = vstv %s2310
        %v2312 = vmul.f32 %v2098, %v2311
        %v2313 = vmul.f32 %v2099, %v2311
        %2316 = vrot.lane.b32.xlu0 %v2312, 127
        %v2317 = vpop.permute.xlu0 %2316
        %2318 = vrot.lane.b32.xlu0 %v2313, 127
        %v2319 = vpop.permute.xlu0 %2318
        %v2322 = vadd.f32 %v2266, %v2317
        %v2323 = vadd.f32 %v2267, %v2319
        %s2324 = sld [smem:[#allocation7 + $0x3d]]
        %v2325 = vstv %s2324
        %v2326 = vmul.f32 %v2098, %v2325
        %v2327 = vmul.f32 %v2099, %v2325
        %2330 = vrot.lane.b32.xlu0 %v2326, 127
        %v2331 = vpop.permute.xlu0 %2330
        %2332 = vrot.lane.b32.xlu0 %v2327, 127
        %v2333 = vpop.permute.xlu0 %2332
        %v2336 = vadd.f32 %v2280, %v2331
        %v2337 = vadd.f32 %v2281, %v2333
        %s2338 = sld [smem:[#allocation7 + $0x61]]
        %v2339 = vstv %s2338
        %v2340 = vmul.f32 %v2098, %v2339
        %v2341 = vmul.f32 %v2099, %v2339
        %2344 = vrot.lane.b32.xlu0 %v2340, 127
        %v2345 = vpop.permute.xlu0 %2344
        %2346 = vrot.lane.b32.xlu0 %v2341, 127
        %v2347 = vpop.permute.xlu0 %2346
        %v2350 = vadd.f32 %v2294, %v2345
        %v2351 = vadd.f32 %v2295, %v2347
        %s2352 = sld [smem:[#allocation7 + $0x85]]
        %v2353 = vstv %s2352
        %v2354 = vmul.f32 %v2098, %v2353
        %v2355 = vmul.f32 %v2099, %v2353
        %2358 = vrot.lane.b32.xlu0 %v2354, 127
        %v2359 = vpop.permute.xlu0 %2358
        %2360 = vrot.lane.b32.xlu0 %v2355, 127
        %v2361 = vpop.permute.xlu0 %2360
        %v2364 = vadd.f32 %v2308, %v2359
        %v2365 = vadd.f32 %v2309, %v2361
        %s2366 = sld [smem:[#allocation7 + $0x22]]
        %v2367 = vstv %s2366
        %v2368 = vmul.f32 %v2100, %v2367
        %v2369 = vmul.f32 %v2101, %v2367
        %2372 = vrot.lane.b32.xlu0 %v2368, 127
        %v2373 = vpop.permute.xlu0 %2372
        %2374 = vrot.lane.b32.xlu0 %v2369, 127
        %v2375 = vpop.permute.xlu0 %2374
        %v2378 = vadd.f32 %v2322, %v2373
        %v2379 = vadd.f32 %v2323, %v2375
        %s2380 = sld [smem:[#allocation7 + $0x46]]
        %v2381 = vstv %s2380
        %v2382 = vmul.f32 %v2100, %v2381
        %v2383 = vmul.f32 %v2101, %v2381
        %2386 = vrot.lane.b32.xlu0 %v2382, 127
        %v2387 = vpop.permute.xlu0 %2386
        %2388 = vrot.lane.b32.xlu0 %v2383, 127
        %v2389 = vpop.permute.xlu0 %2388
        %v2392 = vadd.f32 %v2336, %v2387
        %v2393 = vadd.f32 %v2337, %v2389
        %s2394 = sld [smem:[#allocation7 + $0x6a]]
        %v2395 = vstv %s2394
        %v2396 = vmul.f32 %v2100, %v2395
        %v2397 = vmul.f32 %v2101, %v2395
        %2400 = vrot.lane.b32.xlu0 %v2396, 127
        %v2401 = vpop.permute.xlu0 %2400
        %2402 = vrot.lane.b32.xlu0 %v2397, 127
        %v2403 = vpop.permute.xlu0 %2402
        %v2406 = vadd.f32 %v2350, %v2401
        %v2407 = vadd.f32 %v2351, %v2403
        %s2408 = sld [smem:[#allocation7 + $0x8e]]
        %v2409 = vstv %s2408
        %v2410 = vmul.f32 %v2100, %v2409
        %v2411 = vmul.f32 %v2101, %v2409
        %2414 = vrot.lane.b32.xlu0 %v2410, 127
        %v2415 = vpop.permute.xlu0 %2414
        %2416 = vrot.lane.b32.xlu0 %v2411, 127
        %v2417 = vpop.permute.xlu0 %2416
        %v2420 = vadd.f32 %v2364, %v2415
        %v2421 = vadd.f32 %v2365, %v2417
        %s2422 = sld [smem:[#allocation7 + $0x8]]
        %v2423 = vstv %s2422
        %v2424 = vmul.f32 %v2094, %v2423
        %v2425 = vmul.f32 %v2095, %v2423
        %2428 = vrot.lane.b32.xlu0 %v2424, 126
        %v2429 = vpop.permute.xlu0 %2428
        %2430 = vrot.lane.b32.xlu0 %v2425, 126
        %v2431 = vpop.permute.xlu0 %2430
        %v2434 = vadd.f32 %v2378, %v2429
        %v2435 = vadd.f32 %v2379, %v2431
        %s2436 = sld [smem:[#allocation7 + $0x2c]]
        %v2437 = vstv %s2436
        %v2438 = vmul.f32 %v2094, %v2437
        %v2439 = vmul.f32 %v2095, %v2437
        %2442 = vrot.lane.b32.xlu0 %v2438, 126
        %v2443 = vpop.permute.xlu0 %2442
        %2444 = vrot.lane.b32.xlu0 %v2439, 126
        %v2445 = vpop.permute.xlu0 %2444
        %v2448 = vadd.f32 %v2392, %v2443
        %v2449 = vadd.f32 %v2393, %v2445
        %s2450 = sld [smem:[#allocation7 + $0x50]]
        %v2451 = vstv %s2450
        %v2452 = vmul.f32 %v2094, %v2451
        %v2453 = vmul.f32 %v2095, %v2451
        %2456 = vrot.lane.b32.xlu0 %v2452, 126
        %v2457 = vpop.permute.xlu0 %2456
        %2458 = vrot.lane.b32.xlu0 %v2453, 126
        %v2459 = vpop.permute.xlu0 %2458
        %v2462 = vadd.f32 %v2406, %v2457
        %v2463 = vadd.f32 %v2407, %v2459
        %s2464 = sld [smem:[#allocation7 + $0x74]]
        %v2465 = vstv %s2464
        %v2466 = vmul.f32 %v2094, %v2465
        %v2467 = vmul.f32 %v2095, %v2465
        %2470 = vrot.lane.b32.xlu0 %v2466, 126
        %v2471 = vpop.permute.xlu0 %2470
        %2472 = vrot.lane.b32.xlu0 %v2467, 126
        %v2473 = vpop.permute.xlu0 %2472
        %v2476 = vadd.f32 %v2420, %v2471
        %v2477 = vadd.f32 %v2421, %v2473
        %s2478 = sld [smem:[#allocation7 + $0x11]]
        %v2479 = vstv %s2478
        %v2480 = vmul.f32 %v2096, %v2479
        %v2481 = vmul.f32 %v2097, %v2479
        %2484 = vrot.lane.b32.xlu0 %v2480, 126
        %v2485 = vpop.permute.xlu0 %2484
        %2486 = vrot.lane.b32.xlu0 %v2481, 126
        %v2487 = vpop.permute.xlu0 %2486
        %v2490 = vadd.f32 %v2434, %v2485
        %v2491 = vadd.f32 %v2435, %v2487
        %s2492 = sld [smem:[#allocation7 + $0x35]]
        %v2493 = vstv %s2492
        %v2494 = vmul.f32 %v2096, %v2493
        %v2495 = vmul.f32 %v2097, %v2493
        %2498 = vrot.lane.b32.xlu0 %v2494, 126
        %v2499 = vpop.permute.xlu0 %2498
        %2500 = vrot.lane.b32.xlu0 %v2495, 126
        %v2501 = vpop.permute.xlu0 %2500
        %v2504 = vadd.f32 %v2448, %v2499
        %v2505 = vadd.f32 %v2449, %v2501
        %s2506 = sld [smem:[#allocation7 + $0x59]]
        %v2507 = vstv %s2506
        %v2508 = vmul.f32 %v2096, %v2507
        %v2509 = vmul.f32 %v2097, %v2507
        %2512 = vrot.lane.b32.xlu0 %v2508, 126
        %v2513 = vpop.permute.xlu0 %2512
        %2514 = vrot.lane.b32.xlu0 %v2509, 126
        %v2515 = vpop.permute.xlu0 %2514
        %v2518 = vadd.f32 %v2462, %v2513
        %v2519 = vadd.f32 %v2463, %v2515
        %s2520 = sld [smem:[#allocation7 + $0x7d]]
        %v2521 = vstv %s2520
        %v2522 = vmul.f32 %v2096, %v2521
        %v2523 = vmul.f32 %v2097, %v2521
        %2526 = vrot.lane.b32.xlu0 %v2522, 126
        %v2527 = vpop.permute.xlu0 %2526
        %2528 = vrot.lane.b32.xlu0 %v2523, 126
        %v2529 = vpop.permute.xlu0 %2528
        %v2532 = vadd.f32 %v2476, %v2527
        %v2533 = vadd.f32 %v2477, %v2529
        %s2534 = sld [smem:[#allocation7 + $0x1a]]
        %v2535 = vstv %s2534
        %v2536 = vmul.f32 %v2098, %v2535
        %v2537 = vmul.f32 %v2099, %v2535
        %2540 = vrot.lane.b32.xlu0 %v2536, 126
        %v2541 = vpop.permute.xlu0 %2540
        %2542 = vrot.lane.b32.xlu0 %v2537, 126
        %v2543 = vpop.permute.xlu0 %2542
        %v2546 = vadd.f32 %v2490, %v2541
        %v2547 = vadd.f32 %v2491, %v2543
        %s2548 = sld [smem:[#allocation7 + $0x3e]]
        %v2549 = vstv %s2548
        %v2550 = vmul.f32 %v2098, %v2549
        %v2551 = vmul.f32 %v2099, %v2549
        %2554 = vrot.lane.b32.xlu0 %v2550, 126
        %v2555 = vpop.permute.xlu0 %2554
        %2556 = vrot.lane.b32.xlu0 %v2551, 126
        %v2557 = vpop.permute.xlu0 %2556
        %v2560 = vadd.f32 %v2504, %v2555
        %v2561 = vadd.f32 %v2505, %v2557
        %s2562 = sld [smem:[#allocation7 + $0x62]]
        %v2563 = vstv %s2562
        %v2564 = vmul.f32 %v2098, %v2563
        %v2565 = vmul.f32 %v2099, %v2563
        %2568 = vrot.lane.b32.xlu0 %v2564, 126
        %v2569 = vpop.permute.xlu0 %2568
        %2570 = vrot.lane.b32.xlu0 %v2565, 126
        %v2571 = vpop.permute.xlu0 %2570
        %v2574 = vadd.f32 %v2518, %v2569
        %v2575 = vadd.f32 %v2519, %v2571
        %s2576 = sld [smem:[#allocation7 + $0x86]]
        %v2577 = vstv %s2576
        %v2578 = vmul.f32 %v2098, %v2577
        %v2579 = vmul.f32 %v2099, %v2577
        %2582 = vrot.lane.b32.xlu0 %v2578, 126
        %v2583 = vpop.permute.xlu0 %2582
        %2584 = vrot.lane.b32.xlu0 %v2579, 126
        %v2585 = vpop.permute.xlu0 %2584
        %v2588 = vadd.f32 %v2532, %v2583
        %v2589 = vadd.f32 %v2533, %v2585
        %s2590 = sld [smem:[#allocation7 + $0x23]]
        %v2591 = vstv %s2590
        %v2592 = vmul.f32 %v2100, %v2591
        %v2593 = vmul.f32 %v2101, %v2591
        %2596 = vrot.lane.b32.xlu0 %v2592, 126
        %v2597 = vpop.permute.xlu0 %2596
        %2598 = vrot.lane.b32.xlu0 %v2593, 126
        %v2599 = vpop.permute.xlu0 %2598
        %v2602 = vadd.f32 %v2546, %v2597
        %v2603 = vadd.f32 %v2547, %v2599
        %s2604 = sld [smem:[#allocation7 + $0x47]]
        %v2605 = vstv %s2604
        %v2606 = vmul.f32 %v2100, %v2605
        %v2607 = vmul.f32 %v2101, %v2605
        %2610 = vrot.lane.b32.xlu0 %v2606, 126
        %v2611 = vpop.permute.xlu0 %2610
        %2612 = vrot.lane.b32.xlu0 %v2607, 126
        %v2613 = vpop.permute.xlu0 %2612
        %v2616 = vadd.f32 %v2560, %v2611
        %v2617 = vadd.f32 %v2561, %v2613
        %s2618 = sld [smem:[#allocation7 + $0x6b]]
        %v2619 = vstv %s2618
        %v2620 = vmul.f32 %v2100, %v2619
        %v2621 = vmul.f32 %v2101, %v2619
        %2624 = vrot.lane.b32.xlu0 %v2620, 126
        %v2625 = vpop.permute.xlu0 %2624
        %2626 = vrot.lane.b32.xlu0 %v2621, 126
        %v2627 = vpop.permute.xlu0 %2626
        %v2630 = vadd.f32 %v2574, %v2625
        %v2631 = vadd.f32 %v2575, %v2627
        %s2632 = sld [smem:[#allocation7 + $0x8f]]
        %v2633 = vstv %s2632
        %v2634 = vmul.f32 %v2100, %v2633
        %v2635 = vmul.f32 %v2101, %v2633
        %2638 = vrot.lane.b32.xlu0 %v2634, 126
        %v2639 = vpop.permute.xlu0 %2638
        %2640 = vrot.lane.b32.xlu0 %v2635, 126
        %v2641 = vpop.permute.xlu0 %2640
        %v2644 = vadd.f32 %v2588, %v2639
        %v2645 = vadd.f32 %v2589, %v2641
        %s2646 = sld [smem:[#allocation8]]
        %v2647 = vstv %s2646
        %v2648 = vadd.f32 %v2602, %v2647
        %v2649 = vadd.f32 %v2603, %v2647
        %s2650 = sld [smem:[#allocation8 + $0x1]]
        %v2651 = vstv %s2650
        %v2652 = vadd.f32 %v2616, %v2651
        %v2653 = vadd.f32 %v2617, %v2651
        %s2654 = sld [smem:[#allocation8 + $0x2]]
        %v2655 = vstv %s2654
        %v2656 = vadd.f32 %v2630, %v2655
        %v2657 = vadd.f32 %v2631, %v2655
        %s2658 = sld [smem:[#allocation8 + $0x3]]
        %v2659 = vstv %s2658
        %v2660 = vadd.f32 %v2644, %v2659
        %v2661 = vadd.f32 %v2645, %v2659
        %v2662 = vsel %vm430, %v2648, 0.0
        %v2663 = vsel %vm430, %v2649, 0.0
        %v2664 = vadd.f32 %v2662, %v2663
        %v2665 = vrot.slane %v2664, 4
        %v2666 = vadd.f32 %v2664, %v2665
        %v2667 = vrot.slane %v2666, 2
        %v2668 = vadd.f32 %v2666, %v2667
        %v2669 = vrot.slane %v2668, 1
        %v2670 = vadd.f32 %v2668, %v2669
        %v2671 = vmul.f32 %v2670, %v446
        %v2672 = vsub.f32 %v2648, %v2671
        %v2673 = vsub.f32 %v2649, %v2671
        %v2674 = vmul.f32 %v2672, %v2672
        %v2675 = vmul.f32 %v2673, %v2673
        %v2676 = vsel %vm430, %v2674, 0.0
        %v2677 = vsel %vm430, %v2675, 0.0
        %v2678 = vadd.f32 %v2676, %v2677
        %v2679 = vrot.slane %v2678, 4
        %v2680 = vadd.f32 %v2678, %v2679
        %v2681 = vrot.slane %v2680, 2
        %v2682 = vadd.f32 %v2680, %v2681
        %v2683 = vrot.slane %v2682, 1
        %v2684 = vadd.f32 %v2682, %v2683
        %v2685 = vmul.f32 %v2684, %v446
        %v2686 = vadd.f32 %v2685, 1e-05
        %v2687 = vrsqrt.pop %v2686
        %v2688 = vmul.f32 %v2687, %v2686
        %v2689 = vmul.f32 %v2688, %v2687
        %v2690 = vmul.f32 0.5, %v2689
        %v2691 = vsub.f32 1.5, %v2690
        %v2692 = vmul.f32 %v2687, %v2691
        %vm2693 = vweird.f32 %v2686
        %vm2694 = vweird.f32 %v2687
        %vm2695 = vmor %vm2693, %vm2694
        %v2696 = vsel %vm2695, %v2687, %v2692
        %v2697 = vmul.f32 %v2672, %v2696
        %v2698 = vmul.f32 %v2673, %v2696
        %v2699 = vld [vmem:[%s3] sm:$0xff]
        %v2700 = vld [vmem:[%s3 + $0x8] sm:$0xff]
        %2702 = vset.pattern.permute.xlu0 0
        %2703 = vperm.xlu0 %2702, %v2699
        %v2704 = vpop.permute.xlu0 %2703
        %2707 = vset.pattern.permute.xlu0 0
        %2708 = vperm.xlu0 %2707, %v2700
        %v2709 = vpop.permute.xlu0 %2708
        %v2711 = vmul.f32 %v2697, %v2704
        %v2712 = vmul.f32 %v2698, %v2709
        %v2713 = vld [vmem:[%s4] sm:$0xff]
        %v2714 = vld [vmem:[%s4 + $0x8] sm:$0xff]
        %2716 = vset.pattern.permute.xlu0 0
        %2717 = vperm.xlu0 %2716, %v2713
        %v2718 = vpop.permute.xlu0 %2717
        %2721 = vset.pattern.permute.xlu0 0
        %2722 = vperm.xlu0 %2721, %v2714
        %v2723 = vpop.permute.xlu0 %2722
        %v2725 = vadd.f32 %v2711, %v2718
        %v2726 = vadd.f32 %v2712, %v2723
        %v2727 = vmul.f32 %v2725, 0.5
        %v2728 = vmul.f32 %v2726, 0.5
        %v2729 = vmul.f32 %v2725, 0.70710677
        %v2730 = vmul.f32 %v2726, 0.70710677
        %vm2731 = vcmp.ge.f32.partialorder %v2729, 0.0
        %vm2732 = vcmp.ge.f32.partialorder %v2730, 0.0
        %v2733 = vsel %vm2731, 1.0, -1.0
        %v2734 = vsel %vm2732, 1.0, -1.0
        %v2735 = vand.u32 2147483647, %v2729
        %v2736 = vand.u32 2147483647, %v2730
        %v2737 = vmul.f32 %v2735, 0.3275911
        %v2738 = vmul.f32 %v2736, 0.3275911
        %v2739 = vadd.f32 %v2737, 1.0
        %v2740 = vadd.f32 %v2738, 1.0
        %v2741 = vrcp.pop %v2739
        %v2742 = vmul.f32 %v2739, %v2741
        %v2743 = vsub.f32 1.0, %v2742
        %v2744 = vmul.f32 %v2741, %v2743
        %v2745 = vadd.f32 %v2741, %v2744
        %vm2746 = vweird.f32 %v2739
        %vm2747 = vweird.f32 %v2741
        %vm2748 = vmor %vm2746, %vm2747
        %v2749 = vsel %vm2748, %v2741, %v2745
        %v2750 = vand.u32 2147483647, %v2739
        %vm2751 = vcmp.eq.f32.partialorder %v2750, 8.507059e+37
        %v2752 = vand.u32 %v2739, 2147483648
        %v2753 = vor.u32 1.1754944e-38, %v2752
        %v2754 = vsel %vm2751, %v2753, %v2749
        %v2755 = vmul.f32 1.0, %v2754
        %v2756 = vrcp.pop %v2740
        %v2757 = vmul.f32 %v2740, %v2756
        %v2758 = vsub.f32 1.0, %v2757
        %v2759 = vmul.f32 %v2756, %v2758
        %v2760 = vadd.f32 %v2756, %v2759
        %vm2761 = vweird.f32 %v2740
        %vm2762 = vweird.f32 %v2756
        %vm2763 = vmor %vm2761, %vm2762
        %v2764 = vsel %vm2763, %v2756, %v2760
        %v2765 = vand.u32 2147483647, %v2740
        %vm2766 = vcmp.eq.f32.partialorder %v2765, 8.507059e+37
        %v2767 = vand.u32 %v2740, 2147483648
        %v2768 = vor.u32 1.1754944e-38, %v2767
        %v2769 = vsel %vm2766, %v2768, %v2764
        %v2770 = vmul.f32 1.0, %v2769
        %v2771 = vmul.f32 %v2755, 1.0614054
        %v2772 = vmul.f32 %v2770, 1.0614054
        %v2773 = vadd.f32 %v2771, -1.4531521
        %v2774 = vadd.f32 %v2772, -1.4531521
        %v2775 = vmul.f32 %v2773, %v2755
        %v2776 = vmul.f32 %v2774, %v2770
        %v2777 = vadd.f32 %v2775, 1.4214138
        %v2778 = vadd.f32 %v2776, 1.4214138
        %v2779 = vmul.f32 %v2777, %v2755
        %v2780 = vmul.f32 %v2778, %v2770
        %v2781 = vadd.f32 %v2779, -0.28449672
        %v2782 = vadd.f32 %v2780, -0.28449672
        %v2783 = vmul.f32 %v2781, %v2755
        %v2784 = vmul.f32 %v2782, %v2770
        %v2785 = vadd.f32 %v2783, 0.2548296
        %v2786 = vadd.f32 %v2784, 0.2548296
        %v2787 = vmul.f32 %v2785, %v2755
        %v2788 = vmul.f32 %v2786, %v2770
        %v2789 = vsub.f32 0.0, %v2735
        %v2790 = vsub.f32 0.0, %v2736
        %v2791 = vmul.f32 %v2789, %v2735
        %v2792 = vmul.f32 %v2790, %v2736
        %v2793 = vmul.f32 %v2791, 1.442695
        %v2794 = vpow.pop %v2793
        %v2795 = vmul.f32 %v2792, 1.442695
        %v2796 = vpow.pop %v2795
        %v2797 = vmul.f32 %v2787, %v2794
        %v2798 = vmul.f32 %v2788, %v2796
        %v2799 = vsub.f32 1.0, %v2797
        %v2800 = vsub.f32 1.0, %v2798
        %v2801 = vmul.f32 %v2733, %v2799
        %v2802 = vmul.f32 %v2734, %v2800
        %v2803 = vadd.f32 %v2801, 1.0
        %v2804 = vadd.f32 %v2802, 1.0
        %v2805 = vmul.f32 %v2727, %v2803
        %v2806 = vmul.f32 %v2728, %v2804
        %v2807 = vsel %vm430, %v2652, 0.0
        %v2808 = vsel %vm430, %v2653, 0.0
        %v2809 = vadd.f32 %v2807, %v2808
        %v2810 = vrot.slane %v2809, 4
        %v2811 = vadd.f32 %v2809, %v2810
        %v2812 = vrot.slane %v2811, 2
        %v2813 = vadd.f32 %v2811, %v2812
        %v2814 = vrot.slane %v2813, 1
        %v2815 = vadd.f32 %v2813, %v2814
        %v2816 = vmul.f32 %v2815, %v446
        %v2817 = vsub.f32 %v2652, %v2816
        %v2818 = vsub.f32 %v2653, %v2816
        %v2819 = vmul.f32 %v2817, %v2817
        %v2820 = vmul.f32 %v2818, %v2818
        %v2821 = vsel %vm430, %v2819, 0.0
        %v2822 = vsel %vm430, %v2820, 0.0
        %v2823 = vadd.f32 %v2821, %v2822
        %v2824 = vrot.slane %v2823, 4
        %v2825 = vadd.f32 %v2823, %v2824
        %v2826 = vrot.slane %v2825, 2
        %v2827 = vadd.f32 %v2825, %v2826
        %v2828 = vrot.slane %v2827, 1
        %v2829 = vadd.f32 %v2827, %v2828
        %v2830 = vmul.f32 %v2829, %v446
        %v2831 = vadd.f32 %v2830, 1e-05
        %v2832 = vrsqrt.pop %v2831
        %v2833 = vmul.f32 %v2832, %v2831
        %v2834 = vmul.f32 %v2833, %v2832
        %v2835 = vmul.f32 0.5, %v2834
        %v2836 = vsub.f32 1.5, %v2835
        %v2837 = vmul.f32 %v2832, %v2836
        %vm2838 = vweird.f32 %v2831
        %vm2839 = vweird.f32 %v2832
        %vm2840 = vmor %vm2838, %vm2839
        %v2841 = vsel %vm2840, %v2832, %v2837
        %v2842 = vmul.f32 %v2817, %v2841
        %v2843 = vmul.f32 %v2818, %v2841
        %v2844 = vmul.f32 %v2842, %v2704
        %v2845 = vmul.f32 %v2843, %v2709
        %v2846 = vadd.f32 %v2844, %v2718
        %v2847 = vadd.f32 %v2845, %v2723
        %v2848 = vmul.f32 %v2846, 0.5
        %v2849 = vmul.f32 %v2847, 0.5
        %v2850 = vmul.f32 %v2846, 0.70710677
        %v2851 = vmul.f32 %v2847, 0.70710677
        %vm2852 = vcmp.ge.f32.partialorder %v2850, 0.0
        %vm2853 = vcmp.ge.f32.partialorder %v2851, 0.0
        %v2854 = vsel %vm2852, 1.0, -1.0
        %v2855 = vsel %vm2853, 1.0, -1.0
        %v2856 = vand.u32 2147483647, %v2850
        %v2857 = vand.u32 2147483647, %v2851
        %v2858 = vmul.f32 %v2856, 0.3275911
        %v2859 = vmul.f32 %v2857, 0.3275911
        %v2860 = vadd.f32 %v2858, 1.0
        %v2861 = vadd.f32 %v2859, 1.0
        %v2862 = vrcp.pop %v2860
        %v2863 = vmul.f32 %v2860, %v2862
        %v2864 = vsub.f32 1.0, %v2863
        %v2865 = vmul.f32 %v2862, %v2864
        %v2866 = vadd.f32 %v2862, %v2865
        %vm2867 = vweird.f32 %v2860
        %vm2868 = vweird.f32 %v2862
        %vm2869 = vmor %vm2867, %vm2868
        %v2870 = vsel %vm2869, %v2862, %v2866
        %v2871 = vand.u32 2147483647, %v2860
        %vm2872 = vcmp.eq.f32.partialorder %v2871, 8.507059e+37
        %v2873 = vand.u32 %v2860, 2147483648
        %v2874 = vor.u32 1.1754944e-38, %v2873
        %v2875 = vsel %vm2872, %v2874, %v2870
        %v2876 = vmul.f32 1.0, %v2875
        %v2877 = vrcp.pop %v2861
        %v2878 = vmul.f32 %v2861, %v2877
        %v2879 = vsub.f32 1.0, %v2878
        %v2880 = vmul.f32 %v2877, %v2879
        %v2881 = vadd.f32 %v2877, %v2880
        %vm2882 = vweird.f32 %v2861
        %vm2883 = vweird.f32 %v2877
        %vm2884 = vmor %vm2882, %vm2883
        %v2885 = vsel %vm2884, %v2877, %v2881
        %v2886 = vand.u32 2147483647, %v2861
        %vm2887 = vcmp.eq.f32.partialorder %v2886, 8.507059e+37
        %v2888 = vand.u32 %v2861, 2147483648
        %v2889 = vor.u32 1.1754944e-38, %v2888
        %v2890 = vsel %vm2887, %v2889, %v2885
        %v2891 = vmul.f32 1.0, %v2890
        %v2892 = vmul.f32 %v2876, 1.0614054
        %v2893 = vmul.f32 %v2891, 1.0614054
        %v2894 = vadd.f32 %v2892, -1.4531521
        %v2895 = vadd.f32 %v2893, -1.4531521
        %v2896 = vmul.f32 %v2894, %v2876
        %v2897 = vmul.f32 %v2895, %v2891
        %v2898 = vadd.f32 %v2896, 1.4214138
        %v2899 = vadd.f32 %v2897, 1.4214138
        %v2900 = vmul.f32 %v2898, %v2876
        %v2901 = vmul.f32 %v2899, %v2891
        %v2902 = vadd.f32 %v2900, -0.28449672
        %v2903 = vadd.f32 %v2901, -0.28449672
        %v2904 = vmul.f32 %v2902, %v2876
        %v2905 = vmul.f32 %v2903, %v2891
        %v2906 = vadd.f32 %v2904, 0.2548296
        %v2907 = vadd.f32 %v2905, 0.2548296
        %v2908 = vmul.f32 %v2906, %v2876
        %v2909 = vmul.f32 %v2907, %v2891
        %v2910 = vsub.f32 0.0, %v2856
        %v2911 = vsub.f32 0.0, %v2857
        %v2912 = vmul.f32 %v2910, %v2856
        %v2913 = vmul.f32 %v2911, %v2857
        %v2914 = vmul.f32 %v2912, 1.442695
        %v2915 = vpow.pop %v2914
        %v2916 = vmul.f32 %v2913, 1.442695
        %v2917 = vpow.pop %v2916
        %v2918 = vmul.f32 %v2908, %v2915
        %v2919 = vmul.f32 %v2909, %v2917
        %v2920 = vsub.f32 1.0, %v2918
        %v2921 = vsub.f32 1.0, %v2919
        %v2922 = vmul.f32 %v2854, %v2920
        %v2923 = vmul.f32 %v2855, %v2921
        %v2924 = vadd.f32 %v2922, 1.0
        %v2925 = vadd.f32 %v2923, 1.0
        %v2926 = vmul.f32 %v2848, %v2924
        %v2927 = vmul.f32 %v2849, %v2925
        %v2928 = vsel %vm430, %v2656, 0.0
        %v2929 = vsel %vm430, %v2657, 0.0
        %v2930 = vadd.f32 %v2928, %v2929
        %v2931 = vrot.slane %v2930, 4
        %v2932 = vadd.f32 %v2930, %v2931
        %v2933 = vrot.slane %v2932, 2
        %v2934 = vadd.f32 %v2932, %v2933
        %v2935 = vrot.slane %v2934, 1
        %v2936 = vadd.f32 %v2934, %v2935
        %v2937 = vmul.f32 %v2936, %v446
        %v2938 = vsub.f32 %v2656, %v2937
        %v2939 = vsub.f32 %v2657, %v2937
        %v2940 = vmul.f32 %v2938, %v2938
        %v2941 = vmul.f32 %v2939, %v2939
        %v2942 = vsel %vm430, %v2940, 0.0
        %v2943 = vsel %vm430, %v2941, 0.0
        %v2944 = vadd.f32 %v2942, %v2943
        %v2945 = vrot.slane %v2944, 4
        %v2946 = vadd.f32 %v2944, %v2945
        %v2947 = vrot.slane %v2946, 2
        %v2948 = vadd.f32 %v2946, %v2947
        %v2949 = vrot.slane %v2948, 1
        %v2950 = vadd.f32 %v2948, %v2949
        %v2951 = vmul.f32 %v2950, %v446
        %v2952 = vadd.f32 %v2951, 1e-05
        %v2953 = vrsqrt.pop %v2952
        %v2954 = vmul.f32 %v2953, %v2952
        %v2955 = vmul.f32 %v2954, %v2953
        %v2956 = vmul.f32 0.5, %v2955
        %v2957 = vsub.f32 1.5, %v2956
        %v2958 = vmul.f32 %v2953, %v2957
        %vm2959 = vweird.f32 %v2952
        %vm2960 = vweird.f32 %v2953
        %vm2961 = vmor %vm2959, %vm2960
        %v2962 = vsel %vm2961, %v2953, %v2958
        %v2963 = vmul.f32 %v2938, %v2962
        %v2964 = vmul.f32 %v2939, %v2962
        %v2965 = vmul.f32 %v2963, %v2704
        %v2966 = vmul.f32 %v2964, %v2709
        %v2967 = vadd.f32 %v2965, %v2718
        %v2968 = vadd.f32 %v2966, %v2723
        %v2969 = vmul.f32 %v2967, 0.5
        %v2970 = vmul.f32 %v2968, 0.5
        %v2971 = vmul.f32 %v2967, 0.70710677
        %v2972 = vmul.f32 %v2968, 0.70710677
        %vm2973 = vcmp.ge.f32.partialorder %v2971, 0.0
        %vm2974 = vcmp.ge.f32.partialorder %v2972, 0.0
        %v2975 = vsel %vm2973, 1.0, -1.0
        %v2976 = vsel %vm2974, 1.0, -1.0
        %v2977 = vand.u32 2147483647, %v2971
        %v2978 = vand.u32 2147483647, %v2972
        %v2979 = vmul.f32 %v2977, 0.3275911
        %v2980 = vmul.f32 %v2978, 0.3275911
        %v2981 = vadd.f32 %v2979, 1.0
        %v2982 = vadd.f32 %v2980, 1.0
        %v2983 = vrcp.pop %v2981
        %v2984 = vmul.f32 %v2981, %v2983
        %v2985 = vsub.f32 1.0, %v2984
        %v2986 = vmul.f32 %v2983, %v2985
        %v2987 = vadd.f32 %v2983, %v2986
        %vm2988 = vweird.f32 %v2981
        %vm2989 = vweird.f32 %v2983
        %vm2990 = vmor %vm2988, %vm2989
        %v2991 = vsel %vm2990, %v2983, %v2987
        %v2992 = vand.u32 2147483647, %v2981
        %vm2993 = vcmp.eq.f32.partialorder %v2992, 8.507059e+37
        %v2994 = vand.u32 %v2981, 2147483648
        %v2995 = vor.u32 1.1754944e-38, %v2994
        %v2996 = vsel %vm2993, %v2995, %v2991
        %v2997 = vmul.f32 1.0, %v2996
        %v2998 = vrcp.pop %v2982
        %v2999 = vmul.f32 %v2982, %v2998
        %v3000 = vsub.f32 1.0, %v2999
        %v3001 = vmul.f32 %v2998, %v3000
        %v3002 = vadd.f32 %v2998, %v3001
        %vm3003 = vweird.f32 %v2982
        %vm3004 = vweird.f32 %v2998
        %vm3005 = vmor %vm3003, %vm3004
        %v3006 = vsel %vm3005, %v2998, %v3002
        %v3007 = vand.u32 2147483647, %v2982
        %vm3008 = vcmp.eq.f32.partialorder %v3007, 8.507059e+37
        %v3009 = vand.u32 %v2982, 2147483648
        %v3010 = vor.u32 1.1754944e-38, %v3009
        %v3011 = vsel %vm3008, %v3010, %v3006
        %v3012 = vmul.f32 1.0, %v3011
        %v3013 = vmul.f32 %v2997, 1.0614054
        %v3014 = vmul.f32 %v3012, 1.0614054
        %v3015 = vadd.f32 %v3013, -1.4531521
        %v3016 = vadd.f32 %v3014, -1.4531521
        %v3017 = vmul.f32 %v3015, %v2997
        %v3018 = vmul.f32 %v3016, %v3012
        %v3019 = vadd.f32 %v3017, 1.4214138
        %v3020 = vadd.f32 %v3018, 1.4214138
        %v3021 = vmul.f32 %v3019, %v2997
        %v3022 = vmul.f32 %v3020, %v3012
        %v3023 = vadd.f32 %v3021, -0.28449672
        %v3024 = vadd.f32 %v3022, -0.28449672
        %v3025 = vmul.f32 %v3023, %v2997
        %v3026 = vmul.f32 %v3024, %v3012
        %v3027 = vadd.f32 %v3025, 0.2548296
        %v3028 = vadd.f32 %v3026, 0.2548296
        %v3029 = vmul.f32 %v3027, %v2997
        %v3030 = vmul.f32 %v3028, %v3012
        %v3031 = vsub.f32 0.0, %v2977
        %v3032 = vsub.f32 0.0, %v2978
        %v3033 = vmul.f32 %v3031, %v2977
        %v3034 = vmul.f32 %v3032, %v2978
        %v3035 = vmul.f32 %v3033, 1.442695
        %v3036 = vpow.pop %v3035
        %v3037 = vmul.f32 %v3034, 1.442695
        %v3038 = vpow.pop %v3037
        %v3039 = vmul.f32 %v3029, %v3036
        %v3040 = vmul.f32 %v3030, %v3038
        %v3041 = vsub.f32 1.0, %v3039
        %v3042 = vsub.f32 1.0, %v3040
        %v3043 = vmul.f32 %v2975, %v3041
        %v3044 = vmul.f32 %v2976, %v3042
        %v3045 = vadd.f32 %v3043, 1.0
        %v3046 = vadd.f32 %v3044, 1.0
        %v3047 = vmul.f32 %v2969, %v3045
        %v3048 = vmul.f32 %v2970, %v3046
        %v3049 = vsel %vm430, %v2660, 0.0
        %v3050 = vsel %vm430, %v2661, 0.0
        %v3051 = vadd.f32 %v3049, %v3050
        %v3052 = vrot.slane %v3051, 4
        %v3053 = vadd.f32 %v3051, %v3052
        %v3054 = vrot.slane %v3053, 2
        %v3055 = vadd.f32 %v3053, %v3054
        %v3056 = vrot.slane %v3055, 1
        %v3057 = vadd.f32 %v3055, %v3056
        %v3058 = vmul.f32 %v3057, %v446
        %v3059 = vsub.f32 %v2660, %v3058
        %v3060 = vsub.f32 %v2661, %v3058
        %v3061 = vmul.f32 %v3059, %v3059
        %v3062 = vmul.f32 %v3060, %v3060
        %v3063 = vsel %vm430, %v3061, 0.0
        %v3064 = vsel %vm430, %v3062, 0.0
        %v3065 = vadd.f32 %v3063, %v3064
        %v3066 = vrot.slane %v3065, 4
        %v3067 = vadd.f32 %v3065, %v3066
        %v3068 = vrot.slane %v3067, 2
        %v3069 = vadd.f32 %v3067, %v3068
        %v3070 = vrot.slane %v3069, 1
        %v3071 = vadd.f32 %v3069, %v3070
        %v3072 = vmul.f32 %v3071, %v446
        %v3073 = vadd.f32 %v3072, 1e-05
        %v3074 = vrsqrt.pop %v3073
        %v3075 = vmul.f32 %v3074, %v3073
        %v3076 = vmul.f32 %v3075, %v3074
        %v3077 = vmul.f32 0.5, %v3076
        %v3078 = vsub.f32 1.5, %v3077
        %v3079 = vmul.f32 %v3074, %v3078
        %vm3080 = vweird.f32 %v3073
        %vm3081 = vweird.f32 %v3074
        %vm3082 = vmor %vm3080, %vm3081
        %v3083 = vsel %vm3082, %v3074, %v3079
        %v3084 = vmul.f32 %v3059, %v3083
        %v3085 = vmul.f32 %v3060, %v3083
        %v3086 = vmul.f32 %v3084, %v2704
        %v3087 = vmul.f32 %v3085, %v2709
        %v3088 = vadd.f32 %v3086, %v2718
        %v3089 = vadd.f32 %v3087, %v2723
        %v3090 = vmul.f32 %v3088, 0.5
        %v3091 = vmul.f32 %v3089, 0.5
        %v3092 = vmul.f32 %v3088, 0.70710677
        %v3093 = vmul.f32 %v3089, 0.70710677
        %vm3094 = vcmp.ge.f32.partialorder %v3092, 0.0
        %vm3095 = vcmp.ge.f32.partialorder %v3093, 0.0
        %v3096 = vsel %vm3094, 1.0, -1.0
        %v3097 = vsel %vm3095, 1.0, -1.0
        %v3098 = vand.u32 2147483647, %v3092
        %v3099 = vand.u32 2147483647, %v3093
        %v3100 = vmul.f32 %v3098, 0.3275911
        %v3101 = vmul.f32 %v3099, 0.3275911
        %v3102 = vadd.f32 %v3100, 1.0
        %v3103 = vadd.f32 %v3101, 1.0
        %v3104 = vrcp.pop %v3102
        %v3105 = vmul.f32 %v3102, %v3104
        %v3106 = vsub.f32 1.0, %v3105
        %v3107 = vmul.f32 %v3104, %v3106
        %v3108 = vadd.f32 %v3104, %v3107
        %vm3109 = vweird.f32 %v3102
        %vm3110 = vweird.f32 %v3104
        %vm3111 = vmor %vm3109, %vm3110
        %v3112 = vsel %vm3111, %v3104, %v3108
        %v3113 = vand.u32 2147483647, %v3102
        %vm3114 = vcmp.eq.f32.partialorder %v3113, 8.507059e+37
        %v3115 = vand.u32 %v3102, 2147483648
        %v3116 = vor.u32 1.1754944e-38, %v3115
        %v3117 = vsel %vm3114, %v3116, %v3112
        %v3118 = vmul.f32 1.0, %v3117
        %v3119 = vrcp.pop %v3103
        %v3120 = vmul.f32 %v3103, %v3119
        %v3121 = vsub.f32 1.0, %v3120
        %v3122 = vmul.f32 %v3119, %v3121
        %v3123 = vadd.f32 %v3119, %v3122
        %vm3124 = vweird.f32 %v3103
        %vm3125 = vweird.f32 %v3119
        %vm3126 = vmor %vm3124, %vm3125
        %v3127 = vsel %vm3126, %v3119, %v3123
        %v3128 = vand.u32 2147483647, %v3103
        %vm3129 = vcmp.eq.f32.partialorder %v3128, 8.507059e+37
        %v3130 = vand.u32 %v3103, 2147483648
        %v3131 = vor.u32 1.1754944e-38, %v3130
        %v3132 = vsel %vm3129, %v3131, %v3127
        %v3133 = vmul.f32 1.0, %v3132
        %v3134 = vmul.f32 %v3118, 1.0614054
        %v3135 = vmul.f32 %v3133, 1.0614054
        %v3136 = vadd.f32 %v3134, -1.4531521
        %v3137 = vadd.f32 %v3135, -1.4531521
        %v3138 = vmul.f32 %v3136, %v3118
        %v3139 = vmul.f32 %v3137, %v3133
        %v3140 = vadd.f32 %v3138, 1.4214138
        %v3141 = vadd.f32 %v3139, 1.4214138
        %v3142 = vmul.f32 %v3140, %v3118
        %v3143 = vmul.f32 %v3141, %v3133
        %v3144 = vadd.f32 %v3142, -0.28449672
        %v3145 = vadd.f32 %v3143, -0.28449672
        %v3146 = vmul.f32 %v3144, %v3118
        %v3147 = vmul.f32 %v3145, %v3133
        %v3148 = vadd.f32 %v3146, 0.2548296
        %v3149 = vadd.f32 %v3147, 0.2548296
        %v3150 = vmul.f32 %v3148, %v3118
        %v3151 = vmul.f32 %v3149, %v3133
        %v3152 = vsub.f32 0.0, %v3098
        %v3153 = vsub.f32 0.0, %v3099
        %v3154 = vmul.f32 %v3152, %v3098
        %v3155 = vmul.f32 %v3153, %v3099
        %v3156 = vmul.f32 %v3154, 1.442695
        %v3157 = vpow.pop %v3156
        %v3158 = vmul.f32 %v3155, 1.442695
        %v3159 = vpow.pop %v3158
        %v3160 = vmul.f32 %v3150, %v3157
        %v3161 = vmul.f32 %v3151, %v3159
        %v3162 = vsub.f32 1.0, %v3160
        %v3163 = vsub.f32 1.0, %v3161
        %v3164 = vmul.f32 %v3096, %v3162
        %v3165 = vmul.f32 %v3097, %v3163
        %v3166 = vadd.f32 %v3164, 1.0
        %v3167 = vadd.f32 %v3165, 1.0
        %v3168 = vmul.f32 %v3090, %v3166
        %v3169 = vmul.f32 %v3091, %v3167
        %3172 = vrot.lane.b32.xlu0 %v2805, 1
        %v3173 = vpop.permute.xlu0 %3172
        %3174 = vrot.lane.b32.xlu0 %v2806, 1
        %v3175 = vpop.permute.xlu0 %3174
        %3178 = vst.msk [vmem:[#allocation2 + $0x1] sm:$0xff] %vm954, %v3173
        %3179 = vst.msk [vmem:[#allocation2 + $0x9] sm:$0xff] %vm954, %v3175
        %3182 = vrot.lane.b32.xlu0 %v2926, 1
        %v3183 = vpop.permute.xlu0 %3182
        %3184 = vrot.lane.b32.xlu0 %v2927, 1
        %v3185 = vpop.permute.xlu0 %3184
        %3188 = vst.msk [vmem:[%s965 + $0x1] sm:$0xff] %vm954, %v3183
        %3189 = vst.msk [vmem:[%s965 + $0x9] sm:$0xff] %vm954, %v3185
        %3192 = vrot.lane.b32.xlu0 %v3047, 1
        %v3193 = vpop.permute.xlu0 %3192
        %3194 = vrot.lane.b32.xlu0 %v3048, 1
        %v3195 = vpop.permute.xlu0 %3194
        %3198 = vst.msk [vmem:[%s976 + $0x1] sm:$0xff] %vm954, %v3193
        %3199 = vst.msk [vmem:[%s976 + $0x9] sm:$0xff] %vm954, %v3195
        %3202 = vrot.lane.b32.xlu0 %v3168, 1
        %v3203 = vpop.permute.xlu0 %3202
        %3204 = vrot.lane.b32.xlu0 %v3169, 1
        %v3205 = vpop.permute.xlu0 %3204
        %3208 = vst.msk [vmem:[%s987 + $0x1] sm:$0xff] %vm954, %v3203
        %3209 = vst.msk [vmem:[%s987 + $0x9] sm:$0xff] %vm954, %v3205
        %v3210 = vld [vmem:[#allocation2] sm:$0xff]
        %v3211 = vld [vmem:[#allocation2 + $0x8] sm:$0xff]
        %v3212 = vld [vmem:[#allocation2 + $0x18] sm:$0xff]
        %v3213 = vld [vmem:[#allocation2 + $0x20] sm:$0xff]
        %v3214 = vld [vmem:[#allocation2 + $0x30] sm:$0xff]
        %v3215 = vld [vmem:[#allocation2 + $0x38] sm:$0xff]
        %v3216 = vld [vmem:[#allocation2 + $0x48] sm:$0xff]
        %v3217 = vld [vmem:[#allocation2 + $0x50] sm:$0xff]
        %s3218 = sld [smem:[#allocation10]]
        %v3219 = vstv %s3218
        %v3220 = vmul.f32 %v3210, %v3219
        %v3221 = vmul.f32 %v3211, %v3219
        %v3222 = vadd.f32 %v3220, 0.0
        %v3223 = vadd.f32 %v3221, 0.0
        %s3224 = sld [smem:[#allocation10 + $0x24]]
        %v3225 = vstv %s3224
        %v3226 = vmul.f32 %v3210, %v3225
        %v3227 = vmul.f32 %v3211, %v3225
        %v3228 = vadd.f32 %v3226, 0.0
        %v3229 = vadd.f32 %v3227, 0.0
        %s3230 = sld [smem:[#allocation10 + $0x48]]
        %v3231 = vstv %s3230
        %v3232 = vmul.f32 %v3210, %v3231
        %v3233 = vmul.f32 %v3211, %v3231
        %v3234 = vadd.f32 %v3232, 0.0
        %v3235 = vadd.f32 %v3233, 0.0
        %s3236 = sld [smem:[#allocation10 + $0x6c]]
        %v3237 = vstv %s3236
        %v3238 = vmul.f32 %v3210, %v3237
        %v3239 = vmul.f32 %v3211, %v3237
        %v3240 = vadd.f32 %v3238, 0.0
        %v3241 = vadd.f32 %v3239, 0.0
        %s3242 = sld [smem:[#allocation10 + $0x9]]
        %v3243 = vstv %s3242
        %v3244 = vmul.f32 %v3212, %v3243
        %v3245 = vmul.f32 %v3213, %v3243
        %v3246 = vadd.f32 %v3222, %v3244
        %v3247 = vadd.f32 %v3223, %v3245
        %s3248 = sld [smem:[#allocation10 + $0x2d]]
        %v3249 = vstv %s3248
        %v3250 = vmul.f32 %v3212, %v3249
        %v3251 = vmul.f32 %v3213, %v3249
        %v3252 = vadd.f32 %v3228, %v3250
        %v3253 = vadd.f32 %v3229, %v3251
        %s3254 = sld [smem:[#allocation10 + $0x51]]
        %v3255 = vstv %s3254
        %v3256 = vmul.f32 %v3212, %v3255
        %v3257 = vmul.f32 %v3213, %v3255
        %v3258 = vadd.f32 %v3234, %v3256
        %v3259 = vadd.f32 %v3235, %v3257
        %s3260 = sld [smem:[#allocation10 + $0x75]]
        %v3261 = vstv %s3260
        %v3262 = vmul.f32 %v3212, %v3261
        %v3263 = vmul.f32 %v3213, %v3261
        %v3264 = vadd.f32 %v3240, %v3262
        %v3265 = vadd.f32 %v3241, %v3263
        %s3266 = sld [smem:[#allocation10 + $0x12]]
        %v3267 = vstv %s3266
        %v3268 = vmul.f32 %v3214, %v3267
        %v3269 = vmul.f32 %v3215, %v3267
        %v3270 = vadd.f32 %v3246, %v3268
        %v3271 = vadd.f32 %v3247, %v3269
        %s3272 = sld [smem:[#allocation10 + $0x36]]
        %v3273 = vstv %s3272
        %v3274 = vmul.f32 %v3214, %v3273
        %v3275 = vmul.f32 %v3215, %v3273
        %v3276 = vadd.f32 %v3252, %v3274
        %v3277 = vadd.f32 %v3253, %v3275
        %s3278 = sld [smem:[#allocation10 + $0x5a]]
        %v3279 = vstv %s3278
        %v3280 = vmul.f32 %v3214, %v3279
        %v3281 = vmul.f32 %v3215, %v3279
        %v3282 = vadd.f32 %v3258, %v3280
        %v3283 = vadd.f32 %v3259, %v3281
        %s3284 = sld [smem:[#allocation10 + $0x7e]]
        %v3285 = vstv %s3284
        %v3286 = vmul.f32 %v3214, %v3285
        %v3287 = vmul.f32 %v3215, %v3285
        %v3288 = vadd.f32 %v3264, %v3286
        %v3289 = vadd.f32 %v3265, %v3287
        %s3290 = sld [smem:[#allocation10 + $0x1b]]
        %v3291 = vstv %s3290
        %v3292 = vmul.f32 %v3216, %v3291
        %v3293 = vmul.f32 %v3217, %v3291
        %v3294 = vadd.f32 %v3270, %v3292
        %v3295 = vadd.f32 %v3271, %v3293
        %s3296 = sld [smem:[#allocation10 + $0x3f]]
        %v3297 = vstv %s3296
        %v3298 = vmul.f32 %v3216, %v3297
        %v3299 = vmul.f32 %v3217, %v3297
        %v3300 = vadd.f32 %v3276, %v3298
        %v3301 = vadd.f32 %v3277, %v3299
        %s3302 = sld [smem:[#allocation10 + $0x63]]
        %v3303 = vstv %s3302
        %v3304 = vmul.f32 %v3216, %v3303
        %v3305 = vmul.f32 %v3217, %v3303
        %v3306 = vadd.f32 %v3282, %v3304
        %v3307 = vadd.f32 %v3283, %v3305
        %s3308 = sld [smem:[#allocation10 + $0x87]]
        %v3309 = vstv %s3308
        %v3310 = vmul.f32 %v3216, %v3309
        %v3311 = vmul.f32 %v3217, %v3309
        %v3312 = vadd.f32 %v3288, %v3310
        %v3313 = vadd.f32 %v3289, %v3311
        %s3314 = sld [smem:[#allocation10 + $0x1]]
        %v3315 = vstv %s3314
        %v3316 = vmul.f32 %v3210, %v3315
        %v3317 = vmul.f32 %v3211, %v3315
        %3320 = vrot.lane.b32.xlu0 %v3316, 127
        %v3321 = vpop.permute.xlu0 %3320
        %3322 = vrot.lane.b32.xlu0 %v3317, 127
        %v3323 = vpop.permute.xlu0 %3322
        %v3326 = vadd.f32 %v3294, %v3321
        %v3327 = vadd.f32 %v3295, %v3323
        %s3328 = sld [smem:[#allocation10 + $0x25]]
        %v3329 = vstv %s3328
        %v3330 = vmul.f32 %v3210, %v3329
        %v3331 = vmul.f32 %v3211, %v3329
        %3334 = vrot.lane.b32.xlu0 %v3330, 127
        %v3335 = vpop.permute.xlu0 %3334
        %3336 = vrot.lane.b32.xlu0 %v3331, 127
        %v3337 = vpop.permute.xlu0 %3336
        %v3340 = vadd.f32 %v3300, %v3335
        %v3341 = vadd.f32 %v3301, %v3337
        %s3342 = sld [smem:[#allocation10 + $0x49]]
        %v3343 = vstv %s3342
        %v3344 = vmul.f32 %v3210, %v3343
        %v3345 = vmul.f32 %v3211, %v3343
        %3348 = vrot.lane.b32.xlu0 %v3344, 127
        %v3349 = vpop.permute.xlu0 %3348
        %3350 = vrot.lane.b32.xlu0 %v3345, 127
        %v3351 = vpop.permute.xlu0 %3350
        %v3354 = vadd.f32 %v3306, %v3349
        %v3355 = vadd.f32 %v3307, %v3351
        %s3356 = sld [smem:[#allocation10 + $0x6d]]
        %v3357 = vstv %s3356
        %v3358 = vmul.f32 %v3210, %v3357
        %v3359 = vmul.f32 %v3211, %v3357
        %3362 = vrot.lane.b32.xlu0 %v3358, 127
        %v3363 = vpop.permute.xlu0 %3362
        %3364 = vrot.lane.b32.xlu0 %v3359, 127
        %v3365 = vpop.permute.xlu0 %3364
        %v3368 = vadd.f32 %v3312, %v3363
        %v3369 = vadd.f32 %v3313, %v3365
        %s3370 = sld [smem:[#allocation10 + $0xa]]
        %v3371 = vstv %s3370
        %v3372 = vmul.f32 %v3212, %v3371
        %v3373 = vmul.f32 %v3213, %v3371
        %3376 = vrot.lane.b32.xlu0 %v3372, 127
        %v3377 = vpop.permute.xlu0 %3376
        %3378 = vrot.lane.b32.xlu0 %v3373, 127
        %v3379 = vpop.permute.xlu0 %3378
        %v3382 = vadd.f32 %v3326, %v3377
        %v3383 = vadd.f32 %v3327, %v3379
        %s3384 = sld [smem:[#allocation10 + $0x2e]]
        %v3385 = vstv %s3384
        %v3386 = vmul.f32 %v3212, %v3385
        %v3387 = vmul.f32 %v3213, %v3385
        %3390 = vrot.lane.b32.xlu0 %v3386, 127
        %v3391 = vpop.permute.xlu0 %3390
        %3392 = vrot.lane.b32.xlu0 %v3387, 127
        %v3393 = vpop.permute.xlu0 %3392
        %v3396 = vadd.f32 %v3340, %v3391
        %v3397 = vadd.f32 %v3341, %v3393
        %s3398 = sld [smem:[#allocation10 + $0x52]]
        %v3399 = vstv %s3398
        %v3400 = vmul.f32 %v3212, %v3399
        %v3401 = vmul.f32 %v3213, %v3399
        %3404 = vrot.lane.b32.xlu0 %v3400, 127
        %v3405 = vpop.permute.xlu0 %3404
        %3406 = vrot.lane.b32.xlu0 %v3401, 127
        %v3407 = vpop.permute.xlu0 %3406
        %v3410 = vadd.f32 %v3354, %v3405
        %v3411 = vadd.f32 %v3355, %v3407
        %s3412 = sld [smem:[#allocation10 + $0x76]]
        %v3413 = vstv %s3412
        %v3414 = vmul.f32 %v3212, %v3413
        %v3415 = vmul.f32 %v3213, %v3413
        %3418 = vrot.lane.b32.xlu0 %v3414, 127
        %v3419 = vpop.permute.xlu0 %3418
        %3420 = vrot.lane.b32.xlu0 %v3415, 127
        %v3421 = vpop.permute.xlu0 %3420
        %v3424 = vadd.f32 %v3368, %v3419
        %v3425 = vadd.f32 %v3369, %v3421
        %s3426 = sld [smem:[#allocation10 + $0x13]]
        %v3427 = vstv %s3426
        %v3428 = vmul.f32 %v3214, %v3427
        %v3429 = vmul.f32 %v3215, %v3427
        %3432 = vrot.lane.b32.xlu0 %v3428, 127
        %v3433 = vpop.permute.xlu0 %3432
        %3434 = vrot.lane.b32.xlu0 %v3429, 127
        %v3435 = vpop.permute.xlu0 %3434
        %v3438 = vadd.f32 %v3382, %v3433
        %v3439 = vadd.f32 %v3383, %v3435
        %s3440 = sld [smem:[#allocation10 + $0x37]]
        %v3441 = vstv %s3440
        %v3442 = vmul.f32 %v3214, %v3441
        %v3443 = vmul.f32 %v3215, %v3441
        %3446 = vrot.lane.b32.xlu0 %v3442, 127
        %v3447 = vpop.permute.xlu0 %3446
        %3448 = vrot.lane.b32.xlu0 %v3443, 127
        %v3449 = vpop.permute.xlu0 %3448
        %v3452 = vadd.f32 %v3396, %v3447
        %v3453 = vadd.f32 %v3397, %v3449
        %s3454 = sld [smem:[#allocation10 + $0x5b]]
        %v3455 = vstv %s3454
        %v3456 = vmul.f32 %v3214, %v3455
        %v3457 = vmul.f32 %v3215, %v3455
        %3460 = vrot.lane.b32.xlu0 %v3456, 127
        %v3461 = vpop.permute.xlu0 %3460
        %3462 = vrot.lane.b32.xlu0 %v3457, 127
        %v3463 = vpop.permute.xlu0 %3462
        %v3466 = vadd.f32 %v3410, %v3461
        %v3467 = vadd.f32 %v3411, %v3463
        %s3468 = sld [smem:[#allocation10 + $0x7f]]
        %v3469 = vstv %s3468
        %v3470 = vmul.f32 %v3214, %v3469
        %v3471 = vmul.f32 %v3215, %v3469
        %3474 = vrot.lane.b32.xlu0 %v3470, 127
        %v3475 = vpop.permute.xlu0 %3474
        %3476 = vrot.lane.b32.xlu0 %v3471, 127
        %v3477 = vpop.permute.xlu0 %3476
        %v3480 = vadd.f32 %v3424, %v3475
        %v3481 = vadd.f32 %v3425, %v3477
        %s3482 = sld [smem:[#allocation10 + $0x1c]]
        %v3483 = vstv %s3482
        %v3484 = vmul.f32 %v3216, %v3483
        %v3485 = vmul.f32 %v3217, %v3483
        %3488 = vrot.lane.b32.xlu0 %v3484, 127
        %v3489 = vpop.permute.xlu0 %3488
        %3490 = vrot.lane.b32.xlu0 %v3485, 127
        %v3491 = vpop.permute.xlu0 %3490
        %v3494 = vadd.f32 %v3438, %v3489
        %v3495 = vadd.f32 %v3439, %v3491
        %s3496 = sld [smem:[#allocation10 + $0x40]]
        %v3497 = vstv %s3496
        %v3498 = vmul.f32 %v3216, %v3497
        %v3499 = vmul.f32 %v3217, %v3497
        %3502 = vrot.lane.b32.xlu0 %v3498, 127
        %v3503 = vpop.permute.xlu0 %3502
        %3504 = vrot.lane.b32.xlu0 %v3499, 127
        %v3505 = vpop.permute.xlu0 %3504
        %v3508 = vadd.f32 %v3452, %v3503
        %v3509 = vadd.f32 %v3453, %v3505
        %s3510 = sld [smem:[#allocation10 + $0x64]]
        %v3511 = vstv %s3510
        %v3512 = vmul.f32 %v3216, %v3511
        %v3513 = vmul.f32 %v3217, %v3511
        %3516 = vrot.lane.b32.xlu0 %v3512, 127
        %v3517 = vpop.permute.xlu0 %3516
        %3518 = vrot.lane.b32.xlu0 %v3513, 127
        %v3519 = vpop.permute.xlu0 %3518
        %v3522 = vadd.f32 %v3466, %v3517
        %v3523 = vadd.f32 %v3467, %v3519
        %s3524 = sld [smem:[#allocation10 + $0x88]]
        %v3525 = vstv %s3524
        %v3526 = vmul.f32 %v3216, %v3525
        %v3527 = vmul.f32 %v3217, %v3525
        %3530 = vrot.lane.b32.xlu0 %v3526, 127
        %v3531 = vpop.permute.xlu0 %3530
        %3532 = vrot.lane.b32.xlu0 %v3527, 127
        %v3533 = vpop.permute.xlu0 %3532
        %v3536 = vadd.f32 %v3480, %v3531
        %v3537 = vadd.f32 %v3481, %v3533
        %s3538 = sld [smem:[#allocation10 + $0x2]]
        %v3539 = vstv %s3538
        %v3540 = vmul.f32 %v3210, %v3539
        %v3541 = vmul.f32 %v3211, %v3539
        %3544 = vrot.lane.b32.xlu0 %v3540, 126
        %v3545 = vpop.permute.xlu0 %3544
        %3546 = vrot.lane.b32.xlu0 %v3541, 126
        %v3547 = vpop.permute.xlu0 %3546
        %v3550 = vadd.f32 %v3494, %v3545
        %v3551 = vadd.f32 %v3495, %v3547
        %s3552 = sld [smem:[#allocation10 + $0x26]]
        %v3553 = vstv %s3552
        %v3554 = vmul.f32 %v3210, %v3553
        %v3555 = vmul.f32 %v3211, %v3553
        %3558 = vrot.lane.b32.xlu0 %v3554, 126
        %v3559 = vpop.permute.xlu0 %3558
        %3560 = vrot.lane.b32.xlu0 %v3555, 126
        %v3561 = vpop.permute.xlu0 %3560
        %v3564 = vadd.f32 %v3508, %v3559
        %v3565 = vadd.f32 %v3509, %v3561
        %s3566 = sld [smem:[#allocation10 + $0x4a]]
        %v3567 = vstv %s3566
        %v3568 = vmul.f32 %v3210, %v3567
        %v3569 = vmul.f32 %v3211, %v3567
        %3572 = vrot.lane.b32.xlu0 %v3568, 126
        %v3573 = vpop.permute.xlu0 %3572
        %3574 = vrot.lane.b32.xlu0 %v3569, 126
        %v3575 = vpop.permute.xlu0 %3574
        %v3578 = vadd.f32 %v3522, %v3573
        %v3579 = vadd.f32 %v3523, %v3575
        %s3580 = sld [smem:[#allocation10 + $0x6e]]
        %v3581 = vstv %s3580
        %v3582 = vmul.f32 %v3210, %v3581
        %v3583 = vmul.f32 %v3211, %v3581
        %3586 = vrot.lane.b32.xlu0 %v3582, 126
        %v3587 = vpop.permute.xlu0 %3586
        %3588 = vrot.lane.b32.xlu0 %v3583, 126
        %v3589 = vpop.permute.xlu0 %3588
        %v3592 = vadd.f32 %v3536, %v3587
        %v3593 = vadd.f32 %v3537, %v3589
        %s3594 = sld [smem:[#allocation10 + $0xb]]
        %v3595 = vstv %s3594
        %v3596 = vmul.f32 %v3212, %v3595
        %v3597 = vmul.f32 %v3213, %v3595
        %3600 = vrot.lane.b32.xlu0 %v3596, 126
        %v3601 = vpop.permute.xlu0 %3600
        %3602 = vrot.lane.b32.xlu0 %v3597, 126
        %v3603 = vpop.permute.xlu0 %3602
        %v3606 = vadd.f32 %v3550, %v3601
        %v3607 = vadd.f32 %v3551, %v3603
        %s3608 = sld [smem:[#allocation10 + $0x2f]]
        %v3609 = vstv %s3608
        %v3610 = vmul.f32 %v3212, %v3609
        %v3611 = vmul.f32 %v3213, %v3609
        %3614 = vrot.lane.b32.xlu0 %v3610, 126
        %v3615 = vpop.permute.xlu0 %3614
        %3616 = vrot.lane.b32.xlu0 %v3611, 126
        %v3617 = vpop.permute.xlu0 %3616
        %v3620 = vadd.f32 %v3564, %v3615
        %v3621 = vadd.f32 %v3565, %v3617
        %s3622 = sld [smem:[#allocation10 + $0x53]]
        %v3623 = vstv %s3622
        %v3624 = vmul.f32 %v3212, %v3623
        %v3625 = vmul.f32 %v3213, %v3623
        %3628 = vrot.lane.b32.xlu0 %v3624, 126
        %v3629 = vpop.permute.xlu0 %3628
        %3630 = vrot.lane.b32.xlu0 %v3625, 126
        %v3631 = vpop.permute.xlu0 %3630
        %v3634 = vadd.f32 %v3578, %v3629
        %v3635 = vadd.f32 %v3579, %v3631
        %s3636 = sld [smem:[#allocation10 + $0x77]]
        %v3637 = vstv %s3636
        %v3638 = vmul.f32 %v3212, %v3637
        %v3639 = vmul.f32 %v3213, %v3637
        %3642 = vrot.lane.b32.xlu0 %v3638, 126
        %v3643 = vpop.permute.xlu0 %3642
        %3644 = vrot.lane.b32.xlu0 %v3639, 126
        %v3645 = vpop.permute.xlu0 %3644
        %v3648 = vadd.f32 %v3592, %v3643
        %v3649 = vadd.f32 %v3593, %v3645
        %s3650 = sld [smem:[#allocation10 + $0x14]]
        %v3651 = vstv %s3650
        %v3652 = vmul.f32 %v3214, %v3651
        %v3653 = vmul.f32 %v3215, %v3651
        %3656 = vrot.lane.b32.xlu0 %v3652, 126
        %v3657 = vpop.permute.xlu0 %3656
        %3658 = vrot.lane.b32.xlu0 %v3653, 126
        %v3659 = vpop.permute.xlu0 %3658
        %v3662 = vadd.f32 %v3606, %v3657
        %v3663 = vadd.f32 %v3607, %v3659
        %s3664 = sld [smem:[#allocation10 + $0x38]]
        %v3665 = vstv %s3664
        %v3666 = vmul.f32 %v3214, %v3665
        %v3667 = vmul.f32 %v3215, %v3665
        %3670 = vrot.lane.b32.xlu0 %v3666, 126
        %v3671 = vpop.permute.xlu0 %3670
        %3672 = vrot.lane.b32.xlu0 %v3667, 126
        %v3673 = vpop.permute.xlu0 %3672
        %v3676 = vadd.f32 %v3620, %v3671
        %v3677 = vadd.f32 %v3621, %v3673
        %s3678 = sld [smem:[#allocation10 + $0x5c]]
        %v3679 = vstv %s3678
        %v3680 = vmul.f32 %v3214, %v3679
        %v3681 = vmul.f32 %v3215, %v3679
        %3684 = vrot.lane.b32.xlu0 %v3680, 126
        %v3685 = vpop.permute.xlu0 %3684
        %3686 = vrot.lane.b32.xlu0 %v3681, 126
        %v3687 = vpop.permute.xlu0 %3686
        %v3690 = vadd.f32 %v3634, %v3685
        %v3691 = vadd.f32 %v3635, %v3687
        %s3692 = sld [smem:[#allocation10 + $0x80]]
        %v3693 = vstv %s3692
        %v3694 = vmul.f32 %v3214, %v3693
        %v3695 = vmul.f32 %v3215, %v3693
        %3698 = vrot.lane.b32.xlu0 %v3694, 126
        %v3699 = vpop.permute.xlu0 %3698
        %3700 = vrot.lane.b32.xlu0 %v3695, 126
        %v3701 = vpop.permute.xlu0 %3700
        %v3704 = vadd.f32 %v3648, %v3699
        %v3705 = vadd.f32 %v3649, %v3701
        %s3706 = sld [smem:[#allocation10 + $0x1d]]
        %v3707 = vstv %s3706
        %v3708 = vmul.f32 %v3216, %v3707
        %v3709 = vmul.f32 %v3217, %v3707
        %3712 = vrot.lane.b32.xlu0 %v3708, 126
        %v3713 = vpop.permute.xlu0 %3712
        %3714 = vrot.lane.b32.xlu0 %v3709, 126
        %v3715 = vpop.permute.xlu0 %3714
        %v3718 = vadd.f32 %v3662, %v3713
        %v3719 = vadd.f32 %v3663, %v3715
        %s3720 = sld [smem:[#allocation10 + $0x41]]
        %v3721 = vstv %s3720
        %v3722 = vmul.f32 %v3216, %v3721
        %v3723 = vmul.f32 %v3217, %v3721
        %3726 = vrot.lane.b32.xlu0 %v3722, 126
        %v3727 = vpop.permute.xlu0 %3726
        %3728 = vrot.lane.b32.xlu0 %v3723, 126
        %v3729 = vpop.permute.xlu0 %3728
        %v3732 = vadd.f32 %v3676, %v3727
        %v3733 = vadd.f32 %v3677, %v3729
        %s3734 = sld [smem:[#allocation10 + $0x65]]
        %v3735 = vstv %s3734
        %v3736 = vmul.f32 %v3216, %v3735
        %v3737 = vmul.f32 %v3217, %v3735
        %3740 = vrot.lane.b32.xlu0 %v3736, 126
        %v3741 = vpop.permute.xlu0 %3740
        %3742 = vrot.lane.b32.xlu0 %v3737, 126
        %v3743 = vpop.permute.xlu0 %3742
        %v3746 = vadd.f32 %v3690, %v3741
        %v3747 = vadd.f32 %v3691, %v3743
        %s3748 = sld [smem:[#allocation10 + $0x89]]
        %v3749 = vstv %s3748
        %v3750 = vmul.f32 %v3216, %v3749
        %v3751 = vmul.f32 %v3217, %v3749
        %3754 = vrot.lane.b32.xlu0 %v3750, 126
        %v3755 = vpop.permute.xlu0 %3754
        %3756 = vrot.lane.b32.xlu0 %v3751, 126
        %v3757 = vpop.permute.xlu0 %3756
        %v3760 = vadd.f32 %v3704, %v3755
        %v3761 = vadd.f32 %v3705, %v3757
        %v3762 = vld [vmem:[#allocation2 + $0x1] sm:$0xff]
        %v3763 = vld [vmem:[#allocation2 + $0x9] sm:$0xff]
        %v3764 = vld [vmem:[#allocation2 + $0x19] sm:$0xff]
        %v3765 = vld [vmem:[#allocation2 + $0x21] sm:$0xff]
        %v3766 = vld [vmem:[#allocation2 + $0x31] sm:$0xff]
        %v3767 = vld [vmem:[#allocation2 + $0x39] sm:$0xff]
        %v3768 = vld [vmem:[#allocation2 + $0x49] sm:$0xff]
        %v3769 = vld [vmem:[#allocation2 + $0x51] sm:$0xff]
        %s3770 = sld [smem:[#allocation10 + $0x3]]
        %v3771 = vstv %s3770
        %v3772 = vmul.f32 %v3762, %v3771
        %v3773 = vmul.f32 %v3763, %v3771
        %v3774 = vadd.f32 %v3718, %v3772
        %v3775 = vadd.f32 %v3719, %v3773
        %s3776 = sld [smem:[#allocation10 + $0x27]]
        %v3777 = vstv %s3776
        %v3778 = vmul.f32 %v3762, %v3777
        %v3779 = vmul.f32 %v3763, %v3777
        %v3780 = vadd.f32 %v3732, %v3778
        %v3781 = vadd.f32 %v3733, %v3779
        %s3782 = sld [smem:[#allocation10 + $0x4b]]
        %v3783 = vstv %s3782
        %v3784 = vmul.f32 %v3762, %v3783
        %v3785 = vmul.f32 %v3763, %v3783
        %v3786 = vadd.f32 %v3746, %v3784
        %v3787 = vadd.f32 %v3747, %v3785
        %s3788 = sld [smem:[#allocation10 + $0x6f]]
        %v3789 = vstv %s3788
        %v3790 = vmul.f32 %v3762, %v3789
        %v3791 = vmul.f32 %v3763, %v3789
        %v3792 = vadd.f32 %v3760, %v3790
        %v3793 = vadd.f32 %v3761, %v3791
        %s3794 = sld [smem:[#allocation10 + $0xc]]
        %v3795 = vstv %s3794
        %v3796 = vmul.f32 %v3764, %v3795
        %v3797 = vmul.f32 %v3765, %v3795
        %v3798 = vadd.f32 %v3774, %v3796
        %v3799 = vadd.f32 %v3775, %v3797
        %s3800 = sld [smem:[#allocation10 + $0x30]]
        %v3801 = vstv %s3800
        %v3802 = vmul.f32 %v3764, %v3801
        %v3803 = vmul.f32 %v3765, %v3801
        %v3804 = vadd.f32 %v3780, %v3802
        %v3805 = vadd.f32 %v3781, %v3803
        %s3806 = sld [smem:[#allocation10 + $0x54]]
        %v3807 = vstv %s3806
        %v3808 = vmul.f32 %v3764, %v3807
        %v3809 = vmul.f32 %v3765, %v3807
        %v3810 = vadd.f32 %v3786, %v3808
        %v3811 = vadd.f32 %v3787, %v3809
        %s3812 = sld [smem:[#allocation10 + $0x78]]
        %v3813 = vstv %s3812
        %v3814 = vmul.f32 %v3764, %v3813
        %v3815 = vmul.f32 %v3765, %v3813
        %v3816 = vadd.f32 %v3792, %v3814
        %v3817 = vadd.f32 %v3793, %v3815
        %s3818 = sld [smem:[#allocation10 + $0x15]]
        %v3819 = vstv %s3818
        %v3820 = vmul.f32 %v3766, %v3819
        %v3821 = vmul.f32 %v3767, %v3819
        %v3822 = vadd.f32 %v3798, %v3820
        %v3823 = vadd.f32 %v3799, %v3821
        %s3824 = sld [smem:[#allocation10 + $0x39]]
        %v3825 = vstv %s3824
        %v3826 = vmul.f32 %v3766, %v3825
        %v3827 = vmul.f32 %v3767, %v3825
        %v3828 = vadd.f32 %v3804, %v3826
        %v3829 = vadd.f32 %v3805, %v3827
        %s3830 = sld [smem:[#allocation10 + $0x5d]]
        %v3831 = vstv %s3830
        %v3832 = vmul.f32 %v3766, %v3831
        %v3833 = vmul.f32 %v3767, %v3831
        %v3834 = vadd.f32 %v3810, %v3832
        %v3835 = vadd.f32 %v3811, %v3833
        %s3836 = sld [smem:[#allocation10 + $0x81]]
        %v3837 = vstv %s3836
        %v3838 = vmul.f32 %v3766, %v3837
        %v3839 = vmul.f32 %v3767, %v3837
        %v3840 = vadd.f32 %v3816, %v3838
        %v3841 = vadd.f32 %v3817, %v3839
        %s3842 = sld [smem:[#allocation10 + $0x1e]]
        %v3843 = vstv %s3842
        %v3844 = vmul.f32 %v3768, %v3843
        %v3845 = vmul.f32 %v3769, %v3843
        %v3846 = vadd.f32 %v3822, %v3844
        %v3847 = vadd.f32 %v3823, %v3845
        %s3848 = sld [smem:[#allocation10 + $0x42]]
        %v3849 = vstv %s3848
        %v3850 = vmul.f32 %v3768, %v3849
        %v3851 = vmul.f32 %v3769, %v3849
        %v3852 = vadd.f32 %v3828, %v3850
        %v3853 = vadd.f32 %v3829, %v3851
        %s3854 = sld [smem:[#allocation10 + $0x66]]
        %v3855 = vstv %s3854
        %v3856 = vmul.f32 %v3768, %v3855
        %v3857 = vmul.f32 %v3769, %v3855
        %v3858 = vadd.f32 %v3834, %v3856
        %v3859 = vadd.f32 %v3835, %v3857
        %s3860 = sld [smem:[#allocation10 + $0x8a]]
        %v3861 = vstv %s3860
        %v3862 = vmul.f32 %v3768, %v3861
        %v3863 = vmul.f32 %v3769, %v3861
        %v3864 = vadd.f32 %v3840, %v3862
        %v3865 = vadd.f32 %v3841, %v3863
        %s3866 = sld [smem:[#allocation10 + $0x4]]
        %v3867 = vstv %s3866
        %v3868 = vmul.f32 %v3762, %v3867
        %v3869 = vmul.f32 %v3763, %v3867
        %3872 = vrot.lane.b32.xlu0 %v3868, 127
        %v3873 = vpop.permute.xlu0 %3872
        %3874 = vrot.lane.b32.xlu0 %v3869, 127
        %v3875 = vpop.permute.xlu0 %3874
        %v3878 = vadd.f32 %v3846, %v3873
        %v3879 = vadd.f32 %v3847, %v3875
        %s3880 = sld [smem:[#allocation10 + $0x28]]
        %v3881 = vstv %s3880
        %v3882 = vmul.f32 %v3762, %v3881
        %v3883 = vmul.f32 %v3763, %v3881
        %3886 = vrot.lane.b32.xlu0 %v3882, 127
        %v3887 = vpop.permute.xlu0 %3886
        %3888 = vrot.lane.b32.xlu0 %v3883, 127
        %v3889 = vpop.permute.xlu0 %3888
        %v3892 = vadd.f32 %v3852, %v3887
        %v3893 = vadd.f32 %v3853, %v3889
        %s3894 = sld [smem:[#allocation10 + $0x4c]]
        %v3895 = vstv %s3894
        %v3896 = vmul.f32 %v3762, %v3895
        %v3897 = vmul.f32 %v3763, %v3895
        %3900 = vrot.lane.b32.xlu0 %v3896, 127
        %v3901 = vpop.permute.xlu0 %3900
        %3902 = vrot.lane.b32.xlu0 %v3897, 127
        %v3903 = vpop.permute.xlu0 %3902
        %v3906 = vadd.f32 %v3858, %v3901
        %v3907 = vadd.f32 %v3859, %v3903
        %s3908 = sld [smem:[#allocation10 + $0x70]]
        %v3909 = vstv %s3908
        %v3910 = vmul.f32 %v3762, %v3909
        %v3911 = vmul.f32 %v3763, %v3909
        %3914 = vrot.lane.b32.xlu0 %v3910, 127
        %v3915 = vpop.permute.xlu0 %3914
        %3916 = vrot.lane.b32.xlu0 %v3911, 127
        %v3917 = vpop.permute.xlu0 %3916
        %v3920 = vadd.f32 %v3864, %v3915
        %v3921 = vadd.f32 %v3865, %v3917
        %s3922 = sld [smem:[#allocation10 + $0xd]]
        %v3923 = vstv %s3922
        %v3924 = vmul.f32 %v3764, %v3923
        %v3925 = vmul.f32 %v3765, %v3923
        %3928 = vrot.lane.b32.xlu0 %v3924, 127
        %v3929 = vpop.permute.xlu0 %3928
        %3930 = vrot.lane.b32.xlu0 %v3925, 127
        %v3931 = vpop.permute.xlu0 %3930
        %v3934 = vadd.f32 %v3878, %v3929
        %v3935 = vadd.f32 %v3879, %v3931
        %s3936 = sld [smem:[#allocation10 + $0x31]]
        %v3937 = vstv %s3936
        %v3938 = vmul.f32 %v3764, %v3937
        %v3939 = vmul.f32 %v3765, %v3937
        %3942 = vrot.lane.b32.xlu0 %v3938, 127
        %v3943 = vpop.permute.xlu0 %3942
        %3944 = vrot.lane.b32.xlu0 %v3939, 127
        %v3945 = vpop.permute.xlu0 %3944
        %v3948 = vadd.f32 %v3892, %v3943
        %v3949 = vadd.f32 %v3893, %v3945
        %s3950 = sld [smem:[#allocation10 + $0x55]]
        %v3951 = vstv %s3950
        %v3952 = vmul.f32 %v3764, %v3951
        %v3953 = vmul.f32 %v3765, %v3951
        %3956 = vrot.lane.b32.xlu0 %v3952, 127
        %v3957 = vpop.permute.xlu0 %3956
        %3958 = vrot.lane.b32.xlu0 %v3953, 127
        %v3959 = vpop.permute.xlu0 %3958
        %v3962 = vadd.f32 %v3906, %v3957
        %v3963 = vadd.f32 %v3907, %v3959
        %s3964 = sld [smem:[#allocation10 + $0x79]]
        %v3965 = vstv %s3964
        %v3966 = vmul.f32 %v3764, %v3965
        %v3967 = vmul.f32 %v3765, %v3965
        %3970 = vrot.lane.b32.xlu0 %v3966, 127
        %v3971 = vpop.permute.xlu0 %3970
        %3972 = vrot.lane.b32.xlu0 %v3967, 127
        %v3973 = vpop.permute.xlu0 %3972
        %v3976 = vadd.f32 %v3920, %v3971
        %v3977 = vadd.f32 %v3921, %v3973
        %s3978 = sld [smem:[#allocation10 + $0x16]]
        %v3979 = vstv %s3978
        %v3980 = vmul.f32 %v3766, %v3979
        %v3981 = vmul.f32 %v3767, %v3979
        %3984 = vrot.lane.b32.xlu0 %v3980, 127
        %v3985 = vpop.permute.xlu0 %3984
        %3986 = vrot.lane.b32.xlu0 %v3981, 127
        %v3987 = vpop.permute.xlu0 %3986
        %v3990 = vadd.f32 %v3934, %v3985
        %v3991 = vadd.f32 %v3935, %v3987
        %s3992 = sld [smem:[#allocation10 + $0x3a]]
        %v3993 = vstv %s3992
        %v3994 = vmul.f32 %v3766, %v3993
        %v3995 = vmul.f32 %v3767, %v3993
        %3998 = vrot.lane.b32.xlu0 %v3994, 127
        %v3999 = vpop.permute.xlu0 %3998
        %4000 = vrot.lane.b32.xlu0 %v3995, 127
        %v4001 = vpop.permute.xlu0 %4000
        %v4004 = vadd.f32 %v3948, %v3999
        %v4005 = vadd.f32 %v3949, %v4001
        %s4006 = sld [smem:[#allocation10 + $0x5e]]
        %v4007 = vstv %s4006
        %v4008 = vmul.f32 %v3766, %v4007
        %v4009 = vmul.f32 %v3767, %v4007
        %4012 = vrot.lane.b32.xlu0 %v4008, 127
        %v4013 = vpop.permute.xlu0 %4012
        %4014 = vrot.lane.b32.xlu0 %v4009, 127
        %v4015 = vpop.permute.xlu0 %4014
        %v4018 = vadd.f32 %v3962, %v4013
        %v4019 = vadd.f32 %v3963, %v4015
        %s4020 = sld [smem:[#allocation10 + $0x82]]
        %v4021 = vstv %s4020
        %v4022 = vmul.f32 %v3766, %v4021
        %v4023 = vmul.f32 %v3767, %v4021
        %4026 = vrot.lane.b32.xlu0 %v4022, 127
        %v4027 = vpop.permute.xlu0 %4026
        %4028 = vrot.lane.b32.xlu0 %v4023, 127
        %v4029 = vpop.permute.xlu0 %4028
        %v4032 = vadd.f32 %v3976, %v4027
        %v4033 = vadd.f32 %v3977, %v4029
        %s4034 = sld [smem:[#allocation10 + $0x1f]]
        %v4035 = vstv %s4034
        %v4036 = vmul.f32 %v3768, %v4035
        %v4037 = vmul.f32 %v3769, %v4035
        %4040 = vrot.lane.b32.xlu0 %v4036, 127
        %v4041 = vpop.permute.xlu0 %4040
        %4042 = vrot.lane.b32.xlu0 %v4037, 127
        %v4043 = vpop.permute.xlu0 %4042
        %v4046 = vadd.f32 %v3990, %v4041
        %v4047 = vadd.f32 %v3991, %v4043
        %s4048 = sld [smem:[#allocation10 + $0x43]]
        %v4049 = vstv %s4048
        %v4050 = vmul.f32 %v3768, %v4049
        %v4051 = vmul.f32 %v3769, %v4049
        %4054 = vrot.lane.b32.xlu0 %v4050, 127
        %v4055 = vpop.permute.xlu0 %4054
        %4056 = vrot.lane.b32.xlu0 %v4051, 127
        %v4057 = vpop.permute.xlu0 %4056
        %v4060 = vadd.f32 %v4004, %v4055
        %v4061 = vadd.f32 %v4005, %v4057
        %s4062 = sld [smem:[#allocation10 + $0x67]]
        %v4063 = vstv %s4062
        %v4064 = vmul.f32 %v3768, %v4063
        %v4065 = vmul.f32 %v3769, %v4063
        %4068 = vrot.lane.b32.xlu0 %v4064, 127
        %v4069 = vpop.permute.xlu0 %4068
        %4070 = vrot.lane.b32.xlu0 %v4065, 127
        %v4071 = vpop.permute.xlu0 %4070
        %v4074 = vadd.f32 %v4018, %v4069
        %v4075 = vadd.f32 %v4019, %v4071
        %s4076 = sld [smem:[#allocation10 + $0x8b]]
        %v4077 = vstv %s4076
        %v4078 = vmul.f32 %v3768, %v4077
        %v4079 = vmul.f32 %v3769, %v4077
        %4082 = vrot.lane.b32.xlu0 %v4078, 127
        %v4083 = vpop.permute.xlu0 %4082
        %4084 = vrot.lane.b32.xlu0 %v4079, 127
        %v4085 = vpop.permute.xlu0 %4084
        %v4088 = vadd.f32 %v4032, %v4083
        %v4089 = vadd.f32 %v4033, %v4085
        %s4090 = sld [smem:[#allocation10 + $0x5]]
        %v4091 = vstv %s4090
        %v4092 = vmul.f32 %v3762, %v4091
        %v4093 = vmul.f32 %v3763, %v4091
        %4096 = vrot.lane.b32.xlu0 %v4092, 126
        %v4097 = vpop.permute.xlu0 %4096
        %4098 = vrot.lane.b32.xlu0 %v4093, 126
        %v4099 = vpop.permute.xlu0 %4098
        %v4102 = vadd.f32 %v4046, %v4097
        %v4103 = vadd.f32 %v4047, %v4099
        %s4104 = sld [smem:[#allocation10 + $0x29]]
        %v4105 = vstv %s4104
        %v4106 = vmul.f32 %v3762, %v4105
        %v4107 = vmul.f32 %v3763, %v4105
        %4110 = vrot.lane.b32.xlu0 %v4106, 126
        %v4111 = vpop.permute.xlu0 %4110
        %4112 = vrot.lane.b32.xlu0 %v4107, 126
        %v4113 = vpop.permute.xlu0 %4112
        %v4116 = vadd.f32 %v4060, %v4111
        %v4117 = vadd.f32 %v4061, %v4113
        %s4118 = sld [smem:[#allocation10 + $0x4d]]
        %v4119 = vstv %s4118
        %v4120 = vmul.f32 %v3762, %v4119
        %v4121 = vmul.f32 %v3763, %v4119
        %4124 = vrot.lane.b32.xlu0 %v4120, 126
        %v4125 = vpop.permute.xlu0 %4124
        %4126 = vrot.lane.b32.xlu0 %v4121, 126
        %v4127 = vpop.permute.xlu0 %4126
        %v4130 = vadd.f32 %v4074, %v4125
        %v4131 = vadd.f32 %v4075, %v4127
        %s4132 = sld [smem:[#allocation10 + $0x71]]
        %v4133 = vstv %s4132
        %v4134 = vmul.f32 %v3762, %v4133
        %v4135 = vmul.f32 %v3763, %v4133
        %4138 = vrot.lane.b32.xlu0 %v4134, 126
        %v4139 = vpop.permute.xlu0 %4138
        %4140 = vrot.lane.b32.xlu0 %v4135, 126
        %v4141 = vpop.permute.xlu0 %4140
        %v4144 = vadd.f32 %v4088, %v4139
        %v4145 = vadd.f32 %v4089, %v4141
        %s4146 = sld [smem:[#allocation10 + $0xe]]
        %v4147 = vstv %s4146
        %v4148 = vmul.f32 %v3764, %v4147
        %v4149 = vmul.f32 %v3765, %v4147
        %4152 = vrot.lane.b32.xlu0 %v4148, 126
        %v4153 = vpop.permute.xlu0 %4152
        %4154 = vrot.lane.b32.xlu0 %v4149, 126
        %v4155 = vpop.permute.xlu0 %4154
        %v4158 = vadd.f32 %v4102, %v4153
        %v4159 = vadd.f32 %v4103, %v4155
        %s4160 = sld [smem:[#allocation10 + $0x32]]
        %v4161 = vstv %s4160
        %v4162 = vmul.f32 %v3764, %v4161
        %v4163 = vmul.f32 %v3765, %v4161
        %4166 = vrot.lane.b32.xlu0 %v4162, 126
        %v4167 = vpop.permute.xlu0 %4166
        %4168 = vrot.lane.b32.xlu0 %v4163, 126
        %v4169 = vpop.permute.xlu0 %4168
        %v4172 = vadd.f32 %v4116, %v4167
        %v4173 = vadd.f32 %v4117, %v4169
        %s4174 = sld [smem:[#allocation10 + $0x56]]
        %v4175 = vstv %s4174
        %v4176 = vmul.f32 %v3764, %v4175
        %v4177 = vmul.f32 %v3765, %v4175
        %4180 = vrot.lane.b32.xlu0 %v4176, 126
        %v4181 = vpop.permute.xlu0 %4180
        %4182 = vrot.lane.b32.xlu0 %v4177, 126
        %v4183 = vpop.permute.xlu0 %4182
        %v4186 = vadd.f32 %v4130, %v4181
        %v4187 = vadd.f32 %v4131, %v4183
        %s4188 = sld [smem:[#allocation10 + $0x7a]]
        %v4189 = vstv %s4188
        %v4190 = vmul.f32 %v3764, %v4189
        %v4191 = vmul.f32 %v3765, %v4189
        %4194 = vrot.lane.b32.xlu0 %v4190, 126
        %v4195 = vpop.permute.xlu0 %4194
        %4196 = vrot.lane.b32.xlu0 %v4191, 126
        %v4197 = vpop.permute.xlu0 %4196
        %v4200 = vadd.f32 %v4144, %v4195
        %v4201 = vadd.f32 %v4145, %v4197
        %s4202 = sld [smem:[#allocation10 + $0x17]]
        %v4203 = vstv %s4202
        %v4204 = vmul.f32 %v3766, %v4203
        %v4205 = vmul.f32 %v3767, %v4203
        %4208 = vrot.lane.b32.xlu0 %v4204, 126
        %v4209 = vpop.permute.xlu0 %4208
        %4210 = vrot.lane.b32.xlu0 %v4205, 126
        %v4211 = vpop.permute.xlu0 %4210
        %v4214 = vadd.f32 %v4158, %v4209
        %v4215 = vadd.f32 %v4159, %v4211
        %s4216 = sld [smem:[#allocation10 + $0x3b]]
        %v4217 = vstv %s4216
        %v4218 = vmul.f32 %v3766, %v4217
        %v4219 = vmul.f32 %v3767, %v4217
        %4222 = vrot.lane.b32.xlu0 %v4218, 126
        %v4223 = vpop.permute.xlu0 %4222
        %4224 = vrot.lane.b32.xlu0 %v4219, 126
        %v4225 = vpop.permute.xlu0 %4224
        %v4228 = vadd.f32 %v4172, %v4223
        %v4229 = vadd.f32 %v4173, %v4225
        %s4230 = sld [smem:[#allocation10 + $0x5f]]
        %v4231 = vstv %s4230
        %v4232 = vmul.f32 %v3766, %v4231
        %v4233 = vmul.f32 %v3767, %v4231
        %4236 = vrot.lane.b32.xlu0 %v4232, 126
        %v4237 = vpop.permute.xlu0 %4236
        %4238 = vrot.lane.b32.xlu0 %v4233, 126
        %v4239 = vpop.permute.xlu0 %4238
        %v4242 = vadd.f32 %v4186, %v4237
        %v4243 = vadd.f32 %v4187, %v4239
        %s4244 = sld [smem:[#allocation10 + $0x83]]
        %v4245 = vstv %s4244
        %v4246 = vmul.f32 %v3766, %v4245
        %v4247 = vmul.f32 %v3767, %v4245
        %4250 = vrot.lane.b32.xlu0 %v4246, 126
        %v4251 = vpop.permute.xlu0 %4250
        %4252 = vrot.lane.b32.xlu0 %v4247, 126
        %v4253 = vpop.permute.xlu0 %4252
        %v4256 = vadd.f32 %v4200, %v4251
        %v4257 = vadd.f32 %v4201, %v4253
        %s4258 = sld [smem:[#allocation10 + $0x20]]
        %v4259 = vstv %s4258
        %v4260 = vmul.f32 %v3768, %v4259
        %v4261 = vmul.f32 %v3769, %v4259
        %4264 = vrot.lane.b32.xlu0 %v4260, 126
        %v4265 = vpop.permute.xlu0 %4264
        %4266 = vrot.lane.b32.xlu0 %v4261, 126
        %v4267 = vpop.permute.xlu0 %4266
        %v4270 = vadd.f32 %v4214, %v4265
        %v4271 = vadd.f32 %v4215, %v4267
        %s4272 = sld [smem:[#allocation10 + $0x44]]
        %v4273 = vstv %s4272
        %v4274 = vmul.f32 %v3768, %v4273
        %v4275 = vmul.f32 %v3769, %v4273
        %4278 = vrot.lane.b32.xlu0 %v4274, 126
        %v4279 = vpop.permute.xlu0 %4278
        %4280 = vrot.lane.b32.xlu0 %v4275, 126
        %v4281 = vpop.permute.xlu0 %4280
        %v4284 = vadd.f32 %v4228, %v4279
        %v4285 = vadd.f32 %v4229, %v4281
        %s4286 = sld [smem:[#allocation10 + $0x68]]
        %v4287 = vstv %s4286
        %v4288 = vmul.f32 %v3768, %v4287
        %v4289 = vmul.f32 %v3769, %v4287
        %4292 = vrot.lane.b32.xlu0 %v4288, 126
        %v4293 = vpop.permute.xlu0 %4292
        %4294 = vrot.lane.b32.xlu0 %v4289, 126
        %v4295 = vpop.permute.xlu0 %4294
        %v4298 = vadd.f32 %v4242, %v4293
        %v4299 = vadd.f32 %v4243, %v4295
        %s4300 = sld [smem:[#allocation10 + $0x8c]]
        %v4301 = vstv %s4300
        %v4302 = vmul.f32 %v3768, %v4301
        %v4303 = vmul.f32 %v3769, %v4301
        %4306 = vrot.lane.b32.xlu0 %v4302, 126
        %v4307 = vpop.permute.xlu0 %4306
        %4308 = vrot.lane.b32.xlu0 %v4303, 126
        %v4309 = vpop.permute.xlu0 %4308
        %v4312 = vadd.f32 %v4256, %v4307
        %v4313 = vadd.f32 %v4257, %v4309
        %v4314 = vld [vmem:[#allocation2 + $0x2] sm:$0xff]
        %v4315 = vld [vmem:[#allocation2 + $0xa] sm:$0xff]
        %v4316 = vld [vmem:[#allocation2 + $0x1a] sm:$0xff]
        %v4317 = vld [vmem:[#allocation2 + $0x22] sm:$0xff]
        %v4318 = vld [vmem:[#allocation2 + $0x32] sm:$0xff]
        %v4319 = vld [vmem:[#allocation2 + $0x3a] sm:$0xff]
        %v4320 = vld [vmem:[#allocation2 + $0x4a] sm:$0xff]
        %v4321 = vld [vmem:[#allocation2 + $0x52] sm:$0xff]
        %s4322 = sld [smem:[#allocation10 + $0x6]]
        %v4323 = vstv %s4322
        %v4324 = vmul.f32 %v4314, %v4323
        %v4325 = vmul.f32 %v4315, %v4323
        %v4326 = vadd.f32 %v4270, %v4324
        %v4327 = vadd.f32 %v4271, %v4325
        %s4328 = sld [smem:[#allocation10 + $0x2a]]
        %v4329 = vstv %s4328
        %v4330 = vmul.f32 %v4314, %v4329
        %v4331 = vmul.f32 %v4315, %v4329
        %v4332 = vadd.f32 %v4284, %v4330
        %v4333 = vadd.f32 %v4285, %v4331
        %s4334 = sld [smem:[#allocation10 + $0x4e]]
        %v4335 = vstv %s4334
        %v4336 = vmul.f32 %v4314, %v4335
        %v4337 = vmul.f32 %v4315, %v4335
        %v4338 = vadd.f32 %v4298, %v4336
        %v4339 = vadd.f32 %v4299, %v4337
        %s4340 = sld [smem:[#allocation10 + $0x72]]
        %v4341 = vstv %s4340
        %v4342 = vmul.f32 %v4314, %v4341
        %v4343 = vmul.f32 %v4315, %v4341
        %v4344 = vadd.f32 %v4312, %v4342
        %v4345 = vadd.f32 %v4313, %v4343
        %s4346 = sld [smem:[#allocation10 + $0xf]]
        %v4347 = vstv %s4346
        %v4348 = vmul.f32 %v4316, %v4347
        %v4349 = vmul.f32 %v4317, %v4347
        %v4350 = vadd.f32 %v4326, %v4348
        %v4351 = vadd.f32 %v4327, %v4349
        %s4352 = sld [smem:[#allocation10 + $0x33]]
        %v4353 = vstv %s4352
        %v4354 = vmul.f32 %v4316, %v4353
        %v4355 = vmul.f32 %v4317, %v4353
        %v4356 = vadd.f32 %v4332, %v4354
        %v4357 = vadd.f32 %v4333, %v4355
        %s4358 = sld [smem:[#allocation10 + $0x57]]
        %v4359 = vstv %s4358
        %v4360 = vmul.f32 %v4316, %v4359
        %v4361 = vmul.f32 %v4317, %v4359
        %v4362 = vadd.f32 %v4338, %v4360
        %v4363 = vadd.f32 %v4339, %v4361
        %s4364 = sld [smem:[#allocation10 + $0x7b]]
        %v4365 = vstv %s4364
        %v4366 = vmul.f32 %v4316, %v4365
        %v4367 = vmul.f32 %v4317, %v4365
        %v4368 = vadd.f32 %v4344, %v4366
        %v4369 = vadd.f32 %v4345, %v4367
        %s4370 = sld [smem:[#allocation10 + $0x18]]
        %v4371 = vstv %s4370
        %v4372 = vmul.f32 %v4318, %v4371
        %v4373 = vmul.f32 %v4319, %v4371
        %v4374 = vadd.f32 %v4350, %v4372
        %v4375 = vadd.f32 %v4351, %v4373
        %s4376 = sld [smem:[#allocation10 + $0x3c]]
        %v4377 = vstv %s4376
        %v4378 = vmul.f32 %v4318, %v4377
        %v4379 = vmul.f32 %v4319, %v4377
        %v4380 = vadd.f32 %v4356, %v4378
        %v4381 = vadd.f32 %v4357, %v4379
        %s4382 = sld [smem:[#allocation10 + $0x60]]
        %v4383 = vstv %s4382
        %v4384 = vmul.f32 %v4318, %v4383
        %v4385 = vmul.f32 %v4319, %v4383
        %v4386 = vadd.f32 %v4362, %v4384
        %v4387 = vadd.f32 %v4363, %v4385
        %s4388 = sld [smem:[#allocation10 + $0x84]]
        %v4389 = vstv %s4388
        %v4390 = vmul.f32 %v4318, %v4389
        %v4391 = vmul.f32 %v4319, %v4389
        %v4392 = vadd.f32 %v4368, %v4390
        %v4393 = vadd.f32 %v4369, %v4391
        %s4394 = sld [smem:[#allocation10 + $0x21]]
        %v4395 = vstv %s4394
        %v4396 = vmul.f32 %v4320, %v4395
        %v4397 = vmul.f32 %v4321, %v4395
        %v4398 = vadd.f32 %v4374, %v4396
        %v4399 = vadd.f32 %v4375, %v4397
        %s4400 = sld [smem:[#allocation10 + $0x45]]
        %v4401 = vstv %s4400
        %v4402 = vmul.f32 %v4320, %v4401
        %v4403 = vmul.f32 %v4321, %v4401
        %v4404 = vadd.f32 %v4380, %v4402
        %v4405 = vadd.f32 %v4381, %v4403
        %s4406 = sld [smem:[#allocation10 + $0x69]]
        %v4407 = vstv %s4406
        %v4408 = vmul.f32 %v4320, %v4407
        %v4409 = vmul.f32 %v4321, %v4407
        %v4410 = vadd.f32 %v4386, %v4408
        %v4411 = vadd.f32 %v4387, %v4409
        %s4412 = sld [smem:[#allocation10 + $0x8d]]
        %v4413 = vstv %s4412
        %v4414 = vmul.f32 %v4320, %v4413
        %v4415 = vmul.f32 %v4321, %v4413
        %v4416 = vadd.f32 %v4392, %v4414
        %v4417 = vadd.f32 %v4393, %v4415
        %s4418 = sld [smem:[#allocation10 + $0x7]]
        %v4419 = vstv %s4418
        %v4420 = vmul.f32 %v4314, %v4419
        %v4421 = vmul.f32 %v4315, %v4419
        %4424 = vrot.lane.b32.xlu0 %v4420, 127
        %v4425 = vpop.permute.xlu0 %4424
        %4426 = vrot.lane.b32.xlu0 %v4421, 127
        %v4427 = vpop.permute.xlu0 %4426
        %v4430 = vadd.f32 %v4398, %v4425
        %v4431 = vadd.f32 %v4399, %v4427
        %s4432 = sld [smem:[#allocation10 + $0x2b]]
        %v4433 = vstv %s4432
        %v4434 = vmul.f32 %v4314, %v4433
        %v4435 = vmul.f32 %v4315, %v4433
        %4438 = vrot.lane.b32.xlu0 %v4434, 127
        %v4439 = vpop.permute.xlu0 %4438
        %4440 = vrot.lane.b32.xlu0 %v4435, 127
        %v4441 = vpop.permute.xlu0 %4440
        %v4444 = vadd.f32 %v4404, %v4439
        %v4445 = vadd.f32 %v4405, %v4441
        %s4446 = sld [smem:[#allocation10 + $0x4f]]
        %v4447 = vstv %s4446
        %v4448 = vmul.f32 %v4314, %v4447
        %v4449 = vmul.f32 %v4315, %v4447
        %4452 = vrot.lane.b32.xlu0 %v4448, 127
        %v4453 = vpop.permute.xlu0 %4452
        %4454 = vrot.lane.b32.xlu0 %v4449, 127
        %v4455 = vpop.permute.xlu0 %4454
        %v4458 = vadd.f32 %v4410, %v4453
        %v4459 = vadd.f32 %v4411, %v4455
        %s4460 = sld [smem:[#allocation10 + $0x73]]
        %v4461 = vstv %s4460
        %v4462 = vmul.f32 %v4314, %v4461
        %v4463 = vmul.f32 %v4315, %v4461
        %4466 = vrot.lane.b32.xlu0 %v4462, 127
        %v4467 = vpop.permute.xlu0 %4466
        %4468 = vrot.lane.b32.xlu0 %v4463, 127
        %v4469 = vpop.permute.xlu0 %4468
        %v4472 = vadd.f32 %v4416, %v4467
        %v4473 = vadd.f32 %v4417, %v4469
        %s4474 = sld [smem:[#allocation10 + $0x10]]
        %v4475 = vstv %s4474
        %v4476 = vmul.f32 %v4316, %v4475
        %v4477 = vmul.f32 %v4317, %v4475
        %4480 = vrot.lane.b32.xlu0 %v4476, 127
        %v4481 = vpop.permute.xlu0 %4480
        %4482 = vrot.lane.b32.xlu0 %v4477, 127
        %v4483 = vpop.permute.xlu0 %4482
        %v4486 = vadd.f32 %v4430, %v4481
        %v4487 = vadd.f32 %v4431, %v4483
        %s4488 = sld [smem:[#allocation10 + $0x34]]
        %v4489 = vstv %s4488
        %v4490 = vmul.f32 %v4316, %v4489
        %v4491 = vmul.f32 %v4317, %v4489
        %4494 = vrot.lane.b32.xlu0 %v4490, 127
        %v4495 = vpop.permute.xlu0 %4494
        %4496 = vrot.lane.b32.xlu0 %v4491, 127
        %v4497 = vpop.permute.xlu0 %4496
        %v4500 = vadd.f32 %v4444, %v4495
        %v4501 = vadd.f32 %v4445, %v4497
        %s4502 = sld [smem:[#allocation10 + $0x58]]
        %v4503 = vstv %s4502
        %v4504 = vmul.f32 %v4316, %v4503
        %v4505 = vmul.f32 %v4317, %v4503
        %4508 = vrot.lane.b32.xlu0 %v4504, 127
        %v4509 = vpop.permute.xlu0 %4508
        %4510 = vrot.lane.b32.xlu0 %v4505, 127
        %v4511 = vpop.permute.xlu0 %4510
        %v4514 = vadd.f32 %v4458, %v4509
        %v4515 = vadd.f32 %v4459, %v4511
        %s4516 = sld [smem:[#allocation10 + $0x7c]]
        %v4517 = vstv %s4516
        %v4518 = vmul.f32 %v4316, %v4517
        %v4519 = vmul.f32 %v4317, %v4517
        %4522 = vrot.lane.b32.xlu0 %v4518, 127
        %v4523 = vpop.permute.xlu0 %4522
        %4524 = vrot.lane.b32.xlu0 %v4519, 127
        %v4525 = vpop.permute.xlu0 %4524
        %v4528 = vadd.f32 %v4472, %v4523
        %v4529 = vadd.f32 %v4473, %v4525
        %s4530 = sld [smem:[#allocation10 + $0x19]]
        %v4531 = vstv %s4530
        %v4532 = vmul.f32 %v4318, %v4531
        %v4533 = vmul.f32 %v4319, %v4531
        %4536 = vrot.lane.b32.xlu0 %v4532, 127
        %v4537 = vpop.permute.xlu0 %4536
        %4538 = vrot.lane.b32.xlu0 %v4533, 127
        %v4539 = vpop.permute.xlu0 %4538
        %v4542 = vadd.f32 %v4486, %v4537
        %v4543 = vadd.f32 %v4487, %v4539
        %s4544 = sld [smem:[#allocation10 + $0x3d]]
        %v4545 = vstv %s4544
        %v4546 = vmul.f32 %v4318, %v4545
        %v4547 = vmul.f32 %v4319, %v4545
        %4550 = vrot.lane.b32.xlu0 %v4546, 127
        %v4551 = vpop.permute.xlu0 %4550
        %4552 = vrot.lane.b32.xlu0 %v4547, 127
        %v4553 = vpop.permute.xlu0 %4552
        %v4556 = vadd.f32 %v4500, %v4551
        %v4557 = vadd.f32 %v4501, %v4553
        %s4558 = sld [smem:[#allocation10 + $0x61]]
        %v4559 = vstv %s4558
        %v4560 = vmul.f32 %v4318, %v4559
        %v4561 = vmul.f32 %v4319, %v4559
        %4564 = vrot.lane.b32.xlu0 %v4560, 127
        %v4565 = vpop.permute.xlu0 %4564
        %4566 = vrot.lane.b32.xlu0 %v4561, 127
        %v4567 = vpop.permute.xlu0 %4566
        %v4570 = vadd.f32 %v4514, %v4565
        %v4571 = vadd.f32 %v4515, %v4567
        %s4572 = sld [smem:[#allocation10 + $0x85]]
        %v4573 = vstv %s4572
        %v4574 = vmul.f32 %v4318, %v4573
        %v4575 = vmul.f32 %v4319, %v4573
        %4578 = vrot.lane.b32.xlu0 %v4574, 127
        %v4579 = vpop.permute.xlu0 %4578
        %4580 = vrot.lane.b32.xlu0 %v4575, 127
        %v4581 = vpop.permute.xlu0 %4580
        %v4584 = vadd.f32 %v4528, %v4579
        %v4585 = vadd.f32 %v4529, %v4581
        %s4586 = sld [smem:[#allocation10 + $0x22]]
        %v4587 = vstv %s4586
        %v4588 = vmul.f32 %v4320, %v4587
        %v4589 = vmul.f32 %v4321, %v4587
        %4592 = vrot.lane.b32.xlu0 %v4588, 127
        %v4593 = vpop.permute.xlu0 %4592
        %4594 = vrot.lane.b32.xlu0 %v4589, 127
        %v4595 = vpop.permute.xlu0 %4594
        %v4598 = vadd.f32 %v4542, %v4593
        %v4599 = vadd.f32 %v4543, %v4595
        %s4600 = sld [smem:[#allocation10 + $0x46]]
        %v4601 = vstv %s4600
        %v4602 = vmul.f32 %v4320, %v4601
        %v4603 = vmul.f32 %v4321, %v4601
        %4606 = vrot.lane.b32.xlu0 %v4602, 127
        %v4607 = vpop.permute.xlu0 %4606
        %4608 = vrot.lane.b32.xlu0 %v4603, 127
        %v4609 = vpop.permute.xlu0 %4608
        %v4612 = vadd.f32 %v4556, %v4607
        %v4613 = vadd.f32 %v4557, %v4609
        %s4614 = sld [smem:[#allocation10 + $0x6a]]
        %v4615 = vstv %s4614
        %v4616 = vmul.f32 %v4320, %v4615
        %v4617 = vmul.f32 %v4321, %v4615
        %4620 = vrot.lane.b32.xlu0 %v4616, 127
        %v4621 = vpop.permute.xlu0 %4620
        %4622 = vrot.lane.b32.xlu0 %v4617, 127
        %v4623 = vpop.permute.xlu0 %4622
        %v4626 = vadd.f32 %v4570, %v4621
        %v4627 = vadd.f32 %v4571, %v4623
        %s4628 = sld [smem:[#allocation10 + $0x8e]]
        %v4629 = vstv %s4628
        %v4630 = vmul.f32 %v4320, %v4629
        %v4631 = vmul.f32 %v4321, %v4629
        %4634 = vrot.lane.b32.xlu0 %v4630, 127
        %v4635 = vpop.permute.xlu0 %4634
        %4636 = vrot.lane.b32.xlu0 %v4631, 127
        %v4637 = vpop.permute.xlu0 %4636
        %v4640 = vadd.f32 %v4584, %v4635
        %v4641 = vadd.f32 %v4585, %v4637
        %s4642 = sld [smem:[#allocation10 + $0x8]]
        %v4643 = vstv %s4642
        %v4644 = vmul.f32 %v4314, %v4643
        %v4645 = vmul.f32 %v4315, %v4643
        %4648 = vrot.lane.b32.xlu0 %v4644, 126
        %v4649 = vpop.permute.xlu0 %4648
        %4650 = vrot.lane.b32.xlu0 %v4645, 126
        %v4651 = vpop.permute.xlu0 %4650
        %v4654 = vadd.f32 %v4598, %v4649
        %v4655 = vadd.f32 %v4599, %v4651
        %s4656 = sld [smem:[#allocation10 + $0x2c]]
        %v4657 = vstv %s4656
        %v4658 = vmul.f32 %v4314, %v4657
        %v4659 = vmul.f32 %v4315, %v4657
        %4662 = vrot.lane.b32.xlu0 %v4658, 126
        %v4663 = vpop.permute.xlu0 %4662
        %4664 = vrot.lane.b32.xlu0 %v4659, 126
        %v4665 = vpop.permute.xlu0 %4664
        %v4668 = vadd.f32 %v4612, %v4663
        %v4669 = vadd.f32 %v4613, %v4665
        %s4670 = sld [smem:[#allocation10 + $0x50]]
        %v4671 = vstv %s4670
        %v4672 = vmul.f32 %v4314, %v4671
        %v4673 = vmul.f32 %v4315, %v4671
        %4676 = vrot.lane.b32.xlu0 %v4672, 126
        %v4677 = vpop.permute.xlu0 %4676
        %4678 = vrot.lane.b32.xlu0 %v4673, 126
        %v4679 = vpop.permute.xlu0 %4678
        %v4682 = vadd.f32 %v4626, %v4677
        %v4683 = vadd.f32 %v4627, %v4679
        %s4684 = sld [smem:[#allocation10 + $0x74]]
        %v4685 = vstv %s4684
        %v4686 = vmul.f32 %v4314, %v4685
        %v4687 = vmul.f32 %v4315, %v4685
        %4690 = vrot.lane.b32.xlu0 %v4686, 126
        %v4691 = vpop.permute.xlu0 %4690
        %4692 = vrot.lane.b32.xlu0 %v4687, 126
        %v4693 = vpop.permute.xlu0 %4692
        %v4696 = vadd.f32 %v4640, %v4691
        %v4697 = vadd.f32 %v4641, %v4693
        %s4698 = sld [smem:[#allocation10 + $0x11]]
        %v4699 = vstv %s4698
        %v4700 = vmul.f32 %v4316, %v4699
        %v4701 = vmul.f32 %v4317, %v4699
        %4704 = vrot.lane.b32.xlu0 %v4700, 126
        %v4705 = vpop.permute.xlu0 %4704
        %4706 = vrot.lane.b32.xlu0 %v4701, 126
        %v4707 = vpop.permute.xlu0 %4706
        %v4710 = vadd.f32 %v4654, %v4705
        %v4711 = vadd.f32 %v4655, %v4707
        %s4712 = sld [smem:[#allocation10 + $0x35]]
        %v4713 = vstv %s4712
        %v4714 = vmul.f32 %v4316, %v4713
        %v4715 = vmul.f32 %v4317, %v4713
        %4718 = vrot.lane.b32.xlu0 %v4714, 126
        %v4719 = vpop.permute.xlu0 %4718
        %4720 = vrot.lane.b32.xlu0 %v4715, 126
        %v4721 = vpop.permute.xlu0 %4720
        %v4724 = vadd.f32 %v4668, %v4719
        %v4725 = vadd.f32 %v4669, %v4721
        %s4726 = sld [smem:[#allocation10 + $0x59]]
        %v4727 = vstv %s4726
        %v4728 = vmul.f32 %v4316, %v4727
        %v4729 = vmul.f32 %v4317, %v4727
        %4732 = vrot.lane.b32.xlu0 %v4728, 126
        %v4733 = vpop.permute.xlu0 %4732
        %4734 = vrot.lane.b32.xlu0 %v4729, 126
        %v4735 = vpop.permute.xlu0 %4734
        %v4738 = vadd.f32 %v4682, %v4733
        %v4739 = vadd.f32 %v4683, %v4735
        %s4740 = sld [smem:[#allocation10 + $0x7d]]
        %v4741 = vstv %s4740
        %v4742 = vmul.f32 %v4316, %v4741
        %v4743 = vmul.f32 %v4317, %v4741
        %4746 = vrot.lane.b32.xlu0 %v4742, 126
        %v4747 = vpop.permute.xlu0 %4746
        %4748 = vrot.lane.b32.xlu0 %v4743, 126
        %v4749 = vpop.permute.xlu0 %4748
        %v4752 = vadd.f32 %v4696, %v4747
        %v4753 = vadd.f32 %v4697, %v4749
        %s4754 = sld [smem:[#allocation10 + $0x1a]]
        %v4755 = vstv %s4754
        %v4756 = vmul.f32 %v4318, %v4755
        %v4757 = vmul.f32 %v4319, %v4755
        %4760 = vrot.lane.b32.xlu0 %v4756, 126
        %v4761 = vpop.permute.xlu0 %4760
        %4762 = vrot.lane.b32.xlu0 %v4757, 126
        %v4763 = vpop.permute.xlu0 %4762
        %v4766 = vadd.f32 %v4710, %v4761
        %v4767 = vadd.f32 %v4711, %v4763
        %s4768 = sld [smem:[#allocation10 + $0x3e]]
        %v4769 = vstv %s4768
        %v4770 = vmul.f32 %v4318, %v4769
        %v4771 = vmul.f32 %v4319, %v4769
        %4774 = vrot.lane.b32.xlu0 %v4770, 126
        %v4775 = vpop.permute.xlu0 %4774
        %4776 = vrot.lane.b32.xlu0 %v4771, 126
        %v4777 = vpop.permute.xlu0 %4776
        %v4780 = vadd.f32 %v4724, %v4775
        %v4781 = vadd.f32 %v4725, %v4777
        %s4782 = sld [smem:[#allocation10 + $0x62]]
        %v4783 = vstv %s4782
        %v4784 = vmul.f32 %v4318, %v4783
        %v4785 = vmul.f32 %v4319, %v4783
        %4788 = vrot.lane.b32.xlu0 %v4784, 126
        %v4789 = vpop.permute.xlu0 %4788
        %4790 = vrot.lane.b32.xlu0 %v4785, 126
        %v4791 = vpop.permute.xlu0 %4790
        %v4794 = vadd.f32 %v4738, %v4789
        %v4795 = vadd.f32 %v4739, %v4791
        %s4796 = sld [smem:[#allocation10 + $0x86]]
        %v4797 = vstv %s4796
        %v4798 = vmul.f32 %v4318, %v4797
        %v4799 = vmul.f32 %v4319, %v4797
        %4802 = vrot.lane.b32.xlu0 %v4798, 126
        %v4803 = vpop.permute.xlu0 %4802
        %4804 = vrot.lane.b32.xlu0 %v4799, 126
        %v4805 = vpop.permute.xlu0 %4804
        %v4808 = vadd.f32 %v4752, %v4803
        %v4809 = vadd.f32 %v4753, %v4805
        %s4810 = sld [smem:[#allocation10 + $0x23]]
        %v4811 = vstv %s4810
        %v4812 = vmul.f32 %v4320, %v4811
        %v4813 = vmul.f32 %v4321, %v4811
        %4816 = vrot.lane.b32.xlu0 %v4812, 126
        %v4817 = vpop.permute.xlu0 %4816
        %4818 = vrot.lane.b32.xlu0 %v4813, 126
        %v4819 = vpop.permute.xlu0 %4818
        %v4822 = vadd.f32 %v4766, %v4817
        %v4823 = vadd.f32 %v4767, %v4819
        %s4824 = sld [smem:[#allocation10 + $0x47]]
        %v4825 = vstv %s4824
        %v4826 = vmul.f32 %v4320, %v4825
        %v4827 = vmul.f32 %v4321, %v4825
        %4830 = vrot.lane.b32.xlu0 %v4826, 126
        %v4831 = vpop.permute.xlu0 %4830
        %4832 = vrot.lane.b32.xlu0 %v4827, 126
        %v4833 = vpop.permute.xlu0 %4832
        %v4836 = vadd.f32 %v4780, %v4831
        %v4837 = vadd.f32 %v4781, %v4833
        %s4838 = sld [smem:[#allocation10 + $0x6b]]
        %v4839 = vstv %s4838
        %v4840 = vmul.f32 %v4320, %v4839
        %v4841 = vmul.f32 %v4321, %v4839
        %4844 = vrot.lane.b32.xlu0 %v4840, 126
        %v4845 = vpop.permute.xlu0 %4844
        %4846 = vrot.lane.b32.xlu0 %v4841, 126
        %v4847 = vpop.permute.xlu0 %4846
        %v4850 = vadd.f32 %v4794, %v4845
        %v4851 = vadd.f32 %v4795, %v4847
        %s4852 = sld [smem:[#allocation10 + $0x8f]]
        %v4853 = vstv %s4852
        %v4854 = vmul.f32 %v4320, %v4853
        %v4855 = vmul.f32 %v4321, %v4853
        %4858 = vrot.lane.b32.xlu0 %v4854, 126
        %v4859 = vpop.permute.xlu0 %4858
        %4860 = vrot.lane.b32.xlu0 %v4855, 126
        %v4861 = vpop.permute.xlu0 %4860
        %v4864 = vadd.f32 %v4808, %v4859
        %v4865 = vadd.f32 %v4809, %v4861
        %s4866 = sld [smem:[#allocation11]]
        %v4867 = vstv %s4866
        %v4868 = vadd.f32 %v4822, %v4867
        %v4869 = vadd.f32 %v4823, %v4867
        %s4870 = sld [smem:[#allocation11 + $0x1]]
        %v4871 = vstv %s4870
        %v4872 = vadd.f32 %v4836, %v4871
        %v4873 = vadd.f32 %v4837, %v4871
        %s4874 = sld [smem:[#allocation11 + $0x2]]
        %v4875 = vstv %s4874
        %v4876 = vadd.f32 %v4850, %v4875
        %v4877 = vadd.f32 %v4851, %v4875
        %s4878 = sld [smem:[#allocation11 + $0x3]]
        %v4879 = vstv %s4878
        %v4880 = vadd.f32 %v4864, %v4879
        %v4881 = vadd.f32 %v4865, %v4879
        %v4882 = vadd.f32 %v4868, %v419
        %v4883 = vadd.f32 %v4869, %v420
        %4884 = vst.msk [vmem:[%s404] sm:$0xff] %vm430, %v4882
        %4885 = vst.msk [vmem:[%s404 + $0x8] sm:$0xff] %vm430, %v4883
        %v4886 = vadd.f32 %v4872, %v422
        %v4887 = vadd.f32 %v4873, %v423
        %s4888 = scalar_lea.vmem %s404, 16 [#allocation13]
        %4889 = vst.msk [vmem:[%s4888] sm:$0xff] %vm430, %v4886
        %4890 = vst.msk [vmem:[%s4888 + $0x8] sm:$0xff] %vm430, %v4887
        %v4891 = vadd.f32 %v4876, %v425
        %v4892 = vadd.f32 %v4877, %v426
        %s4893 = scalar_lea.vmem %s404, 32 [#allocation13]
        %4894 = vst.msk [vmem:[%s4893] sm:$0xff] %vm430, %v4891
        %4895 = vst.msk [vmem:[%s4893 + $0x8] sm:$0xff] %vm430, %v4892
        %v4896 = vadd.f32 %v4880, %v428
        %v4897 = vadd.f32 %v4881, %v429
        %s4898 = scalar_lea.vmem %s404, 48 [#allocation13]
        %4899 = vst.msk [vmem:[%s4898] sm:$0xff] %vm430, %v4896
        %4900 = vst.msk [vmem:[%s4898 + $0x8] sm:$0xff] %vm430, %v4897
        %s4901 = sand.u32 %s231, 1
        %s4902 = scalar_lea.sflag [#allocation5], %s4901
        %s4903 = sand.u32 %s231, 1
        %s4904 = smul.addr %s4903, 64
        %s4905 = scalar_lea.vmem [#allocation13], %s4904
        // Predicated region
        $region77: #{tpu_custom_call.1} parent=55 // pred_check
          %p4906 = pneg %p241
        $region78: #{tpu_custom_call.1} parent=55 // pred_check_branch
          %4908 = sbr.rel (%p4906) target = $region80
        $region79: #{tpu_custom_call.1} parent=55 // pred_region
          %4910 = vsyncadd %s4902, 0
          %s4911 = smul.addr %s29, 8
          %s4912 = smul.addr %s4911, 8
          %s4913 = scalar_lea.hbm %s9, %s4912
          %s4914 = sshll.u32 %s4905, 4
          %s4915 = int_to_ptr.vmem [resolvable:$true] %s4914
          %s4916 = sshll.u32 %s4913, 4
          %s4917 = int_to_ptr.hbm [resolvable:$true] %s4916
          %4922 = dma.vmem_to_hbm [thread:$0]  %s4915, 1024, %s4917, %s4902, 128, 128, 8
        $region80: #{tpu_custom_call.1} parent=55 // pred_fallthru
          _
      $region56: #{tpu_custom_call.1} parent=5 // pred_fallthru
        _
      %p4923 = scmp.le.s32.totalorder 2, %s24
      // Predicated region
      $region81: #{tpu_custom_call.1} parent=5 // pred_check
        %p4924 = pneg %p4923
      $region82: #{tpu_custom_call.1} parent=5 // pred_check_branch
        %4926 = sbr.rel (%p4924) target = $region84
      $region83: #{tpu_custom_call.1} parent=5 // pred_region
        %s4927 = ssub.s32 %s24, 2
        // Predicated region
        $region85: #{tpu_custom_call.1} parent=83 // pred_check
          %p4928 = pneg %p247
        $region86: #{tpu_custom_call.1} parent=83 // pred_check_branch
          %4930 = sbr.rel (%p4928) target = $region88
        $region87: #{tpu_custom_call.1} parent=83 // pred_region
          %s4931 = sand.u32 %s232, 1
          %s4932 = scalar_lea.sflag [#allocation5], %s4931
          %s4933 = sand.u32 %s232, 1
          %s4934 = smul.addr %s4933, 64
          %s4935 = scalar_lea.vmem [#allocation13], %s4934
          %4937 = dma.done %s4932, 1024
        $region88: #{tpu_custom_call.1} parent=83 // pred_fallthru
          _
      $region84: #{tpu_custom_call.1} parent=5 // pred_fallthru
        _
    $region6: #{tpu_custom_call.1} parent=1 // loop_footer
      %s28 = sadd.s32 1, %s24
    $region7: #{tpu_custom_call.1} parent=1 // loop_footer_branch
      %23 = sbr.rel target = $region3
    $region8: #{tpu_custom_call.1} parent=1 // loop_exit
      _
    %4938 = vsyncpa [#allocation4], 1
    %s4939 = scalar_lea.sflag [#allocation4], 1
    %4940 = vsyncpa %s4939, 1
    %4941 = vsyncpa [#allocation5], 1
    %s4942 = scalar_lea.sflag [#allocation5], 1
    %4943 = vsyncpa %s4942, 1
    %4944 = vsyncpa [#allocation6], 1
    %s4945 = scalar_lea.sflag [#allocation6], 1
    %4946 = vsyncpa %s4945, 1
    %4947 = vsyncpa [#allocation9], 1
    %4948 = vsyncpa [#allocation12], 1

</llo_original>
